<compile_context>
chip_gen: v7x
topology: tpu7x:2x2x1
jax: 0.10.0
libtpu: 0.0.40
codegen_flags: <defaults>
</compile_context>

<pallas_src>
import functools

import jax
import jax.numpy as jnp
from jax.experimental import pallas as pl
from jax.experimental.pallas import tpu as pltpu


_SMALL_INPUT_BYTES = 64 << 10     # below this, use the fused jnp path
_BLOCK_BYTES_2D = 4 << 20         # ~4 MiB per-array block on the aligned slab
_BLOCK_BYTES_1D = 512 << 10       # conservative block for the ragged 1D path
_VMEM_LIMIT_BYTES = 32 << 20      # 2 arrays x 2 buffers x 4 MiB + headroom


def _steplu_kernel(x_ref, o_ref, *, lthreshold, rthreshold):
    x = x_ref[...]
    zero = jnp.zeros((), dtype=x.dtype)
    lth = jnp.asarray(lthreshold, dtype=x.dtype)
    rth = jnp.asarray(rthreshold, dtype=x.dtype)
    pv = jnp.maximum(x - rth, zero)
    nv = jnp.minimum(x + lth, zero)
    # Keep the compare+select form: correct for negative thresholds too (the
    # max(..)+min(..) algebraic shortcut is not), and VALU slack is free here.
    o_ref[...] = jnp.where(x >= zero, pv, nv)


def _steplu_jnp(x, lth, rth):
    zero = jnp.zeros((), dtype=x.dtype)
    pv = jnp.maximum(x - jnp.asarray(rth, x.dtype), zero)
    nv = jnp.minimum(x + jnp.asarray(lth, x.dtype), zero)
    return jnp.where(x >= zero, pv, nv)


def _round_up(a, b):
    return ((a + b - 1) // b) * b


def _dimension_semantics_candidates(n_axes):
    """Preferred dimension_semantics tuples, most aggressive first.

    On v7x (2 TensorCores per chip) CORE_PARALLEL shards the block axis across
    both cores (~2x aggregate HBM bandwidth driven); on single-TC chips
    (v5e/v6e) plain "parallel" is used.
    """
    try:
        kind = jax.devices()[0].device_kind.lower()
    except Exception:
        kind = ""
    cands = []
    if ("v7" in kind or "7x" in kind) and hasattr(pltpu, "CORE_PARALLEL"):
        cands.append((pltpu.CORE_PARALLEL,) * n_axes)
    cands.append(("parallel",) * n_axes)
    return cands


def _pallas_steplu_call(x_arr, block_shape, grid, lth, rth, donate_x):
    kernel = functools.partial(_steplu_kernel, lthreshold=lth, rthreshold=rth)
    if len(block_shape) == 1:
        index_map = lambda i: (i,)
    else:
        index_map = lambda i: (i, 0)
    spec = pl.BlockSpec(block_shape, index_map)
    last_err = None
    for sems in _dimension_semantics_candidates(len(grid)):
        try:
            return pl.pallas_call(
                kernel,
                out_shape=jax.ShapeDtypeStruct(x_arr.shape, x_arr.dtype),
                grid_spec=pltpu.PrefetchScalarGridSpec(
                    num_scalar_prefetch=0,
                    grid=grid,
                    in_specs=[spec],
                    out_specs=spec,
                ),
                compiler_params=pltpu.CompilerParams(
                    dimension_semantics=sems,
                    vmem_limit_bytes=_VMEM_LIMIT_BYTES,
                ),
                # Optional in-place update: same DMA bytes, but halves the peak
                # HBM footprint when the caller actually donates x.
                input_output_aliases=({0: 0} if donate_x else {}),
            )(x_arr)
        except Exception as err:  # chip-dependent config; try the next one
            last_err = err
    raise last_err


def steplu(x, threshold=None, lthreshold=None, rthreshold=None, *, donate_x=False):
    """StepLU forward (Pallas).  Matches the PyTorch module's forward pass."""
    # Threshold resolution mirrors the module exactly, including its `or`
    # (truthiness) defaulting: an explicit 0.0 l/rthreshold becomes 0.25.
    if threshold is not None:
        lth = rth = threshold
    else:
        lth = lthreshold or 0.25
        rth = rthreshold or 0.25
    # TODO(synk): integer dtypes truncate the float thresholds (matches the jnp
    # reference, not PyTorch's float promotion); intended for floating x.

    orig_shape = x.shape
    n = x.size
    if n == 0:
        return x
    itemsize = jnp.dtype(x.dtype).itemsize

    # Tiny tensors: pallas_call launch + one DMA step dominate; let XLA fuse.
    if n * itemsize < _SMALL_INPUT_BYTES:
        return _steplu_jnp(x, lth, rth)

    sub = {4: 8, 2: 16, 1: 32}.get(itemsize, 8)  # dtype-aware sublane packing
    xf = x.reshape(-1)  # free bitcast for contiguous inputs

    if n % 128 == 0:
        # Lane-dense 2D slab: copy-free reshape, unmasked full-lane stores.
        lanes = next(c for c in (1024, 512, 256, 128) if n % c == 0)
        rows = n // lanes
        target_rows = max(sub, ((_BLOCK_BYTES_2D // (lanes * itemsize)) // sub) * sub)
        if rows <= sub:
            block_rows = rows  # full-extent block on the row axis (allowed)
        else:
            block_rows = max(sub, min(target_rows, (rows // sub) * sub))
        grid = (pl.cdiv(rows, block_rows),)  # partial last block is masked
        out2 = _pallas_steplu_call(
            xf.reshape(rows, lanes), (block_rows, lanes), grid, lth, rth, donate_x)
        return out2.reshape(orig_shape)

    # Ragged flat size: tile the flat 1D array directly (no jnp.pad / out[:n]
    # slice -> no extra full-tensor HBM passes); Pallas masks the partial
    # last block.
    try:
        blk_target = max(1024, ((_BLOCK_BYTES_1D // itemsize) // 1024) * 1024)
        blk = min(blk_target, (n // 1024) * 1024) if n >= 1024 else n
        grid = (pl.cdiv(n, blk),)
        out1 = _pallas_steplu_call(xf, (blk,), grid, lth, rth, donate_x)
        return out1.reshape(orig_shape)
    except Exception:
        # Eager safety net if 1D blocks are rejected by this jax/libtpu combo:
        # padded 2D slab (slower: extra pad + slice passes, but always correct).
        lanes = 128
        pad = _round_up(n, lanes) - n
        xp = jnp.pad(xf, (0, pad))
        rows = (n + pad) // lanes
        target_rows = max(sub, ((_BLOCK_BYTES_2D // (lanes * itemsize)) // sub) * sub)
        block_rows = rows if rows <= sub else max(sub, min(target_rows, (rows // sub) * sub))
        grid = (pl.cdiv(rows, block_rows),)
        out2 = _pallas_steplu_call(
            xp.reshape(rows, lanes), (block_rows, lanes), grid, lth, rth, False)
        return out2.reshape(-1)[:n].reshape(orig_shape)


def steplu_ref(x, threshold=None, lthreshold=None, rthreshold=None):
    """Pure-JAX reference mirroring the PyTorch forward."""
    if threshold is not None:
        lth = rth = threshold
    else:
        lth = lthreshold or 0.25
        rth = rthreshold or 0.25
    return _steplu_jnp(x, lth, rth)


if __name__ == "__main__":
    key = jax.random.PRNGKey(0)
    k1, k2, k3, k4 = jax.random.split(key, 4)

    # 1) Canonical small NCHW input -> small-input (fused jnp) path.
    x1 = jax.random.normal(k1, (2, 4, 16, 16), dtype=jnp.float32)
    o1 = jax.block_until_ready(steplu(x1))
    assert o1.shape == x1.shape and o1.dtype == x1.dtype
    assert jnp.allclose(o1, steplu_ref(x1), atol=1e-6, rtol=1e-6)

    # 2) Larger aligned input -> lane-dense 2D Pallas path (4 MiB blocks,
    #    multi-step grid with a masked partial last block).
    x2 = jax.random.normal(k2, (33, 64, 32, 32), dtype=jnp.float32)
    o2 = jax.block_until_ready(steplu(x2))
    assert o2.shape == x2.shape and o2.dtype == x2.dtype
    assert jnp.allclose(o2, steplu_ref(x2), atol=1e-6, rtol=1e-6)

    # 3) Ragged flat size with asymmetric thresholds -> 1D Pallas path
    #    (no pad, no trailing slice; partial last block masked).
    x3 = jax.random.normal(k3, (3, 5, 67, 67), dtype=jnp.float32)
    o3 = jax.block_until_ready(steplu(x3, lthreshold=0.1, rthreshold=0.3))
    r3 = steplu_ref(x3, lthreshold=0.1, rthreshold=0.3)
    assert o3.shape == x3.shape and o3.dtype == x3.dtype
    assert jnp.allclose(o3, r3, atol=1e-6, rtol=1e-6)

    # 4) bf16 aligned input (exercises the dtype-aware sublane factor).
    x4 = jax.random.normal(k4, (4, 256, 128), dtype=jnp.bfloat16)
    o4 = jax.block_until_ready(steplu(x4, threshold=0.5))
    r4 = steplu_ref(x4, threshold=0.5)
    assert o4.shape == x4.shape and o4.dtype == x4.dtype
    assert jnp.allclose(o4.astype(jnp.float32), r4.astype(jnp.float32),
                        atol=1e-2, rtol=1e-2)

    print("KERNEL_OK")
</pallas_src>

<mosaic_0001>
module attributes {stable_mosaic.version = 11 : i64} {
  func.func @_steplu_kernel(%arg0: i32, %arg1: memref<1024x1024xf32, #tpu.memory_space<vmem>>, %arg2: memref<1024x1024xf32, #tpu.memory_space<vmem>>) attributes {dimension_semantics = [#tpu.dimension_semantics<parallel>], iteration_bounds = array<i64: 3>, scalar_prefetch = 0 : i64, scratch_operands = 0 : i64, tpu.core_type = #tpu.core_type<tc>, window_params = [{transform_indices = @transform_0, window_bounds = array<i64: 1024, 1024>}, {transform_indices = @transform_1, window_bounds = array<i64: 1024, 1024>}]} {
    %c0 = arith.constant 0 : index
    %c0_0 = arith.constant 0 : index
    %0 = vector.load %arg1[%c0, %c0_0] : memref<1024x1024xf32, #tpu.memory_space<vmem>>, vector<1024x1024xf32>
    %cst = arith.constant 2.500000e-01 : f32
    %1 = vector.broadcast %cst : f32 to vector<1024x1024xf32>
    %2 = arith.subf %0, %1 : vector<1024x1024xf32>
    %cst_1 = arith.constant 0.000000e+00 : f32
    %3 = vector.broadcast %cst_1 : f32 to vector<1024x1024xf32>
    %4 = arith.maximumf %2, %3 : vector<1024x1024xf32>
    %cst_2 = arith.constant 2.500000e-01 : f32
    %5 = vector.broadcast %cst_2 : f32 to vector<1024x1024xf32>
    %6 = arith.addf %0, %5 : vector<1024x1024xf32>
    %cst_3 = arith.constant 0.000000e+00 : f32
    %7 = vector.broadcast %cst_3 : f32 to vector<1024x1024xf32>
    %8 = arith.minimumf %6, %7 : vector<1024x1024xf32>
    %cst_4 = arith.constant 0.000000e+00 : f32
    %9 = vector.broadcast %cst_4 : f32 to vector<1024x1024xf32>
    %10 = arith.cmpf oge, %0, %9 : vector<1024x1024xf32>
    %11 = arith.select %10, %4, %8 : vector<1024x1024xi1>, vector<1024x1024xf32>
    %c0_5 = arith.constant 0 : index
    %c0_6 = arith.constant 0 : index
    %12 = vector.load %arg2[%c0_5, %c0_6] : memref<1024x1024xf32, #tpu.memory_space<vmem>>, vector<1024x1024xf32>
    tpu.vector_store %arg2[%c0_5, %c0_6], %11 {strides = array<i32>} : memref<1024x1024xf32, #tpu.memory_space<vmem>>, vector<1024x1024xf32>,
    return
  }
  func.func @transform_0(%arg0: i32) -> (i32, i32) {
    %c0_i32 = arith.constant 0 : i32
    %c0_i32_0 = arith.constant 0 : i32
    return %arg0, %c0_i32 : i32, i32
  }
  func.func @transform_1(%arg0: i32) -> (i32, i32) {
    %c0_i32 = arith.constant 0 : i32
    %c0_i32_0 = arith.constant 0 : i32
    return %arg0, %c0_i32 : i32, i32
  }
}

</mosaic_0001>

<llo_original>
// kernel: tpu_custom_call.1
$region0: #{tpu_custom_call.1}
  #allocation0 [shape = 'u32[]', space=smem, size = 0x4, offset = 0x4, fixed_abs, tag = 'smem constant byte address 0x4 - core index']
  #allocation1 [shape = 'u32[144,128]{1,0:T(1,128)}', space=vmem, size = 0x12000, scoped, tag = 'internal scratch']
  %s0 = inlined_call_operand.hbm [shape: f32[2112,1024], index: 0, kind: input, shape index: {}]
  %s1 = inlined_call_operand.hbm [shape: f32[2112,1024], index: 1, kind: output, shape index: {}]
  %s2 = sld [smem:[#allocation0]]
  $region41: #{tpu_custom_call.1} parent=0
    _
  %s4 = ssub.s32 1, %s2
  %s5 = scalar_select 0, %s4, %s2
  $region1: #{tpu_custom_call.1} parent=0
    #allocation2 [shape = 'u8[8388608]{0}', space=vmem, size = 0x800000, scoped, tag = 'input window, operand 0']
    #allocation3 [shape = 's32[2]{0}', space=sflag, size = 0x8, scoped, tag = 'scoped memory for tpu_custom_call.1']
    #allocation4 [shape = 's32[2]{0}', space=sflag, size = 0x8, scoped, tag = 'scoped memory for tpu_custom_call.1']
    #allocation5 [shape = 'u8[8388608]{0}', space=vmem, size = 0x800000, scoped, tag = 'output window, operand 0']
    %6 = vsyncpa [#allocation3], 0
    %s7 = scalar_lea.sflag [#allocation3], 1
    %8 = vsyncpa %s7, 0
    %9 = vsyncpa [#allocation4], 0
    %s10 = scalar_lea.sflag [#allocation4], 1
    %11 = vsyncpa %s10, 0
    loop: start=0, step=1, limit=5
    $region2: #{tpu_custom_call.1} parent=1 // loop_pre_header
      _
    $region3: #{tpu_custom_call.1} parent=1 // loop_header
      %s13 = sphi 0, %s17
      %p14 = scmp.ge.s32.totalorder %s13, 5
      %s23 = sphi 0, %s25
      %s26 = sphi 0, %s23
      %s27 = sphi 0, %s26
      %s43 = sphi 0, %s27
      %s49 = sphi 0, %s51
      %s52 = sphi 0, %s49
      %s53 = sphi 0, %s52
      %s69 = sphi 0, %s53
    $region4: #{tpu_custom_call.1} parent=1 // loop_header_branch
      %16 = sbr.rel (%p14) target = $region8
    $region5: #{tpu_custom_call.1} parent=1 // loop_body
      %s18 = ssub.s32 %s13, 1
      %s19 = ssub.s32 %s13, 2
      %s20 = sadd.s32 %s13, 1
      %s21 = ssub.s32 %s13, %s20
      %p22 = scmp.eq.s32.totalorder %s21, 0
      %s24 = sadd.s32 %s23, 1
      %s25 = scalar_select %p22, %s23, %s24
      %p28 = pneg %p22
      %p29 = scmp.eq.s32.totalorder %s13, 2
      %p30 = por %p28, %p29
      %p31 = scmp.ne.s32.totalorder %s23, %s26
      %p32 = scmp.eq.s32.totalorder %s13, 0
      %p33 = por %p31, %p32
      %p34 = scmp.ne.s32.totalorder %s23, %s26
      %p35 = scmp.eq.s32.totalorder %s18, 2
      %p36 = por %p34, %p35
      %p37 = scmp.ne.s32.totalorder %s26, %s27
      %p38 = scmp.eq.s32.totalorder %s18, 0
      %p39 = por %p37, %p38
      %p40 = scmp.ne.s32.totalorder %s26, %s27
      %p41 = scmp.eq.s32.totalorder %s19, 2
      %p42 = por %p40, %p41
      %p44 = scmp.ne.s32.totalorder %s27, %s43
      %p45 = scmp.eq.s32.totalorder %s19, 0
      %p46 = por %p44, %p45
      %s47 = ssub.s32 %s13, %s20
      %p48 = scmp.eq.s32.totalorder %s47, 0
      %s50 = sadd.s32 %s49, 1
      %s51 = scalar_select %p48, %s49, %s50
      %p54 = pneg %p48
      %p55 = scmp.eq.s32.totalorder %s13, 2
      %p56 = por %p54, %p55
      %p57 = scmp.ne.s32.totalorder %s49, %s52
      %p58 = scmp.eq.s32.totalorder %s13, 0
      %p59 = por %p57, %p58
      %p60 = scmp.ne.s32.totalorder %s49, %s52
      %p61 = scmp.eq.s32.totalorder %s18, 2
      %p62 = por %p60, %p61
      %p63 = scmp.ne.s32.totalorder %s52, %s53
      %p64 = scmp.eq.s32.totalorder %s18, 0
      %p65 = por %p63, %p64
      %p66 = scmp.ne.s32.totalorder %s52, %s53
      %p67 = scmp.eq.s32.totalorder %s19, 2
      %p68 = por %p66, %p67
      %p70 = scmp.ne.s32.totalorder %s53, %s69
      %p71 = scmp.eq.s32.totalorder %s19, 0
      %p72 = por %p70, %p71
      %p73 = scmp.le.s32.totalorder 1, %s13
      %p74 = scmp.lt.s32.totalorder %s13, 4
      %p75 = pnand %p73, %p74
      %p76 = pneg %p75
      // Predicated region
      $region9: #{tpu_custom_call.1} parent=5 // pred_check
        _
      $region10: #{tpu_custom_call.1} parent=5 // pred_check_branch
        %78 = sbr.rel (%p75) target = $region12
      $region11: #{tpu_custom_call.1} parent=5 // pred_region
        %s79 = ssub.s32 %s13, 1
      $region12: #{tpu_custom_call.1} parent=5 // pred_fallthru
        _
      %p80 = scmp.lt.s32.totalorder %s13, 3
      // Predicated region
      $region13: #{tpu_custom_call.1} parent=5 // pred_check
        %p81 = pneg %p80
      $region14: #{tpu_custom_call.1} parent=5 // pred_check_branch
        %83 = sbr.rel (%p81) target = $region16
      $region15: #{tpu_custom_call.1} parent=5 // pred_region
        // Predicated region
        $region17: #{tpu_custom_call.1} parent=15 // pred_check
          %p84 = pneg %p33
        $region18: #{tpu_custom_call.1} parent=15 // pred_check_branch
          %86 = sbr.rel (%p84) target = $region20
        $region19: #{tpu_custom_call.1} parent=15 // pred_region
          %s87 = sand.u32 %s23, 1
          %s88 = scalar_lea.sflag [#allocation3], %s87
          %s89 = sand.u32 %s23, 1
          %s90 = smul.addr %s89, 8192
          %s91 = scalar_lea.vmem [#allocation2], %s90
          %s92 = smul.u32 128, %s13
          %s93 = ssub.s32 264, %s92
          %p94 = scmp.lt.s32.totalorder %s93, 128
          %s95 = scalar_select %p94, %s93, 128
          %s96 = smul.u32 128, %s95
          %s97 = smul.u32 %s96, 8
          %s99 = ssub.s32 131072, %s97
          %100 = vsyncadd %s88, %s99
          %p101 = scmp.ne.s32.totalorder 0, %s97
          %s102 = smul.addr %s92, 8
          %s103 = smul.addr %s102, 128
          %s104 = scalar_lea.hbm %s0, %s103
          %s105 = smul.u32 64, %s95
          %s106 = sshll.u32 %s91, 4
          %s107 = int_to_ptr.vmem [resolvable:$true] %s106
          %s108 = sshll.u32 %s105, 4
          %112 = dma.hbm_to_vmem [thread:$0]  (%p101), %s104, %s108, %s107, %s88, 1024, 1024, 64
        $region20: #{tpu_custom_call.1} parent=15 // pred_fallthru
          _
      $region16: #{tpu_custom_call.1} parent=5 // pred_fallthru
        _
      %p113 = scmp.le.s32.totalorder 1, %s13
      %p114 = scmp.lt.s32.totalorder %s13, 4
      %p115 = pnand %p113, %p114
      %p116 = pneg %p115
      // Predicated region
      $region21: #{tpu_custom_call.1} parent=5 // pred_check
        _
      $region22: #{tpu_custom_call.1} parent=5 // pred_check_branch
        %118 = sbr.rel (%p115) target = $region24
      $region23: #{tpu_custom_call.1} parent=5 // pred_region
        %s119 = ssub.s32 %s13, 1
        %s120 = sand.u32 %s26, 1
        %s121 = scalar_lea.sflag [#allocation3], %s120
        %s122 = sand.u32 %s26, 1
        %s123 = smul.addr %s122, 8192
        %s124 = scalar_lea.vmem [#allocation2], %s123
        // Predicated region
        $region25: #{tpu_custom_call.1} parent=23 // pred_check
          %p125 = pneg %p39
        $region26: #{tpu_custom_call.1} parent=23 // pred_check_branch
          %127 = sbr.rel (%p125) target = $region28
        $region27: #{tpu_custom_call.1} parent=23 // pred_region
          %128 = dma.done %s121, 131072
        $region28: #{tpu_custom_call.1} parent=23 // pred_fallthru
          _
        %s129 = sand.u32 %s26, 1
        %s130 = scalar_lea.sflag [#allocation3], %s129
        %s131 = sand.u32 %s26, 1
        %s132 = smul.addr %s131, 8192
        %s133 = scalar_lea.vmem [#allocation2], %s132
        %p134 = pneg %p39
        %p135 = pneg %p36
        %p136 = pneg %p65
        %p137 = pneg %p62
        %s138 = sand.u32 %s52, 1
        %s139 = scalar_lea.sflag [#allocation4], %s138
        %s140 = sand.u32 %s52, 1
        %s141 = smul.addr %s140, 8192
        %s142 = scalar_lea.vmem [#allocation5], %s141
        %s143 = smul.u32 128, %s18
        %s144 = ssub.s32 264, %s143
        %p145 = scmp.lt.s32.totalorder %s144, 128
        %s146 = scalar_select %p145, %s144, 128
        %s147 = smul.u32 128, %s146
        %s148 = smul.u32 %s147, 8
        %s149 = smul.u32 128, %s18
        %s150 = ssub.s32 264, %s149
        %p151 = scmp.lt.s32.totalorder %s150, 128
        %s152 = scalar_select %p151, %s150, 128
        %s153 = smul.u32 128, %s152
        %s154 = smul.u32 %s153, 8
        %v155 = vld [vmem:[%s124] sm:$0xff]
        %v156 = vld [vmem:[%s124 + $0x8] sm:$0xff]
        %v157 = vld [vmem:[%s124 + $0x10] sm:$0xff]
        %v158 = vld [vmem:[%s124 + $0x18] sm:$0xff]
        %v159 = vld [vmem:[%s124 + $0x20] sm:$0xff]
        %v160 = vld [vmem:[%s124 + $0x28] sm:$0xff]
        %v161 = vld [vmem:[%s124 + $0x30] sm:$0xff]
        %v162 = vld [vmem:[%s124 + $0x38] sm:$0xff]
        %v163 = vld [vmem:[%s124 + $0x40] sm:$0xff]
        %v164 = vld [vmem:[%s124 + $0x48] sm:$0xff]
        %v165 = vld [vmem:[%s124 + $0x50] sm:$0xff]
        %v166 = vld [vmem:[%s124 + $0x58] sm:$0xff]
        %v167 = vld [vmem:[%s124 + $0x60] sm:$0xff]
        %v168 = vld [vmem:[%s124 + $0x68] sm:$0xff]
        %v169 = vld [vmem:[%s124 + $0x70] sm:$0xff]
        %v170 = vld [vmem:[%s124 + $0x78] sm:$0xff]
        %v171 = vld [vmem:[%s124 + $0x80] sm:$0xff]
        %v172 = vld [vmem:[%s124 + $0x88] sm:$0xff]
        %v173 = vld [vmem:[%s124 + $0x90] sm:$0xff]
        %v174 = vld [vmem:[%s124 + $0x98] sm:$0xff]
        %v175 = vld [vmem:[%s124 + $0xa0] sm:$0xff]
        %v176 = vld [vmem:[%s124 + $0xa8] sm:$0xff]
        %v177 = vld [vmem:[%s124 + $0xb0] sm:$0xff]
        %v178 = vld [vmem:[%s124 + $0xb8] sm:$0xff]
        %v179 = vld [vmem:[%s124 + $0xc0] sm:$0xff]
        %v180 = vld [vmem:[%s124 + $0xc8] sm:$0xff]
        %v181 = vld [vmem:[%s124 + $0xd0] sm:$0xff]
        %v182 = vld [vmem:[%s124 + $0xd8] sm:$0xff]
        %v183 = vld [vmem:[%s124 + $0xe0] sm:$0xff]
        %v184 = vld [vmem:[%s124 + $0xe8] sm:$0xff]
        %v185 = vld [vmem:[%s124 + $0xf0] sm:$0xff]
        %v186 = vld [vmem:[%s124 + $0xf8] sm:$0xff]
        %v187 = vld [vmem:[%s124 + $0x100] sm:$0xff]
        %v188 = vld [vmem:[%s124 + $0x108] sm:$0xff]
        %v189 = vld [vmem:[%s124 + $0x110] sm:$0xff]
        %v190 = vld [vmem:[%s124 + $0x118] sm:$0xff]
        %v191 = vld [vmem:[%s124 + $0x120] sm:$0xff]
        %v192 = vld [vmem:[%s124 + $0x128] sm:$0xff]
        %v193 = vld [vmem:[%s124 + $0x130] sm:$0xff]
        %v194 = vld [vmem:[%s124 + $0x138] sm:$0xff]
        %v195 = vld [vmem:[%s124 + $0x140] sm:$0xff]
        %v196 = vld [vmem:[%s124 + $0x148] sm:$0xff]
        %v197 = vld [vmem:[%s124 + $0x150] sm:$0xff]
        %v198 = vld [vmem:[%s124 + $0x158] sm:$0xff]
        %v199 = vld [vmem:[%s124 + $0x160] sm:$0xff]
        %v200 = vld [vmem:[%s124 + $0x168] sm:$0xff]
        %v201 = vld [vmem:[%s124 + $0x170] sm:$0xff]
        %v202 = vld [vmem:[%s124 + $0x178] sm:$0xff]
        %v203 = vld [vmem:[%s124 + $0x180] sm:$0xff]
        %v204 = vld [vmem:[%s124 + $0x188] sm:$0xff]
        %v205 = vld [vmem:[%s124 + $0x190] sm:$0xff]
        %v206 = vld [vmem:[%s124 + $0x198] sm:$0xff]
        %v207 = vld [vmem:[%s124 + $0x1a0] sm:$0xff]
        %v208 = vld [vmem:[%s124 + $0x1a8] sm:$0xff]
        %v209 = vld [vmem:[%s124 + $0x1b0] sm:$0xff]
        %v210 = vld [vmem:[%s124 + $0x1b8] sm:$0xff]
        %v211 = vld [vmem:[%s124 + $0x1c0] sm:$0xff]
        %v212 = vld [vmem:[%s124 + $0x1c8] sm:$0xff]
        %v213 = vld [vmem:[%s124 + $0x1d0] sm:$0xff]
        %v214 = vld [vmem:[%s124 + $0x1d8] sm:$0xff]
        %v215 = vld [vmem:[%s124 + $0x1e0] sm:$0xff]
        %v216 = vld [vmem:[%s124 + $0x1e8] sm:$0xff]
        %v217 = vld [vmem:[%s124 + $0x1f0] sm:$0xff]
        %v218 = vld [vmem:[%s124 + $0x1f8] sm:$0xff]
        %v219 = vld [vmem:[%s124 + $0x200] sm:$0xff]
        %v220 = vld [vmem:[%s124 + $0x208] sm:$0xff]
        %v221 = vld [vmem:[%s124 + $0x210] sm:$0xff]
        %v222 = vld [vmem:[%s124 + $0x218] sm:$0xff]
        %v223 = vld [vmem:[%s124 + $0x220] sm:$0xff]
        %v224 = vld [vmem:[%s124 + $0x228] sm:$0xff]
        %v225 = vld [vmem:[%s124 + $0x230] sm:$0xff]
        %v226 = vld [vmem:[%s124 + $0x238] sm:$0xff]
        %v227 = vld [vmem:[%s124 + $0x240] sm:$0xff]
        %v228 = vld [vmem:[%s124 + $0x248] sm:$0xff]
        %v229 = vld [vmem:[%s124 + $0x250] sm:$0xff]
        %v230 = vld [vmem:[%s124 + $0x258] sm:$0xff]
        %v231 = vld [vmem:[%s124 + $0x260] sm:$0xff]
        %v232 = vld [vmem:[%s124 + $0x268] sm:$0xff]
        %v233 = vld [vmem:[%s124 + $0x270] sm:$0xff]
        %v234 = vld [vmem:[%s124 + $0x278] sm:$0xff]
        %v235 = vld [vmem:[%s124 + $0x280] sm:$0xff]
        %v236 = vld [vmem:[%s124 + $0x288] sm:$0xff]
        %v237 = vld [vmem:[%s124 + $0x290] sm:$0xff]
        %v238 = vld [vmem:[%s124 + $0x298] sm:$0xff]
        %v239 = vld [vmem:[%s124 + $0x2a0] sm:$0xff]
        %v240 = vld [vmem:[%s124 + $0x2a8] sm:$0xff]
        %v241 = vld [vmem:[%s124 + $0x2b0] sm:$0xff]
        %v242 = vld [vmem:[%s124 + $0x2b8] sm:$0xff]
        %v243 = vld [vmem:[%s124 + $0x2c0] sm:$0xff]
        %v244 = vld [vmem:[%s124 + $0x2c8] sm:$0xff]
        %v245 = vld [vmem:[%s124 + $0x2d0] sm:$0xff]
        %v246 = vld [vmem:[%s124 + $0x2d8] sm:$0xff]
        %v247 = vld [vmem:[%s124 + $0x2e0] sm:$0xff]
        %v248 = vld [vmem:[%s124 + $0x2e8] sm:$0xff]
        %v249 = vld [vmem:[%s124 + $0x2f0] sm:$0xff]
        %v250 = vld [vmem:[%s124 + $0x2f8] sm:$0xff]
        %v251 = vld [vmem:[%s124 + $0x300] sm:$0xff]
        %v252 = vld [vmem:[%s124 + $0x308] sm:$0xff]
        %v253 = vld [vmem:[%s124 + $0x310] sm:$0xff]
        %v254 = vld [vmem:[%s124 + $0x318] sm:$0xff]
        %v255 = vld [vmem:[%s124 + $0x320] sm:$0xff]
        %v256 = vld [vmem:[%s124 + $0x328] sm:$0xff]
        %v257 = vld [vmem:[%s124 + $0x330] sm:$0xff]
        %v258 = vld [vmem:[%s124 + $0x338] sm:$0xff]
        %v259 = vld [vmem:[%s124 + $0x340] sm:$0xff]
        %v260 = vld [vmem:[%s124 + $0x348] sm:$0xff]
        %v261 = vld [vmem:[%s124 + $0x350] sm:$0xff]
        %v262 = vld [vmem:[%s124 + $0x358] sm:$0xff]
        %v263 = vld [vmem:[%s124 + $0x360] sm:$0xff]
        %v264 = vld [vmem:[%s124 + $0x368] sm:$0xff]
        %v265 = vld [vmem:[%s124 + $0x370] sm:$0xff]
        %v266 = vld [vmem:[%s124 + $0x378] sm:$0xff]
        %v267 = vld [vmem:[%s124 + $0x380] sm:$0xff]
        %v268 = vld [vmem:[%s124 + $0x388] sm:$0xff]
        %v269 = vld [vmem:[%s124 + $0x390] sm:$0xff]
        %v270 = vld [vmem:[%s124 + $0x398] sm:$0xff]
        %v271 = vld [vmem:[%s124 + $0x3a0] sm:$0xff]
        %v272 = vld [vmem:[%s124 + $0x3a8] sm:$0xff]
        %v273 = vld [vmem:[%s124 + $0x3b0] sm:$0xff]
        %v274 = vld [vmem:[%s124 + $0x3b8] sm:$0xff]
        %v275 = vld [vmem:[%s124 + $0x3c0] sm:$0xff]
        %v276 = vld [vmem:[%s124 + $0x3c8] sm:$0xff]
        %v277 = vld [vmem:[%s124 + $0x3d0] sm:$0xff]
        %v278 = vld [vmem:[%s124 + $0x3d8] sm:$0xff]
        %v279 = vld [vmem:[%s124 + $0x3e0] sm:$0xff]
        %v280 = vld [vmem:[%s124 + $0x3e8] sm:$0xff]
        %v281 = vld [vmem:[%s124 + $0x3f0] sm:$0xff]
        %v282 = vld [vmem:[%s124 + $0x3f8] sm:$0xff]
        %v283 = vld [vmem:[%s124 + $0x400] sm:$0xff]
        %v284 = vld [vmem:[%s124 + $0x408] sm:$0xff]
        %v285 = vld [vmem:[%s124 + $0x410] sm:$0xff]
        %v286 = vld [vmem:[%s124 + $0x418] sm:$0xff]
        %v287 = vld [vmem:[%s124 + $0x420] sm:$0xff]
        %v288 = vld [vmem:[%s124 + $0x428] sm:$0xff]
        %v289 = vld [vmem:[%s124 + $0x430] sm:$0xff]
        %v290 = vld [vmem:[%s124 + $0x438] sm:$0xff]
        %v291 = vld [vmem:[%s124 + $0x440] sm:$0xff]
        %v292 = vld [vmem:[%s124 + $0x448] sm:$0xff]
        %v293 = vld [vmem:[%s124 + $0x450] sm:$0xff]
        %v294 = vld [vmem:[%s124 + $0x458] sm:$0xff]
        %v295 = vld [vmem:[%s124 + $0x460] sm:$0xff]
        %v296 = vld [vmem:[%s124 + $0x468] sm:$0xff]
        %v297 = vld [vmem:[%s124 + $0x470] sm:$0xff]
        %v298 = vld [vmem:[%s124 + $0x478] sm:$0xff]
        %v299 = vld [vmem:[%s124 + $0x480] sm:$0xff]
        %v300 = vld [vmem:[%s124 + $0x488] sm:$0xff]
        %v301 = vld [vmem:[%s124 + $0x490] sm:$0xff]
        %v302 = vld [vmem:[%s124 + $0x498] sm:$0xff]
        %v303 = vld [vmem:[%s124 + $0x4a0] sm:$0xff]
        %v304 = vld [vmem:[%s124 + $0x4a8] sm:$0xff]
        %v305 = vld [vmem:[%s124 + $0x4b0] sm:$0xff]
        %v306 = vld [vmem:[%s124 + $0x4b8] sm:$0xff]
        %v307 = vld [vmem:[%s124 + $0x4c0] sm:$0xff]
        %v308 = vld [vmem:[%s124 + $0x4c8] sm:$0xff]
        %v309 = vld [vmem:[%s124 + $0x4d0] sm:$0xff]
        %v310 = vld [vmem:[%s124 + $0x4d8] sm:$0xff]
        %v311 = vld [vmem:[%s124 + $0x4e0] sm:$0xff]
        %v312 = vld [vmem:[%s124 + $0x4e8] sm:$0xff]
        %v313 = vld [vmem:[%s124 + $0x4f0] sm:$0xff]
        %v314 = vld [vmem:[%s124 + $0x4f8] sm:$0xff]
        %v315 = vld [vmem:[%s124 + $0x500] sm:$0xff]
        %v316 = vld [vmem:[%s124 + $0x508] sm:$0xff]
        %v317 = vld [vmem:[%s124 + $0x510] sm:$0xff]
        %v318 = vld [vmem:[%s124 + $0x518] sm:$0xff]
        %v319 = vld [vmem:[%s124 + $0x520] sm:$0xff]
        %v320 = vld [vmem:[%s124 + $0x528] sm:$0xff]
        %v321 = vld [vmem:[%s124 + $0x530] sm:$0xff]
        %v322 = vld [vmem:[%s124 + $0x538] sm:$0xff]
        %v323 = vld [vmem:[%s124 + $0x540] sm:$0xff]
        %v324 = vld [vmem:[%s124 + $0x548] sm:$0xff]
        %v325 = vld [vmem:[%s124 + $0x550] sm:$0xff]
        %v326 = vld [vmem:[%s124 + $0x558] sm:$0xff]
        %v327 = vld [vmem:[%s124 + $0x560] sm:$0xff]
        %v328 = vld [vmem:[%s124 + $0x568] sm:$0xff]
        %v329 = vld [vmem:[%s124 + $0x570] sm:$0xff]
        %v330 = vld [vmem:[%s124 + $0x578] sm:$0xff]
        %v331 = vld [vmem:[%s124 + $0x580] sm:$0xff]
        %v332 = vld [vmem:[%s124 + $0x588] sm:$0xff]
        %v333 = vld [vmem:[%s124 + $0x590] sm:$0xff]
        %v334 = vld [vmem:[%s124 + $0x598] sm:$0xff]
        %v335 = vld [vmem:[%s124 + $0x5a0] sm:$0xff]
        %v336 = vld [vmem:[%s124 + $0x5a8] sm:$0xff]
        %v337 = vld [vmem:[%s124 + $0x5b0] sm:$0xff]
        %v338 = vld [vmem:[%s124 + $0x5b8] sm:$0xff]
        %v339 = vld [vmem:[%s124 + $0x5c0] sm:$0xff]
        %v340 = vld [vmem:[%s124 + $0x5c8] sm:$0xff]
        %v341 = vld [vmem:[%s124 + $0x5d0] sm:$0xff]
        %v342 = vld [vmem:[%s124 + $0x5d8] sm:$0xff]
        %v343 = vld [vmem:[%s124 + $0x5e0] sm:$0xff]
        %v344 = vld [vmem:[%s124 + $0x5e8] sm:$0xff]
        %v345 = vld [vmem:[%s124 + $0x5f0] sm:$0xff]
        %v346 = vld [vmem:[%s124 + $0x5f8] sm:$0xff]
        %v347 = vld [vmem:[%s124 + $0x600] sm:$0xff]
        %v348 = vld [vmem:[%s124 + $0x608] sm:$0xff]
        %v349 = vld [vmem:[%s124 + $0x610] sm:$0xff]
        %v350 = vld [vmem:[%s124 + $0x618] sm:$0xff]
        %v351 = vld [vmem:[%s124 + $0x620] sm:$0xff]
        %v352 = vld [vmem:[%s124 + $0x628] sm:$0xff]
        %v353 = vld [vmem:[%s124 + $0x630] sm:$0xff]
        %v354 = vld [vmem:[%s124 + $0x638] sm:$0xff]
        %v355 = vld [vmem:[%s124 + $0x640] sm:$0xff]
        %v356 = vld [vmem:[%s124 + $0x648] sm:$0xff]
        %v357 = vld [vmem:[%s124 + $0x650] sm:$0xff]
        %v358 = vld [vmem:[%s124 + $0x658] sm:$0xff]
        %v359 = vld [vmem:[%s124 + $0x660] sm:$0xff]
        %v360 = vld [vmem:[%s124 + $0x668] sm:$0xff]
        %v361 = vld [vmem:[%s124 + $0x670] sm:$0xff]
        %v362 = vld [vmem:[%s124 + $0x678] sm:$0xff]
        %v363 = vld [vmem:[%s124 + $0x680] sm:$0xff]
        %v364 = vld [vmem:[%s124 + $0x688] sm:$0xff]
        %v365 = vld [vmem:[%s124 + $0x690] sm:$0xff]
        %v366 = vld [vmem:[%s124 + $0x698] sm:$0xff]
        %v367 = vld [vmem:[%s124 + $0x6a0] sm:$0xff]
        %v368 = vld [vmem:[%s124 + $0x6a8] sm:$0xff]
        %v369 = vld [vmem:[%s124 + $0x6b0] sm:$0xff]
        %v370 = vld [vmem:[%s124 + $0x6b8] sm:$0xff]
        %v371 = vld [vmem:[%s124 + $0x6c0] sm:$0xff]
        %v372 = vld [vmem:[%s124 + $0x6c8] sm:$0xff]
        %v373 = vld [vmem:[%s124 + $0x6d0] sm:$0xff]
        %v374 = vld [vmem:[%s124 + $0x6d8] sm:$0xff]
        %v375 = vld [vmem:[%s124 + $0x6e0] sm:$0xff]
        %v376 = vld [vmem:[%s124 + $0x6e8] sm:$0xff]
        %v377 = vld [vmem:[%s124 + $0x6f0] sm:$0xff]
        %v378 = vld [vmem:[%s124 + $0x6f8] sm:$0xff]
        %v379 = vld [vmem:[%s124 + $0x700] sm:$0xff]
        %v380 = vld [vmem:[%s124 + $0x708] sm:$0xff]
        %v381 = vld [vmem:[%s124 + $0x710] sm:$0xff]
        %v382 = vld [vmem:[%s124 + $0x718] sm:$0xff]
        %v383 = vld [vmem:[%s124 + $0x720] sm:$0xff]
        %v384 = vld [vmem:[%s124 + $0x728] sm:$0xff]
        %v385 = vld [vmem:[%s124 + $0x730] sm:$0xff]
        %v386 = vld [vmem:[%s124 + $0x738] sm:$0xff]
        %v387 = vld [vmem:[%s124 + $0x740] sm:$0xff]
        %v388 = vld [vmem:[%s124 + $0x748] sm:$0xff]
        %v389 = vld [vmem:[%s124 + $0x750] sm:$0xff]
        %v390 = vld [vmem:[%s124 + $0x758] sm:$0xff]
        %v391 = vld [vmem:[%s124 + $0x760] sm:$0xff]
        %v392 = vld [vmem:[%s124 + $0x768] sm:$0xff]
        %v393 = vld [vmem:[%s124 + $0x770] sm:$0xff]
        %v394 = vld [vmem:[%s124 + $0x778] sm:$0xff]
        %v395 = vld [vmem:[%s124 + $0x780] sm:$0xff]
        %v396 = vld [vmem:[%s124 + $0x788] sm:$0xff]
        %v397 = vld [vmem:[%s124 + $0x790] sm:$0xff]
        %v398 = vld [vmem:[%s124 + $0x798] sm:$0xff]
        %v399 = vld [vmem:[%s124 + $0x7a0] sm:$0xff]
        %v400 = vld [vmem:[%s124 + $0x7a8] sm:$0xff]
        %v401 = vld [vmem:[%s124 + $0x7b0] sm:$0xff]
        %v402 = vld [vmem:[%s124 + $0x7b8] sm:$0xff]
        %v403 = vld [vmem:[%s124 + $0x7c0] sm:$0xff]
        %v404 = vld [vmem:[%s124 + $0x7c8] sm:$0xff]
        %v405 = vld [vmem:[%s124 + $0x7d0] sm:$0xff]
        %v406 = vld [vmem:[%s124 + $0x7d8] sm:$0xff]
        %v407 = vld [vmem:[%s124 + $0x7e0] sm:$0xff]
        %v408 = vld [vmem:[%s124 + $0x7e8] sm:$0xff]
        %v409 = vld [vmem:[%s124 + $0x7f0] sm:$0xff]
        %v410 = vld [vmem:[%s124 + $0x7f8] sm:$0xff]
        %v411 = vld [vmem:[%s124 + $0x800] sm:$0xff]
        %v412 = vld [vmem:[%s124 + $0x808] sm:$0xff]
        %v413 = vld [vmem:[%s124 + $0x810] sm:$0xff]
        %v414 = vld [vmem:[%s124 + $0x818] sm:$0xff]
        %v415 = vld [vmem:[%s124 + $0x820] sm:$0xff]
        %v416 = vld [vmem:[%s124 + $0x828] sm:$0xff]
        %v417 = vld [vmem:[%s124 + $0x830] sm:$0xff]
        %v418 = vld [vmem:[%s124 + $0x838] sm:$0xff]
        %v419 = vld [vmem:[%s124 + $0x840] sm:$0xff]
        %v420 = vld [vmem:[%s124 + $0x848] sm:$0xff]
        %v421 = vld [vmem:[%s124 + $0x850] sm:$0xff]
        %v422 = vld [vmem:[%s124 + $0x858] sm:$0xff]
        %v423 = vld [vmem:[%s124 + $0x860] sm:$0xff]
        %v424 = vld [vmem:[%s124 + $0x868] sm:$0xff]
        %v425 = vld [vmem:[%s124 + $0x870] sm:$0xff]
        %v426 = vld [vmem:[%s124 + $0x878] sm:$0xff]
        %v427 = vld [vmem:[%s124 + $0x880] sm:$0xff]
        %v428 = vld [vmem:[%s124 + $0x888] sm:$0xff]
        %v429 = vld [vmem:[%s124 + $0x890] sm:$0xff]
        %v430 = vld [vmem:[%s124 + $0x898] sm:$0xff]
        %v431 = vld [vmem:[%s124 + $0x8a0] sm:$0xff]
        %v432 = vld [vmem:[%s124 + $0x8a8] sm:$0xff]
        %v433 = vld [vmem:[%s124 + $0x8b0] sm:$0xff]
        %v434 = vld [vmem:[%s124 + $0x8b8] sm:$0xff]
        %v435 = vld [vmem:[%s124 + $0x8c0] sm:$0xff]
        %v436 = vld [vmem:[%s124 + $0x8c8] sm:$0xff]
        %v437 = vld [vmem:[%s124 + $0x8d0] sm:$0xff]
        %v438 = vld [vmem:[%s124 + $0x8d8] sm:$0xff]
        %v439 = vld [vmem:[%s124 + $0x8e0] sm:$0xff]
        %v440 = vld [vmem:[%s124 + $0x8e8] sm:$0xff]
        %v441 = vld [vmem:[%s124 + $0x8f0] sm:$0xff]
        %v442 = vld [vmem:[%s124 + $0x8f8] sm:$0xff]
        %v443 = vld [vmem:[%s124 + $0x900] sm:$0xff]
        %v444 = vld [vmem:[%s124 + $0x908] sm:$0xff]
        %v445 = vld [vmem:[%s124 + $0x910] sm:$0xff]
        %v446 = vld [vmem:[%s124 + $0x918] sm:$0xff]
        %v447 = vld [vmem:[%s124 + $0x920] sm:$0xff]
        %v448 = vld [vmem:[%s124 + $0x928] sm:$0xff]
        %v449 = vld [vmem:[%s124 + $0x930] sm:$0xff]
        %v450 = vld [vmem:[%s124 + $0x938] sm:$0xff]
        %v451 = vld [vmem:[%s124 + $0x940] sm:$0xff]
        %v452 = vld [vmem:[%s124 + $0x948] sm:$0xff]
        %v453 = vld [vmem:[%s124 + $0x950] sm:$0xff]
        %v454 = vld [vmem:[%s124 + $0x958] sm:$0xff]
        %v455 = vld [vmem:[%s124 + $0x960] sm:$0xff]
        %v456 = vld [vmem:[%s124 + $0x968] sm:$0xff]
        %v457 = vld [vmem:[%s124 + $0x970] sm:$0xff]
        %v458 = vld [vmem:[%s124 + $0x978] sm:$0xff]
        %v459 = vld [vmem:[%s124 + $0x980] sm:$0xff]
        %v460 = vld [vmem:[%s124 + $0x988] sm:$0xff]
        %v461 = vld [vmem:[%s124 + $0x990] sm:$0xff]
        %v462 = vld [vmem:[%s124 + $0x998] sm:$0xff]
        %v463 = vld [vmem:[%s124 + $0x9a0] sm:$0xff]
        %v464 = vld [vmem:[%s124 + $0x9a8] sm:$0xff]
        %v465 = vld [vmem:[%s124 + $0x9b0] sm:$0xff]
        %v466 = vld [vmem:[%s124 + $0x9b8] sm:$0xff]
        %v467 = vld [vmem:[%s124 + $0x9c0] sm:$0xff]
        %v468 = vld [vmem:[%s124 + $0x9c8] sm:$0xff]
        %v469 = vld [vmem:[%s124 + $0x9d0] sm:$0xff]
        %v470 = vld [vmem:[%s124 + $0x9d8] sm:$0xff]
        %v471 = vld [vmem:[%s124 + $0x9e0] sm:$0xff]
        %v472 = vld [vmem:[%s124 + $0x9e8] sm:$0xff]
        %v473 = vld [vmem:[%s124 + $0x9f0] sm:$0xff]
        %v474 = vld [vmem:[%s124 + $0x9f8] sm:$0xff]
        %v475 = vld [vmem:[%s124 + $0xa00] sm:$0xff]
        %v476 = vld [vmem:[%s124 + $0xa08] sm:$0xff]
        %v477 = vld [vmem:[%s124 + $0xa10] sm:$0xff]
        %v478 = vld [vmem:[%s124 + $0xa18] sm:$0xff]
        %v479 = vld [vmem:[%s124 + $0xa20] sm:$0xff]
        %v480 = vld [vmem:[%s124 + $0xa28] sm:$0xff]
        %v481 = vld [vmem:[%s124 + $0xa30] sm:$0xff]
        %v482 = vld [vmem:[%s124 + $0xa38] sm:$0xff]
        %v483 = vld [vmem:[%s124 + $0xa40] sm:$0xff]
        %v484 = vld [vmem:[%s124 + $0xa48] sm:$0xff]
        %v485 = vld [vmem:[%s124 + $0xa50] sm:$0xff]
        %v486 = vld [vmem:[%s124 + $0xa58] sm:$0xff]
        %v487 = vld [vmem:[%s124 + $0xa60] sm:$0xff]
        %v488 = vld [vmem:[%s124 + $0xa68] sm:$0xff]
        %v489 = vld [vmem:[%s124 + $0xa70] sm:$0xff]
        %v490 = vld [vmem:[%s124 + $0xa78] sm:$0xff]
        %v491 = vld [vmem:[%s124 + $0xa80] sm:$0xff]
        %v492 = vld [vmem:[%s124 + $0xa88] sm:$0xff]
        %v493 = vld [vmem:[%s124 + $0xa90] sm:$0xff]
        %v494 = vld [vmem:[%s124 + $0xa98] sm:$0xff]
        %v495 = vld [vmem:[%s124 + $0xaa0] sm:$0xff]
        %v496 = vld [vmem:[%s124 + $0xaa8] sm:$0xff]
        %v497 = vld [vmem:[%s124 + $0xab0] sm:$0xff]
        %v498 = vld [vmem:[%s124 + $0xab8] sm:$0xff]
        %v499 = vld [vmem:[%s124 + $0xac0] sm:$0xff]
        %v500 = vld [vmem:[%s124 + $0xac8] sm:$0xff]
        %v501 = vld [vmem:[%s124 + $0xad0] sm:$0xff]
        %v502 = vld [vmem:[%s124 + $0xad8] sm:$0xff]
        %v503 = vld [vmem:[%s124 + $0xae0] sm:$0xff]
        %v504 = vld [vmem:[%s124 + $0xae8] sm:$0xff]
        %v505 = vld [vmem:[%s124 + $0xaf0] sm:$0xff]
        %v506 = vld [vmem:[%s124 + $0xaf8] sm:$0xff]
        %v507 = vld [vmem:[%s124 + $0xb00] sm:$0xff]
        %v508 = vld [vmem:[%s124 + $0xb08] sm:$0xff]
        %v509 = vld [vmem:[%s124 + $0xb10] sm:$0xff]
        %v510 = vld [vmem:[%s124 + $0xb18] sm:$0xff]
        %v511 = vld [vmem:[%s124 + $0xb20] sm:$0xff]
        %v512 = vld [vmem:[%s124 + $0xb28] sm:$0xff]
        %v513 = vld [vmem:[%s124 + $0xb30] sm:$0xff]
        %v514 = vld [vmem:[%s124 + $0xb38] sm:$0xff]
        %v515 = vld [vmem:[%s124 + $0xb40] sm:$0xff]
        %v516 = vld [vmem:[%s124 + $0xb48] sm:$0xff]
        %v517 = vld [vmem:[%s124 + $0xb50] sm:$0xff]
        %v518 = vld [vmem:[%s124 + $0xb58] sm:$0xff]
        %v519 = vld [vmem:[%s124 + $0xb60] sm:$0xff]
        %v520 = vld [vmem:[%s124 + $0xb68] sm:$0xff]
        %v521 = vld [vmem:[%s124 + $0xb70] sm:$0xff]
        %v522 = vld [vmem:[%s124 + $0xb78] sm:$0xff]
        %v523 = vld [vmem:[%s124 + $0xb80] sm:$0xff]
        %v524 = vld [vmem:[%s124 + $0xb88] sm:$0xff]
        %v525 = vld [vmem:[%s124 + $0xb90] sm:$0xff]
        %v526 = vld [vmem:[%s124 + $0xb98] sm:$0xff]
        %v527 = vld [vmem:[%s124 + $0xba0] sm:$0xff]
        %v528 = vld [vmem:[%s124 + $0xba8] sm:$0xff]
        %v529 = vld [vmem:[%s124 + $0xbb0] sm:$0xff]
        %v530 = vld [vmem:[%s124 + $0xbb8] sm:$0xff]
        %v531 = vld [vmem:[%s124 + $0xbc0] sm:$0xff]
        %v532 = vld [vmem:[%s124 + $0xbc8] sm:$0xff]
        %v533 = vld [vmem:[%s124 + $0xbd0] sm:$0xff]
        %v534 = vld [vmem:[%s124 + $0xbd8] sm:$0xff]
        %v535 = vld [vmem:[%s124 + $0xbe0] sm:$0xff]
        %v536 = vld [vmem:[%s124 + $0xbe8] sm:$0xff]
        %v537 = vld [vmem:[%s124 + $0xbf0] sm:$0xff]
        %v538 = vld [vmem:[%s124 + $0xbf8] sm:$0xff]
        %v539 = vld [vmem:[%s124 + $0xc00] sm:$0xff]
        %v540 = vld [vmem:[%s124 + $0xc08] sm:$0xff]
        %v541 = vld [vmem:[%s124 + $0xc10] sm:$0xff]
        %v542 = vld [vmem:[%s124 + $0xc18] sm:$0xff]
        %v543 = vld [vmem:[%s124 + $0xc20] sm:$0xff]
        %v544 = vld [vmem:[%s124 + $0xc28] sm:$0xff]
        %v545 = vld [vmem:[%s124 + $0xc30] sm:$0xff]
        %v546 = vld [vmem:[%s124 + $0xc38] sm:$0xff]
        %v547 = vld [vmem:[%s124 + $0xc40] sm:$0xff]
        %v548 = vld [vmem:[%s124 + $0xc48] sm:$0xff]
        %v549 = vld [vmem:[%s124 + $0xc50] sm:$0xff]
        %v550 = vld [vmem:[%s124 + $0xc58] sm:$0xff]
        %v551 = vld [vmem:[%s124 + $0xc60] sm:$0xff]
        %v552 = vld [vmem:[%s124 + $0xc68] sm:$0xff]
        %v553 = vld [vmem:[%s124 + $0xc70] sm:$0xff]
        %v554 = vld [vmem:[%s124 + $0xc78] sm:$0xff]
        %v555 = vld [vmem:[%s124 + $0xc80] sm:$0xff]
        %v556 = vld [vmem:[%s124 + $0xc88] sm:$0xff]
        %v557 = vld [vmem:[%s124 + $0xc90] sm:$0xff]
        %v558 = vld [vmem:[%s124 + $0xc98] sm:$0xff]
        %v559 = vld [vmem:[%s124 + $0xca0] sm:$0xff]
        %v560 = vld [vmem:[%s124 + $0xca8] sm:$0xff]
        %v561 = vld [vmem:[%s124 + $0xcb0] sm:$0xff]
        %v562 = vld [vmem:[%s124 + $0xcb8] sm:$0xff]
        %v563 = vld [vmem:[%s124 + $0xcc0] sm:$0xff]
        %v564 = vld [vmem:[%s124 + $0xcc8] sm:$0xff]
        %v565 = vld [vmem:[%s124 + $0xcd0] sm:$0xff]
        %v566 = vld [vmem:[%s124 + $0xcd8] sm:$0xff]
        %v567 = vld [vmem:[%s124 + $0xce0] sm:$0xff]
        %v568 = vld [vmem:[%s124 + $0xce8] sm:$0xff]
        %v569 = vld [vmem:[%s124 + $0xcf0] sm:$0xff]
        %v570 = vld [vmem:[%s124 + $0xcf8] sm:$0xff]
        %v571 = vld [vmem:[%s124 + $0xd00] sm:$0xff]
        %v572 = vld [vmem:[%s124 + $0xd08] sm:$0xff]
        %v573 = vld [vmem:[%s124 + $0xd10] sm:$0xff]
        %v574 = vld [vmem:[%s124 + $0xd18] sm:$0xff]
        %v575 = vld [vmem:[%s124 + $0xd20] sm:$0xff]
        %v576 = vld [vmem:[%s124 + $0xd28] sm:$0xff]
        %v577 = vld [vmem:[%s124 + $0xd30] sm:$0xff]
        %v578 = vld [vmem:[%s124 + $0xd38] sm:$0xff]
        %v579 = vld [vmem:[%s124 + $0xd40] sm:$0xff]
        %v580 = vld [vmem:[%s124 + $0xd48] sm:$0xff]
        %v581 = vld [vmem:[%s124 + $0xd50] sm:$0xff]
        %v582 = vld [vmem:[%s124 + $0xd58] sm:$0xff]
        %v583 = vld [vmem:[%s124 + $0xd60] sm:$0xff]
        %v584 = vld [vmem:[%s124 + $0xd68] sm:$0xff]
        %v585 = vld [vmem:[%s124 + $0xd70] sm:$0xff]
        %v586 = vld [vmem:[%s124 + $0xd78] sm:$0xff]
        %v587 = vld [vmem:[%s124 + $0xd80] sm:$0xff]
        %v588 = vld [vmem:[%s124 + $0xd88] sm:$0xff]
        %v589 = vld [vmem:[%s124 + $0xd90] sm:$0xff]
        %v590 = vld [vmem:[%s124 + $0xd98] sm:$0xff]
        %v591 = vld [vmem:[%s124 + $0xda0] sm:$0xff]
        %v592 = vld [vmem:[%s124 + $0xda8] sm:$0xff]
        %v593 = vld [vmem:[%s124 + $0xdb0] sm:$0xff]
        %v594 = vld [vmem:[%s124 + $0xdb8] sm:$0xff]
        %v595 = vld [vmem:[%s124 + $0xdc0] sm:$0xff]
        %v596 = vld [vmem:[%s124 + $0xdc8] sm:$0xff]
        %v597 = vld [vmem:[%s124 + $0xdd0] sm:$0xff]
        %v598 = vld [vmem:[%s124 + $0xdd8] sm:$0xff]
        %v599 = vld [vmem:[%s124 + $0xde0] sm:$0xff]
        %v600 = vld [vmem:[%s124 + $0xde8] sm:$0xff]
        %v601 = vld [vmem:[%s124 + $0xdf0] sm:$0xff]
        %v602 = vld [vmem:[%s124 + $0xdf8] sm:$0xff]
        %v603 = vld [vmem:[%s124 + $0xe00] sm:$0xff]
        %v604 = vld [vmem:[%s124 + $0xe08] sm:$0xff]
        %v605 = vld [vmem:[%s124 + $0xe10] sm:$0xff]
        %v606 = vld [vmem:[%s124 + $0xe18] sm:$0xff]
        %v607 = vld [vmem:[%s124 + $0xe20] sm:$0xff]
        %v608 = vld [vmem:[%s124 + $0xe28] sm:$0xff]
        %v609 = vld [vmem:[%s124 + $0xe30] sm:$0xff]
        %v610 = vld [vmem:[%s124 + $0xe38] sm:$0xff]
        %v611 = vld [vmem:[%s124 + $0xe40] sm:$0xff]
        %v612 = vld [vmem:[%s124 + $0xe48] sm:$0xff]
        %v613 = vld [vmem:[%s124 + $0xe50] sm:$0xff]
        %v614 = vld [vmem:[%s124 + $0xe58] sm:$0xff]
        %v615 = vld [vmem:[%s124 + $0xe60] sm:$0xff]
        %v616 = vld [vmem:[%s124 + $0xe68] sm:$0xff]
        %v617 = vld [vmem:[%s124 + $0xe70] sm:$0xff]
        %v618 = vld [vmem:[%s124 + $0xe78] sm:$0xff]
        %v619 = vld [vmem:[%s124 + $0xe80] sm:$0xff]
        %v620 = vld [vmem:[%s124 + $0xe88] sm:$0xff]
        %v621 = vld [vmem:[%s124 + $0xe90] sm:$0xff]
        %v622 = vld [vmem:[%s124 + $0xe98] sm:$0xff]
        %v623 = vld [vmem:[%s124 + $0xea0] sm:$0xff]
        %v624 = vld [vmem:[%s124 + $0xea8] sm:$0xff]
        %v625 = vld [vmem:[%s124 + $0xeb0] sm:$0xff]
        %v626 = vld [vmem:[%s124 + $0xeb8] sm:$0xff]
        %v627 = vld [vmem:[%s124 + $0xec0] sm:$0xff]
        %v628 = vld [vmem:[%s124 + $0xec8] sm:$0xff]
        %v629 = vld [vmem:[%s124 + $0xed0] sm:$0xff]
        %v630 = vld [vmem:[%s124 + $0xed8] sm:$0xff]
        %v631 = vld [vmem:[%s124 + $0xee0] sm:$0xff]
        %v632 = vld [vmem:[%s124 + $0xee8] sm:$0xff]
        %v633 = vld [vmem:[%s124 + $0xef0] sm:$0xff]
        %v634 = vld [vmem:[%s124 + $0xef8] sm:$0xff]
        %v635 = vld [vmem:[%s124 + $0xf00] sm:$0xff]
        %v636 = vld [vmem:[%s124 + $0xf08] sm:$0xff]
        %v637 = vld [vmem:[%s124 + $0xf10] sm:$0xff]
        %v638 = vld [vmem:[%s124 + $0xf18] sm:$0xff]
        %v639 = vld [vmem:[%s124 + $0xf20] sm:$0xff]
        %v640 = vld [vmem:[%s124 + $0xf28] sm:$0xff]
        %v641 = vld [vmem:[%s124 + $0xf30] sm:$0xff]
        %v642 = vld [vmem:[%s124 + $0xf38] sm:$0xff]
        %v643 = vld [vmem:[%s124 + $0xf40] sm:$0xff]
        %v644 = vld [vmem:[%s124 + $0xf48] sm:$0xff]
        %v645 = vld [vmem:[%s124 + $0xf50] sm:$0xff]
        %v646 = vld [vmem:[%s124 + $0xf58] sm:$0xff]
        %v647 = vld [vmem:[%s124 + $0xf60] sm:$0xff]
        %v648 = vld [vmem:[%s124 + $0xf68] sm:$0xff]
        %v649 = vld [vmem:[%s124 + $0xf70] sm:$0xff]
        %v650 = vld [vmem:[%s124 + $0xf78] sm:$0xff]
        %v651 = vld [vmem:[%s124 + $0xf80] sm:$0xff]
        %v652 = vld [vmem:[%s124 + $0xf88] sm:$0xff]
        %v653 = vld [vmem:[%s124 + $0xf90] sm:$0xff]
        %v654 = vld [vmem:[%s124 + $0xf98] sm:$0xff]
        %v655 = vld [vmem:[%s124 + $0xfa0] sm:$0xff]
        %v656 = vld [vmem:[%s124 + $0xfa8] sm:$0xff]
        %v657 = vld [vmem:[%s124 + $0xfb0] sm:$0xff]
        %v658 = vld [vmem:[%s124 + $0xfb8] sm:$0xff]
        %v659 = vld [vmem:[%s124 + $0xfc0] sm:$0xff]
        %v660 = vld [vmem:[%s124 + $0xfc8] sm:$0xff]
        %v661 = vld [vmem:[%s124 + $0xfd0] sm:$0xff]
        %v662 = vld [vmem:[%s124 + $0xfd8] sm:$0xff]
        %v663 = vld [vmem:[%s124 + $0xfe0] sm:$0xff]
        %v664 = vld [vmem:[%s124 + $0xfe8] sm:$0xff]
        %v665 = vld [vmem:[%s124 + $0xff0] sm:$0xff]
        %v666 = vld [vmem:[%s124 + $0xff8] sm:$0xff]
        %v667 = vld [vmem:[%s124 + $0x1000] sm:$0xff]
        %v668 = vld [vmem:[%s124 + $0x1008] sm:$0xff]
        %v669 = vld [vmem:[%s124 + $0x1010] sm:$0xff]
        %v670 = vld [vmem:[%s124 + $0x1018] sm:$0xff]
        %v671 = vld [vmem:[%s124 + $0x1020] sm:$0xff]
        %v672 = vld [vmem:[%s124 + $0x1028] sm:$0xff]
        %v673 = vld [vmem:[%s124 + $0x1030] sm:$0xff]
        %v674 = vld [vmem:[%s124 + $0x1038] sm:$0xff]
        %v675 = vld [vmem:[%s124 + $0x1040] sm:$0xff]
        %v676 = vld [vmem:[%s124 + $0x1048] sm:$0xff]
        %v677 = vld [vmem:[%s124 + $0x1050] sm:$0xff]
        %v678 = vld [vmem:[%s124 + $0x1058] sm:$0xff]
        %v679 = vld [vmem:[%s124 + $0x1060] sm:$0xff]
        %v680 = vld [vmem:[%s124 + $0x1068] sm:$0xff]
        %v681 = vld [vmem:[%s124 + $0x1070] sm:$0xff]
        %v682 = vld [vmem:[%s124 + $0x1078] sm:$0xff]
        %v683 = vld [vmem:[%s124 + $0x1080] sm:$0xff]
        %v684 = vld [vmem:[%s124 + $0x1088] sm:$0xff]
        %v685 = vld [vmem:[%s124 + $0x1090] sm:$0xff]
        %v686 = vld [vmem:[%s124 + $0x1098] sm:$0xff]
        %v687 = vld [vmem:[%s124 + $0x10a0] sm:$0xff]
        %v688 = vld [vmem:[%s124 + $0x10a8] sm:$0xff]
        %v689 = vld [vmem:[%s124 + $0x10b0] sm:$0xff]
        %v690 = vld [vmem:[%s124 + $0x10b8] sm:$0xff]
        %v691 = vld [vmem:[%s124 + $0x10c0] sm:$0xff]
        %v692 = vld [vmem:[%s124 + $0x10c8] sm:$0xff]
        %v693 = vld [vmem:[%s124 + $0x10d0] sm:$0xff]
        %v694 = vld [vmem:[%s124 + $0x10d8] sm:$0xff]
        %v695 = vld [vmem:[%s124 + $0x10e0] sm:$0xff]
        %v696 = vld [vmem:[%s124 + $0x10e8] sm:$0xff]
        %v697 = vld [vmem:[%s124 + $0x10f0] sm:$0xff]
        %v698 = vld [vmem:[%s124 + $0x10f8] sm:$0xff]
        %v699 = vld [vmem:[%s124 + $0x1100] sm:$0xff]
        %v700 = vld [vmem:[%s124 + $0x1108] sm:$0xff]
        %v701 = vld [vmem:[%s124 + $0x1110] sm:$0xff]
        %v702 = vld [vmem:[%s124 + $0x1118] sm:$0xff]
        %v703 = vld [vmem:[%s124 + $0x1120] sm:$0xff]
        %v704 = vld [vmem:[%s124 + $0x1128] sm:$0xff]
        %v705 = vld [vmem:[%s124 + $0x1130] sm:$0xff]
        %v706 = vld [vmem:[%s124 + $0x1138] sm:$0xff]
        %v707 = vld [vmem:[%s124 + $0x1140] sm:$0xff]
        %v708 = vld [vmem:[%s124 + $0x1148] sm:$0xff]
        %v709 = vld [vmem:[%s124 + $0x1150] sm:$0xff]
        %v710 = vld [vmem:[%s124 + $0x1158] sm:$0xff]
        %v711 = vld [vmem:[%s124 + $0x1160] sm:$0xff]
        %v712 = vld [vmem:[%s124 + $0x1168] sm:$0xff]
        %v713 = vld [vmem:[%s124 + $0x1170] sm:$0xff]
        %v714 = vld [vmem:[%s124 + $0x1178] sm:$0xff]
        %v715 = vld [vmem:[%s124 + $0x1180] sm:$0xff]
        %v716 = vld [vmem:[%s124 + $0x1188] sm:$0xff]
        %v717 = vld [vmem:[%s124 + $0x1190] sm:$0xff]
        %v718 = vld [vmem:[%s124 + $0x1198] sm:$0xff]
        %v719 = vld [vmem:[%s124 + $0x11a0] sm:$0xff]
        %v720 = vld [vmem:[%s124 + $0x11a8] sm:$0xff]
        %v721 = vld [vmem:[%s124 + $0x11b0] sm:$0xff]
        %v722 = vld [vmem:[%s124 + $0x11b8] sm:$0xff]
        %v723 = vld [vmem:[%s124 + $0x11c0] sm:$0xff]
        %v724 = vld [vmem:[%s124 + $0x11c8] sm:$0xff]
        %v725 = vld [vmem:[%s124 + $0x11d0] sm:$0xff]
        %v726 = vld [vmem:[%s124 + $0x11d8] sm:$0xff]
        %v727 = vld [vmem:[%s124 + $0x11e0] sm:$0xff]
        %v728 = vld [vmem:[%s124 + $0x11e8] sm:$0xff]
        %v729 = vld [vmem:[%s124 + $0x11f0] sm:$0xff]
        %v730 = vld [vmem:[%s124 + $0x11f8] sm:$0xff]
        %v731 = vld [vmem:[%s124 + $0x1200] sm:$0xff]
        %v732 = vld [vmem:[%s124 + $0x1208] sm:$0xff]
        %v733 = vld [vmem:[%s124 + $0x1210] sm:$0xff]
        %v734 = vld [vmem:[%s124 + $0x1218] sm:$0xff]
        %v735 = vld [vmem:[%s124 + $0x1220] sm:$0xff]
        %v736 = vld [vmem:[%s124 + $0x1228] sm:$0xff]
        %v737 = vld [vmem:[%s124 + $0x1230] sm:$0xff]
        %v738 = vld [vmem:[%s124 + $0x1238] sm:$0xff]
        %v739 = vld [vmem:[%s124 + $0x1240] sm:$0xff]
        %v740 = vld [vmem:[%s124 + $0x1248] sm:$0xff]
        %v741 = vld [vmem:[%s124 + $0x1250] sm:$0xff]
        %v742 = vld [vmem:[%s124 + $0x1258] sm:$0xff]
        %v743 = vld [vmem:[%s124 + $0x1260] sm:$0xff]
        %v744 = vld [vmem:[%s124 + $0x1268] sm:$0xff]
        %v745 = vld [vmem:[%s124 + $0x1270] sm:$0xff]
        %v746 = vld [vmem:[%s124 + $0x1278] sm:$0xff]
        %v747 = vld [vmem:[%s124 + $0x1280] sm:$0xff]
        %v748 = vld [vmem:[%s124 + $0x1288] sm:$0xff]
        %v749 = vld [vmem:[%s124 + $0x1290] sm:$0xff]
        %v750 = vld [vmem:[%s124 + $0x1298] sm:$0xff]
        %v751 = vld [vmem:[%s124 + $0x12a0] sm:$0xff]
        %v752 = vld [vmem:[%s124 + $0x12a8] sm:$0xff]
        %v753 = vld [vmem:[%s124 + $0x12b0] sm:$0xff]
        %v754 = vld [vmem:[%s124 + $0x12b8] sm:$0xff]
        %v755 = vld [vmem:[%s124 + $0x12c0] sm:$0xff]
        %v756 = vld [vmem:[%s124 + $0x12c8] sm:$0xff]
        %v757 = vld [vmem:[%s124 + $0x12d0] sm:$0xff]
        %v758 = vld [vmem:[%s124 + $0x12d8] sm:$0xff]
        %v759 = vld [vmem:[%s124 + $0x12e0] sm:$0xff]
        %v760 = vld [vmem:[%s124 + $0x12e8] sm:$0xff]
        %v761 = vld [vmem:[%s124 + $0x12f0] sm:$0xff]
        %v762 = vld [vmem:[%s124 + $0x12f8] sm:$0xff]
        %v763 = vld [vmem:[%s124 + $0x1300] sm:$0xff]
        %v764 = vld [vmem:[%s124 + $0x1308] sm:$0xff]
        %v765 = vld [vmem:[%s124 + $0x1310] sm:$0xff]
        %v766 = vld [vmem:[%s124 + $0x1318] sm:$0xff]
        %v767 = vld [vmem:[%s124 + $0x1320] sm:$0xff]
        %v768 = vld [vmem:[%s124 + $0x1328] sm:$0xff]
        %v769 = vld [vmem:[%s124 + $0x1330] sm:$0xff]
        %v770 = vld [vmem:[%s124 + $0x1338] sm:$0xff]
        %v771 = vld [vmem:[%s124 + $0x1340] sm:$0xff]
        %v772 = vld [vmem:[%s124 + $0x1348] sm:$0xff]
        %v773 = vld [vmem:[%s124 + $0x1350] sm:$0xff]
        %v774 = vld [vmem:[%s124 + $0x1358] sm:$0xff]
        %v775 = vld [vmem:[%s124 + $0x1360] sm:$0xff]
        %v776 = vld [vmem:[%s124 + $0x1368] sm:$0xff]
        %v777 = vld [vmem:[%s124 + $0x1370] sm:$0xff]
        %v778 = vld [vmem:[%s124 + $0x1378] sm:$0xff]
        %v779 = vld [vmem:[%s124 + $0x1380] sm:$0xff]
        %v780 = vld [vmem:[%s124 + $0x1388] sm:$0xff]
        %v781 = vld [vmem:[%s124 + $0x1390] sm:$0xff]
        %v782 = vld [vmem:[%s124 + $0x1398] sm:$0xff]
        %v783 = vld [vmem:[%s124 + $0x13a0] sm:$0xff]
        %v784 = vld [vmem:[%s124 + $0x13a8] sm:$0xff]
        %v785 = vld [vmem:[%s124 + $0x13b0] sm:$0xff]
        %v786 = vld [vmem:[%s124 + $0x13b8] sm:$0xff]
        %v787 = vld [vmem:[%s124 + $0x13c0] sm:$0xff]
        %v788 = vld [vmem:[%s124 + $0x13c8] sm:$0xff]
        %v789 = vld [vmem:[%s124 + $0x13d0] sm:$0xff]
        %v790 = vld [vmem:[%s124 + $0x13d8] sm:$0xff]
        %v791 = vld [vmem:[%s124 + $0x13e0] sm:$0xff]
        %v792 = vld [vmem:[%s124 + $0x13e8] sm:$0xff]
        %v793 = vld [vmem:[%s124 + $0x13f0] sm:$0xff]
        %v794 = vld [vmem:[%s124 + $0x13f8] sm:$0xff]
        %v795 = vld [vmem:[%s124 + $0x1400] sm:$0xff]
        %v796 = vld [vmem:[%s124 + $0x1408] sm:$0xff]
        %v797 = vld [vmem:[%s124 + $0x1410] sm:$0xff]
        %v798 = vld [vmem:[%s124 + $0x1418] sm:$0xff]
        %v799 = vld [vmem:[%s124 + $0x1420] sm:$0xff]
        %v800 = vld [vmem:[%s124 + $0x1428] sm:$0xff]
        %v801 = vld [vmem:[%s124 + $0x1430] sm:$0xff]
        %v802 = vld [vmem:[%s124 + $0x1438] sm:$0xff]
        %v803 = vld [vmem:[%s124 + $0x1440] sm:$0xff]
        %v804 = vld [vmem:[%s124 + $0x1448] sm:$0xff]
        %v805 = vld [vmem:[%s124 + $0x1450] sm:$0xff]
        %v806 = vld [vmem:[%s124 + $0x1458] sm:$0xff]
        %v807 = vld [vmem:[%s124 + $0x1460] sm:$0xff]
        %v808 = vld [vmem:[%s124 + $0x1468] sm:$0xff]
        %v809 = vld [vmem:[%s124 + $0x1470] sm:$0xff]
        %v810 = vld [vmem:[%s124 + $0x1478] sm:$0xff]
        %v811 = vld [vmem:[%s124 + $0x1480] sm:$0xff]
        %v812 = vld [vmem:[%s124 + $0x1488] sm:$0xff]
        %v813 = vld [vmem:[%s124 + $0x1490] sm:$0xff]
        %v814 = vld [vmem:[%s124 + $0x1498] sm:$0xff]
        %v815 = vld [vmem:[%s124 + $0x14a0] sm:$0xff]
        %v816 = vld [vmem:[%s124 + $0x14a8] sm:$0xff]
        %v817 = vld [vmem:[%s124 + $0x14b0] sm:$0xff]
        %v818 = vld [vmem:[%s124 + $0x14b8] sm:$0xff]
        %v819 = vld [vmem:[%s124 + $0x14c0] sm:$0xff]
        %v820 = vld [vmem:[%s124 + $0x14c8] sm:$0xff]
        %v821 = vld [vmem:[%s124 + $0x14d0] sm:$0xff]
        %v822 = vld [vmem:[%s124 + $0x14d8] sm:$0xff]
        %v823 = vld [vmem:[%s124 + $0x14e0] sm:$0xff]
        %v824 = vld [vmem:[%s124 + $0x14e8] sm:$0xff]
        %v825 = vld [vmem:[%s124 + $0x14f0] sm:$0xff]
        %v826 = vld [vmem:[%s124 + $0x14f8] sm:$0xff]
        %v827 = vld [vmem:[%s124 + $0x1500] sm:$0xff]
        %v828 = vld [vmem:[%s124 + $0x1508] sm:$0xff]
        %v829 = vld [vmem:[%s124 + $0x1510] sm:$0xff]
        %v830 = vld [vmem:[%s124 + $0x1518] sm:$0xff]
        %v831 = vld [vmem:[%s124 + $0x1520] sm:$0xff]
        %v832 = vld [vmem:[%s124 + $0x1528] sm:$0xff]
        %v833 = vld [vmem:[%s124 + $0x1530] sm:$0xff]
        %v834 = vld [vmem:[%s124 + $0x1538] sm:$0xff]
        %v835 = vld [vmem:[%s124 + $0x1540] sm:$0xff]
        %v836 = vld [vmem:[%s124 + $0x1548] sm:$0xff]
        %v837 = vld [vmem:[%s124 + $0x1550] sm:$0xff]
        %v838 = vld [vmem:[%s124 + $0x1558] sm:$0xff]
        %v839 = vld [vmem:[%s124 + $0x1560] sm:$0xff]
        %v840 = vld [vmem:[%s124 + $0x1568] sm:$0xff]
        %v841 = vld [vmem:[%s124 + $0x1570] sm:$0xff]
        %v842 = vld [vmem:[%s124 + $0x1578] sm:$0xff]
        %v843 = vld [vmem:[%s124 + $0x1580] sm:$0xff]
        %v844 = vld [vmem:[%s124 + $0x1588] sm:$0xff]
        %v845 = vld [vmem:[%s124 + $0x1590] sm:$0xff]
        %v846 = vld [vmem:[%s124 + $0x1598] sm:$0xff]
        %v847 = vld [vmem:[%s124 + $0x15a0] sm:$0xff]
        %v848 = vld [vmem:[%s124 + $0x15a8] sm:$0xff]
        %v849 = vld [vmem:[%s124 + $0x15b0] sm:$0xff]
        %v850 = vld [vmem:[%s124 + $0x15b8] sm:$0xff]
        %v851 = vld [vmem:[%s124 + $0x15c0] sm:$0xff]
        %v852 = vld [vmem:[%s124 + $0x15c8] sm:$0xff]
        %v853 = vld [vmem:[%s124 + $0x15d0] sm:$0xff]
        %v854 = vld [vmem:[%s124 + $0x15d8] sm:$0xff]
        %v855 = vld [vmem:[%s124 + $0x15e0] sm:$0xff]
        %v856 = vld [vmem:[%s124 + $0x15e8] sm:$0xff]
        %v857 = vld [vmem:[%s124 + $0x15f0] sm:$0xff]
        %v858 = vld [vmem:[%s124 + $0x15f8] sm:$0xff]
        %v859 = vld [vmem:[%s124 + $0x1600] sm:$0xff]
        %v860 = vld [vmem:[%s124 + $0x1608] sm:$0xff]
        %v861 = vld [vmem:[%s124 + $0x1610] sm:$0xff]
        %v862 = vld [vmem:[%s124 + $0x1618] sm:$0xff]
        %v863 = vld [vmem:[%s124 + $0x1620] sm:$0xff]
        %v864 = vld [vmem:[%s124 + $0x1628] sm:$0xff]
        %v865 = vld [vmem:[%s124 + $0x1630] sm:$0xff]
        %v866 = vld [vmem:[%s124 + $0x1638] sm:$0xff]
        %v867 = vld [vmem:[%s124 + $0x1640] sm:$0xff]
        %v868 = vld [vmem:[%s124 + $0x1648] sm:$0xff]
        %v869 = vld [vmem:[%s124 + $0x1650] sm:$0xff]
        %v870 = vld [vmem:[%s124 + $0x1658] sm:$0xff]
        %v871 = vld [vmem:[%s124 + $0x1660] sm:$0xff]
        %v872 = vld [vmem:[%s124 + $0x1668] sm:$0xff]
        %v873 = vld [vmem:[%s124 + $0x1670] sm:$0xff]
        %v874 = vld [vmem:[%s124 + $0x1678] sm:$0xff]
        %v875 = vld [vmem:[%s124 + $0x1680] sm:$0xff]
        %v876 = vld [vmem:[%s124 + $0x1688] sm:$0xff]
        %v877 = vld [vmem:[%s124 + $0x1690] sm:$0xff]
        %v878 = vld [vmem:[%s124 + $0x1698] sm:$0xff]
        %v879 = vld [vmem:[%s124 + $0x16a0] sm:$0xff]
        %v880 = vld [vmem:[%s124 + $0x16a8] sm:$0xff]
        %v881 = vld [vmem:[%s124 + $0x16b0] sm:$0xff]
        %v882 = vld [vmem:[%s124 + $0x16b8] sm:$0xff]
        %v883 = vld [vmem:[%s124 + $0x16c0] sm:$0xff]
        %v884 = vld [vmem:[%s124 + $0x16c8] sm:$0xff]
        %v885 = vld [vmem:[%s124 + $0x16d0] sm:$0xff]
        %v886 = vld [vmem:[%s124 + $0x16d8] sm:$0xff]
        %v887 = vld [vmem:[%s124 + $0x16e0] sm:$0xff]
        %v888 = vld [vmem:[%s124 + $0x16e8] sm:$0xff]
        %v889 = vld [vmem:[%s124 + $0x16f0] sm:$0xff]
        %v890 = vld [vmem:[%s124 + $0x16f8] sm:$0xff]
        %v891 = vld [vmem:[%s124 + $0x1700] sm:$0xff]
        %v892 = vld [vmem:[%s124 + $0x1708] sm:$0xff]
        %v893 = vld [vmem:[%s124 + $0x1710] sm:$0xff]
        %v894 = vld [vmem:[%s124 + $0x1718] sm:$0xff]
        %v895 = vld [vmem:[%s124 + $0x1720] sm:$0xff]
        %v896 = vld [vmem:[%s124 + $0x1728] sm:$0xff]
        %v897 = vld [vmem:[%s124 + $0x1730] sm:$0xff]
        %v898 = vld [vmem:[%s124 + $0x1738] sm:$0xff]
        %v899 = vld [vmem:[%s124 + $0x1740] sm:$0xff]
        %v900 = vld [vmem:[%s124 + $0x1748] sm:$0xff]
        %v901 = vld [vmem:[%s124 + $0x1750] sm:$0xff]
        %v902 = vld [vmem:[%s124 + $0x1758] sm:$0xff]
        %v903 = vld [vmem:[%s124 + $0x1760] sm:$0xff]
        %v904 = vld [vmem:[%s124 + $0x1768] sm:$0xff]
        %v905 = vld [vmem:[%s124 + $0x1770] sm:$0xff]
        %v906 = vld [vmem:[%s124 + $0x1778] sm:$0xff]
        %v907 = vld [vmem:[%s124 + $0x1780] sm:$0xff]
        %v908 = vld [vmem:[%s124 + $0x1788] sm:$0xff]
        %v909 = vld [vmem:[%s124 + $0x1790] sm:$0xff]
        %v910 = vld [vmem:[%s124 + $0x1798] sm:$0xff]
        %v911 = vld [vmem:[%s124 + $0x17a0] sm:$0xff]
        %v912 = vld [vmem:[%s124 + $0x17a8] sm:$0xff]
        %v913 = vld [vmem:[%s124 + $0x17b0] sm:$0xff]
        %v914 = vld [vmem:[%s124 + $0x17b8] sm:$0xff]
        %v915 = vld [vmem:[%s124 + $0x17c0] sm:$0xff]
        %v916 = vld [vmem:[%s124 + $0x17c8] sm:$0xff]
        %v917 = vld [vmem:[%s124 + $0x17d0] sm:$0xff]
        %v918 = vld [vmem:[%s124 + $0x17d8] sm:$0xff]
        %v919 = vld [vmem:[%s124 + $0x17e0] sm:$0xff]
        %v920 = vld [vmem:[%s124 + $0x17e8] sm:$0xff]
        %v921 = vld [vmem:[%s124 + $0x17f0] sm:$0xff]
        %v922 = vld [vmem:[%s124 + $0x17f8] sm:$0xff]
        %v923 = vld [vmem:[%s124 + $0x1800] sm:$0xff]
        %v924 = vld [vmem:[%s124 + $0x1808] sm:$0xff]
        %v925 = vld [vmem:[%s124 + $0x1810] sm:$0xff]
        %v926 = vld [vmem:[%s124 + $0x1818] sm:$0xff]
        %v927 = vld [vmem:[%s124 + $0x1820] sm:$0xff]
        %v928 = vld [vmem:[%s124 + $0x1828] sm:$0xff]
        %v929 = vld [vmem:[%s124 + $0x1830] sm:$0xff]
        %v930 = vld [vmem:[%s124 + $0x1838] sm:$0xff]
        %v931 = vld [vmem:[%s124 + $0x1840] sm:$0xff]
        %v932 = vld [vmem:[%s124 + $0x1848] sm:$0xff]
        %v933 = vld [vmem:[%s124 + $0x1850] sm:$0xff]
        %v934 = vld [vmem:[%s124 + $0x1858] sm:$0xff]
        %v935 = vld [vmem:[%s124 + $0x1860] sm:$0xff]
        %v936 = vld [vmem:[%s124 + $0x1868] sm:$0xff]
        %v937 = vld [vmem:[%s124 + $0x1870] sm:$0xff]
        %v938 = vld [vmem:[%s124 + $0x1878] sm:$0xff]
        %v939 = vld [vmem:[%s124 + $0x1880] sm:$0xff]
        %v940 = vld [vmem:[%s124 + $0x1888] sm:$0xff]
        %v941 = vld [vmem:[%s124 + $0x1890] sm:$0xff]
        %v942 = vld [vmem:[%s124 + $0x1898] sm:$0xff]
        %v943 = vld [vmem:[%s124 + $0x18a0] sm:$0xff]
        %v944 = vld [vmem:[%s124 + $0x18a8] sm:$0xff]
        %v945 = vld [vmem:[%s124 + $0x18b0] sm:$0xff]
        %v946 = vld [vmem:[%s124 + $0x18b8] sm:$0xff]
        %v947 = vld [vmem:[%s124 + $0x18c0] sm:$0xff]
        %v948 = vld [vmem:[%s124 + $0x18c8] sm:$0xff]
        %v949 = vld [vmem:[%s124 + $0x18d0] sm:$0xff]
        %v950 = vld [vmem:[%s124 + $0x18d8] sm:$0xff]
        %v951 = vld [vmem:[%s124 + $0x18e0] sm:$0xff]
        %v952 = vld [vmem:[%s124 + $0x18e8] sm:$0xff]
        %v953 = vld [vmem:[%s124 + $0x18f0] sm:$0xff]
        %v954 = vld [vmem:[%s124 + $0x18f8] sm:$0xff]
        %v955 = vld [vmem:[%s124 + $0x1900] sm:$0xff]
        %v956 = vld [vmem:[%s124 + $0x1908] sm:$0xff]
        %v957 = vld [vmem:[%s124 + $0x1910] sm:$0xff]
        %v958 = vld [vmem:[%s124 + $0x1918] sm:$0xff]
        %v959 = vld [vmem:[%s124 + $0x1920] sm:$0xff]
        %v960 = vld [vmem:[%s124 + $0x1928] sm:$0xff]
        %v961 = vld [vmem:[%s124 + $0x1930] sm:$0xff]
        %v962 = vld [vmem:[%s124 + $0x1938] sm:$0xff]
        %v963 = vld [vmem:[%s124 + $0x1940] sm:$0xff]
        %v964 = vld [vmem:[%s124 + $0x1948] sm:$0xff]
        %v965 = vld [vmem:[%s124 + $0x1950] sm:$0xff]
        %v966 = vld [vmem:[%s124 + $0x1958] sm:$0xff]
        %v967 = vld [vmem:[%s124 + $0x1960] sm:$0xff]
        %v968 = vld [vmem:[%s124 + $0x1968] sm:$0xff]
        %v969 = vld [vmem:[%s124 + $0x1970] sm:$0xff]
        %v970 = vld [vmem:[%s124 + $0x1978] sm:$0xff]
        %v971 = vld [vmem:[%s124 + $0x1980] sm:$0xff]
        %v972 = vld [vmem:[%s124 + $0x1988] sm:$0xff]
        %v973 = vld [vmem:[%s124 + $0x1990] sm:$0xff]
        %v974 = vld [vmem:[%s124 + $0x1998] sm:$0xff]
        %v975 = vld [vmem:[%s124 + $0x19a0] sm:$0xff]
        %v976 = vld [vmem:[%s124 + $0x19a8] sm:$0xff]
        %v977 = vld [vmem:[%s124 + $0x19b0] sm:$0xff]
        %v978 = vld [vmem:[%s124 + $0x19b8] sm:$0xff]
        %v979 = vld [vmem:[%s124 + $0x19c0] sm:$0xff]
        %v980 = vld [vmem:[%s124 + $0x19c8] sm:$0xff]
        %v981 = vld [vmem:[%s124 + $0x19d0] sm:$0xff]
        %v982 = vld [vmem:[%s124 + $0x19d8] sm:$0xff]
        %v983 = vld [vmem:[%s124 + $0x19e0] sm:$0xff]
        %v984 = vld [vmem:[%s124 + $0x19e8] sm:$0xff]
        %v985 = vld [vmem:[%s124 + $0x19f0] sm:$0xff]
        %v986 = vld [vmem:[%s124 + $0x19f8] sm:$0xff]
        %v987 = vld [vmem:[%s124 + $0x1a00] sm:$0xff]
        %v988 = vld [vmem:[%s124 + $0x1a08] sm:$0xff]
        %v989 = vld [vmem:[%s124 + $0x1a10] sm:$0xff]
        %v990 = vld [vmem:[%s124 + $0x1a18] sm:$0xff]
        %v991 = vld [vmem:[%s124 + $0x1a20] sm:$0xff]
        %v992 = vld [vmem:[%s124 + $0x1a28] sm:$0xff]
        %v993 = vld [vmem:[%s124 + $0x1a30] sm:$0xff]
        %v994 = vld [vmem:[%s124 + $0x1a38] sm:$0xff]
        %v995 = vld [vmem:[%s124 + $0x1a40] sm:$0xff]
        %v996 = vld [vmem:[%s124 + $0x1a48] sm:$0xff]
        %v997 = vld [vmem:[%s124 + $0x1a50] sm:$0xff]
        %v998 = vld [vmem:[%s124 + $0x1a58] sm:$0xff]
        %v999 = vld [vmem:[%s124 + $0x1a60] sm:$0xff]
        %v1000 = vld [vmem:[%s124 + $0x1a68] sm:$0xff]
        %v1001 = vld [vmem:[%s124 + $0x1a70] sm:$0xff]
        %v1002 = vld [vmem:[%s124 + $0x1a78] sm:$0xff]
        %v1003 = vld [vmem:[%s124 + $0x1a80] sm:$0xff]
        %v1004 = vld [vmem:[%s124 + $0x1a88] sm:$0xff]
        %v1005 = vld [vmem:[%s124 + $0x1a90] sm:$0xff]
        %v1006 = vld [vmem:[%s124 + $0x1a98] sm:$0xff]
        %v1007 = vld [vmem:[%s124 + $0x1aa0] sm:$0xff]
        %v1008 = vld [vmem:[%s124 + $0x1aa8] sm:$0xff]
        %v1009 = vld [vmem:[%s124 + $0x1ab0] sm:$0xff]
        %v1010 = vld [vmem:[%s124 + $0x1ab8] sm:$0xff]
        %v1011 = vld [vmem:[%s124 + $0x1ac0] sm:$0xff]
        %v1012 = vld [vmem:[%s124 + $0x1ac8] sm:$0xff]
        %v1013 = vld [vmem:[%s124 + $0x1ad0] sm:$0xff]
        %v1014 = vld [vmem:[%s124 + $0x1ad8] sm:$0xff]
        %v1015 = vld [vmem:[%s124 + $0x1ae0] sm:$0xff]
        %v1016 = vld [vmem:[%s124 + $0x1ae8] sm:$0xff]
        %v1017 = vld [vmem:[%s124 + $0x1af0] sm:$0xff]
        %v1018 = vld [vmem:[%s124 + $0x1af8] sm:$0xff]
        %v1019 = vld [vmem:[%s124 + $0x1b00] sm:$0xff]
        %v1020 = vld [vmem:[%s124 + $0x1b08] sm:$0xff]
        %v1021 = vld [vmem:[%s124 + $0x1b10] sm:$0xff]
        %v1022 = vld [vmem:[%s124 + $0x1b18] sm:$0xff]
        %v1023 = vld [vmem:[%s124 + $0x1b20] sm:$0xff]
        %v1024 = vld [vmem:[%s124 + $0x1b28] sm:$0xff]
        %v1025 = vld [vmem:[%s124 + $0x1b30] sm:$0xff]
        %v1026 = vld [vmem:[%s124 + $0x1b38] sm:$0xff]
        %v1027 = vld [vmem:[%s124 + $0x1b40] sm:$0xff]
        %v1028 = vld [vmem:[%s124 + $0x1b48] sm:$0xff]
        %v1029 = vld [vmem:[%s124 + $0x1b50] sm:$0xff]
        %v1030 = vld [vmem:[%s124 + $0x1b58] sm:$0xff]
        %v1031 = vld [vmem:[%s124 + $0x1b60] sm:$0xff]
        %v1032 = vld [vmem:[%s124 + $0x1b68] sm:$0xff]
        %v1033 = vld [vmem:[%s124 + $0x1b70] sm:$0xff]
        %v1034 = vld [vmem:[%s124 + $0x1b78] sm:$0xff]
        %v1035 = vld [vmem:[%s124 + $0x1b80] sm:$0xff]
        %v1036 = vld [vmem:[%s124 + $0x1b88] sm:$0xff]
        %v1037 = vld [vmem:[%s124 + $0x1b90] sm:$0xff]
        %v1038 = vld [vmem:[%s124 + $0x1b98] sm:$0xff]
        %v1039 = vld [vmem:[%s124 + $0x1ba0] sm:$0xff]
        %v1040 = vld [vmem:[%s124 + $0x1ba8] sm:$0xff]
        %v1041 = vld [vmem:[%s124 + $0x1bb0] sm:$0xff]
        %v1042 = vld [vmem:[%s124 + $0x1bb8] sm:$0xff]
        %v1043 = vld [vmem:[%s124 + $0x1bc0] sm:$0xff]
        %v1044 = vld [vmem:[%s124 + $0x1bc8] sm:$0xff]
        %v1045 = vld [vmem:[%s124 + $0x1bd0] sm:$0xff]
        %v1046 = vld [vmem:[%s124 + $0x1bd8] sm:$0xff]
        %v1047 = vld [vmem:[%s124 + $0x1be0] sm:$0xff]
        %v1048 = vld [vmem:[%s124 + $0x1be8] sm:$0xff]
        %v1049 = vld [vmem:[%s124 + $0x1bf0] sm:$0xff]
        %v1050 = vld [vmem:[%s124 + $0x1bf8] sm:$0xff]
        %v1051 = vld [vmem:[%s124 + $0x1c00] sm:$0xff]
        %v1052 = vld [vmem:[%s124 + $0x1c08] sm:$0xff]
        %v1053 = vld [vmem:[%s124 + $0x1c10] sm:$0xff]
        %v1054 = vld [vmem:[%s124 + $0x1c18] sm:$0xff]
        %v1055 = vld [vmem:[%s124 + $0x1c20] sm:$0xff]
        %v1056 = vld [vmem:[%s124 + $0x1c28] sm:$0xff]
        %v1057 = vld [vmem:[%s124 + $0x1c30] sm:$0xff]
        %v1058 = vld [vmem:[%s124 + $0x1c38] sm:$0xff]
        %v1059 = vld [vmem:[%s124 + $0x1c40] sm:$0xff]
        %v1060 = vld [vmem:[%s124 + $0x1c48] sm:$0xff]
        %v1061 = vld [vmem:[%s124 + $0x1c50] sm:$0xff]
        %v1062 = vld [vmem:[%s124 + $0x1c58] sm:$0xff]
        %v1063 = vld [vmem:[%s124 + $0x1c60] sm:$0xff]
        %v1064 = vld [vmem:[%s124 + $0x1c68] sm:$0xff]
        %v1065 = vld [vmem:[%s124 + $0x1c70] sm:$0xff]
        %v1066 = vld [vmem:[%s124 + $0x1c78] sm:$0xff]
        %v1067 = vld [vmem:[%s124 + $0x1c80] sm:$0xff]
        %v1068 = vld [vmem:[%s124 + $0x1c88] sm:$0xff]
        %v1069 = vld [vmem:[%s124 + $0x1c90] sm:$0xff]
        %v1070 = vld [vmem:[%s124 + $0x1c98] sm:$0xff]
        %v1071 = vld [vmem:[%s124 + $0x1ca0] sm:$0xff]
        %v1072 = vld [vmem:[%s124 + $0x1ca8] sm:$0xff]
        %v1073 = vld [vmem:[%s124 + $0x1cb0] sm:$0xff]
        %v1074 = vld [vmem:[%s124 + $0x1cb8] sm:$0xff]
        %v1075 = vld [vmem:[%s124 + $0x1cc0] sm:$0xff]
        %v1076 = vld [vmem:[%s124 + $0x1cc8] sm:$0xff]
        %v1077 = vld [vmem:[%s124 + $0x1cd0] sm:$0xff]
        %v1078 = vld [vmem:[%s124 + $0x1cd8] sm:$0xff]
        %v1079 = vld [vmem:[%s124 + $0x1ce0] sm:$0xff]
        %v1080 = vld [vmem:[%s124 + $0x1ce8] sm:$0xff]
        %v1081 = vld [vmem:[%s124 + $0x1cf0] sm:$0xff]
        %v1082 = vld [vmem:[%s124 + $0x1cf8] sm:$0xff]
        %v1083 = vld [vmem:[%s124 + $0x1d00] sm:$0xff]
        %v1084 = vld [vmem:[%s124 + $0x1d08] sm:$0xff]
        %v1085 = vld [vmem:[%s124 + $0x1d10] sm:$0xff]
        %v1086 = vld [vmem:[%s124 + $0x1d18] sm:$0xff]
        %v1087 = vld [vmem:[%s124 + $0x1d20] sm:$0xff]
        %v1088 = vld [vmem:[%s124 + $0x1d28] sm:$0xff]
        %v1089 = vld [vmem:[%s124 + $0x1d30] sm:$0xff]
        %v1090 = vld [vmem:[%s124 + $0x1d38] sm:$0xff]
        %v1091 = vld [vmem:[%s124 + $0x1d40] sm:$0xff]
        %v1092 = vld [vmem:[%s124 + $0x1d48] sm:$0xff]
        %v1093 = vld [vmem:[%s124 + $0x1d50] sm:$0xff]
        %v1094 = vld [vmem:[%s124 + $0x1d58] sm:$0xff]
        %v1095 = vld [vmem:[%s124 + $0x1d60] sm:$0xff]
        %v1096 = vld [vmem:[%s124 + $0x1d68] sm:$0xff]
        %v1097 = vld [vmem:[%s124 + $0x1d70] sm:$0xff]
        %v1098 = vld [vmem:[%s124 + $0x1d78] sm:$0xff]
        %v1099 = vld [vmem:[%s124 + $0x1d80] sm:$0xff]
        %v1100 = vld [vmem:[%s124 + $0x1d88] sm:$0xff]
        %v1101 = vld [vmem:[%s124 + $0x1d90] sm:$0xff]
        %v1102 = vld [vmem:[%s124 + $0x1d98] sm:$0xff]
        %v1103 = vld [vmem:[%s124 + $0x1da0] sm:$0xff]
        %v1104 = vld [vmem:[%s124 + $0x1da8] sm:$0xff]
        %v1105 = vld [vmem:[%s124 + $0x1db0] sm:$0xff]
        %v1106 = vld [vmem:[%s124 + $0x1db8] sm:$0xff]
        %v1107 = vld [vmem:[%s124 + $0x1dc0] sm:$0xff]
        %v1108 = vld [vmem:[%s124 + $0x1dc8] sm:$0xff]
        %v1109 = vld [vmem:[%s124 + $0x1dd0] sm:$0xff]
        %v1110 = vld [vmem:[%s124 + $0x1dd8] sm:$0xff]
        %v1111 = vld [vmem:[%s124 + $0x1de0] sm:$0xff]
        %v1112 = vld [vmem:[%s124 + $0x1de8] sm:$0xff]
        %v1113 = vld [vmem:[%s124 + $0x1df0] sm:$0xff]
        %v1114 = vld [vmem:[%s124 + $0x1df8] sm:$0xff]
        %v1115 = vld [vmem:[%s124 + $0x1e00] sm:$0xff]
        %v1116 = vld [vmem:[%s124 + $0x1e08] sm:$0xff]
        %v1117 = vld [vmem:[%s124 + $0x1e10] sm:$0xff]
        %v1118 = vld [vmem:[%s124 + $0x1e18] sm:$0xff]
        %v1119 = vld [vmem:[%s124 + $0x1e20] sm:$0xff]
        %v1120 = vld [vmem:[%s124 + $0x1e28] sm:$0xff]
        %v1121 = vld [vmem:[%s124 + $0x1e30] sm:$0xff]
        %v1122 = vld [vmem:[%s124 + $0x1e38] sm:$0xff]
        %v1123 = vld [vmem:[%s124 + $0x1e40] sm:$0xff]
        %v1124 = vld [vmem:[%s124 + $0x1e48] sm:$0xff]
        %v1125 = vld [vmem:[%s124 + $0x1e50] sm:$0xff]
        %v1126 = vld [vmem:[%s124 + $0x1e58] sm:$0xff]
        %v1127 = vld [vmem:[%s124 + $0x1e60] sm:$0xff]
        %v1128 = vld [vmem:[%s124 + $0x1e68] sm:$0xff]
        %v1129 = vld [vmem:[%s124 + $0x1e70] sm:$0xff]
        %v1130 = vld [vmem:[%s124 + $0x1e78] sm:$0xff]
        %v1131 = vld [vmem:[%s124 + $0x1e80] sm:$0xff]
        %v1132 = vld [vmem:[%s124 + $0x1e88] sm:$0xff]
        %v1133 = vld [vmem:[%s124 + $0x1e90] sm:$0xff]
        %v1134 = vld [vmem:[%s124 + $0x1e98] sm:$0xff]
        %v1135 = vld [vmem:[%s124 + $0x1ea0] sm:$0xff]
        %v1136 = vld [vmem:[%s124 + $0x1ea8] sm:$0xff]
        %v1137 = vld [vmem:[%s124 + $0x1eb0] sm:$0xff]
        %v1138 = vld [vmem:[%s124 + $0x1eb8] sm:$0xff]
        %v1139 = vld [vmem:[%s124 + $0x1ec0] sm:$0xff]
        %v1140 = vld [vmem:[%s124 + $0x1ec8] sm:$0xff]
        %v1141 = vld [vmem:[%s124 + $0x1ed0] sm:$0xff]
        %v1142 = vld [vmem:[%s124 + $0x1ed8] sm:$0xff]
        %v1143 = vld [vmem:[%s124 + $0x1ee0] sm:$0xff]
        %v1144 = vld [vmem:[%s124 + $0x1ee8] sm:$0xff]
        %v1145 = vld [vmem:[%s124 + $0x1ef0] sm:$0xff]
        %v1146 = vld [vmem:[%s124 + $0x1ef8] sm:$0xff]
        %v1147 = vld [vmem:[%s124 + $0x1f00] sm:$0xff]
        %v1148 = vld [vmem:[%s124 + $0x1f08] sm:$0xff]
        %v1149 = vld [vmem:[%s124 + $0x1f10] sm:$0xff]
        %v1150 = vld [vmem:[%s124 + $0x1f18] sm:$0xff]
        %v1151 = vld [vmem:[%s124 + $0x1f20] sm:$0xff]
        %v1152 = vld [vmem:[%s124 + $0x1f28] sm:$0xff]
        %v1153 = vld [vmem:[%s124 + $0x1f30] sm:$0xff]
        %v1154 = vld [vmem:[%s124 + $0x1f38] sm:$0xff]
        %v1155 = vld [vmem:[%s124 + $0x1f40] sm:$0xff]
        %v1156 = vld [vmem:[%s124 + $0x1f48] sm:$0xff]
        %v1157 = vld [vmem:[%s124 + $0x1f50] sm:$0xff]
        %v1158 = vld [vmem:[%s124 + $0x1f58] sm:$0xff]
        %v1159 = vld [vmem:[%s124 + $0x1f60] sm:$0xff]
        %v1160 = vld [vmem:[%s124 + $0x1f68] sm:$0xff]
        %v1161 = vld [vmem:[%s124 + $0x1f70] sm:$0xff]
        %v1162 = vld [vmem:[%s124 + $0x1f78] sm:$0xff]
        %v1163 = vld [vmem:[%s124 + $0x1f80] sm:$0xff]
        %v1164 = vld [vmem:[%s124 + $0x1f88] sm:$0xff]
        %v1165 = vld [vmem:[%s124 + $0x1f90] sm:$0xff]
        %v1166 = vld [vmem:[%s124 + $0x1f98] sm:$0xff]
        %v1167 = vld [vmem:[%s124 + $0x1fa0] sm:$0xff]
        %v1168 = vld [vmem:[%s124 + $0x1fa8] sm:$0xff]
        %v1169 = vld [vmem:[%s124 + $0x1fb0] sm:$0xff]
        %v1170 = vld [vmem:[%s124 + $0x1fb8] sm:$0xff]
        %v1171 = vld [vmem:[%s124 + $0x1fc0] sm:$0xff]
        %v1172 = vld [vmem:[%s124 + $0x1fc8] sm:$0xff]
        %v1173 = vld [vmem:[%s124 + $0x1fd0] sm:$0xff]
        %v1174 = vld [vmem:[%s124 + $0x1fd8] sm:$0xff]
        %v1175 = vld [vmem:[%s124 + $0x1fe0] sm:$0xff]
        %v1176 = vld [vmem:[%s124 + $0x1fe8] sm:$0xff]
        %v1177 = vld [vmem:[%s124 + $0x1ff0] sm:$0xff]
        %v1178 = vld [vmem:[%s124 + $0x1ff8] sm:$0xff]
        %v1179 = vsub.f32 %v155, 0.25
        %v1180 = vsub.f32 %v156, 0.25
        %v1181 = vsub.f32 %v157, 0.25
        %v1182 = vsub.f32 %v158, 0.25
        %v1183 = vsub.f32 %v159, 0.25
        %v1184 = vsub.f32 %v160, 0.25
        %v1185 = vsub.f32 %v161, 0.25
        %v1186 = vsub.f32 %v162, 0.25
        %v1187 = vsub.f32 %v163, 0.25
        %v1188 = vsub.f32 %v164, 0.25
        %v1189 = vsub.f32 %v165, 0.25
        %v1190 = vsub.f32 %v166, 0.25
        %v1191 = vsub.f32 %v167, 0.25
        %v1192 = vsub.f32 %v168, 0.25
        %v1193 = vsub.f32 %v169, 0.25
        %v1194 = vsub.f32 %v170, 0.25
        %v1195 = vsub.f32 %v171, 0.25
        %v1196 = vsub.f32 %v172, 0.25
        %v1197 = vsub.f32 %v173, 0.25
        %v1198 = vsub.f32 %v174, 0.25
        %v1199 = vsub.f32 %v175, 0.25
        %v1200 = vsub.f32 %v176, 0.25
        %v1201 = vsub.f32 %v177, 0.25
        %v1202 = vsub.f32 %v178, 0.25
        %v1203 = vsub.f32 %v179, 0.25
        %v1204 = vsub.f32 %v180, 0.25
        %v1205 = vsub.f32 %v181, 0.25
        %v1206 = vsub.f32 %v182, 0.25
        %v1207 = vsub.f32 %v183, 0.25
        %v1208 = vsub.f32 %v184, 0.25
        %v1209 = vsub.f32 %v185, 0.25
        %v1210 = vsub.f32 %v186, 0.25
        %v1211 = vsub.f32 %v187, 0.25
        %v1212 = vsub.f32 %v188, 0.25
        %v1213 = vsub.f32 %v189, 0.25
        %v1214 = vsub.f32 %v190, 0.25
        %v1215 = vsub.f32 %v191, 0.25
        %v1216 = vsub.f32 %v192, 0.25
        %v1217 = vsub.f32 %v193, 0.25
        %v1218 = vsub.f32 %v194, 0.25
        %v1219 = vsub.f32 %v195, 0.25
        %v1220 = vsub.f32 %v196, 0.25
        %v1221 = vsub.f32 %v197, 0.25
        %v1222 = vsub.f32 %v198, 0.25
        %v1223 = vsub.f32 %v199, 0.25
        %v1224 = vsub.f32 %v200, 0.25
        %v1225 = vsub.f32 %v201, 0.25
        %v1226 = vsub.f32 %v202, 0.25
        %v1227 = vsub.f32 %v203, 0.25
        %v1228 = vsub.f32 %v204, 0.25
        %v1229 = vsub.f32 %v205, 0.25
        %v1230 = vsub.f32 %v206, 0.25
        %v1231 = vsub.f32 %v207, 0.25
        %v1232 = vsub.f32 %v208, 0.25
        %v1233 = vsub.f32 %v209, 0.25
        %v1234 = vsub.f32 %v210, 0.25
        %v1235 = vsub.f32 %v211, 0.25
        %v1236 = vsub.f32 %v212, 0.25
        %v1237 = vsub.f32 %v213, 0.25
        %v1238 = vsub.f32 %v214, 0.25
        %v1239 = vsub.f32 %v215, 0.25
        %v1240 = vsub.f32 %v216, 0.25
        %v1241 = vsub.f32 %v217, 0.25
        %v1242 = vsub.f32 %v218, 0.25
        %v1243 = vsub.f32 %v219, 0.25
        %v1244 = vsub.f32 %v220, 0.25
        %v1245 = vsub.f32 %v221, 0.25
        %v1246 = vsub.f32 %v222, 0.25
        %v1247 = vsub.f32 %v223, 0.25
        %v1248 = vsub.f32 %v224, 0.25
        %v1249 = vsub.f32 %v225, 0.25
        %v1250 = vsub.f32 %v226, 0.25
        %v1251 = vsub.f32 %v227, 0.25
        %v1252 = vsub.f32 %v228, 0.25
        %v1253 = vsub.f32 %v229, 0.25
        %v1254 = vsub.f32 %v230, 0.25
        %v1255 = vsub.f32 %v231, 0.25
        %v1256 = vsub.f32 %v232, 0.25
        %v1257 = vsub.f32 %v233, 0.25
        %v1258 = vsub.f32 %v234, 0.25
        %v1259 = vsub.f32 %v235, 0.25
        %v1260 = vsub.f32 %v236, 0.25
        %v1261 = vsub.f32 %v237, 0.25
        %v1262 = vsub.f32 %v238, 0.25
        %v1263 = vsub.f32 %v239, 0.25
        %v1264 = vsub.f32 %v240, 0.25
        %v1265 = vsub.f32 %v241, 0.25
        %v1266 = vsub.f32 %v242, 0.25
        %v1267 = vsub.f32 %v243, 0.25
        %v1268 = vsub.f32 %v244, 0.25
        %v1269 = vsub.f32 %v245, 0.25
        %v1270 = vsub.f32 %v246, 0.25
        %v1271 = vsub.f32 %v247, 0.25
        %v1272 = vsub.f32 %v248, 0.25
        %v1273 = vsub.f32 %v249, 0.25
        %v1274 = vsub.f32 %v250, 0.25
        %v1275 = vsub.f32 %v251, 0.25
        %v1276 = vsub.f32 %v252, 0.25
        %v1277 = vsub.f32 %v253, 0.25
        %v1278 = vsub.f32 %v254, 0.25
        %v1279 = vsub.f32 %v255, 0.25
        %v1280 = vsub.f32 %v256, 0.25
        %v1281 = vsub.f32 %v257, 0.25
        %v1282 = vsub.f32 %v258, 0.25
        %v1283 = vsub.f32 %v259, 0.25
        %v1284 = vsub.f32 %v260, 0.25
        %v1285 = vsub.f32 %v261, 0.25
        %v1286 = vsub.f32 %v262, 0.25
        %v1287 = vsub.f32 %v263, 0.25
        %v1288 = vsub.f32 %v264, 0.25
        %v1289 = vsub.f32 %v265, 0.25
        %v1290 = vsub.f32 %v266, 0.25
        %v1291 = vsub.f32 %v267, 0.25
        %v1292 = vsub.f32 %v268, 0.25
        %v1293 = vsub.f32 %v269, 0.25
        %v1294 = vsub.f32 %v270, 0.25
        %v1295 = vsub.f32 %v271, 0.25
        %v1296 = vsub.f32 %v272, 0.25
        %v1297 = vsub.f32 %v273, 0.25
        %v1298 = vsub.f32 %v274, 0.25
        %v1299 = vsub.f32 %v275, 0.25
        %v1300 = vsub.f32 %v276, 0.25
        %v1301 = vsub.f32 %v277, 0.25
        %v1302 = vsub.f32 %v278, 0.25
        %v1303 = vsub.f32 %v279, 0.25
        %v1304 = vsub.f32 %v280, 0.25
        %v1305 = vsub.f32 %v281, 0.25
        %v1306 = vsub.f32 %v282, 0.25
        %v1307 = vsub.f32 %v283, 0.25
        %v1308 = vsub.f32 %v284, 0.25
        %v1309 = vsub.f32 %v285, 0.25
        %v1310 = vsub.f32 %v286, 0.25
        %v1311 = vsub.f32 %v287, 0.25
        %v1312 = vsub.f32 %v288, 0.25
        %v1313 = vsub.f32 %v289, 0.25
        %v1314 = vsub.f32 %v290, 0.25
        %v1315 = vsub.f32 %v291, 0.25
        %v1316 = vsub.f32 %v292, 0.25
        %v1317 = vsub.f32 %v293, 0.25
        %v1318 = vsub.f32 %v294, 0.25
        %v1319 = vsub.f32 %v295, 0.25
        %v1320 = vsub.f32 %v296, 0.25
        %v1321 = vsub.f32 %v297, 0.25
        %v1322 = vsub.f32 %v298, 0.25
        %v1323 = vsub.f32 %v299, 0.25
        %v1324 = vsub.f32 %v300, 0.25
        %v1325 = vsub.f32 %v301, 0.25
        %v1326 = vsub.f32 %v302, 0.25
        %v1327 = vsub.f32 %v303, 0.25
        %v1328 = vsub.f32 %v304, 0.25
        %v1329 = vsub.f32 %v305, 0.25
        %v1330 = vsub.f32 %v306, 0.25
        %v1331 = vsub.f32 %v307, 0.25
        %v1332 = vsub.f32 %v308, 0.25
        %v1333 = vsub.f32 %v309, 0.25
        %v1334 = vsub.f32 %v310, 0.25
        %v1335 = vsub.f32 %v311, 0.25
        %v1336 = vsub.f32 %v312, 0.25
        %v1337 = vsub.f32 %v313, 0.25
        %v1338 = vsub.f32 %v314, 0.25
        %v1339 = vsub.f32 %v315, 0.25
        %v1340 = vsub.f32 %v316, 0.25
        %v1341 = vsub.f32 %v317, 0.25
        %v1342 = vsub.f32 %v318, 0.25
        %v1343 = vsub.f32 %v319, 0.25
        %v1344 = vsub.f32 %v320, 0.25
        %v1345 = vsub.f32 %v321, 0.25
        %v1346 = vsub.f32 %v322, 0.25
        %v1347 = vsub.f32 %v323, 0.25
        %v1348 = vsub.f32 %v324, 0.25
        %v1349 = vsub.f32 %v325, 0.25
        %v1350 = vsub.f32 %v326, 0.25
        %v1351 = vsub.f32 %v327, 0.25
        %v1352 = vsub.f32 %v328, 0.25
        %v1353 = vsub.f32 %v329, 0.25
        %v1354 = vsub.f32 %v330, 0.25
        %v1355 = vsub.f32 %v331, 0.25
        %v1356 = vsub.f32 %v332, 0.25
        %v1357 = vsub.f32 %v333, 0.25
        %v1358 = vsub.f32 %v334, 0.25
        %v1359 = vsub.f32 %v335, 0.25
        %v1360 = vsub.f32 %v336, 0.25
        %v1361 = vsub.f32 %v337, 0.25
        %v1362 = vsub.f32 %v338, 0.25
        %v1363 = vsub.f32 %v339, 0.25
        %v1364 = vsub.f32 %v340, 0.25
        %v1365 = vsub.f32 %v341, 0.25
        %v1366 = vsub.f32 %v342, 0.25
        %v1367 = vsub.f32 %v343, 0.25
        %v1368 = vsub.f32 %v344, 0.25
        %v1369 = vsub.f32 %v345, 0.25
        %v1370 = vsub.f32 %v346, 0.25
        %v1371 = vsub.f32 %v347, 0.25
        %v1372 = vsub.f32 %v348, 0.25
        %v1373 = vsub.f32 %v349, 0.25
        %v1374 = vsub.f32 %v350, 0.25
        %v1375 = vsub.f32 %v351, 0.25
        %v1376 = vsub.f32 %v352, 0.25
        %v1377 = vsub.f32 %v353, 0.25
        %v1378 = vsub.f32 %v354, 0.25
        %v1379 = vsub.f32 %v355, 0.25
        %v1380 = vsub.f32 %v356, 0.25
        %v1381 = vsub.f32 %v357, 0.25
        %v1382 = vsub.f32 %v358, 0.25
        %v1383 = vsub.f32 %v359, 0.25
        %v1384 = vsub.f32 %v360, 0.25
        %v1385 = vsub.f32 %v361, 0.25
        %v1386 = vsub.f32 %v362, 0.25
        %v1387 = vsub.f32 %v363, 0.25
        %v1388 = vsub.f32 %v364, 0.25
        %v1389 = vsub.f32 %v365, 0.25
        %v1390 = vsub.f32 %v366, 0.25
        %v1391 = vsub.f32 %v367, 0.25
        %v1392 = vsub.f32 %v368, 0.25
        %v1393 = vsub.f32 %v369, 0.25
        %v1394 = vsub.f32 %v370, 0.25
        %v1395 = vsub.f32 %v371, 0.25
        %v1396 = vsub.f32 %v372, 0.25
        %v1397 = vsub.f32 %v373, 0.25
        %v1398 = vsub.f32 %v374, 0.25
        %v1399 = vsub.f32 %v375, 0.25
        %v1400 = vsub.f32 %v376, 0.25
        %v1401 = vsub.f32 %v377, 0.25
        %v1402 = vsub.f32 %v378, 0.25
        %v1403 = vsub.f32 %v379, 0.25
        %v1404 = vsub.f32 %v380, 0.25
        %v1405 = vsub.f32 %v381, 0.25
        %v1406 = vsub.f32 %v382, 0.25
        %v1407 = vsub.f32 %v383, 0.25
        %v1408 = vsub.f32 %v384, 0.25
        %v1409 = vsub.f32 %v385, 0.25
        %v1410 = vsub.f32 %v386, 0.25
        %v1411 = vsub.f32 %v387, 0.25
        %v1412 = vsub.f32 %v388, 0.25
        %v1413 = vsub.f32 %v389, 0.25
        %v1414 = vsub.f32 %v390, 0.25
        %v1415 = vsub.f32 %v391, 0.25
        %v1416 = vsub.f32 %v392, 0.25
        %v1417 = vsub.f32 %v393, 0.25
        %v1418 = vsub.f32 %v394, 0.25
        %v1419 = vsub.f32 %v395, 0.25
        %v1420 = vsub.f32 %v396, 0.25
        %v1421 = vsub.f32 %v397, 0.25
        %v1422 = vsub.f32 %v398, 0.25
        %v1423 = vsub.f32 %v399, 0.25
        %v1424 = vsub.f32 %v400, 0.25
        %v1425 = vsub.f32 %v401, 0.25
        %v1426 = vsub.f32 %v402, 0.25
        %v1427 = vsub.f32 %v403, 0.25
        %v1428 = vsub.f32 %v404, 0.25
        %v1429 = vsub.f32 %v405, 0.25
        %v1430 = vsub.f32 %v406, 0.25
        %v1431 = vsub.f32 %v407, 0.25
        %v1432 = vsub.f32 %v408, 0.25
        %v1433 = vsub.f32 %v409, 0.25
        %v1434 = vsub.f32 %v410, 0.25
        %v1435 = vsub.f32 %v411, 0.25
        %v1436 = vsub.f32 %v412, 0.25
        %v1437 = vsub.f32 %v413, 0.25
        %v1438 = vsub.f32 %v414, 0.25
        %v1439 = vsub.f32 %v415, 0.25
        %v1440 = vsub.f32 %v416, 0.25
        %v1441 = vsub.f32 %v417, 0.25
        %v1442 = vsub.f32 %v418, 0.25
        %v1443 = vsub.f32 %v419, 0.25
        %v1444 = vsub.f32 %v420, 0.25
        %v1445 = vsub.f32 %v421, 0.25
        %v1446 = vsub.f32 %v422, 0.25
        %v1447 = vsub.f32 %v423, 0.25
        %v1448 = vsub.f32 %v424, 0.25
        %v1449 = vsub.f32 %v425, 0.25
        %v1450 = vsub.f32 %v426, 0.25
        %v1451 = vsub.f32 %v427, 0.25
        %v1452 = vsub.f32 %v428, 0.25
        %v1453 = vsub.f32 %v429, 0.25
        %v1454 = vsub.f32 %v430, 0.25
        %v1455 = vsub.f32 %v431, 0.25
        %v1456 = vsub.f32 %v432, 0.25
        %v1457 = vsub.f32 %v433, 0.25
        %v1458 = vsub.f32 %v434, 0.25
        %v1459 = vsub.f32 %v435, 0.25
        %v1460 = vsub.f32 %v436, 0.25
        %v1461 = vsub.f32 %v437, 0.25
        %v1462 = vsub.f32 %v438, 0.25
        %v1463 = vsub.f32 %v439, 0.25
        %v1464 = vsub.f32 %v440, 0.25
        %v1465 = vsub.f32 %v441, 0.25
        %v1466 = vsub.f32 %v442, 0.25
        %v1467 = vsub.f32 %v443, 0.25
        %v1468 = vsub.f32 %v444, 0.25
        %v1469 = vsub.f32 %v445, 0.25
        %v1470 = vsub.f32 %v446, 0.25
        %v1471 = vsub.f32 %v447, 0.25
        %v1472 = vsub.f32 %v448, 0.25
        %v1473 = vsub.f32 %v449, 0.25
        %v1474 = vsub.f32 %v450, 0.25
        %v1475 = vsub.f32 %v451, 0.25
        %v1476 = vsub.f32 %v452, 0.25
        %v1477 = vsub.f32 %v453, 0.25
        %v1478 = vsub.f32 %v454, 0.25
        %v1479 = vsub.f32 %v455, 0.25
        %v1480 = vsub.f32 %v456, 0.25
        %v1481 = vsub.f32 %v457, 0.25
        %v1482 = vsub.f32 %v458, 0.25
        %v1483 = vsub.f32 %v459, 0.25
        %v1484 = vsub.f32 %v460, 0.25
        %v1485 = vsub.f32 %v461, 0.25
        %v1486 = vsub.f32 %v462, 0.25
        %v1487 = vsub.f32 %v463, 0.25
        %v1488 = vsub.f32 %v464, 0.25
        %v1489 = vsub.f32 %v465, 0.25
        %v1490 = vsub.f32 %v466, 0.25
        %v1491 = vsub.f32 %v467, 0.25
        %v1492 = vsub.f32 %v468, 0.25
        %v1493 = vsub.f32 %v469, 0.25
        %v1494 = vsub.f32 %v470, 0.25
        %v1495 = vsub.f32 %v471, 0.25
        %v1496 = vsub.f32 %v472, 0.25
        %v1497 = vsub.f32 %v473, 0.25
        %v1498 = vsub.f32 %v474, 0.25
        %v1499 = vsub.f32 %v475, 0.25
        %v1500 = vsub.f32 %v476, 0.25
        %v1501 = vsub.f32 %v477, 0.25
        %v1502 = vsub.f32 %v478, 0.25
        %v1503 = vsub.f32 %v479, 0.25
        %v1504 = vsub.f32 %v480, 0.25
        %v1505 = vsub.f32 %v481, 0.25
        %v1506 = vsub.f32 %v482, 0.25
        %v1507 = vsub.f32 %v483, 0.25
        %v1508 = vsub.f32 %v484, 0.25
        %v1509 = vsub.f32 %v485, 0.25
        %v1510 = vsub.f32 %v486, 0.25
        %v1511 = vsub.f32 %v487, 0.25
        %v1512 = vsub.f32 %v488, 0.25
        %v1513 = vsub.f32 %v489, 0.25
        %v1514 = vsub.f32 %v490, 0.25
        %v1515 = vsub.f32 %v491, 0.25
        %v1516 = vsub.f32 %v492, 0.25
        %v1517 = vsub.f32 %v493, 0.25
        %v1518 = vsub.f32 %v494, 0.25
        %v1519 = vsub.f32 %v495, 0.25
        %v1520 = vsub.f32 %v496, 0.25
        %v1521 = vsub.f32 %v497, 0.25
        %v1522 = vsub.f32 %v498, 0.25
        %v1523 = vsub.f32 %v499, 0.25
        %v1524 = vsub.f32 %v500, 0.25
        %v1525 = vsub.f32 %v501, 0.25
        %v1526 = vsub.f32 %v502, 0.25
        %v1527 = vsub.f32 %v503, 0.25
        %v1528 = vsub.f32 %v504, 0.25
        %v1529 = vsub.f32 %v505, 0.25
        %v1530 = vsub.f32 %v506, 0.25
        %v1531 = vsub.f32 %v507, 0.25
        %v1532 = vsub.f32 %v508, 0.25
        %v1533 = vsub.f32 %v509, 0.25
        %v1534 = vsub.f32 %v510, 0.25
        %v1535 = vsub.f32 %v511, 0.25
        %v1536 = vsub.f32 %v512, 0.25
        %v1537 = vsub.f32 %v513, 0.25
        %v1538 = vsub.f32 %v514, 0.25
        %v1539 = vsub.f32 %v515, 0.25
        %v1540 = vsub.f32 %v516, 0.25
        %v1541 = vsub.f32 %v517, 0.25
        %v1542 = vsub.f32 %v518, 0.25
        %v1543 = vsub.f32 %v519, 0.25
        %v1544 = vsub.f32 %v520, 0.25
        %v1545 = vsub.f32 %v521, 0.25
        %v1546 = vsub.f32 %v522, 0.25
        %v1547 = vsub.f32 %v523, 0.25
        %v1548 = vsub.f32 %v524, 0.25
        %v1549 = vsub.f32 %v525, 0.25
        %v1550 = vsub.f32 %v526, 0.25
        %v1551 = vsub.f32 %v527, 0.25
        %v1552 = vsub.f32 %v528, 0.25
        %v1553 = vsub.f32 %v529, 0.25
        %v1554 = vsub.f32 %v530, 0.25
        %v1555 = vsub.f32 %v531, 0.25
        %v1556 = vsub.f32 %v532, 0.25
        %v1557 = vsub.f32 %v533, 0.25
        %v1558 = vsub.f32 %v534, 0.25
        %v1559 = vsub.f32 %v535, 0.25
        %v1560 = vsub.f32 %v536, 0.25
        %v1561 = vsub.f32 %v537, 0.25
        %v1562 = vsub.f32 %v538, 0.25
        %v1563 = vsub.f32 %v539, 0.25
        %v1564 = vsub.f32 %v540, 0.25
        %v1565 = vsub.f32 %v541, 0.25
        %v1566 = vsub.f32 %v542, 0.25
        %v1567 = vsub.f32 %v543, 0.25
        %v1568 = vsub.f32 %v544, 0.25
        %v1569 = vsub.f32 %v545, 0.25
        %v1570 = vsub.f32 %v546, 0.25
        %v1571 = vsub.f32 %v547, 0.25
        %v1572 = vsub.f32 %v548, 0.25
        %v1573 = vsub.f32 %v549, 0.25
        %v1574 = vsub.f32 %v550, 0.25
        %v1575 = vsub.f32 %v551, 0.25
        %v1576 = vsub.f32 %v552, 0.25
        %v1577 = vsub.f32 %v553, 0.25
        %v1578 = vsub.f32 %v554, 0.25
        %v1579 = vsub.f32 %v555, 0.25
        %v1580 = vsub.f32 %v556, 0.25
        %v1581 = vsub.f32 %v557, 0.25
        %v1582 = vsub.f32 %v558, 0.25
        %v1583 = vsub.f32 %v559, 0.25
        %v1584 = vsub.f32 %v560, 0.25
        %v1585 = vsub.f32 %v561, 0.25
        %v1586 = vsub.f32 %v562, 0.25
        %v1587 = vsub.f32 %v563, 0.25
        %v1588 = vsub.f32 %v564, 0.25
        %v1589 = vsub.f32 %v565, 0.25
        %v1590 = vsub.f32 %v566, 0.25
        %v1591 = vsub.f32 %v567, 0.25
        %v1592 = vsub.f32 %v568, 0.25
        %v1593 = vsub.f32 %v569, 0.25
        %v1594 = vsub.f32 %v570, 0.25
        %v1595 = vsub.f32 %v571, 0.25
        %v1596 = vsub.f32 %v572, 0.25
        %v1597 = vsub.f32 %v573, 0.25
        %v1598 = vsub.f32 %v574, 0.25
        %v1599 = vsub.f32 %v575, 0.25
        %v1600 = vsub.f32 %v576, 0.25
        %v1601 = vsub.f32 %v577, 0.25
        %v1602 = vsub.f32 %v578, 0.25
        %v1603 = vsub.f32 %v579, 0.25
        %v1604 = vsub.f32 %v580, 0.25
        %v1605 = vsub.f32 %v581, 0.25
        %v1606 = vsub.f32 %v582, 0.25
        %v1607 = vsub.f32 %v583, 0.25
        %v1608 = vsub.f32 %v584, 0.25
        %v1609 = vsub.f32 %v585, 0.25
        %v1610 = vsub.f32 %v586, 0.25
        %v1611 = vsub.f32 %v587, 0.25
        %v1612 = vsub.f32 %v588, 0.25
        %v1613 = vsub.f32 %v589, 0.25
        %v1614 = vsub.f32 %v590, 0.25
        %v1615 = vsub.f32 %v591, 0.25
        %v1616 = vsub.f32 %v592, 0.25
        %v1617 = vsub.f32 %v593, 0.25
        %v1618 = vsub.f32 %v594, 0.25
        %v1619 = vsub.f32 %v595, 0.25
        %v1620 = vsub.f32 %v596, 0.25
        %v1621 = vsub.f32 %v597, 0.25
        %v1622 = vsub.f32 %v598, 0.25
        %v1623 = vsub.f32 %v599, 0.25
        %v1624 = vsub.f32 %v600, 0.25
        %v1625 = vsub.f32 %v601, 0.25
        %v1626 = vsub.f32 %v602, 0.25
        %v1627 = vsub.f32 %v603, 0.25
        %v1628 = vsub.f32 %v604, 0.25
        %v1629 = vsub.f32 %v605, 0.25
        %v1630 = vsub.f32 %v606, 0.25
        %v1631 = vsub.f32 %v607, 0.25
        %v1632 = vsub.f32 %v608, 0.25
        %v1633 = vsub.f32 %v609, 0.25
        %v1634 = vsub.f32 %v610, 0.25
        %v1635 = vsub.f32 %v611, 0.25
        %v1636 = vsub.f32 %v612, 0.25
        %v1637 = vsub.f32 %v613, 0.25
        %v1638 = vsub.f32 %v614, 0.25
        %v1639 = vsub.f32 %v615, 0.25
        %v1640 = vsub.f32 %v616, 0.25
        %v1641 = vsub.f32 %v617, 0.25
        %v1642 = vsub.f32 %v618, 0.25
        %v1643 = vsub.f32 %v619, 0.25
        %v1644 = vsub.f32 %v620, 0.25
        %v1645 = vsub.f32 %v621, 0.25
        %v1646 = vsub.f32 %v622, 0.25
        %v1647 = vsub.f32 %v623, 0.25
        %v1648 = vsub.f32 %v624, 0.25
        %v1649 = vsub.f32 %v625, 0.25
        %v1650 = vsub.f32 %v626, 0.25
        %v1651 = vsub.f32 %v627, 0.25
        %v1652 = vsub.f32 %v628, 0.25
        %v1653 = vsub.f32 %v629, 0.25
        %v1654 = vsub.f32 %v630, 0.25
        %v1655 = vsub.f32 %v631, 0.25
        %v1656 = vsub.f32 %v632, 0.25
        %v1657 = vsub.f32 %v633, 0.25
        %v1658 = vsub.f32 %v634, 0.25
        %v1659 = vsub.f32 %v635, 0.25
        %v1660 = vsub.f32 %v636, 0.25
        %v1661 = vsub.f32 %v637, 0.25
        %v1662 = vsub.f32 %v638, 0.25
        %v1663 = vsub.f32 %v639, 0.25
        %v1664 = vsub.f32 %v640, 0.25
        %v1665 = vsub.f32 %v641, 0.25
        %v1666 = vsub.f32 %v642, 0.25
        %v1667 = vsub.f32 %v643, 0.25
        %v1668 = vsub.f32 %v644, 0.25
        %v1669 = vsub.f32 %v645, 0.25
        %v1670 = vsub.f32 %v646, 0.25
        %v1671 = vsub.f32 %v647, 0.25
        %v1672 = vsub.f32 %v648, 0.25
        %v1673 = vsub.f32 %v649, 0.25
        %v1674 = vsub.f32 %v650, 0.25
        %v1675 = vsub.f32 %v651, 0.25
        %v1676 = vsub.f32 %v652, 0.25
        %v1677 = vsub.f32 %v653, 0.25
        %v1678 = vsub.f32 %v654, 0.25
        %v1679 = vsub.f32 %v655, 0.25
        %v1680 = vsub.f32 %v656, 0.25
        %v1681 = vsub.f32 %v657, 0.25
        %v1682 = vsub.f32 %v658, 0.25
        %v1683 = vsub.f32 %v659, 0.25
        %v1684 = vsub.f32 %v660, 0.25
        %v1685 = vsub.f32 %v661, 0.25
        %v1686 = vsub.f32 %v662, 0.25
        %v1687 = vsub.f32 %v663, 0.25
        %v1688 = vsub.f32 %v664, 0.25
        %v1689 = vsub.f32 %v665, 0.25
        %v1690 = vsub.f32 %v666, 0.25
        %v1691 = vsub.f32 %v667, 0.25
        %v1692 = vsub.f32 %v668, 0.25
        %v1693 = vsub.f32 %v669, 0.25
        %v1694 = vsub.f32 %v670, 0.25
        %v1695 = vsub.f32 %v671, 0.25
        %v1696 = vsub.f32 %v672, 0.25
        %v1697 = vsub.f32 %v673, 0.25
        %v1698 = vsub.f32 %v674, 0.25
        %v1699 = vsub.f32 %v675, 0.25
        %v1700 = vsub.f32 %v676, 0.25
        %v1701 = vsub.f32 %v677, 0.25
        %v1702 = vsub.f32 %v678, 0.25
        %v1703 = vsub.f32 %v679, 0.25
        %v1704 = vsub.f32 %v680, 0.25
        %v1705 = vsub.f32 %v681, 0.25
        %v1706 = vsub.f32 %v682, 0.25
        %v1707 = vsub.f32 %v683, 0.25
        %v1708 = vsub.f32 %v684, 0.25
        %v1709 = vsub.f32 %v685, 0.25
        %v1710 = vsub.f32 %v686, 0.25
        %v1711 = vsub.f32 %v687, 0.25
        %v1712 = vsub.f32 %v688, 0.25
        %v1713 = vsub.f32 %v689, 0.25
        %v1714 = vsub.f32 %v690, 0.25
        %v1715 = vsub.f32 %v691, 0.25
        %v1716 = vsub.f32 %v692, 0.25
        %v1717 = vsub.f32 %v693, 0.25
        %v1718 = vsub.f32 %v694, 0.25
        %v1719 = vsub.f32 %v695, 0.25
        %v1720 = vsub.f32 %v696, 0.25
        %v1721 = vsub.f32 %v697, 0.25
        %v1722 = vsub.f32 %v698, 0.25
        %v1723 = vsub.f32 %v699, 0.25
        %v1724 = vsub.f32 %v700, 0.25
        %v1725 = vsub.f32 %v701, 0.25
        %v1726 = vsub.f32 %v702, 0.25
        %v1727 = vsub.f32 %v703, 0.25
        %v1728 = vsub.f32 %v704, 0.25
        %v1729 = vsub.f32 %v705, 0.25
        %v1730 = vsub.f32 %v706, 0.25
        %v1731 = vsub.f32 %v707, 0.25
        %v1732 = vsub.f32 %v708, 0.25
        %v1733 = vsub.f32 %v709, 0.25
        %v1734 = vsub.f32 %v710, 0.25
        %v1735 = vsub.f32 %v711, 0.25
        %v1736 = vsub.f32 %v712, 0.25
        %v1737 = vsub.f32 %v713, 0.25
        %v1738 = vsub.f32 %v714, 0.25
        %v1739 = vsub.f32 %v715, 0.25
        %v1740 = vsub.f32 %v716, 0.25
        %v1741 = vsub.f32 %v717, 0.25
        %v1742 = vsub.f32 %v718, 0.25
        %v1743 = vsub.f32 %v719, 0.25
        %v1744 = vsub.f32 %v720, 0.25
        %v1745 = vsub.f32 %v721, 0.25
        %v1746 = vsub.f32 %v722, 0.25
        %v1747 = vsub.f32 %v723, 0.25
        %v1748 = vsub.f32 %v724, 0.25
        %v1749 = vsub.f32 %v725, 0.25
        %v1750 = vsub.f32 %v726, 0.25
        %v1751 = vsub.f32 %v727, 0.25
        %v1752 = vsub.f32 %v728, 0.25
        %v1753 = vsub.f32 %v729, 0.25
        %v1754 = vsub.f32 %v730, 0.25
        %v1755 = vsub.f32 %v731, 0.25
        %v1756 = vsub.f32 %v732, 0.25
        %v1757 = vsub.f32 %v733, 0.25
        %v1758 = vsub.f32 %v734, 0.25
        %v1759 = vsub.f32 %v735, 0.25
        %v1760 = vsub.f32 %v736, 0.25
        %v1761 = vsub.f32 %v737, 0.25
        %v1762 = vsub.f32 %v738, 0.25
        %v1763 = vsub.f32 %v739, 0.25
        %v1764 = vsub.f32 %v740, 0.25
        %v1765 = vsub.f32 %v741, 0.25
        %v1766 = vsub.f32 %v742, 0.25
        %v1767 = vsub.f32 %v743, 0.25
        %v1768 = vsub.f32 %v744, 0.25
        %v1769 = vsub.f32 %v745, 0.25
        %v1770 = vsub.f32 %v746, 0.25
        %v1771 = vsub.f32 %v747, 0.25
        %v1772 = vsub.f32 %v748, 0.25
        %v1773 = vsub.f32 %v749, 0.25
        %v1774 = vsub.f32 %v750, 0.25
        %v1775 = vsub.f32 %v751, 0.25
        %v1776 = vsub.f32 %v752, 0.25
        %v1777 = vsub.f32 %v753, 0.25
        %v1778 = vsub.f32 %v754, 0.25
        %v1779 = vsub.f32 %v755, 0.25
        %v1780 = vsub.f32 %v756, 0.25
        %v1781 = vsub.f32 %v757, 0.25
        %v1782 = vsub.f32 %v758, 0.25
        %v1783 = vsub.f32 %v759, 0.25
        %v1784 = vsub.f32 %v760, 0.25
        %v1785 = vsub.f32 %v761, 0.25
        %v1786 = vsub.f32 %v762, 0.25
        %v1787 = vsub.f32 %v763, 0.25
        %v1788 = vsub.f32 %v764, 0.25
        %v1789 = vsub.f32 %v765, 0.25
        %v1790 = vsub.f32 %v766, 0.25
        %v1791 = vsub.f32 %v767, 0.25
        %v1792 = vsub.f32 %v768, 0.25
        %v1793 = vsub.f32 %v769, 0.25
        %v1794 = vsub.f32 %v770, 0.25
        %v1795 = vsub.f32 %v771, 0.25
        %v1796 = vsub.f32 %v772, 0.25
        %v1797 = vsub.f32 %v773, 0.25
        %v1798 = vsub.f32 %v774, 0.25
        %v1799 = vsub.f32 %v775, 0.25
        %v1800 = vsub.f32 %v776, 0.25
        %v1801 = vsub.f32 %v777, 0.25
        %v1802 = vsub.f32 %v778, 0.25
        %v1803 = vsub.f32 %v779, 0.25
        %v1804 = vsub.f32 %v780, 0.25
        %v1805 = vsub.f32 %v781, 0.25
        %v1806 = vsub.f32 %v782, 0.25
        %v1807 = vsub.f32 %v783, 0.25
        %v1808 = vsub.f32 %v784, 0.25
        %v1809 = vsub.f32 %v785, 0.25
        %v1810 = vsub.f32 %v786, 0.25
        %v1811 = vsub.f32 %v787, 0.25
        %v1812 = vsub.f32 %v788, 0.25
        %v1813 = vsub.f32 %v789, 0.25
        %v1814 = vsub.f32 %v790, 0.25
        %v1815 = vsub.f32 %v791, 0.25
        %v1816 = vsub.f32 %v792, 0.25
        %v1817 = vsub.f32 %v793, 0.25
        %v1818 = vsub.f32 %v794, 0.25
        %v1819 = vsub.f32 %v795, 0.25
        %v1820 = vsub.f32 %v796, 0.25
        %v1821 = vsub.f32 %v797, 0.25
        %v1822 = vsub.f32 %v798, 0.25
        %v1823 = vsub.f32 %v799, 0.25
        %v1824 = vsub.f32 %v800, 0.25
        %v1825 = vsub.f32 %v801, 0.25
        %v1826 = vsub.f32 %v802, 0.25
        %v1827 = vsub.f32 %v803, 0.25
        %v1828 = vsub.f32 %v804, 0.25
        %v1829 = vsub.f32 %v805, 0.25
        %v1830 = vsub.f32 %v806, 0.25
        %v1831 = vsub.f32 %v807, 0.25
        %v1832 = vsub.f32 %v808, 0.25
        %v1833 = vsub.f32 %v809, 0.25
        %v1834 = vsub.f32 %v810, 0.25
        %v1835 = vsub.f32 %v811, 0.25
        %v1836 = vsub.f32 %v812, 0.25
        %v1837 = vsub.f32 %v813, 0.25
        %v1838 = vsub.f32 %v814, 0.25
        %v1839 = vsub.f32 %v815, 0.25
        %v1840 = vsub.f32 %v816, 0.25
        %v1841 = vsub.f32 %v817, 0.25
        %v1842 = vsub.f32 %v818, 0.25
        %v1843 = vsub.f32 %v819, 0.25
        %v1844 = vsub.f32 %v820, 0.25
        %v1845 = vsub.f32 %v821, 0.25
        %v1846 = vsub.f32 %v822, 0.25
        %v1847 = vsub.f32 %v823, 0.25
        %v1848 = vsub.f32 %v824, 0.25
        %v1849 = vsub.f32 %v825, 0.25
        %v1850 = vsub.f32 %v826, 0.25
        %v1851 = vsub.f32 %v827, 0.25
        %v1852 = vsub.f32 %v828, 0.25
        %v1853 = vsub.f32 %v829, 0.25
        %v1854 = vsub.f32 %v830, 0.25
        %v1855 = vsub.f32 %v831, 0.25
        %v1856 = vsub.f32 %v832, 0.25
        %v1857 = vsub.f32 %v833, 0.25
        %v1858 = vsub.f32 %v834, 0.25
        %v1859 = vsub.f32 %v835, 0.25
        %v1860 = vsub.f32 %v836, 0.25
        %v1861 = vsub.f32 %v837, 0.25
        %v1862 = vsub.f32 %v838, 0.25
        %v1863 = vsub.f32 %v839, 0.25
        %v1864 = vsub.f32 %v840, 0.25
        %v1865 = vsub.f32 %v841, 0.25
        %v1866 = vsub.f32 %v842, 0.25
        %v1867 = vsub.f32 %v843, 0.25
        %v1868 = vsub.f32 %v844, 0.25
        %v1869 = vsub.f32 %v845, 0.25
        %v1870 = vsub.f32 %v846, 0.25
        %v1871 = vsub.f32 %v847, 0.25
        %v1872 = vsub.f32 %v848, 0.25
        %v1873 = vsub.f32 %v849, 0.25
        %v1874 = vsub.f32 %v850, 0.25
        %v1875 = vsub.f32 %v851, 0.25
        %v1876 = vsub.f32 %v852, 0.25
        %v1877 = vsub.f32 %v853, 0.25
        %v1878 = vsub.f32 %v854, 0.25
        %v1879 = vsub.f32 %v855, 0.25
        %v1880 = vsub.f32 %v856, 0.25
        %v1881 = vsub.f32 %v857, 0.25
        %v1882 = vsub.f32 %v858, 0.25
        %v1883 = vsub.f32 %v859, 0.25
        %v1884 = vsub.f32 %v860, 0.25
        %v1885 = vsub.f32 %v861, 0.25
        %v1886 = vsub.f32 %v862, 0.25
        %v1887 = vsub.f32 %v863, 0.25
        %v1888 = vsub.f32 %v864, 0.25
        %v1889 = vsub.f32 %v865, 0.25
        %v1890 = vsub.f32 %v866, 0.25
        %v1891 = vsub.f32 %v867, 0.25
        %v1892 = vsub.f32 %v868, 0.25
        %v1893 = vsub.f32 %v869, 0.25
        %v1894 = vsub.f32 %v870, 0.25
        %v1895 = vsub.f32 %v871, 0.25
        %v1896 = vsub.f32 %v872, 0.25
        %v1897 = vsub.f32 %v873, 0.25
        %v1898 = vsub.f32 %v874, 0.25
        %v1899 = vsub.f32 %v875, 0.25
        %v1900 = vsub.f32 %v876, 0.25
        %v1901 = vsub.f32 %v877, 0.25
        %v1902 = vsub.f32 %v878, 0.25
        %v1903 = vsub.f32 %v879, 0.25
        %v1904 = vsub.f32 %v880, 0.25
        %v1905 = vsub.f32 %v881, 0.25
        %v1906 = vsub.f32 %v882, 0.25
        %v1907 = vsub.f32 %v883, 0.25
        %v1908 = vsub.f32 %v884, 0.25
        %v1909 = vsub.f32 %v885, 0.25
        %v1910 = vsub.f32 %v886, 0.25
        %v1911 = vsub.f32 %v887, 0.25
        %v1912 = vsub.f32 %v888, 0.25
        %v1913 = vsub.f32 %v889, 0.25
        %v1914 = vsub.f32 %v890, 0.25
        %v1915 = vsub.f32 %v891, 0.25
        %v1916 = vsub.f32 %v892, 0.25
        %v1917 = vsub.f32 %v893, 0.25
        %v1918 = vsub.f32 %v894, 0.25
        %v1919 = vsub.f32 %v895, 0.25
        %v1920 = vsub.f32 %v896, 0.25
        %v1921 = vsub.f32 %v897, 0.25
        %v1922 = vsub.f32 %v898, 0.25
        %v1923 = vsub.f32 %v899, 0.25
        %v1924 = vsub.f32 %v900, 0.25
        %v1925 = vsub.f32 %v901, 0.25
        %v1926 = vsub.f32 %v902, 0.25
        %v1927 = vsub.f32 %v903, 0.25
        %v1928 = vsub.f32 %v904, 0.25
        %v1929 = vsub.f32 %v905, 0.25
        %v1930 = vsub.f32 %v906, 0.25
        %v1931 = vsub.f32 %v907, 0.25
        %v1932 = vsub.f32 %v908, 0.25
        %v1933 = vsub.f32 %v909, 0.25
        %v1934 = vsub.f32 %v910, 0.25
        %v1935 = vsub.f32 %v911, 0.25
        %v1936 = vsub.f32 %v912, 0.25
        %v1937 = vsub.f32 %v913, 0.25
        %v1938 = vsub.f32 %v914, 0.25
        %v1939 = vsub.f32 %v915, 0.25
        %v1940 = vsub.f32 %v916, 0.25
        %v1941 = vsub.f32 %v917, 0.25
        %v1942 = vsub.f32 %v918, 0.25
        %v1943 = vsub.f32 %v919, 0.25
        %v1944 = vsub.f32 %v920, 0.25
        %v1945 = vsub.f32 %v921, 0.25
        %v1946 = vsub.f32 %v922, 0.25
        %v1947 = vsub.f32 %v923, 0.25
        %v1948 = vsub.f32 %v924, 0.25
        %v1949 = vsub.f32 %v925, 0.25
        %v1950 = vsub.f32 %v926, 0.25
        %v1951 = vsub.f32 %v927, 0.25
        %v1952 = vsub.f32 %v928, 0.25
        %v1953 = vsub.f32 %v929, 0.25
        %v1954 = vsub.f32 %v930, 0.25
        %v1955 = vsub.f32 %v931, 0.25
        %v1956 = vsub.f32 %v932, 0.25
        %v1957 = vsub.f32 %v933, 0.25
        %v1958 = vsub.f32 %v934, 0.25
        %v1959 = vsub.f32 %v935, 0.25
        %v1960 = vsub.f32 %v936, 0.25
        %v1961 = vsub.f32 %v937, 0.25
        %v1962 = vsub.f32 %v938, 0.25
        %v1963 = vsub.f32 %v939, 0.25
        %v1964 = vsub.f32 %v940, 0.25
        %v1965 = vsub.f32 %v941, 0.25
        %v1966 = vsub.f32 %v942, 0.25
        %v1967 = vsub.f32 %v943, 0.25
        %v1968 = vsub.f32 %v944, 0.25
        %v1969 = vsub.f32 %v945, 0.25
        %v1970 = vsub.f32 %v946, 0.25
        %v1971 = vsub.f32 %v947, 0.25
        %v1972 = vsub.f32 %v948, 0.25
        %v1973 = vsub.f32 %v949, 0.25
        %v1974 = vsub.f32 %v950, 0.25
        %v1975 = vsub.f32 %v951, 0.25
        %v1976 = vsub.f32 %v952, 0.25
        %v1977 = vsub.f32 %v953, 0.25
        %v1978 = vsub.f32 %v954, 0.25
        %v1979 = vsub.f32 %v955, 0.25
        %v1980 = vsub.f32 %v956, 0.25
        %v1981 = vsub.f32 %v957, 0.25
        %v1982 = vsub.f32 %v958, 0.25
        %v1983 = vsub.f32 %v959, 0.25
        %v1984 = vsub.f32 %v960, 0.25
        %v1985 = vsub.f32 %v961, 0.25
        %v1986 = vsub.f32 %v962, 0.25
        %v1987 = vsub.f32 %v963, 0.25
        %v1988 = vsub.f32 %v964, 0.25
        %v1989 = vsub.f32 %v965, 0.25
        %v1990 = vsub.f32 %v966, 0.25
        %v1991 = vsub.f32 %v967, 0.25
        %v1992 = vsub.f32 %v968, 0.25
        %v1993 = vsub.f32 %v969, 0.25
        %v1994 = vsub.f32 %v970, 0.25
        %v1995 = vsub.f32 %v971, 0.25
        %v1996 = vsub.f32 %v972, 0.25
        %v1997 = vsub.f32 %v973, 0.25
        %v1998 = vsub.f32 %v974, 0.25
        %v1999 = vsub.f32 %v975, 0.25
        %v2000 = vsub.f32 %v976, 0.25
        %v2001 = vsub.f32 %v977, 0.25
        %v2002 = vsub.f32 %v978, 0.25
        %v2003 = vsub.f32 %v979, 0.25
        %v2004 = vsub.f32 %v980, 0.25
        %v2005 = vsub.f32 %v981, 0.25
        %v2006 = vsub.f32 %v982, 0.25
        %v2007 = vsub.f32 %v983, 0.25
        %v2008 = vsub.f32 %v984, 0.25
        %v2009 = vsub.f32 %v985, 0.25
        %v2010 = vsub.f32 %v986, 0.25
        %v2011 = vsub.f32 %v987, 0.25
        %v2012 = vsub.f32 %v988, 0.25
        %v2013 = vsub.f32 %v989, 0.25
        %v2014 = vsub.f32 %v990, 0.25
        %v2015 = vsub.f32 %v991, 0.25
        %v2016 = vsub.f32 %v992, 0.25
        %v2017 = vsub.f32 %v993, 0.25
        %v2018 = vsub.f32 %v994, 0.25
        %v2019 = vsub.f32 %v995, 0.25
        %v2020 = vsub.f32 %v996, 0.25
        %v2021 = vsub.f32 %v997, 0.25
        %v2022 = vsub.f32 %v998, 0.25
        %v2023 = vsub.f32 %v999, 0.25
        %v2024 = vsub.f32 %v1000, 0.25
        %v2025 = vsub.f32 %v1001, 0.25
        %v2026 = vsub.f32 %v1002, 0.25
        %v2027 = vsub.f32 %v1003, 0.25
        %v2028 = vsub.f32 %v1004, 0.25
        %v2029 = vsub.f32 %v1005, 0.25
        %v2030 = vsub.f32 %v1006, 0.25
        %v2031 = vsub.f32 %v1007, 0.25
        %v2032 = vsub.f32 %v1008, 0.25
        %v2033 = vsub.f32 %v1009, 0.25
        %v2034 = vsub.f32 %v1010, 0.25
        %v2035 = vsub.f32 %v1011, 0.25
        %v2036 = vsub.f32 %v1012, 0.25
        %v2037 = vsub.f32 %v1013, 0.25
        %v2038 = vsub.f32 %v1014, 0.25
        %v2039 = vsub.f32 %v1015, 0.25
        %v2040 = vsub.f32 %v1016, 0.25
        %v2041 = vsub.f32 %v1017, 0.25
        %v2042 = vsub.f32 %v1018, 0.25
        %v2043 = vsub.f32 %v1019, 0.25
        %v2044 = vsub.f32 %v1020, 0.25
        %v2045 = vsub.f32 %v1021, 0.25
        %v2046 = vsub.f32 %v1022, 0.25
        %v2047 = vsub.f32 %v1023, 0.25
        %v2048 = vsub.f32 %v1024, 0.25
        %v2049 = vsub.f32 %v1025, 0.25
        %v2050 = vsub.f32 %v1026, 0.25
        %v2051 = vsub.f32 %v1027, 0.25
        %v2052 = vsub.f32 %v1028, 0.25
        %v2053 = vsub.f32 %v1029, 0.25
        %v2054 = vsub.f32 %v1030, 0.25
        %v2055 = vsub.f32 %v1031, 0.25
        %v2056 = vsub.f32 %v1032, 0.25
        %v2057 = vsub.f32 %v1033, 0.25
        %v2058 = vsub.f32 %v1034, 0.25
        %v2059 = vsub.f32 %v1035, 0.25
        %v2060 = vsub.f32 %v1036, 0.25
        %v2061 = vsub.f32 %v1037, 0.25
        %v2062 = vsub.f32 %v1038, 0.25
        %v2063 = vsub.f32 %v1039, 0.25
        %v2064 = vsub.f32 %v1040, 0.25
        %v2065 = vsub.f32 %v1041, 0.25
        %v2066 = vsub.f32 %v1042, 0.25
        %v2067 = vsub.f32 %v1043, 0.25
        %v2068 = vsub.f32 %v1044, 0.25
        %v2069 = vsub.f32 %v1045, 0.25
        %v2070 = vsub.f32 %v1046, 0.25
        %v2071 = vsub.f32 %v1047, 0.25
        %v2072 = vsub.f32 %v1048, 0.25
        %v2073 = vsub.f32 %v1049, 0.25
        %v2074 = vsub.f32 %v1050, 0.25
        %v2075 = vsub.f32 %v1051, 0.25
        %v2076 = vsub.f32 %v1052, 0.25
        %v2077 = vsub.f32 %v1053, 0.25
        %v2078 = vsub.f32 %v1054, 0.25
        %v2079 = vsub.f32 %v1055, 0.25
        %v2080 = vsub.f32 %v1056, 0.25
        %v2081 = vsub.f32 %v1057, 0.25
        %v2082 = vsub.f32 %v1058, 0.25
        %v2083 = vsub.f32 %v1059, 0.25
        %v2084 = vsub.f32 %v1060, 0.25
        %v2085 = vsub.f32 %v1061, 0.25
        %v2086 = vsub.f32 %v1062, 0.25
        %v2087 = vsub.f32 %v1063, 0.25
        %v2088 = vsub.f32 %v1064, 0.25
        %v2089 = vsub.f32 %v1065, 0.25
        %v2090 = vsub.f32 %v1066, 0.25
        %v2091 = vsub.f32 %v1067, 0.25
        %v2092 = vsub.f32 %v1068, 0.25
        %v2093 = vsub.f32 %v1069, 0.25
        %v2094 = vsub.f32 %v1070, 0.25
        %v2095 = vsub.f32 %v1071, 0.25
        %v2096 = vsub.f32 %v1072, 0.25
        %v2097 = vsub.f32 %v1073, 0.25
        %v2098 = vsub.f32 %v1074, 0.25
        %v2099 = vsub.f32 %v1075, 0.25
        %v2100 = vsub.f32 %v1076, 0.25
        %v2101 = vsub.f32 %v1077, 0.25
        %v2102 = vsub.f32 %v1078, 0.25
        %v2103 = vsub.f32 %v1079, 0.25
        %v2104 = vsub.f32 %v1080, 0.25
        %v2105 = vsub.f32 %v1081, 0.25
        %v2106 = vsub.f32 %v1082, 0.25
        %v2107 = vsub.f32 %v1083, 0.25
        %v2108 = vsub.f32 %v1084, 0.25
        %v2109 = vsub.f32 %v1085, 0.25
        %v2110 = vsub.f32 %v1086, 0.25
        %v2111 = vsub.f32 %v1087, 0.25
        %v2112 = vsub.f32 %v1088, 0.25
        %v2113 = vsub.f32 %v1089, 0.25
        %v2114 = vsub.f32 %v1090, 0.25
        %v2115 = vsub.f32 %v1091, 0.25
        %v2116 = vsub.f32 %v1092, 0.25
        %v2117 = vsub.f32 %v1093, 0.25
        %v2118 = vsub.f32 %v1094, 0.25
        %v2119 = vsub.f32 %v1095, 0.25
        %v2120 = vsub.f32 %v1096, 0.25
        %v2121 = vsub.f32 %v1097, 0.25
        %v2122 = vsub.f32 %v1098, 0.25
        %v2123 = vsub.f32 %v1099, 0.25
        %v2124 = vsub.f32 %v1100, 0.25
        %v2125 = vsub.f32 %v1101, 0.25
        %v2126 = vsub.f32 %v1102, 0.25
        %v2127 = vsub.f32 %v1103, 0.25
        %v2128 = vsub.f32 %v1104, 0.25
        %v2129 = vsub.f32 %v1105, 0.25
        %v2130 = vsub.f32 %v1106, 0.25
        %v2131 = vsub.f32 %v1107, 0.25
        %v2132 = vsub.f32 %v1108, 0.25
        %v2133 = vsub.f32 %v1109, 0.25
        %v2134 = vsub.f32 %v1110, 0.25
        %v2135 = vsub.f32 %v1111, 0.25
        %v2136 = vsub.f32 %v1112, 0.25
        %v2137 = vsub.f32 %v1113, 0.25
        %v2138 = vsub.f32 %v1114, 0.25
        %v2139 = vsub.f32 %v1115, 0.25
        %v2140 = vsub.f32 %v1116, 0.25
        %v2141 = vsub.f32 %v1117, 0.25
        %v2142 = vsub.f32 %v1118, 0.25
        %v2143 = vsub.f32 %v1119, 0.25
        %v2144 = vsub.f32 %v1120, 0.25
        %v2145 = vsub.f32 %v1121, 0.25
        %v2146 = vsub.f32 %v1122, 0.25
        %v2147 = vsub.f32 %v1123, 0.25
        %v2148 = vsub.f32 %v1124, 0.25
        %v2149 = vsub.f32 %v1125, 0.25
        %v2150 = vsub.f32 %v1126, 0.25
        %v2151 = vsub.f32 %v1127, 0.25
        %v2152 = vsub.f32 %v1128, 0.25
        %v2153 = vsub.f32 %v1129, 0.25
        %v2154 = vsub.f32 %v1130, 0.25
        %v2155 = vsub.f32 %v1131, 0.25
        %v2156 = vsub.f32 %v1132, 0.25
        %v2157 = vsub.f32 %v1133, 0.25
        %v2158 = vsub.f32 %v1134, 0.25
        %v2159 = vsub.f32 %v1135, 0.25
        %v2160 = vsub.f32 %v1136, 0.25
        %v2161 = vsub.f32 %v1137, 0.25
        %v2162 = vsub.f32 %v1138, 0.25
        %v2163 = vsub.f32 %v1139, 0.25
        %v2164 = vsub.f32 %v1140, 0.25
        %v2165 = vsub.f32 %v1141, 0.25
        %v2166 = vsub.f32 %v1142, 0.25
        %v2167 = vsub.f32 %v1143, 0.25
        %v2168 = vsub.f32 %v1144, 0.25
        %v2169 = vsub.f32 %v1145, 0.25
        %v2170 = vsub.f32 %v1146, 0.25
        %v2171 = vsub.f32 %v1147, 0.25
        %v2172 = vsub.f32 %v1148, 0.25
        %v2173 = vsub.f32 %v1149, 0.25
        %v2174 = vsub.f32 %v1150, 0.25
        %v2175 = vsub.f32 %v1151, 0.25
        %v2176 = vsub.f32 %v1152, 0.25
        %v2177 = vsub.f32 %v1153, 0.25
        %v2178 = vsub.f32 %v1154, 0.25
        %v2179 = vsub.f32 %v1155, 0.25
        %v2180 = vsub.f32 %v1156, 0.25
        %v2181 = vsub.f32 %v1157, 0.25
        %v2182 = vsub.f32 %v1158, 0.25
        %v2183 = vsub.f32 %v1159, 0.25
        %v2184 = vsub.f32 %v1160, 0.25
        %v2185 = vsub.f32 %v1161, 0.25
        %v2186 = vsub.f32 %v1162, 0.25
        %v2187 = vsub.f32 %v1163, 0.25
        %v2188 = vsub.f32 %v1164, 0.25
        %v2189 = vsub.f32 %v1165, 0.25
        %v2190 = vsub.f32 %v1166, 0.25
        %v2191 = vsub.f32 %v1167, 0.25
        %v2192 = vsub.f32 %v1168, 0.25
        %v2193 = vsub.f32 %v1169, 0.25
        %v2194 = vsub.f32 %v1170, 0.25
        %v2195 = vsub.f32 %v1171, 0.25
        %v2196 = vsub.f32 %v1172, 0.25
        %v2197 = vsub.f32 %v1173, 0.25
        %v2198 = vsub.f32 %v1174, 0.25
        %v2199 = vsub.f32 %v1175, 0.25
        %v2200 = vsub.f32 %v1176, 0.25
        %v2201 = vsub.f32 %v1177, 0.25
        %v2202 = vsub.f32 %v1178, 0.25
        %v2203 = vmax.f32 %v1179, 0.0
        %v2204 = vmax.f32 %v1180, 0.0
        %v2205 = vmax.f32 %v1181, 0.0
        %v2206 = vmax.f32 %v1182, 0.0
        %v2207 = vmax.f32 %v1183, 0.0
        %v2208 = vmax.f32 %v1184, 0.0
        %v2209 = vmax.f32 %v1185, 0.0
        %v2210 = vmax.f32 %v1186, 0.0
        %v2211 = vmax.f32 %v1187, 0.0
        %v2212 = vmax.f32 %v1188, 0.0
        %v2213 = vmax.f32 %v1189, 0.0
        %v2214 = vmax.f32 %v1190, 0.0
        %v2215 = vmax.f32 %v1191, 0.0
        %v2216 = vmax.f32 %v1192, 0.0
        %v2217 = vmax.f32 %v1193, 0.0
        %v2218 = vmax.f32 %v1194, 0.0
        %v2219 = vmax.f32 %v1195, 0.0
        %v2220 = vmax.f32 %v1196, 0.0
        %v2221 = vmax.f32 %v1197, 0.0
        %v2222 = vmax.f32 %v1198, 0.0
        %v2223 = vmax.f32 %v1199, 0.0
        %v2224 = vmax.f32 %v1200, 0.0
        %v2225 = vmax.f32 %v1201, 0.0
        %v2226 = vmax.f32 %v1202, 0.0
        %v2227 = vmax.f32 %v1203, 0.0
        %v2228 = vmax.f32 %v1204, 0.0
        %v2229 = vmax.f32 %v1205, 0.0
        %v2230 = vmax.f32 %v1206, 0.0
        %v2231 = vmax.f32 %v1207, 0.0
        %v2232 = vmax.f32 %v1208, 0.0
        %v2233 = vmax.f32 %v1209, 0.0
        %v2234 = vmax.f32 %v1210, 0.0
        %v2235 = vmax.f32 %v1211, 0.0
        %v2236 = vmax.f32 %v1212, 0.0
        %v2237 = vmax.f32 %v1213, 0.0
        %v2238 = vmax.f32 %v1214, 0.0
        %v2239 = vmax.f32 %v1215, 0.0
        %v2240 = vmax.f32 %v1216, 0.0
        %v2241 = vmax.f32 %v1217, 0.0
        %v2242 = vmax.f32 %v1218, 0.0
        %v2243 = vmax.f32 %v1219, 0.0
        %v2244 = vmax.f32 %v1220, 0.0
        %v2245 = vmax.f32 %v1221, 0.0
        %v2246 = vmax.f32 %v1222, 0.0
        %v2247 = vmax.f32 %v1223, 0.0
        %v2248 = vmax.f32 %v1224, 0.0
        %v2249 = vmax.f32 %v1225, 0.0
        %v2250 = vmax.f32 %v1226, 0.0
        %v2251 = vmax.f32 %v1227, 0.0
        %v2252 = vmax.f32 %v1228, 0.0
        %v2253 = vmax.f32 %v1229, 0.0
        %v2254 = vmax.f32 %v1230, 0.0
        %v2255 = vmax.f32 %v1231, 0.0
        %v2256 = vmax.f32 %v1232, 0.0
        %v2257 = vmax.f32 %v1233, 0.0
        %v2258 = vmax.f32 %v1234, 0.0
        %v2259 = vmax.f32 %v1235, 0.0
        %v2260 = vmax.f32 %v1236, 0.0
        %v2261 = vmax.f32 %v1237, 0.0
        %v2262 = vmax.f32 %v1238, 0.0
        %v2263 = vmax.f32 %v1239, 0.0
        %v2264 = vmax.f32 %v1240, 0.0
        %v2265 = vmax.f32 %v1241, 0.0
        %v2266 = vmax.f32 %v1242, 0.0
        %v2267 = vmax.f32 %v1243, 0.0
        %v2268 = vmax.f32 %v1244, 0.0
        %v2269 = vmax.f32 %v1245, 0.0
        %v2270 = vmax.f32 %v1246, 0.0
        %v2271 = vmax.f32 %v1247, 0.0
        %v2272 = vmax.f32 %v1248, 0.0
        %v2273 = vmax.f32 %v1249, 0.0
        %v2274 = vmax.f32 %v1250, 0.0
        %v2275 = vmax.f32 %v1251, 0.0
        %v2276 = vmax.f32 %v1252, 0.0
        %v2277 = vmax.f32 %v1253, 0.0
        %v2278 = vmax.f32 %v1254, 0.0
        %v2279 = vmax.f32 %v1255, 0.0
        %v2280 = vmax.f32 %v1256, 0.0
        %v2281 = vmax.f32 %v1257, 0.0
        %v2282 = vmax.f32 %v1258, 0.0
        %v2283 = vmax.f32 %v1259, 0.0
        %v2284 = vmax.f32 %v1260, 0.0
        %v2285 = vmax.f32 %v1261, 0.0
        %v2286 = vmax.f32 %v1262, 0.0
        %v2287 = vmax.f32 %v1263, 0.0
        %v2288 = vmax.f32 %v1264, 0.0
        %v2289 = vmax.f32 %v1265, 0.0
        %v2290 = vmax.f32 %v1266, 0.0
        %v2291 = vmax.f32 %v1267, 0.0
        %v2292 = vmax.f32 %v1268, 0.0
        %v2293 = vmax.f32 %v1269, 0.0
        %v2294 = vmax.f32 %v1270, 0.0
        %v2295 = vmax.f32 %v1271, 0.0
        %v2296 = vmax.f32 %v1272, 0.0
        %v2297 = vmax.f32 %v1273, 0.0
        %v2298 = vmax.f32 %v1274, 0.0
        %v2299 = vmax.f32 %v1275, 0.0
        %v2300 = vmax.f32 %v1276, 0.0
        %v2301 = vmax.f32 %v1277, 0.0
        %v2302 = vmax.f32 %v1278, 0.0
        %v2303 = vmax.f32 %v1279, 0.0
        %v2304 = vmax.f32 %v1280, 0.0
        %v2305 = vmax.f32 %v1281, 0.0
        %v2306 = vmax.f32 %v1282, 0.0
        %v2307 = vmax.f32 %v1283, 0.0
        %v2308 = vmax.f32 %v1284, 0.0
        %v2309 = vmax.f32 %v1285, 0.0
        %v2310 = vmax.f32 %v1286, 0.0
        %v2311 = vmax.f32 %v1287, 0.0
        %v2312 = vmax.f32 %v1288, 0.0
        %v2313 = vmax.f32 %v1289, 0.0
        %v2314 = vmax.f32 %v1290, 0.0
        %v2315 = vmax.f32 %v1291, 0.0
        %v2316 = vmax.f32 %v1292, 0.0
        %v2317 = vmax.f32 %v1293, 0.0
        %v2318 = vmax.f32 %v1294, 0.0
        %v2319 = vmax.f32 %v1295, 0.0
        %v2320 = vmax.f32 %v1296, 0.0
        %v2321 = vmax.f32 %v1297, 0.0
        %v2322 = vmax.f32 %v1298, 0.0
        %v2323 = vmax.f32 %v1299, 0.0
        %v2324 = vmax.f32 %v1300, 0.0
        %v2325 = vmax.f32 %v1301, 0.0
        %v2326 = vmax.f32 %v1302, 0.0
        %v2327 = vmax.f32 %v1303, 0.0
        %v2328 = vmax.f32 %v1304, 0.0
        %v2329 = vmax.f32 %v1305, 0.0
        %v2330 = vmax.f32 %v1306, 0.0
        %v2331 = vmax.f32 %v1307, 0.0
        %v2332 = vmax.f32 %v1308, 0.0
        %v2333 = vmax.f32 %v1309, 0.0
        %v2334 = vmax.f32 %v1310, 0.0
        %v2335 = vmax.f32 %v1311, 0.0
        %v2336 = vmax.f32 %v1312, 0.0
        %v2337 = vmax.f32 %v1313, 0.0
        %v2338 = vmax.f32 %v1314, 0.0
        %v2339 = vmax.f32 %v1315, 0.0
        %v2340 = vmax.f32 %v1316, 0.0
        %v2341 = vmax.f32 %v1317, 0.0
        %v2342 = vmax.f32 %v1318, 0.0
        %v2343 = vmax.f32 %v1319, 0.0
        %v2344 = vmax.f32 %v1320, 0.0
        %v2345 = vmax.f32 %v1321, 0.0
        %v2346 = vmax.f32 %v1322, 0.0
        %v2347 = vmax.f32 %v1323, 0.0
        %v2348 = vmax.f32 %v1324, 0.0
        %v2349 = vmax.f32 %v1325, 0.0
        %v2350 = vmax.f32 %v1326, 0.0
        %v2351 = vmax.f32 %v1327, 0.0
        %v2352 = vmax.f32 %v1328, 0.0
        %v2353 = vmax.f32 %v1329, 0.0
        %v2354 = vmax.f32 %v1330, 0.0
        %v2355 = vmax.f32 %v1331, 0.0
        %v2356 = vmax.f32 %v1332, 0.0
        %v2357 = vmax.f32 %v1333, 0.0
        %v2358 = vmax.f32 %v1334, 0.0
        %v2359 = vmax.f32 %v1335, 0.0
        %v2360 = vmax.f32 %v1336, 0.0
        %v2361 = vmax.f32 %v1337, 0.0
        %v2362 = vmax.f32 %v1338, 0.0
        %v2363 = vmax.f32 %v1339, 0.0
        %v2364 = vmax.f32 %v1340, 0.0
        %v2365 = vmax.f32 %v1341, 0.0
        %v2366 = vmax.f32 %v1342, 0.0
        %v2367 = vmax.f32 %v1343, 0.0
        %v2368 = vmax.f32 %v1344, 0.0
        %v2369 = vmax.f32 %v1345, 0.0
        %v2370 = vmax.f32 %v1346, 0.0
        %v2371 = vmax.f32 %v1347, 0.0
        %v2372 = vmax.f32 %v1348, 0.0
        %v2373 = vmax.f32 %v1349, 0.0
        %v2374 = vmax.f32 %v1350, 0.0
        %v2375 = vmax.f32 %v1351, 0.0
        %v2376 = vmax.f32 %v1352, 0.0
        %v2377 = vmax.f32 %v1353, 0.0
        %v2378 = vmax.f32 %v1354, 0.0
        %v2379 = vmax.f32 %v1355, 0.0
        %v2380 = vmax.f32 %v1356, 0.0
        %v2381 = vmax.f32 %v1357, 0.0
        %v2382 = vmax.f32 %v1358, 0.0
        %v2383 = vmax.f32 %v1359, 0.0
        %v2384 = vmax.f32 %v1360, 0.0
        %v2385 = vmax.f32 %v1361, 0.0
        %v2386 = vmax.f32 %v1362, 0.0
        %v2387 = vmax.f32 %v1363, 0.0
        %v2388 = vmax.f32 %v1364, 0.0
        %v2389 = vmax.f32 %v1365, 0.0
        %v2390 = vmax.f32 %v1366, 0.0
        %v2391 = vmax.f32 %v1367, 0.0
        %v2392 = vmax.f32 %v1368, 0.0
        %v2393 = vmax.f32 %v1369, 0.0
        %v2394 = vmax.f32 %v1370, 0.0
        %v2395 = vmax.f32 %v1371, 0.0
        %v2396 = vmax.f32 %v1372, 0.0
        %v2397 = vmax.f32 %v1373, 0.0
        %v2398 = vmax.f32 %v1374, 0.0
        %v2399 = vmax.f32 %v1375, 0.0
        %v2400 = vmax.f32 %v1376, 0.0
        %v2401 = vmax.f32 %v1377, 0.0
        %v2402 = vmax.f32 %v1378, 0.0
        %v2403 = vmax.f32 %v1379, 0.0
        %v2404 = vmax.f32 %v1380, 0.0
        %v2405 = vmax.f32 %v1381, 0.0
        %v2406 = vmax.f32 %v1382, 0.0
        %v2407 = vmax.f32 %v1383, 0.0
        %v2408 = vmax.f32 %v1384, 0.0
        %v2409 = vmax.f32 %v1385, 0.0
        %v2410 = vmax.f32 %v1386, 0.0
        %v2411 = vmax.f32 %v1387, 0.0
        %v2412 = vmax.f32 %v1388, 0.0
        %v2413 = vmax.f32 %v1389, 0.0
        %v2414 = vmax.f32 %v1390, 0.0
        %v2415 = vmax.f32 %v1391, 0.0
        %v2416 = vmax.f32 %v1392, 0.0
        %v2417 = vmax.f32 %v1393, 0.0
        %v2418 = vmax.f32 %v1394, 0.0
        %v2419 = vmax.f32 %v1395, 0.0
        %v2420 = vmax.f32 %v1396, 0.0
        %v2421 = vmax.f32 %v1397, 0.0
        %v2422 = vmax.f32 %v1398, 0.0
        %v2423 = vmax.f32 %v1399, 0.0
        %v2424 = vmax.f32 %v1400, 0.0
        %v2425 = vmax.f32 %v1401, 0.0
        %v2426 = vmax.f32 %v1402, 0.0
        %v2427 = vmax.f32 %v1403, 0.0
        %v2428 = vmax.f32 %v1404, 0.0
        %v2429 = vmax.f32 %v1405, 0.0
        %v2430 = vmax.f32 %v1406, 0.0
        %v2431 = vmax.f32 %v1407, 0.0
        %v2432 = vmax.f32 %v1408, 0.0
        %v2433 = vmax.f32 %v1409, 0.0
        %v2434 = vmax.f32 %v1410, 0.0
        %v2435 = vmax.f32 %v1411, 0.0
        %v2436 = vmax.f32 %v1412, 0.0
        %v2437 = vmax.f32 %v1413, 0.0
        %v2438 = vmax.f32 %v1414, 0.0
        %v2439 = vmax.f32 %v1415, 0.0
        %v2440 = vmax.f32 %v1416, 0.0
        %v2441 = vmax.f32 %v1417, 0.0
        %v2442 = vmax.f32 %v1418, 0.0
        %v2443 = vmax.f32 %v1419, 0.0
        %v2444 = vmax.f32 %v1420, 0.0
        %v2445 = vmax.f32 %v1421, 0.0
        %v2446 = vmax.f32 %v1422, 0.0
        %v2447 = vmax.f32 %v1423, 0.0
        %v2448 = vmax.f32 %v1424, 0.0
        %v2449 = vmax.f32 %v1425, 0.0
        %v2450 = vmax.f32 %v1426, 0.0
        %v2451 = vmax.f32 %v1427, 0.0
        %v2452 = vmax.f32 %v1428, 0.0
        %v2453 = vmax.f32 %v1429, 0.0
        %v2454 = vmax.f32 %v1430, 0.0
        %v2455 = vmax.f32 %v1431, 0.0
        %v2456 = vmax.f32 %v1432, 0.0
        %v2457 = vmax.f32 %v1433, 0.0
        %v2458 = vmax.f32 %v1434, 0.0
        %v2459 = vmax.f32 %v1435, 0.0
        %v2460 = vmax.f32 %v1436, 0.0
        %v2461 = vmax.f32 %v1437, 0.0
        %v2462 = vmax.f32 %v1438, 0.0
        %v2463 = vmax.f32 %v1439, 0.0
        %v2464 = vmax.f32 %v1440, 0.0
        %v2465 = vmax.f32 %v1441, 0.0
        %v2466 = vmax.f32 %v1442, 0.0
        %v2467 = vmax.f32 %v1443, 0.0
        %v2468 = vmax.f32 %v1444, 0.0
        %v2469 = vmax.f32 %v1445, 0.0
        %v2470 = vmax.f32 %v1446, 0.0
        %v2471 = vmax.f32 %v1447, 0.0
        %v2472 = vmax.f32 %v1448, 0.0
        %v2473 = vmax.f32 %v1449, 0.0
        %v2474 = vmax.f32 %v1450, 0.0
        %v2475 = vmax.f32 %v1451, 0.0
        %v2476 = vmax.f32 %v1452, 0.0
        %v2477 = vmax.f32 %v1453, 0.0
        %v2478 = vmax.f32 %v1454, 0.0
        %v2479 = vmax.f32 %v1455, 0.0
        %v2480 = vmax.f32 %v1456, 0.0
        %v2481 = vmax.f32 %v1457, 0.0
        %v2482 = vmax.f32 %v1458, 0.0
        %v2483 = vmax.f32 %v1459, 0.0
        %v2484 = vmax.f32 %v1460, 0.0
        %v2485 = vmax.f32 %v1461, 0.0
        %v2486 = vmax.f32 %v1462, 0.0
        %v2487 = vmax.f32 %v1463, 0.0
        %v2488 = vmax.f32 %v1464, 0.0
        %v2489 = vmax.f32 %v1465, 0.0
        %v2490 = vmax.f32 %v1466, 0.0
        %v2491 = vmax.f32 %v1467, 0.0
        %v2492 = vmax.f32 %v1468, 0.0
        %v2493 = vmax.f32 %v1469, 0.0
        %v2494 = vmax.f32 %v1470, 0.0
        %v2495 = vmax.f32 %v1471, 0.0
        %v2496 = vmax.f32 %v1472, 0.0
        %v2497 = vmax.f32 %v1473, 0.0
        %v2498 = vmax.f32 %v1474, 0.0
        %v2499 = vmax.f32 %v1475, 0.0
        %v2500 = vmax.f32 %v1476, 0.0
        %v2501 = vmax.f32 %v1477, 0.0
        %v2502 = vmax.f32 %v1478, 0.0
        %v2503 = vmax.f32 %v1479, 0.0
        %v2504 = vmax.f32 %v1480, 0.0
        %v2505 = vmax.f32 %v1481, 0.0
        %v2506 = vmax.f32 %v1482, 0.0
        %v2507 = vmax.f32 %v1483, 0.0
        %v2508 = vmax.f32 %v1484, 0.0
        %v2509 = vmax.f32 %v1485, 0.0
        %v2510 = vmax.f32 %v1486, 0.0
        %v2511 = vmax.f32 %v1487, 0.0
        %v2512 = vmax.f32 %v1488, 0.0
        %v2513 = vmax.f32 %v1489, 0.0
        %v2514 = vmax.f32 %v1490, 0.0
        %v2515 = vmax.f32 %v1491, 0.0
        %v2516 = vmax.f32 %v1492, 0.0
        %v2517 = vmax.f32 %v1493, 0.0
        %v2518 = vmax.f32 %v1494, 0.0
        %v2519 = vmax.f32 %v1495, 0.0
        %v2520 = vmax.f32 %v1496, 0.0
        %v2521 = vmax.f32 %v1497, 0.0
        %v2522 = vmax.f32 %v1498, 0.0
        %v2523 = vmax.f32 %v1499, 0.0
        %v2524 = vmax.f32 %v1500, 0.0
        %v2525 = vmax.f32 %v1501, 0.0
        %v2526 = vmax.f32 %v1502, 0.0
        %v2527 = vmax.f32 %v1503, 0.0
        %v2528 = vmax.f32 %v1504, 0.0
        %v2529 = vmax.f32 %v1505, 0.0
        %v2530 = vmax.f32 %v1506, 0.0
        %v2531 = vmax.f32 %v1507, 0.0
        %v2532 = vmax.f32 %v1508, 0.0
        %v2533 = vmax.f32 %v1509, 0.0
        %v2534 = vmax.f32 %v1510, 0.0
        %v2535 = vmax.f32 %v1511, 0.0
        %v2536 = vmax.f32 %v1512, 0.0
        %v2537 = vmax.f32 %v1513, 0.0
        %v2538 = vmax.f32 %v1514, 0.0
        %v2539 = vmax.f32 %v1515, 0.0
        %v2540 = vmax.f32 %v1516, 0.0
        %v2541 = vmax.f32 %v1517, 0.0
        %v2542 = vmax.f32 %v1518, 0.0
        %v2543 = vmax.f32 %v1519, 0.0
        %v2544 = vmax.f32 %v1520, 0.0
        %v2545 = vmax.f32 %v1521, 0.0
        %v2546 = vmax.f32 %v1522, 0.0
        %v2547 = vmax.f32 %v1523, 0.0
        %v2548 = vmax.f32 %v1524, 0.0
        %v2549 = vmax.f32 %v1525, 0.0
        %v2550 = vmax.f32 %v1526, 0.0
        %v2551 = vmax.f32 %v1527, 0.0
        %v2552 = vmax.f32 %v1528, 0.0
        %v2553 = vmax.f32 %v1529, 0.0
        %v2554 = vmax.f32 %v1530, 0.0
        %v2555 = vmax.f32 %v1531, 0.0
        %v2556 = vmax.f32 %v1532, 0.0
        %v2557 = vmax.f32 %v1533, 0.0
        %v2558 = vmax.f32 %v1534, 0.0
        %v2559 = vmax.f32 %v1535, 0.0
        %v2560 = vmax.f32 %v1536, 0.0
        %v2561 = vmax.f32 %v1537, 0.0
        %v2562 = vmax.f32 %v1538, 0.0
        %v2563 = vmax.f32 %v1539, 0.0
        %v2564 = vmax.f32 %v1540, 0.0
        %v2565 = vmax.f32 %v1541, 0.0
        %v2566 = vmax.f32 %v1542, 0.0
        %v2567 = vmax.f32 %v1543, 0.0
        %v2568 = vmax.f32 %v1544, 0.0
        %v2569 = vmax.f32 %v1545, 0.0
        %v2570 = vmax.f32 %v1546, 0.0
        %v2571 = vmax.f32 %v1547, 0.0
        %v2572 = vmax.f32 %v1548, 0.0
        %v2573 = vmax.f32 %v1549, 0.0
        %v2574 = vmax.f32 %v1550, 0.0
        %v2575 = vmax.f32 %v1551, 0.0
        %v2576 = vmax.f32 %v1552, 0.0
        %v2577 = vmax.f32 %v1553, 0.0
        %v2578 = vmax.f32 %v1554, 0.0
        %v2579 = vmax.f32 %v1555, 0.0
        %v2580 = vmax.f32 %v1556, 0.0
        %v2581 = vmax.f32 %v1557, 0.0
        %v2582 = vmax.f32 %v1558, 0.0
        %v2583 = vmax.f32 %v1559, 0.0
        %v2584 = vmax.f32 %v1560, 0.0
        %v2585 = vmax.f32 %v1561, 0.0
        %v2586 = vmax.f32 %v1562, 0.0
        %v2587 = vmax.f32 %v1563, 0.0
        %v2588 = vmax.f32 %v1564, 0.0
        %v2589 = vmax.f32 %v1565, 0.0
        %v2590 = vmax.f32 %v1566, 0.0
        %v2591 = vmax.f32 %v1567, 0.0
        %v2592 = vmax.f32 %v1568, 0.0
        %v2593 = vmax.f32 %v1569, 0.0
        %v2594 = vmax.f32 %v1570, 0.0
        %v2595 = vmax.f32 %v1571, 0.0
        %v2596 = vmax.f32 %v1572, 0.0
        %v2597 = vmax.f32 %v1573, 0.0
        %v2598 = vmax.f32 %v1574, 0.0
        %v2599 = vmax.f32 %v1575, 0.0
        %v2600 = vmax.f32 %v1576, 0.0
        %v2601 = vmax.f32 %v1577, 0.0
        %v2602 = vmax.f32 %v1578, 0.0
        %v2603 = vmax.f32 %v1579, 0.0
        %v2604 = vmax.f32 %v1580, 0.0
        %v2605 = vmax.f32 %v1581, 0.0
        %v2606 = vmax.f32 %v1582, 0.0
        %v2607 = vmax.f32 %v1583, 0.0
        %v2608 = vmax.f32 %v1584, 0.0
        %v2609 = vmax.f32 %v1585, 0.0
        %v2610 = vmax.f32 %v1586, 0.0
        %v2611 = vmax.f32 %v1587, 0.0
        %v2612 = vmax.f32 %v1588, 0.0
        %v2613 = vmax.f32 %v1589, 0.0
        %v2614 = vmax.f32 %v1590, 0.0
        %v2615 = vmax.f32 %v1591, 0.0
        %v2616 = vmax.f32 %v1592, 0.0
        %v2617 = vmax.f32 %v1593, 0.0
        %v2618 = vmax.f32 %v1594, 0.0
        %v2619 = vmax.f32 %v1595, 0.0
        %v2620 = vmax.f32 %v1596, 0.0
        %v2621 = vmax.f32 %v1597, 0.0
        %v2622 = vmax.f32 %v1598, 0.0
        %v2623 = vmax.f32 %v1599, 0.0
        %v2624 = vmax.f32 %v1600, 0.0
        %v2625 = vmax.f32 %v1601, 0.0
        %v2626 = vmax.f32 %v1602, 0.0
        %v2627 = vmax.f32 %v1603, 0.0
        %v2628 = vmax.f32 %v1604, 0.0
        %v2629 = vmax.f32 %v1605, 0.0
        %v2630 = vmax.f32 %v1606, 0.0
        %v2631 = vmax.f32 %v1607, 0.0
        %v2632 = vmax.f32 %v1608, 0.0
        %v2633 = vmax.f32 %v1609, 0.0
        %v2634 = vmax.f32 %v1610, 0.0
        %v2635 = vmax.f32 %v1611, 0.0
        %v2636 = vmax.f32 %v1612, 0.0
        %v2637 = vmax.f32 %v1613, 0.0
        %v2638 = vmax.f32 %v1614, 0.0
        %v2639 = vmax.f32 %v1615, 0.0
        %v2640 = vmax.f32 %v1616, 0.0
        %v2641 = vmax.f32 %v1617, 0.0
        %v2642 = vmax.f32 %v1618, 0.0
        %v2643 = vmax.f32 %v1619, 0.0
        %v2644 = vmax.f32 %v1620, 0.0
        %v2645 = vmax.f32 %v1621, 0.0
        %v2646 = vmax.f32 %v1622, 0.0
        %v2647 = vmax.f32 %v1623, 0.0
        %v2648 = vmax.f32 %v1624, 0.0
        %v2649 = vmax.f32 %v1625, 0.0
        %v2650 = vmax.f32 %v1626, 0.0
        %v2651 = vmax.f32 %v1627, 0.0
        %v2652 = vmax.f32 %v1628, 0.0
        %v2653 = vmax.f32 %v1629, 0.0
        %v2654 = vmax.f32 %v1630, 0.0
        %v2655 = vmax.f32 %v1631, 0.0
        %v2656 = vmax.f32 %v1632, 0.0
        %v2657 = vmax.f32 %v1633, 0.0
        %v2658 = vmax.f32 %v1634, 0.0
        %v2659 = vmax.f32 %v1635, 0.0
        %v2660 = vmax.f32 %v1636, 0.0
        %v2661 = vmax.f32 %v1637, 0.0
        %v2662 = vmax.f32 %v1638, 0.0
        %v2663 = vmax.f32 %v1639, 0.0
        %v2664 = vmax.f32 %v1640, 0.0
        %v2665 = vmax.f32 %v1641, 0.0
        %v2666 = vmax.f32 %v1642, 0.0
        %v2667 = vmax.f32 %v1643, 0.0
        %v2668 = vmax.f32 %v1644, 0.0
        %v2669 = vmax.f32 %v1645, 0.0
        %v2670 = vmax.f32 %v1646, 0.0
        %v2671 = vmax.f32 %v1647, 0.0
        %v2672 = vmax.f32 %v1648, 0.0
        %v2673 = vmax.f32 %v1649, 0.0
        %v2674 = vmax.f32 %v1650, 0.0
        %v2675 = vmax.f32 %v1651, 0.0
        %v2676 = vmax.f32 %v1652, 0.0
        %v2677 = vmax.f32 %v1653, 0.0
        %v2678 = vmax.f32 %v1654, 0.0
        %v2679 = vmax.f32 %v1655, 0.0
        %v2680 = vmax.f32 %v1656, 0.0
        %v2681 = vmax.f32 %v1657, 0.0
        %v2682 = vmax.f32 %v1658, 0.0
        %v2683 = vmax.f32 %v1659, 0.0
        %v2684 = vmax.f32 %v1660, 0.0
        %v2685 = vmax.f32 %v1661, 0.0
        %v2686 = vmax.f32 %v1662, 0.0
        %v2687 = vmax.f32 %v1663, 0.0
        %v2688 = vmax.f32 %v1664, 0.0
        %v2689 = vmax.f32 %v1665, 0.0
        %v2690 = vmax.f32 %v1666, 0.0
        %v2691 = vmax.f32 %v1667, 0.0
        %v2692 = vmax.f32 %v1668, 0.0
        %v2693 = vmax.f32 %v1669, 0.0
        %v2694 = vmax.f32 %v1670, 0.0
        %v2695 = vmax.f32 %v1671, 0.0
        %v2696 = vmax.f32 %v1672, 0.0
        %v2697 = vmax.f32 %v1673, 0.0
        %v2698 = vmax.f32 %v1674, 0.0
        %v2699 = vmax.f32 %v1675, 0.0
        %v2700 = vmax.f32 %v1676, 0.0
        %v2701 = vmax.f32 %v1677, 0.0
        %v2702 = vmax.f32 %v1678, 0.0
        %v2703 = vmax.f32 %v1679, 0.0
        %v2704 = vmax.f32 %v1680, 0.0
        %v2705 = vmax.f32 %v1681, 0.0
        %v2706 = vmax.f32 %v1682, 0.0
        %v2707 = vmax.f32 %v1683, 0.0
        %v2708 = vmax.f32 %v1684, 0.0
        %v2709 = vmax.f32 %v1685, 0.0
        %v2710 = vmax.f32 %v1686, 0.0
        %v2711 = vmax.f32 %v1687, 0.0
        %v2712 = vmax.f32 %v1688, 0.0
        %v2713 = vmax.f32 %v1689, 0.0
        %v2714 = vmax.f32 %v1690, 0.0
        %v2715 = vmax.f32 %v1691, 0.0
        %v2716 = vmax.f32 %v1692, 0.0
        %v2717 = vmax.f32 %v1693, 0.0
        %v2718 = vmax.f32 %v1694, 0.0
        %v2719 = vmax.f32 %v1695, 0.0
        %v2720 = vmax.f32 %v1696, 0.0
        %v2721 = vmax.f32 %v1697, 0.0
        %v2722 = vmax.f32 %v1698, 0.0
        %v2723 = vmax.f32 %v1699, 0.0
        %v2724 = vmax.f32 %v1700, 0.0
        %v2725 = vmax.f32 %v1701, 0.0
        %v2726 = vmax.f32 %v1702, 0.0
        %v2727 = vmax.f32 %v1703, 0.0
        %v2728 = vmax.f32 %v1704, 0.0
        %v2729 = vmax.f32 %v1705, 0.0
        %v2730 = vmax.f32 %v1706, 0.0
        %v2731 = vmax.f32 %v1707, 0.0
        %v2732 = vmax.f32 %v1708, 0.0
        %v2733 = vmax.f32 %v1709, 0.0
        %v2734 = vmax.f32 %v1710, 0.0
        %v2735 = vmax.f32 %v1711, 0.0
        %v2736 = vmax.f32 %v1712, 0.0
        %v2737 = vmax.f32 %v1713, 0.0
        %v2738 = vmax.f32 %v1714, 0.0
        %v2739 = vmax.f32 %v1715, 0.0
        %v2740 = vmax.f32 %v1716, 0.0
        %v2741 = vmax.f32 %v1717, 0.0
        %v2742 = vmax.f32 %v1718, 0.0
        %v2743 = vmax.f32 %v1719, 0.0
        %v2744 = vmax.f32 %v1720, 0.0
        %v2745 = vmax.f32 %v1721, 0.0
        %v2746 = vmax.f32 %v1722, 0.0
        %v2747 = vmax.f32 %v1723, 0.0
        %v2748 = vmax.f32 %v1724, 0.0
        %v2749 = vmax.f32 %v1725, 0.0
        %v2750 = vmax.f32 %v1726, 0.0
        %v2751 = vmax.f32 %v1727, 0.0
        %v2752 = vmax.f32 %v1728, 0.0
        %v2753 = vmax.f32 %v1729, 0.0
        %v2754 = vmax.f32 %v1730, 0.0
        %v2755 = vmax.f32 %v1731, 0.0
        %v2756 = vmax.f32 %v1732, 0.0
        %v2757 = vmax.f32 %v1733, 0.0
        %v2758 = vmax.f32 %v1734, 0.0
        %v2759 = vmax.f32 %v1735, 0.0
        %v2760 = vmax.f32 %v1736, 0.0
        %v2761 = vmax.f32 %v1737, 0.0
        %v2762 = vmax.f32 %v1738, 0.0
        %v2763 = vmax.f32 %v1739, 0.0
        %v2764 = vmax.f32 %v1740, 0.0
        %v2765 = vmax.f32 %v1741, 0.0
        %v2766 = vmax.f32 %v1742, 0.0
        %v2767 = vmax.f32 %v1743, 0.0
        %v2768 = vmax.f32 %v1744, 0.0
        %v2769 = vmax.f32 %v1745, 0.0
        %v2770 = vmax.f32 %v1746, 0.0
        %v2771 = vmax.f32 %v1747, 0.0
        %v2772 = vmax.f32 %v1748, 0.0
        %v2773 = vmax.f32 %v1749, 0.0
        %v2774 = vmax.f32 %v1750, 0.0
        %v2775 = vmax.f32 %v1751, 0.0
        %v2776 = vmax.f32 %v1752, 0.0
        %v2777 = vmax.f32 %v1753, 0.0
        %v2778 = vmax.f32 %v1754, 0.0
        %v2779 = vmax.f32 %v1755, 0.0
        %v2780 = vmax.f32 %v1756, 0.0
        %v2781 = vmax.f32 %v1757, 0.0
        %v2782 = vmax.f32 %v1758, 0.0
        %v2783 = vmax.f32 %v1759, 0.0
        %v2784 = vmax.f32 %v1760, 0.0
        %v2785 = vmax.f32 %v1761, 0.0
        %v2786 = vmax.f32 %v1762, 0.0
        %v2787 = vmax.f32 %v1763, 0.0
        %v2788 = vmax.f32 %v1764, 0.0
        %v2789 = vmax.f32 %v1765, 0.0
        %v2790 = vmax.f32 %v1766, 0.0
        %v2791 = vmax.f32 %v1767, 0.0
        %v2792 = vmax.f32 %v1768, 0.0
        %v2793 = vmax.f32 %v1769, 0.0
        %v2794 = vmax.f32 %v1770, 0.0
        %v2795 = vmax.f32 %v1771, 0.0
        %v2796 = vmax.f32 %v1772, 0.0
        %v2797 = vmax.f32 %v1773, 0.0
        %v2798 = vmax.f32 %v1774, 0.0
        %v2799 = vmax.f32 %v1775, 0.0
        %v2800 = vmax.f32 %v1776, 0.0
        %v2801 = vmax.f32 %v1777, 0.0
        %v2802 = vmax.f32 %v1778, 0.0
        %v2803 = vmax.f32 %v1779, 0.0
        %v2804 = vmax.f32 %v1780, 0.0
        %v2805 = vmax.f32 %v1781, 0.0
        %v2806 = vmax.f32 %v1782, 0.0
        %v2807 = vmax.f32 %v1783, 0.0
        %v2808 = vmax.f32 %v1784, 0.0
        %v2809 = vmax.f32 %v1785, 0.0
        %v2810 = vmax.f32 %v1786, 0.0
        %v2811 = vmax.f32 %v1787, 0.0
        %v2812 = vmax.f32 %v1788, 0.0
        %v2813 = vmax.f32 %v1789, 0.0
        %v2814 = vmax.f32 %v1790, 0.0
        %v2815 = vmax.f32 %v1791, 0.0
        %v2816 = vmax.f32 %v1792, 0.0
        %v2817 = vmax.f32 %v1793, 0.0
        %v2818 = vmax.f32 %v1794, 0.0
        %v2819 = vmax.f32 %v1795, 0.0
        %v2820 = vmax.f32 %v1796, 0.0
        %v2821 = vmax.f32 %v1797, 0.0
        %v2822 = vmax.f32 %v1798, 0.0
        %v2823 = vmax.f32 %v1799, 0.0
        %v2824 = vmax.f32 %v1800, 0.0
        %v2825 = vmax.f32 %v1801, 0.0
        %v2826 = vmax.f32 %v1802, 0.0
        %v2827 = vmax.f32 %v1803, 0.0
        %v2828 = vmax.f32 %v1804, 0.0
        %v2829 = vmax.f32 %v1805, 0.0
        %v2830 = vmax.f32 %v1806, 0.0
        %v2831 = vmax.f32 %v1807, 0.0
        %v2832 = vmax.f32 %v1808, 0.0
        %v2833 = vmax.f32 %v1809, 0.0
        %v2834 = vmax.f32 %v1810, 0.0
        %v2835 = vmax.f32 %v1811, 0.0
        %v2836 = vmax.f32 %v1812, 0.0
        %v2837 = vmax.f32 %v1813, 0.0
        %v2838 = vmax.f32 %v1814, 0.0
        %v2839 = vmax.f32 %v1815, 0.0
        %v2840 = vmax.f32 %v1816, 0.0
        %v2841 = vmax.f32 %v1817, 0.0
        %v2842 = vmax.f32 %v1818, 0.0
        %v2843 = vmax.f32 %v1819, 0.0
        %v2844 = vmax.f32 %v1820, 0.0
        %v2845 = vmax.f32 %v1821, 0.0
        %v2846 = vmax.f32 %v1822, 0.0
        %v2847 = vmax.f32 %v1823, 0.0
        %v2848 = vmax.f32 %v1824, 0.0
        %v2849 = vmax.f32 %v1825, 0.0
        %v2850 = vmax.f32 %v1826, 0.0
        %v2851 = vmax.f32 %v1827, 0.0
        %v2852 = vmax.f32 %v1828, 0.0
        %v2853 = vmax.f32 %v1829, 0.0
        %v2854 = vmax.f32 %v1830, 0.0
        %v2855 = vmax.f32 %v1831, 0.0
        %v2856 = vmax.f32 %v1832, 0.0
        %v2857 = vmax.f32 %v1833, 0.0
        %v2858 = vmax.f32 %v1834, 0.0
        %v2859 = vmax.f32 %v1835, 0.0
        %v2860 = vmax.f32 %v1836, 0.0
        %v2861 = vmax.f32 %v1837, 0.0
        %v2862 = vmax.f32 %v1838, 0.0
        %v2863 = vmax.f32 %v1839, 0.0
        %v2864 = vmax.f32 %v1840, 0.0
        %v2865 = vmax.f32 %v1841, 0.0
        %v2866 = vmax.f32 %v1842, 0.0
        %v2867 = vmax.f32 %v1843, 0.0
        %v2868 = vmax.f32 %v1844, 0.0
        %v2869 = vmax.f32 %v1845, 0.0
        %v2870 = vmax.f32 %v1846, 0.0
        %v2871 = vmax.f32 %v1847, 0.0
        %v2872 = vmax.f32 %v1848, 0.0
        %v2873 = vmax.f32 %v1849, 0.0
        %v2874 = vmax.f32 %v1850, 0.0
        %v2875 = vmax.f32 %v1851, 0.0
        %v2876 = vmax.f32 %v1852, 0.0
        %v2877 = vmax.f32 %v1853, 0.0
        %v2878 = vmax.f32 %v1854, 0.0
        %v2879 = vmax.f32 %v1855, 0.0
        %v2880 = vmax.f32 %v1856, 0.0
        %v2881 = vmax.f32 %v1857, 0.0
        %v2882 = vmax.f32 %v1858, 0.0
        %v2883 = vmax.f32 %v1859, 0.0
        %v2884 = vmax.f32 %v1860, 0.0
        %v2885 = vmax.f32 %v1861, 0.0
        %v2886 = vmax.f32 %v1862, 0.0
        %v2887 = vmax.f32 %v1863, 0.0
        %v2888 = vmax.f32 %v1864, 0.0
        %v2889 = vmax.f32 %v1865, 0.0
        %v2890 = vmax.f32 %v1866, 0.0
        %v2891 = vmax.f32 %v1867, 0.0
        %v2892 = vmax.f32 %v1868, 0.0
        %v2893 = vmax.f32 %v1869, 0.0
        %v2894 = vmax.f32 %v1870, 0.0
        %v2895 = vmax.f32 %v1871, 0.0
        %v2896 = vmax.f32 %v1872, 0.0
        %v2897 = vmax.f32 %v1873, 0.0
        %v2898 = vmax.f32 %v1874, 0.0
        %v2899 = vmax.f32 %v1875, 0.0
        %v2900 = vmax.f32 %v1876, 0.0
        %v2901 = vmax.f32 %v1877, 0.0
        %v2902 = vmax.f32 %v1878, 0.0
        %v2903 = vmax.f32 %v1879, 0.0
        %v2904 = vmax.f32 %v1880, 0.0
        %v2905 = vmax.f32 %v1881, 0.0
        %v2906 = vmax.f32 %v1882, 0.0
        %v2907 = vmax.f32 %v1883, 0.0
        %v2908 = vmax.f32 %v1884, 0.0
        %v2909 = vmax.f32 %v1885, 0.0
        %v2910 = vmax.f32 %v1886, 0.0
        %v2911 = vmax.f32 %v1887, 0.0
        %v2912 = vmax.f32 %v1888, 0.0
        %v2913 = vmax.f32 %v1889, 0.0
        %v2914 = vmax.f32 %v1890, 0.0
        %v2915 = vmax.f32 %v1891, 0.0
        %v2916 = vmax.f32 %v1892, 0.0
        %v2917 = vmax.f32 %v1893, 0.0
        %v2918 = vmax.f32 %v1894, 0.0
        %v2919 = vmax.f32 %v1895, 0.0
        %v2920 = vmax.f32 %v1896, 0.0
        %v2921 = vmax.f32 %v1897, 0.0
        %v2922 = vmax.f32 %v1898, 0.0
        %v2923 = vmax.f32 %v1899, 0.0
        %v2924 = vmax.f32 %v1900, 0.0
        %v2925 = vmax.f32 %v1901, 0.0
        %v2926 = vmax.f32 %v1902, 0.0
        %v2927 = vmax.f32 %v1903, 0.0
        %v2928 = vmax.f32 %v1904, 0.0
        %v2929 = vmax.f32 %v1905, 0.0
        %v2930 = vmax.f32 %v1906, 0.0
        %v2931 = vmax.f32 %v1907, 0.0
        %v2932 = vmax.f32 %v1908, 0.0
        %v2933 = vmax.f32 %v1909, 0.0
        %v2934 = vmax.f32 %v1910, 0.0
        %v2935 = vmax.f32 %v1911, 0.0
        %v2936 = vmax.f32 %v1912, 0.0
        %v2937 = vmax.f32 %v1913, 0.0
        %v2938 = vmax.f32 %v1914, 0.0
        %v2939 = vmax.f32 %v1915, 0.0
        %v2940 = vmax.f32 %v1916, 0.0
        %v2941 = vmax.f32 %v1917, 0.0
        %v2942 = vmax.f32 %v1918, 0.0
        %v2943 = vmax.f32 %v1919, 0.0
        %v2944 = vmax.f32 %v1920, 0.0
        %v2945 = vmax.f32 %v1921, 0.0
        %v2946 = vmax.f32 %v1922, 0.0
        %v2947 = vmax.f32 %v1923, 0.0
        %v2948 = vmax.f32 %v1924, 0.0
        %v2949 = vmax.f32 %v1925, 0.0
        %v2950 = vmax.f32 %v1926, 0.0
        %v2951 = vmax.f32 %v1927, 0.0
        %v2952 = vmax.f32 %v1928, 0.0
        %v2953 = vmax.f32 %v1929, 0.0
        %v2954 = vmax.f32 %v1930, 0.0
        %v2955 = vmax.f32 %v1931, 0.0
        %v2956 = vmax.f32 %v1932, 0.0
        %v2957 = vmax.f32 %v1933, 0.0
        %v2958 = vmax.f32 %v1934, 0.0
        %v2959 = vmax.f32 %v1935, 0.0
        %v2960 = vmax.f32 %v1936, 0.0
        %v2961 = vmax.f32 %v1937, 0.0
        %v2962 = vmax.f32 %v1938, 0.0
        %v2963 = vmax.f32 %v1939, 0.0
        %v2964 = vmax.f32 %v1940, 0.0
        %v2965 = vmax.f32 %v1941, 0.0
        %v2966 = vmax.f32 %v1942, 0.0
        %v2967 = vmax.f32 %v1943, 0.0
        %v2968 = vmax.f32 %v1944, 0.0
        %v2969 = vmax.f32 %v1945, 0.0
        %v2970 = vmax.f32 %v1946, 0.0
        %v2971 = vmax.f32 %v1947, 0.0
        %v2972 = vmax.f32 %v1948, 0.0
        %v2973 = vmax.f32 %v1949, 0.0
        %v2974 = vmax.f32 %v1950, 0.0
        %v2975 = vmax.f32 %v1951, 0.0
        %v2976 = vmax.f32 %v1952, 0.0
        %v2977 = vmax.f32 %v1953, 0.0
        %v2978 = vmax.f32 %v1954, 0.0
        %v2979 = vmax.f32 %v1955, 0.0
        %v2980 = vmax.f32 %v1956, 0.0
        %v2981 = vmax.f32 %v1957, 0.0
        %v2982 = vmax.f32 %v1958, 0.0
        %v2983 = vmax.f32 %v1959, 0.0
        %v2984 = vmax.f32 %v1960, 0.0
        %v2985 = vmax.f32 %v1961, 0.0
        %v2986 = vmax.f32 %v1962, 0.0
        %v2987 = vmax.f32 %v1963, 0.0
        %v2988 = vmax.f32 %v1964, 0.0
        %v2989 = vmax.f32 %v1965, 0.0
        %v2990 = vmax.f32 %v1966, 0.0
        %v2991 = vmax.f32 %v1967, 0.0
        %v2992 = vmax.f32 %v1968, 0.0
        %v2993 = vmax.f32 %v1969, 0.0
        %v2994 = vmax.f32 %v1970, 0.0
        %v2995 = vmax.f32 %v1971, 0.0
        %v2996 = vmax.f32 %v1972, 0.0
        %v2997 = vmax.f32 %v1973, 0.0
        %v2998 = vmax.f32 %v1974, 0.0
        %v2999 = vmax.f32 %v1975, 0.0
        %v3000 = vmax.f32 %v1976, 0.0
        %v3001 = vmax.f32 %v1977, 0.0
        %v3002 = vmax.f32 %v1978, 0.0
        %v3003 = vmax.f32 %v1979, 0.0
        %v3004 = vmax.f32 %v1980, 0.0
        %v3005 = vmax.f32 %v1981, 0.0
        %v3006 = vmax.f32 %v1982, 0.0
        %v3007 = vmax.f32 %v1983, 0.0
        %v3008 = vmax.f32 %v1984, 0.0
        %v3009 = vmax.f32 %v1985, 0.0
        %v3010 = vmax.f32 %v1986, 0.0
        %v3011 = vmax.f32 %v1987, 0.0
        %v3012 = vmax.f32 %v1988, 0.0
        %v3013 = vmax.f32 %v1989, 0.0
        %v3014 = vmax.f32 %v1990, 0.0
        %v3015 = vmax.f32 %v1991, 0.0
        %v3016 = vmax.f32 %v1992, 0.0
        %v3017 = vmax.f32 %v1993, 0.0
        %v3018 = vmax.f32 %v1994, 0.0
        %v3019 = vmax.f32 %v1995, 0.0
        %v3020 = vmax.f32 %v1996, 0.0
        %v3021 = vmax.f32 %v1997, 0.0
        %v3022 = vmax.f32 %v1998, 0.0
        %v3023 = vmax.f32 %v1999, 0.0
        %v3024 = vmax.f32 %v2000, 0.0
        %v3025 = vmax.f32 %v2001, 0.0
        %v3026 = vmax.f32 %v2002, 0.0
        %v3027 = vmax.f32 %v2003, 0.0
        %v3028 = vmax.f32 %v2004, 0.0
        %v3029 = vmax.f32 %v2005, 0.0
        %v3030 = vmax.f32 %v2006, 0.0
        %v3031 = vmax.f32 %v2007, 0.0
        %v3032 = vmax.f32 %v2008, 0.0
        %v3033 = vmax.f32 %v2009, 0.0
        %v3034 = vmax.f32 %v2010, 0.0
        %v3035 = vmax.f32 %v2011, 0.0
        %v3036 = vmax.f32 %v2012, 0.0
        %v3037 = vmax.f32 %v2013, 0.0
        %v3038 = vmax.f32 %v2014, 0.0
        %v3039 = vmax.f32 %v2015, 0.0
        %v3040 = vmax.f32 %v2016, 0.0
        %v3041 = vmax.f32 %v2017, 0.0
        %v3042 = vmax.f32 %v2018, 0.0
        %v3043 = vmax.f32 %v2019, 0.0
        %v3044 = vmax.f32 %v2020, 0.0
        %v3045 = vmax.f32 %v2021, 0.0
        %v3046 = vmax.f32 %v2022, 0.0
        %v3047 = vmax.f32 %v2023, 0.0
        %v3048 = vmax.f32 %v2024, 0.0
        %v3049 = vmax.f32 %v2025, 0.0
        %v3050 = vmax.f32 %v2026, 0.0
        %v3051 = vmax.f32 %v2027, 0.0
        %v3052 = vmax.f32 %v2028, 0.0
        %v3053 = vmax.f32 %v2029, 0.0
        %v3054 = vmax.f32 %v2030, 0.0
        %v3055 = vmax.f32 %v2031, 0.0
        %v3056 = vmax.f32 %v2032, 0.0
        %v3057 = vmax.f32 %v2033, 0.0
        %v3058 = vmax.f32 %v2034, 0.0
        %v3059 = vmax.f32 %v2035, 0.0
        %v3060 = vmax.f32 %v2036, 0.0
        %v3061 = vmax.f32 %v2037, 0.0
        %v3062 = vmax.f32 %v2038, 0.0
        %v3063 = vmax.f32 %v2039, 0.0
        %v3064 = vmax.f32 %v2040, 0.0
        %v3065 = vmax.f32 %v2041, 0.0
        %v3066 = vmax.f32 %v2042, 0.0
        %v3067 = vmax.f32 %v2043, 0.0
        %v3068 = vmax.f32 %v2044, 0.0
        %v3069 = vmax.f32 %v2045, 0.0
        %v3070 = vmax.f32 %v2046, 0.0
        %v3071 = vmax.f32 %v2047, 0.0
        %v3072 = vmax.f32 %v2048, 0.0
        %v3073 = vmax.f32 %v2049, 0.0
        %v3074 = vmax.f32 %v2050, 0.0
        %v3075 = vmax.f32 %v2051, 0.0
        %v3076 = vmax.f32 %v2052, 0.0
        %v3077 = vmax.f32 %v2053, 0.0
        %v3078 = vmax.f32 %v2054, 0.0
        %v3079 = vmax.f32 %v2055, 0.0
        %v3080 = vmax.f32 %v2056, 0.0
        %v3081 = vmax.f32 %v2057, 0.0
        %v3082 = vmax.f32 %v2058, 0.0
        %v3083 = vmax.f32 %v2059, 0.0
        %v3084 = vmax.f32 %v2060, 0.0
        %v3085 = vmax.f32 %v2061, 0.0
        %v3086 = vmax.f32 %v2062, 0.0
        %v3087 = vmax.f32 %v2063, 0.0
        %v3088 = vmax.f32 %v2064, 0.0
        %v3089 = vmax.f32 %v2065, 0.0
        %v3090 = vmax.f32 %v2066, 0.0
        %v3091 = vmax.f32 %v2067, 0.0
        %v3092 = vmax.f32 %v2068, 0.0
        %v3093 = vmax.f32 %v2069, 0.0
        %v3094 = vmax.f32 %v2070, 0.0
        %v3095 = vmax.f32 %v2071, 0.0
        %v3096 = vmax.f32 %v2072, 0.0
        %v3097 = vmax.f32 %v2073, 0.0
        %v3098 = vmax.f32 %v2074, 0.0
        %v3099 = vmax.f32 %v2075, 0.0
        %v3100 = vmax.f32 %v2076, 0.0
        %v3101 = vmax.f32 %v2077, 0.0
        %v3102 = vmax.f32 %v2078, 0.0
        %v3103 = vmax.f32 %v2079, 0.0
        %v3104 = vmax.f32 %v2080, 0.0
        %v3105 = vmax.f32 %v2081, 0.0
        %v3106 = vmax.f32 %v2082, 0.0
        %v3107 = vmax.f32 %v2083, 0.0
        %v3108 = vmax.f32 %v2084, 0.0
        %v3109 = vmax.f32 %v2085, 0.0
        %v3110 = vmax.f32 %v2086, 0.0
        %v3111 = vmax.f32 %v2087, 0.0
        %v3112 = vmax.f32 %v2088, 0.0
        %v3113 = vmax.f32 %v2089, 0.0
        %v3114 = vmax.f32 %v2090, 0.0
        %v3115 = vmax.f32 %v2091, 0.0
        %v3116 = vmax.f32 %v2092, 0.0
        %v3117 = vmax.f32 %v2093, 0.0
        %v3118 = vmax.f32 %v2094, 0.0
        %v3119 = vmax.f32 %v2095, 0.0
        %v3120 = vmax.f32 %v2096, 0.0
        %v3121 = vmax.f32 %v2097, 0.0
        %v3122 = vmax.f32 %v2098, 0.0
        %v3123 = vmax.f32 %v2099, 0.0
        %v3124 = vmax.f32 %v2100, 0.0
        %v3125 = vmax.f32 %v2101, 0.0
        %v3126 = vmax.f32 %v2102, 0.0
        %v3127 = vmax.f32 %v2103, 0.0
        %v3128 = vmax.f32 %v2104, 0.0
        %v3129 = vmax.f32 %v2105, 0.0
        %v3130 = vmax.f32 %v2106, 0.0
        %v3131 = vmax.f32 %v2107, 0.0
        %v3132 = vmax.f32 %v2108, 0.0
        %v3133 = vmax.f32 %v2109, 0.0
        %v3134 = vmax.f32 %v2110, 0.0
        %v3135 = vmax.f32 %v2111, 0.0
        %v3136 = vmax.f32 %v2112, 0.0
        %v3137 = vmax.f32 %v2113, 0.0
        %v3138 = vmax.f32 %v2114, 0.0
        %v3139 = vmax.f32 %v2115, 0.0
        %v3140 = vmax.f32 %v2116, 0.0
        %v3141 = vmax.f32 %v2117, 0.0
        %v3142 = vmax.f32 %v2118, 0.0
        %v3143 = vmax.f32 %v2119, 0.0
        %v3144 = vmax.f32 %v2120, 0.0
        %v3145 = vmax.f32 %v2121, 0.0
        %v3146 = vmax.f32 %v2122, 0.0
        %v3147 = vmax.f32 %v2123, 0.0
        %v3148 = vmax.f32 %v2124, 0.0
        %v3149 = vmax.f32 %v2125, 0.0
        %v3150 = vmax.f32 %v2126, 0.0
        %v3151 = vmax.f32 %v2127, 0.0
        %v3152 = vmax.f32 %v2128, 0.0
        %v3153 = vmax.f32 %v2129, 0.0
        %v3154 = vmax.f32 %v2130, 0.0
        %v3155 = vmax.f32 %v2131, 0.0
        %v3156 = vmax.f32 %v2132, 0.0
        %v3157 = vmax.f32 %v2133, 0.0
        %v3158 = vmax.f32 %v2134, 0.0
        %v3159 = vmax.f32 %v2135, 0.0
        %v3160 = vmax.f32 %v2136, 0.0
        %v3161 = vmax.f32 %v2137, 0.0
        %v3162 = vmax.f32 %v2138, 0.0
        %v3163 = vmax.f32 %v2139, 0.0
        %v3164 = vmax.f32 %v2140, 0.0
        %v3165 = vmax.f32 %v2141, 0.0
        %v3166 = vmax.f32 %v2142, 0.0
        %v3167 = vmax.f32 %v2143, 0.0
        %v3168 = vmax.f32 %v2144, 0.0
        %v3169 = vmax.f32 %v2145, 0.0
        %v3170 = vmax.f32 %v2146, 0.0
        %v3171 = vmax.f32 %v2147, 0.0
        %v3172 = vmax.f32 %v2148, 0.0
        %v3173 = vmax.f32 %v2149, 0.0
        %v3174 = vmax.f32 %v2150, 0.0
        %v3175 = vmax.f32 %v2151, 0.0
        %v3176 = vmax.f32 %v2152, 0.0
        %v3177 = vmax.f32 %v2153, 0.0
        %v3178 = vmax.f32 %v2154, 0.0
        %v3179 = vmax.f32 %v2155, 0.0
        %v3180 = vmax.f32 %v2156, 0.0
        %v3181 = vmax.f32 %v2157, 0.0
        %v3182 = vmax.f32 %v2158, 0.0
        %v3183 = vmax.f32 %v2159, 0.0
        %v3184 = vmax.f32 %v2160, 0.0
        %v3185 = vmax.f32 %v2161, 0.0
        %v3186 = vmax.f32 %v2162, 0.0
        %v3187 = vmax.f32 %v2163, 0.0
        %v3188 = vmax.f32 %v2164, 0.0
        %v3189 = vmax.f32 %v2165, 0.0
        %v3190 = vmax.f32 %v2166, 0.0
        %v3191 = vmax.f32 %v2167, 0.0
        %v3192 = vmax.f32 %v2168, 0.0
        %v3193 = vmax.f32 %v2169, 0.0
        %v3194 = vmax.f32 %v2170, 0.0
        %v3195 = vmax.f32 %v2171, 0.0
        %v3196 = vmax.f32 %v2172, 0.0
        %v3197 = vmax.f32 %v2173, 0.0
        %v3198 = vmax.f32 %v2174, 0.0
        %v3199 = vmax.f32 %v2175, 0.0
        %v3200 = vmax.f32 %v2176, 0.0
        %v3201 = vmax.f32 %v2177, 0.0
        %v3202 = vmax.f32 %v2178, 0.0
        %v3203 = vmax.f32 %v2179, 0.0
        %v3204 = vmax.f32 %v2180, 0.0
        %v3205 = vmax.f32 %v2181, 0.0
        %v3206 = vmax.f32 %v2182, 0.0
        %v3207 = vmax.f32 %v2183, 0.0
        %v3208 = vmax.f32 %v2184, 0.0
        %v3209 = vmax.f32 %v2185, 0.0
        %v3210 = vmax.f32 %v2186, 0.0
        %v3211 = vmax.f32 %v2187, 0.0
        %v3212 = vmax.f32 %v2188, 0.0
        %v3213 = vmax.f32 %v2189, 0.0
        %v3214 = vmax.f32 %v2190, 0.0
        %v3215 = vmax.f32 %v2191, 0.0
        %v3216 = vmax.f32 %v2192, 0.0
        %v3217 = vmax.f32 %v2193, 0.0
        %v3218 = vmax.f32 %v2194, 0.0
        %v3219 = vmax.f32 %v2195, 0.0
        %v3220 = vmax.f32 %v2196, 0.0
        %v3221 = vmax.f32 %v2197, 0.0
        %v3222 = vmax.f32 %v2198, 0.0
        %v3223 = vmax.f32 %v2199, 0.0
        %v3224 = vmax.f32 %v2200, 0.0
        %v3225 = vmax.f32 %v2201, 0.0
        %v3226 = vmax.f32 %v2202, 0.0
        %v3227 = vadd.f32 %v155, 0.25
        %v3228 = vadd.f32 %v156, 0.25
        %v3229 = vadd.f32 %v157, 0.25
        %v3230 = vadd.f32 %v158, 0.25
        %v3231 = vadd.f32 %v159, 0.25
        %v3232 = vadd.f32 %v160, 0.25
        %v3233 = vadd.f32 %v161, 0.25
        %v3234 = vadd.f32 %v162, 0.25
        %v3235 = vadd.f32 %v163, 0.25
        %v3236 = vadd.f32 %v164, 0.25
        %v3237 = vadd.f32 %v165, 0.25
        %v3238 = vadd.f32 %v166, 0.25
        %v3239 = vadd.f32 %v167, 0.25
        %v3240 = vadd.f32 %v168, 0.25
        %v3241 = vadd.f32 %v169, 0.25
        %v3242 = vadd.f32 %v170, 0.25
        %v3243 = vadd.f32 %v171, 0.25
        %v3244 = vadd.f32 %v172, 0.25
        %v3245 = vadd.f32 %v173, 0.25
        %v3246 = vadd.f32 %v174, 0.25
        %v3247 = vadd.f32 %v175, 0.25
        %v3248 = vadd.f32 %v176, 0.25
        %v3249 = vadd.f32 %v177, 0.25
        %v3250 = vadd.f32 %v178, 0.25
        %v3251 = vadd.f32 %v179, 0.25
        %v3252 = vadd.f32 %v180, 0.25
        %v3253 = vadd.f32 %v181, 0.25
        %v3254 = vadd.f32 %v182, 0.25
        %v3255 = vadd.f32 %v183, 0.25
        %v3256 = vadd.f32 %v184, 0.25
        %v3257 = vadd.f32 %v185, 0.25
        %v3258 = vadd.f32 %v186, 0.25
        %v3259 = vadd.f32 %v187, 0.25
        %v3260 = vadd.f32 %v188, 0.25
        %v3261 = vadd.f32 %v189, 0.25
        %v3262 = vadd.f32 %v190, 0.25
        %v3263 = vadd.f32 %v191, 0.25
        %v3264 = vadd.f32 %v192, 0.25
        %v3265 = vadd.f32 %v193, 0.25
        %v3266 = vadd.f32 %v194, 0.25
        %v3267 = vadd.f32 %v195, 0.25
        %v3268 = vadd.f32 %v196, 0.25
        %v3269 = vadd.f32 %v197, 0.25
        %v3270 = vadd.f32 %v198, 0.25
        %v3271 = vadd.f32 %v199, 0.25
        %v3272 = vadd.f32 %v200, 0.25
        %v3273 = vadd.f32 %v201, 0.25
        %v3274 = vadd.f32 %v202, 0.25
        %v3275 = vadd.f32 %v203, 0.25
        %v3276 = vadd.f32 %v204, 0.25
        %v3277 = vadd.f32 %v205, 0.25
        %v3278 = vadd.f32 %v206, 0.25
        %v3279 = vadd.f32 %v207, 0.25
        %v3280 = vadd.f32 %v208, 0.25
        %v3281 = vadd.f32 %v209, 0.25
        %v3282 = vadd.f32 %v210, 0.25
        %v3283 = vadd.f32 %v211, 0.25
        %v3284 = vadd.f32 %v212, 0.25
        %v3285 = vadd.f32 %v213, 0.25
        %v3286 = vadd.f32 %v214, 0.25
        %v3287 = vadd.f32 %v215, 0.25
        %v3288 = vadd.f32 %v216, 0.25
        %v3289 = vadd.f32 %v217, 0.25
        %v3290 = vadd.f32 %v218, 0.25
        %v3291 = vadd.f32 %v219, 0.25
        %v3292 = vadd.f32 %v220, 0.25
        %v3293 = vadd.f32 %v221, 0.25
        %v3294 = vadd.f32 %v222, 0.25
        %v3295 = vadd.f32 %v223, 0.25
        %v3296 = vadd.f32 %v224, 0.25
        %v3297 = vadd.f32 %v225, 0.25
        %v3298 = vadd.f32 %v226, 0.25
        %v3299 = vadd.f32 %v227, 0.25
        %v3300 = vadd.f32 %v228, 0.25
        %v3301 = vadd.f32 %v229, 0.25
        %v3302 = vadd.f32 %v230, 0.25
        %v3303 = vadd.f32 %v231, 0.25
        %v3304 = vadd.f32 %v232, 0.25
        %v3305 = vadd.f32 %v233, 0.25
        %v3306 = vadd.f32 %v234, 0.25
        %v3307 = vadd.f32 %v235, 0.25
        %v3308 = vadd.f32 %v236, 0.25
        %v3309 = vadd.f32 %v237, 0.25
        %v3310 = vadd.f32 %v238, 0.25
        %v3311 = vadd.f32 %v239, 0.25
        %v3312 = vadd.f32 %v240, 0.25
        %v3313 = vadd.f32 %v241, 0.25
        %v3314 = vadd.f32 %v242, 0.25
        %v3315 = vadd.f32 %v243, 0.25
        %v3316 = vadd.f32 %v244, 0.25
        %v3317 = vadd.f32 %v245, 0.25
        %v3318 = vadd.f32 %v246, 0.25
        %v3319 = vadd.f32 %v247, 0.25
        %v3320 = vadd.f32 %v248, 0.25
        %v3321 = vadd.f32 %v249, 0.25
        %v3322 = vadd.f32 %v250, 0.25
        %v3323 = vadd.f32 %v251, 0.25
        %v3324 = vadd.f32 %v252, 0.25
        %v3325 = vadd.f32 %v253, 0.25
        %v3326 = vadd.f32 %v254, 0.25
        %v3327 = vadd.f32 %v255, 0.25
        %v3328 = vadd.f32 %v256, 0.25
        %v3329 = vadd.f32 %v257, 0.25
        %v3330 = vadd.f32 %v258, 0.25
        %v3331 = vadd.f32 %v259, 0.25
        %v3332 = vadd.f32 %v260, 0.25
        %v3333 = vadd.f32 %v261, 0.25
        %v3334 = vadd.f32 %v262, 0.25
        %v3335 = vadd.f32 %v263, 0.25
        %v3336 = vadd.f32 %v264, 0.25
        %v3337 = vadd.f32 %v265, 0.25
        %v3338 = vadd.f32 %v266, 0.25
        %v3339 = vadd.f32 %v267, 0.25
        %v3340 = vadd.f32 %v268, 0.25
        %v3341 = vadd.f32 %v269, 0.25
        %v3342 = vadd.f32 %v270, 0.25
        %v3343 = vadd.f32 %v271, 0.25
        %v3344 = vadd.f32 %v272, 0.25
        %v3345 = vadd.f32 %v273, 0.25
        %v3346 = vadd.f32 %v274, 0.25
        %v3347 = vadd.f32 %v275, 0.25
        %v3348 = vadd.f32 %v276, 0.25
        %v3349 = vadd.f32 %v277, 0.25
        %v3350 = vadd.f32 %v278, 0.25
        %v3351 = vadd.f32 %v279, 0.25
        %v3352 = vadd.f32 %v280, 0.25
        %v3353 = vadd.f32 %v281, 0.25
        %v3354 = vadd.f32 %v282, 0.25
        %v3355 = vadd.f32 %v283, 0.25
        %v3356 = vadd.f32 %v284, 0.25
        %v3357 = vadd.f32 %v285, 0.25
        %v3358 = vadd.f32 %v286, 0.25
        %v3359 = vadd.f32 %v287, 0.25
        %v3360 = vadd.f32 %v288, 0.25
        %v3361 = vadd.f32 %v289, 0.25
        %v3362 = vadd.f32 %v290, 0.25
        %v3363 = vadd.f32 %v291, 0.25
        %v3364 = vadd.f32 %v292, 0.25
        %v3365 = vadd.f32 %v293, 0.25
        %v3366 = vadd.f32 %v294, 0.25
        %v3367 = vadd.f32 %v295, 0.25
        %v3368 = vadd.f32 %v296, 0.25
        %v3369 = vadd.f32 %v297, 0.25
        %v3370 = vadd.f32 %v298, 0.25
        %v3371 = vadd.f32 %v299, 0.25
        %v3372 = vadd.f32 %v300, 0.25
        %v3373 = vadd.f32 %v301, 0.25
        %v3374 = vadd.f32 %v302, 0.25
        %v3375 = vadd.f32 %v303, 0.25
        %v3376 = vadd.f32 %v304, 0.25
        %v3377 = vadd.f32 %v305, 0.25
        %v3378 = vadd.f32 %v306, 0.25
        %v3379 = vadd.f32 %v307, 0.25
        %v3380 = vadd.f32 %v308, 0.25
        %v3381 = vadd.f32 %v309, 0.25
        %v3382 = vadd.f32 %v310, 0.25
        %v3383 = vadd.f32 %v311, 0.25
        %v3384 = vadd.f32 %v312, 0.25
        %v3385 = vadd.f32 %v313, 0.25
        %v3386 = vadd.f32 %v314, 0.25
        %v3387 = vadd.f32 %v315, 0.25
        %v3388 = vadd.f32 %v316, 0.25
        %v3389 = vadd.f32 %v317, 0.25
        %v3390 = vadd.f32 %v318, 0.25
        %v3391 = vadd.f32 %v319, 0.25
        %v3392 = vadd.f32 %v320, 0.25
        %v3393 = vadd.f32 %v321, 0.25
        %v3394 = vadd.f32 %v322, 0.25
        %v3395 = vadd.f32 %v323, 0.25
        %v3396 = vadd.f32 %v324, 0.25
        %v3397 = vadd.f32 %v325, 0.25
        %v3398 = vadd.f32 %v326, 0.25
        %v3399 = vadd.f32 %v327, 0.25
        %v3400 = vadd.f32 %v328, 0.25
        %v3401 = vadd.f32 %v329, 0.25
        %v3402 = vadd.f32 %v330, 0.25
        %v3403 = vadd.f32 %v331, 0.25
        %v3404 = vadd.f32 %v332, 0.25
        %v3405 = vadd.f32 %v333, 0.25
        %v3406 = vadd.f32 %v334, 0.25
        %v3407 = vadd.f32 %v335, 0.25
        %v3408 = vadd.f32 %v336, 0.25
        %v3409 = vadd.f32 %v337, 0.25
        %v3410 = vadd.f32 %v338, 0.25
        %v3411 = vadd.f32 %v339, 0.25
        %v3412 = vadd.f32 %v340, 0.25
        %v3413 = vadd.f32 %v341, 0.25
        %v3414 = vadd.f32 %v342, 0.25
        %v3415 = vadd.f32 %v343, 0.25
        %v3416 = vadd.f32 %v344, 0.25
        %v3417 = vadd.f32 %v345, 0.25
        %v3418 = vadd.f32 %v346, 0.25
        %v3419 = vadd.f32 %v347, 0.25
        %v3420 = vadd.f32 %v348, 0.25
        %v3421 = vadd.f32 %v349, 0.25
        %v3422 = vadd.f32 %v350, 0.25
        %v3423 = vadd.f32 %v351, 0.25
        %v3424 = vadd.f32 %v352, 0.25
        %v3425 = vadd.f32 %v353, 0.25
        %v3426 = vadd.f32 %v354, 0.25
        %v3427 = vadd.f32 %v355, 0.25
        %v3428 = vadd.f32 %v356, 0.25
        %v3429 = vadd.f32 %v357, 0.25
        %v3430 = vadd.f32 %v358, 0.25
        %v3431 = vadd.f32 %v359, 0.25
        %v3432 = vadd.f32 %v360, 0.25
        %v3433 = vadd.f32 %v361, 0.25
        %v3434 = vadd.f32 %v362, 0.25
        %v3435 = vadd.f32 %v363, 0.25
        %v3436 = vadd.f32 %v364, 0.25
        %v3437 = vadd.f32 %v365, 0.25
        %v3438 = vadd.f32 %v366, 0.25
        %v3439 = vadd.f32 %v367, 0.25
        %v3440 = vadd.f32 %v368, 0.25
        %v3441 = vadd.f32 %v369, 0.25
        %v3442 = vadd.f32 %v370, 0.25
        %v3443 = vadd.f32 %v371, 0.25
        %v3444 = vadd.f32 %v372, 0.25
        %v3445 = vadd.f32 %v373, 0.25
        %v3446 = vadd.f32 %v374, 0.25
        %v3447 = vadd.f32 %v375, 0.25
        %v3448 = vadd.f32 %v376, 0.25
        %v3449 = vadd.f32 %v377, 0.25
        %v3450 = vadd.f32 %v378, 0.25
        %v3451 = vadd.f32 %v379, 0.25
        %v3452 = vadd.f32 %v380, 0.25
        %v3453 = vadd.f32 %v381, 0.25
        %v3454 = vadd.f32 %v382, 0.25
        %v3455 = vadd.f32 %v383, 0.25
        %v3456 = vadd.f32 %v384, 0.25
        %v3457 = vadd.f32 %v385, 0.25
        %v3458 = vadd.f32 %v386, 0.25
        %v3459 = vadd.f32 %v387, 0.25
        %v3460 = vadd.f32 %v388, 0.25
        %v3461 = vadd.f32 %v389, 0.25
        %v3462 = vadd.f32 %v390, 0.25
        %v3463 = vadd.f32 %v391, 0.25
        %v3464 = vadd.f32 %v392, 0.25
        %v3465 = vadd.f32 %v393, 0.25
        %v3466 = vadd.f32 %v394, 0.25
        %v3467 = vadd.f32 %v395, 0.25
        %v3468 = vadd.f32 %v396, 0.25
        %v3469 = vadd.f32 %v397, 0.25
        %v3470 = vadd.f32 %v398, 0.25
        %v3471 = vadd.f32 %v399, 0.25
        %v3472 = vadd.f32 %v400, 0.25
        %v3473 = vadd.f32 %v401, 0.25
        %v3474 = vadd.f32 %v402, 0.25
        %v3475 = vadd.f32 %v403, 0.25
        %v3476 = vadd.f32 %v404, 0.25
        %v3477 = vadd.f32 %v405, 0.25
        %v3478 = vadd.f32 %v406, 0.25
        %v3479 = vadd.f32 %v407, 0.25
        %v3480 = vadd.f32 %v408, 0.25
        %v3481 = vadd.f32 %v409, 0.25
        %v3482 = vadd.f32 %v410, 0.25
        %v3483 = vadd.f32 %v411, 0.25
        %v3484 = vadd.f32 %v412, 0.25
        %v3485 = vadd.f32 %v413, 0.25
        %v3486 = vadd.f32 %v414, 0.25
        %v3487 = vadd.f32 %v415, 0.25
        %v3488 = vadd.f32 %v416, 0.25
        %v3489 = vadd.f32 %v417, 0.25
        %v3490 = vadd.f32 %v418, 0.25
        %v3491 = vadd.f32 %v419, 0.25
        %v3492 = vadd.f32 %v420, 0.25
        %v3493 = vadd.f32 %v421, 0.25
        %v3494 = vadd.f32 %v422, 0.25
        %v3495 = vadd.f32 %v423, 0.25
        %v3496 = vadd.f32 %v424, 0.25
        %v3497 = vadd.f32 %v425, 0.25
        %v3498 = vadd.f32 %v426, 0.25
        %v3499 = vadd.f32 %v427, 0.25
        %v3500 = vadd.f32 %v428, 0.25
        %v3501 = vadd.f32 %v429, 0.25
        %v3502 = vadd.f32 %v430, 0.25
        %v3503 = vadd.f32 %v431, 0.25
        %v3504 = vadd.f32 %v432, 0.25
        %v3505 = vadd.f32 %v433, 0.25
        %v3506 = vadd.f32 %v434, 0.25
        %v3507 = vadd.f32 %v435, 0.25
        %v3508 = vadd.f32 %v436, 0.25
        %v3509 = vadd.f32 %v437, 0.25
        %v3510 = vadd.f32 %v438, 0.25
        %v3511 = vadd.f32 %v439, 0.25
        %v3512 = vadd.f32 %v440, 0.25
        %v3513 = vadd.f32 %v441, 0.25
        %v3514 = vadd.f32 %v442, 0.25
        %v3515 = vadd.f32 %v443, 0.25
        %v3516 = vadd.f32 %v444, 0.25
        %v3517 = vadd.f32 %v445, 0.25
        %v3518 = vadd.f32 %v446, 0.25
        %v3519 = vadd.f32 %v447, 0.25
        %v3520 = vadd.f32 %v448, 0.25
        %v3521 = vadd.f32 %v449, 0.25
        %v3522 = vadd.f32 %v450, 0.25
        %v3523 = vadd.f32 %v451, 0.25
        %v3524 = vadd.f32 %v452, 0.25
        %v3525 = vadd.f32 %v453, 0.25
        %v3526 = vadd.f32 %v454, 0.25
        %v3527 = vadd.f32 %v455, 0.25
        %v3528 = vadd.f32 %v456, 0.25
        %v3529 = vadd.f32 %v457, 0.25
        %v3530 = vadd.f32 %v458, 0.25
        %v3531 = vadd.f32 %v459, 0.25
        %v3532 = vadd.f32 %v460, 0.25
        %v3533 = vadd.f32 %v461, 0.25
        %v3534 = vadd.f32 %v462, 0.25
        %v3535 = vadd.f32 %v463, 0.25
        %v3536 = vadd.f32 %v464, 0.25
        %v3537 = vadd.f32 %v465, 0.25
        %v3538 = vadd.f32 %v466, 0.25
        %v3539 = vadd.f32 %v467, 0.25
        %v3540 = vadd.f32 %v468, 0.25
        %v3541 = vadd.f32 %v469, 0.25
        %v3542 = vadd.f32 %v470, 0.25
        %v3543 = vadd.f32 %v471, 0.25
        %v3544 = vadd.f32 %v472, 0.25
        %v3545 = vadd.f32 %v473, 0.25
        %v3546 = vadd.f32 %v474, 0.25
        %v3547 = vadd.f32 %v475, 0.25
        %v3548 = vadd.f32 %v476, 0.25
        %v3549 = vadd.f32 %v477, 0.25
        %v3550 = vadd.f32 %v478, 0.25
        %v3551 = vadd.f32 %v479, 0.25
        %v3552 = vadd.f32 %v480, 0.25
        %v3553 = vadd.f32 %v481, 0.25
        %v3554 = vadd.f32 %v482, 0.25
        %v3555 = vadd.f32 %v483, 0.25
        %v3556 = vadd.f32 %v484, 0.25
        %v3557 = vadd.f32 %v485, 0.25
        %v3558 = vadd.f32 %v486, 0.25
        %v3559 = vadd.f32 %v487, 0.25
        %v3560 = vadd.f32 %v488, 0.25
        %v3561 = vadd.f32 %v489, 0.25
        %v3562 = vadd.f32 %v490, 0.25
        %v3563 = vadd.f32 %v491, 0.25
        %v3564 = vadd.f32 %v492, 0.25
        %v3565 = vadd.f32 %v493, 0.25
        %v3566 = vadd.f32 %v494, 0.25
        %v3567 = vadd.f32 %v495, 0.25
        %v3568 = vadd.f32 %v496, 0.25
        %v3569 = vadd.f32 %v497, 0.25
        %v3570 = vadd.f32 %v498, 0.25
        %v3571 = vadd.f32 %v499, 0.25
        %v3572 = vadd.f32 %v500, 0.25
        %v3573 = vadd.f32 %v501, 0.25
        %v3574 = vadd.f32 %v502, 0.25
        %v3575 = vadd.f32 %v503, 0.25
        %v3576 = vadd.f32 %v504, 0.25
        %v3577 = vadd.f32 %v505, 0.25
        %v3578 = vadd.f32 %v506, 0.25
        %v3579 = vadd.f32 %v507, 0.25
        %v3580 = vadd.f32 %v508, 0.25
        %v3581 = vadd.f32 %v509, 0.25
        %v3582 = vadd.f32 %v510, 0.25
        %v3583 = vadd.f32 %v511, 0.25
        %v3584 = vadd.f32 %v512, 0.25
        %v3585 = vadd.f32 %v513, 0.25
        %v3586 = vadd.f32 %v514, 0.25
        %v3587 = vadd.f32 %v515, 0.25
        %v3588 = vadd.f32 %v516, 0.25
        %v3589 = vadd.f32 %v517, 0.25
        %v3590 = vadd.f32 %v518, 0.25
        %v3591 = vadd.f32 %v519, 0.25
        %v3592 = vadd.f32 %v520, 0.25
        %v3593 = vadd.f32 %v521, 0.25
        %v3594 = vadd.f32 %v522, 0.25
        %v3595 = vadd.f32 %v523, 0.25
        %v3596 = vadd.f32 %v524, 0.25
        %v3597 = vadd.f32 %v525, 0.25
        %v3598 = vadd.f32 %v526, 0.25
        %v3599 = vadd.f32 %v527, 0.25
        %v3600 = vadd.f32 %v528, 0.25
        %v3601 = vadd.f32 %v529, 0.25
        %v3602 = vadd.f32 %v530, 0.25
        %v3603 = vadd.f32 %v531, 0.25
        %v3604 = vadd.f32 %v532, 0.25
        %v3605 = vadd.f32 %v533, 0.25
        %v3606 = vadd.f32 %v534, 0.25
        %v3607 = vadd.f32 %v535, 0.25
        %v3608 = vadd.f32 %v536, 0.25
        %v3609 = vadd.f32 %v537, 0.25
        %v3610 = vadd.f32 %v538, 0.25
        %v3611 = vadd.f32 %v539, 0.25
        %v3612 = vadd.f32 %v540, 0.25
        %v3613 = vadd.f32 %v541, 0.25
        %v3614 = vadd.f32 %v542, 0.25
        %v3615 = vadd.f32 %v543, 0.25
        %v3616 = vadd.f32 %v544, 0.25
        %v3617 = vadd.f32 %v545, 0.25
        %v3618 = vadd.f32 %v546, 0.25
        %v3619 = vadd.f32 %v547, 0.25
        %v3620 = vadd.f32 %v548, 0.25
        %v3621 = vadd.f32 %v549, 0.25
        %v3622 = vadd.f32 %v550, 0.25
        %v3623 = vadd.f32 %v551, 0.25
        %v3624 = vadd.f32 %v552, 0.25
        %v3625 = vadd.f32 %v553, 0.25
        %v3626 = vadd.f32 %v554, 0.25
        %v3627 = vadd.f32 %v555, 0.25
        %v3628 = vadd.f32 %v556, 0.25
        %v3629 = vadd.f32 %v557, 0.25
        %v3630 = vadd.f32 %v558, 0.25
        %v3631 = vadd.f32 %v559, 0.25
        %v3632 = vadd.f32 %v560, 0.25
        %v3633 = vadd.f32 %v561, 0.25
        %v3634 = vadd.f32 %v562, 0.25
        %v3635 = vadd.f32 %v563, 0.25
        %v3636 = vadd.f32 %v564, 0.25
        %v3637 = vadd.f32 %v565, 0.25
        %v3638 = vadd.f32 %v566, 0.25
        %v3639 = vadd.f32 %v567, 0.25
        %v3640 = vadd.f32 %v568, 0.25
        %v3641 = vadd.f32 %v569, 0.25
        %v3642 = vadd.f32 %v570, 0.25
        %v3643 = vadd.f32 %v571, 0.25
        %v3644 = vadd.f32 %v572, 0.25
        %v3645 = vadd.f32 %v573, 0.25
        %v3646 = vadd.f32 %v574, 0.25
        %v3647 = vadd.f32 %v575, 0.25
        %v3648 = vadd.f32 %v576, 0.25
        %v3649 = vadd.f32 %v577, 0.25
        %v3650 = vadd.f32 %v578, 0.25
        %v3651 = vadd.f32 %v579, 0.25
        %v3652 = vadd.f32 %v580, 0.25
        %v3653 = vadd.f32 %v581, 0.25
        %v3654 = vadd.f32 %v582, 0.25
        %v3655 = vadd.f32 %v583, 0.25
        %v3656 = vadd.f32 %v584, 0.25
        %v3657 = vadd.f32 %v585, 0.25
        %v3658 = vadd.f32 %v586, 0.25
        %v3659 = vadd.f32 %v587, 0.25
        %v3660 = vadd.f32 %v588, 0.25
        %v3661 = vadd.f32 %v589, 0.25
        %v3662 = vadd.f32 %v590, 0.25
        %v3663 = vadd.f32 %v591, 0.25
        %v3664 = vadd.f32 %v592, 0.25
        %v3665 = vadd.f32 %v593, 0.25
        %v3666 = vadd.f32 %v594, 0.25
        %v3667 = vadd.f32 %v595, 0.25
        %v3668 = vadd.f32 %v596, 0.25
        %v3669 = vadd.f32 %v597, 0.25
        %v3670 = vadd.f32 %v598, 0.25
        %v3671 = vadd.f32 %v599, 0.25
        %v3672 = vadd.f32 %v600, 0.25
        %v3673 = vadd.f32 %v601, 0.25
        %v3674 = vadd.f32 %v602, 0.25
        %v3675 = vadd.f32 %v603, 0.25
        %v3676 = vadd.f32 %v604, 0.25
        %v3677 = vadd.f32 %v605, 0.25
        %v3678 = vadd.f32 %v606, 0.25
        %v3679 = vadd.f32 %v607, 0.25
        %v3680 = vadd.f32 %v608, 0.25
        %v3681 = vadd.f32 %v609, 0.25
        %v3682 = vadd.f32 %v610, 0.25
        %v3683 = vadd.f32 %v611, 0.25
        %v3684 = vadd.f32 %v612, 0.25
        %v3685 = vadd.f32 %v613, 0.25
        %v3686 = vadd.f32 %v614, 0.25
        %v3687 = vadd.f32 %v615, 0.25
        %v3688 = vadd.f32 %v616, 0.25
        %v3689 = vadd.f32 %v617, 0.25
        %v3690 = vadd.f32 %v618, 0.25
        %v3691 = vadd.f32 %v619, 0.25
        %v3692 = vadd.f32 %v620, 0.25
        %v3693 = vadd.f32 %v621, 0.25
        %v3694 = vadd.f32 %v622, 0.25
        %v3695 = vadd.f32 %v623, 0.25
        %v3696 = vadd.f32 %v624, 0.25
        %v3697 = vadd.f32 %v625, 0.25
        %v3698 = vadd.f32 %v626, 0.25
        %v3699 = vadd.f32 %v627, 0.25
        %v3700 = vadd.f32 %v628, 0.25
        %v3701 = vadd.f32 %v629, 0.25
        %v3702 = vadd.f32 %v630, 0.25
        %v3703 = vadd.f32 %v631, 0.25
        %v3704 = vadd.f32 %v632, 0.25
        %v3705 = vadd.f32 %v633, 0.25
        %v3706 = vadd.f32 %v634, 0.25
        %v3707 = vadd.f32 %v635, 0.25
        %v3708 = vadd.f32 %v636, 0.25
        %v3709 = vadd.f32 %v637, 0.25
        %v3710 = vadd.f32 %v638, 0.25
        %v3711 = vadd.f32 %v639, 0.25
        %v3712 = vadd.f32 %v640, 0.25
        %v3713 = vadd.f32 %v641, 0.25
        %v3714 = vadd.f32 %v642, 0.25
        %v3715 = vadd.f32 %v643, 0.25
        %v3716 = vadd.f32 %v644, 0.25
        %v3717 = vadd.f32 %v645, 0.25
        %v3718 = vadd.f32 %v646, 0.25
        %v3719 = vadd.f32 %v647, 0.25
        %v3720 = vadd.f32 %v648, 0.25
        %v3721 = vadd.f32 %v649, 0.25
        %v3722 = vadd.f32 %v650, 0.25
        %v3723 = vadd.f32 %v651, 0.25
        %v3724 = vadd.f32 %v652, 0.25
        %v3725 = vadd.f32 %v653, 0.25
        %v3726 = vadd.f32 %v654, 0.25
        %v3727 = vadd.f32 %v655, 0.25
        %v3728 = vadd.f32 %v656, 0.25
        %v3729 = vadd.f32 %v657, 0.25
        %v3730 = vadd.f32 %v658, 0.25
        %v3731 = vadd.f32 %v659, 0.25
        %v3732 = vadd.f32 %v660, 0.25
        %v3733 = vadd.f32 %v661, 0.25
        %v3734 = vadd.f32 %v662, 0.25
        %v3735 = vadd.f32 %v663, 0.25
        %v3736 = vadd.f32 %v664, 0.25
        %v3737 = vadd.f32 %v665, 0.25
        %v3738 = vadd.f32 %v666, 0.25
        %v3739 = vadd.f32 %v667, 0.25
        %v3740 = vadd.f32 %v668, 0.25
        %v3741 = vadd.f32 %v669, 0.25
        %v3742 = vadd.f32 %v670, 0.25
        %v3743 = vadd.f32 %v671, 0.25
        %v3744 = vadd.f32 %v672, 0.25
        %v3745 = vadd.f32 %v673, 0.25
        %v3746 = vadd.f32 %v674, 0.25
        %v3747 = vadd.f32 %v675, 0.25
        %v3748 = vadd.f32 %v676, 0.25
        %v3749 = vadd.f32 %v677, 0.25
        %v3750 = vadd.f32 %v678, 0.25
        %v3751 = vadd.f32 %v679, 0.25
        %v3752 = vadd.f32 %v680, 0.25
        %v3753 = vadd.f32 %v681, 0.25
        %v3754 = vadd.f32 %v682, 0.25
        %v3755 = vadd.f32 %v683, 0.25
        %v3756 = vadd.f32 %v684, 0.25
        %v3757 = vadd.f32 %v685, 0.25
        %v3758 = vadd.f32 %v686, 0.25
        %v3759 = vadd.f32 %v687, 0.25
        %v3760 = vadd.f32 %v688, 0.25
        %v3761 = vadd.f32 %v689, 0.25
        %v3762 = vadd.f32 %v690, 0.25
        %v3763 = vadd.f32 %v691, 0.25
        %v3764 = vadd.f32 %v692, 0.25
        %v3765 = vadd.f32 %v693, 0.25
        %v3766 = vadd.f32 %v694, 0.25
        %v3767 = vadd.f32 %v695, 0.25
        %v3768 = vadd.f32 %v696, 0.25
        %v3769 = vadd.f32 %v697, 0.25
        %v3770 = vadd.f32 %v698, 0.25
        %v3771 = vadd.f32 %v699, 0.25
        %v3772 = vadd.f32 %v700, 0.25
        %v3773 = vadd.f32 %v701, 0.25
        %v3774 = vadd.f32 %v702, 0.25
        %v3775 = vadd.f32 %v703, 0.25
        %v3776 = vadd.f32 %v704, 0.25
        %v3777 = vadd.f32 %v705, 0.25
        %v3778 = vadd.f32 %v706, 0.25
        %v3779 = vadd.f32 %v707, 0.25
        %v3780 = vadd.f32 %v708, 0.25
        %v3781 = vadd.f32 %v709, 0.25
        %v3782 = vadd.f32 %v710, 0.25
        %v3783 = vadd.f32 %v711, 0.25
        %v3784 = vadd.f32 %v712, 0.25
        %v3785 = vadd.f32 %v713, 0.25
        %v3786 = vadd.f32 %v714, 0.25
        %v3787 = vadd.f32 %v715, 0.25
        %v3788 = vadd.f32 %v716, 0.25
        %v3789 = vadd.f32 %v717, 0.25
        %v3790 = vadd.f32 %v718, 0.25
        %v3791 = vadd.f32 %v719, 0.25
        %v3792 = vadd.f32 %v720, 0.25
        %v3793 = vadd.f32 %v721, 0.25
        %v3794 = vadd.f32 %v722, 0.25
        %v3795 = vadd.f32 %v723, 0.25
        %v3796 = vadd.f32 %v724, 0.25
        %v3797 = vadd.f32 %v725, 0.25
        %v3798 = vadd.f32 %v726, 0.25
        %v3799 = vadd.f32 %v727, 0.25
        %v3800 = vadd.f32 %v728, 0.25
        %v3801 = vadd.f32 %v729, 0.25
        %v3802 = vadd.f32 %v730, 0.25
        %v3803 = vadd.f32 %v731, 0.25
        %v3804 = vadd.f32 %v732, 0.25
        %v3805 = vadd.f32 %v733, 0.25
        %v3806 = vadd.f32 %v734, 0.25
        %v3807 = vadd.f32 %v735, 0.25
        %v3808 = vadd.f32 %v736, 0.25
        %v3809 = vadd.f32 %v737, 0.25
        %v3810 = vadd.f32 %v738, 0.25
        %v3811 = vadd.f32 %v739, 0.25
        %v3812 = vadd.f32 %v740, 0.25
        %v3813 = vadd.f32 %v741, 0.25
        %v3814 = vadd.f32 %v742, 0.25
        %v3815 = vadd.f32 %v743, 0.25
        %v3816 = vadd.f32 %v744, 0.25
        %v3817 = vadd.f32 %v745, 0.25
        %v3818 = vadd.f32 %v746, 0.25
        %v3819 = vadd.f32 %v747, 0.25
        %v3820 = vadd.f32 %v748, 0.25
        %v3821 = vadd.f32 %v749, 0.25
        %v3822 = vadd.f32 %v750, 0.25
        %v3823 = vadd.f32 %v751, 0.25
        %v3824 = vadd.f32 %v752, 0.25
        %v3825 = vadd.f32 %v753, 0.25
        %v3826 = vadd.f32 %v754, 0.25
        %v3827 = vadd.f32 %v755, 0.25
        %v3828 = vadd.f32 %v756, 0.25
        %v3829 = vadd.f32 %v757, 0.25
        %v3830 = vadd.f32 %v758, 0.25
        %v3831 = vadd.f32 %v759, 0.25
        %v3832 = vadd.f32 %v760, 0.25
        %v3833 = vadd.f32 %v761, 0.25
        %v3834 = vadd.f32 %v762, 0.25
        %v3835 = vadd.f32 %v763, 0.25
        %v3836 = vadd.f32 %v764, 0.25
        %v3837 = vadd.f32 %v765, 0.25
        %v3838 = vadd.f32 %v766, 0.25
        %v3839 = vadd.f32 %v767, 0.25
        %v3840 = vadd.f32 %v768, 0.25
        %v3841 = vadd.f32 %v769, 0.25
        %v3842 = vadd.f32 %v770, 0.25
        %v3843 = vadd.f32 %v771, 0.25
        %v3844 = vadd.f32 %v772, 0.25
        %v3845 = vadd.f32 %v773, 0.25
        %v3846 = vadd.f32 %v774, 0.25
        %v3847 = vadd.f32 %v775, 0.25
        %v3848 = vadd.f32 %v776, 0.25
        %v3849 = vadd.f32 %v777, 0.25
        %v3850 = vadd.f32 %v778, 0.25
        %v3851 = vadd.f32 %v779, 0.25
        %v3852 = vadd.f32 %v780, 0.25
        %v3853 = vadd.f32 %v781, 0.25
        %v3854 = vadd.f32 %v782, 0.25
        %v3855 = vadd.f32 %v783, 0.25
        %v3856 = vadd.f32 %v784, 0.25
        %v3857 = vadd.f32 %v785, 0.25
        %v3858 = vadd.f32 %v786, 0.25
        %v3859 = vadd.f32 %v787, 0.25
        %v3860 = vadd.f32 %v788, 0.25
        %v3861 = vadd.f32 %v789, 0.25
        %v3862 = vadd.f32 %v790, 0.25
        %v3863 = vadd.f32 %v791, 0.25
        %v3864 = vadd.f32 %v792, 0.25
        %v3865 = vadd.f32 %v793, 0.25
        %v3866 = vadd.f32 %v794, 0.25
        %v3867 = vadd.f32 %v795, 0.25
        %v3868 = vadd.f32 %v796, 0.25
        %v3869 = vadd.f32 %v797, 0.25
        %v3870 = vadd.f32 %v798, 0.25
        %v3871 = vadd.f32 %v799, 0.25
        %v3872 = vadd.f32 %v800, 0.25
        %v3873 = vadd.f32 %v801, 0.25
        %v3874 = vadd.f32 %v802, 0.25
        %v3875 = vadd.f32 %v803, 0.25
        %v3876 = vadd.f32 %v804, 0.25
        %v3877 = vadd.f32 %v805, 0.25
        %v3878 = vadd.f32 %v806, 0.25
        %v3879 = vadd.f32 %v807, 0.25
        %v3880 = vadd.f32 %v808, 0.25
        %v3881 = vadd.f32 %v809, 0.25
        %v3882 = vadd.f32 %v810, 0.25
        %v3883 = vadd.f32 %v811, 0.25
        %v3884 = vadd.f32 %v812, 0.25
        %v3885 = vadd.f32 %v813, 0.25
        %v3886 = vadd.f32 %v814, 0.25
        %v3887 = vadd.f32 %v815, 0.25
        %v3888 = vadd.f32 %v816, 0.25
        %v3889 = vadd.f32 %v817, 0.25
        %v3890 = vadd.f32 %v818, 0.25
        %v3891 = vadd.f32 %v819, 0.25
        %v3892 = vadd.f32 %v820, 0.25
        %v3893 = vadd.f32 %v821, 0.25
        %v3894 = vadd.f32 %v822, 0.25
        %v3895 = vadd.f32 %v823, 0.25
        %v3896 = vadd.f32 %v824, 0.25
        %v3897 = vadd.f32 %v825, 0.25
        %v3898 = vadd.f32 %v826, 0.25
        %v3899 = vadd.f32 %v827, 0.25
        %v3900 = vadd.f32 %v828, 0.25
        %v3901 = vadd.f32 %v829, 0.25
        %v3902 = vadd.f32 %v830, 0.25
        %v3903 = vadd.f32 %v831, 0.25
        %v3904 = vadd.f32 %v832, 0.25
        %v3905 = vadd.f32 %v833, 0.25
        %v3906 = vadd.f32 %v834, 0.25
        %v3907 = vadd.f32 %v835, 0.25
        %v3908 = vadd.f32 %v836, 0.25
        %v3909 = vadd.f32 %v837, 0.25
        %v3910 = vadd.f32 %v838, 0.25
        %v3911 = vadd.f32 %v839, 0.25
        %v3912 = vadd.f32 %v840, 0.25
        %v3913 = vadd.f32 %v841, 0.25
        %v3914 = vadd.f32 %v842, 0.25
        %v3915 = vadd.f32 %v843, 0.25
        %v3916 = vadd.f32 %v844, 0.25
        %v3917 = vadd.f32 %v845, 0.25
        %v3918 = vadd.f32 %v846, 0.25
        %v3919 = vadd.f32 %v847, 0.25
        %v3920 = vadd.f32 %v848, 0.25
        %v3921 = vadd.f32 %v849, 0.25
        %v3922 = vadd.f32 %v850, 0.25
        %v3923 = vadd.f32 %v851, 0.25
        %v3924 = vadd.f32 %v852, 0.25
        %v3925 = vadd.f32 %v853, 0.25
        %v3926 = vadd.f32 %v854, 0.25
        %v3927 = vadd.f32 %v855, 0.25
        %v3928 = vadd.f32 %v856, 0.25
        %v3929 = vadd.f32 %v857, 0.25
        %v3930 = vadd.f32 %v858, 0.25
        %v3931 = vadd.f32 %v859, 0.25
        %v3932 = vadd.f32 %v860, 0.25
        %v3933 = vadd.f32 %v861, 0.25
        %v3934 = vadd.f32 %v862, 0.25
        %v3935 = vadd.f32 %v863, 0.25
        %v3936 = vadd.f32 %v864, 0.25
        %v3937 = vadd.f32 %v865, 0.25
        %v3938 = vadd.f32 %v866, 0.25
        %v3939 = vadd.f32 %v867, 0.25
        %v3940 = vadd.f32 %v868, 0.25
        %v3941 = vadd.f32 %v869, 0.25
        %v3942 = vadd.f32 %v870, 0.25
        %v3943 = vadd.f32 %v871, 0.25
        %v3944 = vadd.f32 %v872, 0.25
        %v3945 = vadd.f32 %v873, 0.25
        %v3946 = vadd.f32 %v874, 0.25
        %v3947 = vadd.f32 %v875, 0.25
        %v3948 = vadd.f32 %v876, 0.25
        %v3949 = vadd.f32 %v877, 0.25
        %v3950 = vadd.f32 %v878, 0.25
        %v3951 = vadd.f32 %v879, 0.25
        %v3952 = vadd.f32 %v880, 0.25
        %v3953 = vadd.f32 %v881, 0.25
        %v3954 = vadd.f32 %v882, 0.25
        %v3955 = vadd.f32 %v883, 0.25
        %v3956 = vadd.f32 %v884, 0.25
        %v3957 = vadd.f32 %v885, 0.25
        %v3958 = vadd.f32 %v886, 0.25
        %v3959 = vadd.f32 %v887, 0.25
        %v3960 = vadd.f32 %v888, 0.25
        %v3961 = vadd.f32 %v889, 0.25
        %v3962 = vadd.f32 %v890, 0.25
        %v3963 = vadd.f32 %v891, 0.25
        %v3964 = vadd.f32 %v892, 0.25
        %v3965 = vadd.f32 %v893, 0.25
        %v3966 = vadd.f32 %v894, 0.25
        %v3967 = vadd.f32 %v895, 0.25
        %v3968 = vadd.f32 %v896, 0.25
        %v3969 = vadd.f32 %v897, 0.25
        %v3970 = vadd.f32 %v898, 0.25
        %v3971 = vadd.f32 %v899, 0.25
        %v3972 = vadd.f32 %v900, 0.25
        %v3973 = vadd.f32 %v901, 0.25
        %v3974 = vadd.f32 %v902, 0.25
        %v3975 = vadd.f32 %v903, 0.25
        %v3976 = vadd.f32 %v904, 0.25
        %v3977 = vadd.f32 %v905, 0.25
        %v3978 = vadd.f32 %v906, 0.25
        %v3979 = vadd.f32 %v907, 0.25
        %v3980 = vadd.f32 %v908, 0.25
        %v3981 = vadd.f32 %v909, 0.25
        %v3982 = vadd.f32 %v910, 0.25
        %v3983 = vadd.f32 %v911, 0.25
        %v3984 = vadd.f32 %v912, 0.25
        %v3985 = vadd.f32 %v913, 0.25
        %v3986 = vadd.f32 %v914, 0.25
        %v3987 = vadd.f32 %v915, 0.25
        %v3988 = vadd.f32 %v916, 0.25
        %v3989 = vadd.f32 %v917, 0.25
        %v3990 = vadd.f32 %v918, 0.25
        %v3991 = vadd.f32 %v919, 0.25
        %v3992 = vadd.f32 %v920, 0.25
        %v3993 = vadd.f32 %v921, 0.25
        %v3994 = vadd.f32 %v922, 0.25
        %v3995 = vadd.f32 %v923, 0.25
        %v3996 = vadd.f32 %v924, 0.25
        %v3997 = vadd.f32 %v925, 0.25
        %v3998 = vadd.f32 %v926, 0.25
        %v3999 = vadd.f32 %v927, 0.25
        %v4000 = vadd.f32 %v928, 0.25
        %v4001 = vadd.f32 %v929, 0.25
        %v4002 = vadd.f32 %v930, 0.25
        %v4003 = vadd.f32 %v931, 0.25
        %v4004 = vadd.f32 %v932, 0.25
        %v4005 = vadd.f32 %v933, 0.25
        %v4006 = vadd.f32 %v934, 0.25
        %v4007 = vadd.f32 %v935, 0.25
        %v4008 = vadd.f32 %v936, 0.25
        %v4009 = vadd.f32 %v937, 0.25
        %v4010 = vadd.f32 %v938, 0.25
        %v4011 = vadd.f32 %v939, 0.25
        %v4012 = vadd.f32 %v940, 0.25
        %v4013 = vadd.f32 %v941, 0.25
        %v4014 = vadd.f32 %v942, 0.25
        %v4015 = vadd.f32 %v943, 0.25
        %v4016 = vadd.f32 %v944, 0.25
        %v4017 = vadd.f32 %v945, 0.25
        %v4018 = vadd.f32 %v946, 0.25
        %v4019 = vadd.f32 %v947, 0.25
        %v4020 = vadd.f32 %v948, 0.25
        %v4021 = vadd.f32 %v949, 0.25
        %v4022 = vadd.f32 %v950, 0.25
        %v4023 = vadd.f32 %v951, 0.25
        %v4024 = vadd.f32 %v952, 0.25
        %v4025 = vadd.f32 %v953, 0.25
        %v4026 = vadd.f32 %v954, 0.25
        %v4027 = vadd.f32 %v955, 0.25
        %v4028 = vadd.f32 %v956, 0.25
        %v4029 = vadd.f32 %v957, 0.25
        %v4030 = vadd.f32 %v958, 0.25
        %v4031 = vadd.f32 %v959, 0.25
        %v4032 = vadd.f32 %v960, 0.25
        %v4033 = vadd.f32 %v961, 0.25
        %v4034 = vadd.f32 %v962, 0.25
        %v4035 = vadd.f32 %v963, 0.25
        %v4036 = vadd.f32 %v964, 0.25
        %v4037 = vadd.f32 %v965, 0.25
        %v4038 = vadd.f32 %v966, 0.25
        %v4039 = vadd.f32 %v967, 0.25
        %v4040 = vadd.f32 %v968, 0.25
        %v4041 = vadd.f32 %v969, 0.25
        %v4042 = vadd.f32 %v970, 0.25
        %v4043 = vadd.f32 %v971, 0.25
        %v4044 = vadd.f32 %v972, 0.25
        %v4045 = vadd.f32 %v973, 0.25
        %v4046 = vadd.f32 %v974, 0.25
        %v4047 = vadd.f32 %v975, 0.25
        %v4048 = vadd.f32 %v976, 0.25
        %v4049 = vadd.f32 %v977, 0.25
        %v4050 = vadd.f32 %v978, 0.25
        %v4051 = vadd.f32 %v979, 0.25
        %v4052 = vadd.f32 %v980, 0.25
        %v4053 = vadd.f32 %v981, 0.25
        %v4054 = vadd.f32 %v982, 0.25
        %v4055 = vadd.f32 %v983, 0.25
        %v4056 = vadd.f32 %v984, 0.25
        %v4057 = vadd.f32 %v985, 0.25
        %v4058 = vadd.f32 %v986, 0.25
        %v4059 = vadd.f32 %v987, 0.25
        %v4060 = vadd.f32 %v988, 0.25
        %v4061 = vadd.f32 %v989, 0.25
        %v4062 = vadd.f32 %v990, 0.25
        %v4063 = vadd.f32 %v991, 0.25
        %v4064 = vadd.f32 %v992, 0.25
        %v4065 = vadd.f32 %v993, 0.25
        %v4066 = vadd.f32 %v994, 0.25
        %v4067 = vadd.f32 %v995, 0.25
        %v4068 = vadd.f32 %v996, 0.25
        %v4069 = vadd.f32 %v997, 0.25
        %v4070 = vadd.f32 %v998, 0.25
        %v4071 = vadd.f32 %v999, 0.25
        %v4072 = vadd.f32 %v1000, 0.25
        %v4073 = vadd.f32 %v1001, 0.25
        %v4074 = vadd.f32 %v1002, 0.25
        %v4075 = vadd.f32 %v1003, 0.25
        %v4076 = vadd.f32 %v1004, 0.25
        %v4077 = vadd.f32 %v1005, 0.25
        %v4078 = vadd.f32 %v1006, 0.25
        %v4079 = vadd.f32 %v1007, 0.25
        %v4080 = vadd.f32 %v1008, 0.25
        %v4081 = vadd.f32 %v1009, 0.25
        %v4082 = vadd.f32 %v1010, 0.25
        %v4083 = vadd.f32 %v1011, 0.25
        %v4084 = vadd.f32 %v1012, 0.25
        %v4085 = vadd.f32 %v1013, 0.25
        %v4086 = vadd.f32 %v1014, 0.25
        %v4087 = vadd.f32 %v1015, 0.25
        %v4088 = vadd.f32 %v1016, 0.25
        %v4089 = vadd.f32 %v1017, 0.25
        %v4090 = vadd.f32 %v1018, 0.25
        %v4091 = vadd.f32 %v1019, 0.25
        %v4092 = vadd.f32 %v1020, 0.25
        %v4093 = vadd.f32 %v1021, 0.25
        %v4094 = vadd.f32 %v1022, 0.25
        %v4095 = vadd.f32 %v1023, 0.25
        %v4096 = vadd.f32 %v1024, 0.25
        %v4097 = vadd.f32 %v1025, 0.25
        %v4098 = vadd.f32 %v1026, 0.25
        %v4099 = vadd.f32 %v1027, 0.25
        %v4100 = vadd.f32 %v1028, 0.25
        %v4101 = vadd.f32 %v1029, 0.25
        %v4102 = vadd.f32 %v1030, 0.25
        %v4103 = vadd.f32 %v1031, 0.25
        %v4104 = vadd.f32 %v1032, 0.25
        %v4105 = vadd.f32 %v1033, 0.25
        %v4106 = vadd.f32 %v1034, 0.25
        %v4107 = vadd.f32 %v1035, 0.25
        %v4108 = vadd.f32 %v1036, 0.25
        %v4109 = vadd.f32 %v1037, 0.25
        %v4110 = vadd.f32 %v1038, 0.25
        %v4111 = vadd.f32 %v1039, 0.25
        %v4112 = vadd.f32 %v1040, 0.25
        %v4113 = vadd.f32 %v1041, 0.25
        %v4114 = vadd.f32 %v1042, 0.25
        %v4115 = vadd.f32 %v1043, 0.25
        %v4116 = vadd.f32 %v1044, 0.25
        %v4117 = vadd.f32 %v1045, 0.25
        %v4118 = vadd.f32 %v1046, 0.25
        %v4119 = vadd.f32 %v1047, 0.25
        %v4120 = vadd.f32 %v1048, 0.25
        %v4121 = vadd.f32 %v1049, 0.25
        %v4122 = vadd.f32 %v1050, 0.25
        %v4123 = vadd.f32 %v1051, 0.25
        %v4124 = vadd.f32 %v1052, 0.25
        %v4125 = vadd.f32 %v1053, 0.25
        %v4126 = vadd.f32 %v1054, 0.25
        %v4127 = vadd.f32 %v1055, 0.25
        %v4128 = vadd.f32 %v1056, 0.25
        %v4129 = vadd.f32 %v1057, 0.25
        %v4130 = vadd.f32 %v1058, 0.25
        %v4131 = vadd.f32 %v1059, 0.25
        %v4132 = vadd.f32 %v1060, 0.25
        %v4133 = vadd.f32 %v1061, 0.25
        %v4134 = vadd.f32 %v1062, 0.25
        %v4135 = vadd.f32 %v1063, 0.25
        %v4136 = vadd.f32 %v1064, 0.25
        %v4137 = vadd.f32 %v1065, 0.25
        %v4138 = vadd.f32 %v1066, 0.25
        %v4139 = vadd.f32 %v1067, 0.25
        %v4140 = vadd.f32 %v1068, 0.25
        %v4141 = vadd.f32 %v1069, 0.25
        %v4142 = vadd.f32 %v1070, 0.25
        %v4143 = vadd.f32 %v1071, 0.25
        %v4144 = vadd.f32 %v1072, 0.25
        %v4145 = vadd.f32 %v1073, 0.25
        %v4146 = vadd.f32 %v1074, 0.25
        %v4147 = vadd.f32 %v1075, 0.25
        %v4148 = vadd.f32 %v1076, 0.25
        %v4149 = vadd.f32 %v1077, 0.25
        %v4150 = vadd.f32 %v1078, 0.25
        %v4151 = vadd.f32 %v1079, 0.25
        %v4152 = vadd.f32 %v1080, 0.25
        %v4153 = vadd.f32 %v1081, 0.25
        %v4154 = vadd.f32 %v1082, 0.25
        %v4155 = vadd.f32 %v1083, 0.25
        %v4156 = vadd.f32 %v1084, 0.25
        %v4157 = vadd.f32 %v1085, 0.25
        %v4158 = vadd.f32 %v1086, 0.25
        %v4159 = vadd.f32 %v1087, 0.25
        %v4160 = vadd.f32 %v1088, 0.25
        %v4161 = vadd.f32 %v1089, 0.25
        %v4162 = vadd.f32 %v1090, 0.25
        %v4163 = vadd.f32 %v1091, 0.25
        %v4164 = vadd.f32 %v1092, 0.25
        %v4165 = vadd.f32 %v1093, 0.25
        %v4166 = vadd.f32 %v1094, 0.25
        %v4167 = vadd.f32 %v1095, 0.25
        %v4168 = vadd.f32 %v1096, 0.25
        %v4169 = vadd.f32 %v1097, 0.25
        %v4170 = vadd.f32 %v1098, 0.25
        %v4171 = vadd.f32 %v1099, 0.25
        %v4172 = vadd.f32 %v1100, 0.25
        %v4173 = vadd.f32 %v1101, 0.25
        %v4174 = vadd.f32 %v1102, 0.25
        %v4175 = vadd.f32 %v1103, 0.25
        %v4176 = vadd.f32 %v1104, 0.25
        %v4177 = vadd.f32 %v1105, 0.25
        %v4178 = vadd.f32 %v1106, 0.25
        %v4179 = vadd.f32 %v1107, 0.25
        %v4180 = vadd.f32 %v1108, 0.25
        %v4181 = vadd.f32 %v1109, 0.25
        %v4182 = vadd.f32 %v1110, 0.25
        %v4183 = vadd.f32 %v1111, 0.25
        %v4184 = vadd.f32 %v1112, 0.25
        %v4185 = vadd.f32 %v1113, 0.25
        %v4186 = vadd.f32 %v1114, 0.25
        %v4187 = vadd.f32 %v1115, 0.25
        %v4188 = vadd.f32 %v1116, 0.25
        %v4189 = vadd.f32 %v1117, 0.25
        %v4190 = vadd.f32 %v1118, 0.25
        %v4191 = vadd.f32 %v1119, 0.25
        %v4192 = vadd.f32 %v1120, 0.25
        %v4193 = vadd.f32 %v1121, 0.25
        %v4194 = vadd.f32 %v1122, 0.25
        %v4195 = vadd.f32 %v1123, 0.25
        %v4196 = vadd.f32 %v1124, 0.25
        %v4197 = vadd.f32 %v1125, 0.25
        %v4198 = vadd.f32 %v1126, 0.25
        %v4199 = vadd.f32 %v1127, 0.25
        %v4200 = vadd.f32 %v1128, 0.25
        %v4201 = vadd.f32 %v1129, 0.25
        %v4202 = vadd.f32 %v1130, 0.25
        %v4203 = vadd.f32 %v1131, 0.25
        %v4204 = vadd.f32 %v1132, 0.25
        %v4205 = vadd.f32 %v1133, 0.25
        %v4206 = vadd.f32 %v1134, 0.25
        %v4207 = vadd.f32 %v1135, 0.25
        %v4208 = vadd.f32 %v1136, 0.25
        %v4209 = vadd.f32 %v1137, 0.25
        %v4210 = vadd.f32 %v1138, 0.25
        %v4211 = vadd.f32 %v1139, 0.25
        %v4212 = vadd.f32 %v1140, 0.25
        %v4213 = vadd.f32 %v1141, 0.25
        %v4214 = vadd.f32 %v1142, 0.25
        %v4215 = vadd.f32 %v1143, 0.25
        %v4216 = vadd.f32 %v1144, 0.25
        %v4217 = vadd.f32 %v1145, 0.25
        %v4218 = vadd.f32 %v1146, 0.25
        %v4219 = vadd.f32 %v1147, 0.25
        %v4220 = vadd.f32 %v1148, 0.25
        %v4221 = vadd.f32 %v1149, 0.25
        %v4222 = vadd.f32 %v1150, 0.25
        %v4223 = vadd.f32 %v1151, 0.25
        %v4224 = vadd.f32 %v1152, 0.25
        %v4225 = vadd.f32 %v1153, 0.25
        %v4226 = vadd.f32 %v1154, 0.25
        %v4227 = vadd.f32 %v1155, 0.25
        %v4228 = vadd.f32 %v1156, 0.25
        %v4229 = vadd.f32 %v1157, 0.25
        %v4230 = vadd.f32 %v1158, 0.25
        %v4231 = vadd.f32 %v1159, 0.25
        %v4232 = vadd.f32 %v1160, 0.25
        %v4233 = vadd.f32 %v1161, 0.25
        %v4234 = vadd.f32 %v1162, 0.25
        %v4235 = vadd.f32 %v1163, 0.25
        %v4236 = vadd.f32 %v1164, 0.25
        %v4237 = vadd.f32 %v1165, 0.25
        %v4238 = vadd.f32 %v1166, 0.25
        %v4239 = vadd.f32 %v1167, 0.25
        %v4240 = vadd.f32 %v1168, 0.25
        %v4241 = vadd.f32 %v1169, 0.25
        %v4242 = vadd.f32 %v1170, 0.25
        %v4243 = vadd.f32 %v1171, 0.25
        %v4244 = vadd.f32 %v1172, 0.25
        %v4245 = vadd.f32 %v1173, 0.25
        %v4246 = vadd.f32 %v1174, 0.25
        %v4247 = vadd.f32 %v1175, 0.25
        %v4248 = vadd.f32 %v1176, 0.25
        %v4249 = vadd.f32 %v1177, 0.25
        %v4250 = vadd.f32 %v1178, 0.25
        %v4251 = vmin.f32 %v3227, 0.0
        %v4252 = vmin.f32 %v3228, 0.0
        %v4253 = vmin.f32 %v3229, 0.0
        %v4254 = vmin.f32 %v3230, 0.0
        %v4255 = vmin.f32 %v3231, 0.0
        %v4256 = vmin.f32 %v3232, 0.0
        %v4257 = vmin.f32 %v3233, 0.0
        %v4258 = vmin.f32 %v3234, 0.0
        %v4259 = vmin.f32 %v3235, 0.0
        %v4260 = vmin.f32 %v3236, 0.0
        %v4261 = vmin.f32 %v3237, 0.0
        %v4262 = vmin.f32 %v3238, 0.0
        %v4263 = vmin.f32 %v3239, 0.0
        %v4264 = vmin.f32 %v3240, 0.0
        %v4265 = vmin.f32 %v3241, 0.0
        %v4266 = vmin.f32 %v3242, 0.0
        %v4267 = vmin.f32 %v3243, 0.0
        %v4268 = vmin.f32 %v3244, 0.0
        %v4269 = vmin.f32 %v3245, 0.0
        %v4270 = vmin.f32 %v3246, 0.0
        %v4271 = vmin.f32 %v3247, 0.0
        %v4272 = vmin.f32 %v3248, 0.0
        %v4273 = vmin.f32 %v3249, 0.0
        %v4274 = vmin.f32 %v3250, 0.0
        %v4275 = vmin.f32 %v3251, 0.0
        %v4276 = vmin.f32 %v3252, 0.0
        %v4277 = vmin.f32 %v3253, 0.0
        %v4278 = vmin.f32 %v3254, 0.0
        %v4279 = vmin.f32 %v3255, 0.0
        %v4280 = vmin.f32 %v3256, 0.0
        %v4281 = vmin.f32 %v3257, 0.0
        %v4282 = vmin.f32 %v3258, 0.0
        %v4283 = vmin.f32 %v3259, 0.0
        %v4284 = vmin.f32 %v3260, 0.0
        %v4285 = vmin.f32 %v3261, 0.0
        %v4286 = vmin.f32 %v3262, 0.0
        %v4287 = vmin.f32 %v3263, 0.0
        %v4288 = vmin.f32 %v3264, 0.0
        %v4289 = vmin.f32 %v3265, 0.0
        %v4290 = vmin.f32 %v3266, 0.0
        %v4291 = vmin.f32 %v3267, 0.0
        %v4292 = vmin.f32 %v3268, 0.0
        %v4293 = vmin.f32 %v3269, 0.0
        %v4294 = vmin.f32 %v3270, 0.0
        %v4295 = vmin.f32 %v3271, 0.0
        %v4296 = vmin.f32 %v3272, 0.0
        %v4297 = vmin.f32 %v3273, 0.0
        %v4298 = vmin.f32 %v3274, 0.0
        %v4299 = vmin.f32 %v3275, 0.0
        %v4300 = vmin.f32 %v3276, 0.0
        %v4301 = vmin.f32 %v3277, 0.0
        %v4302 = vmin.f32 %v3278, 0.0
        %v4303 = vmin.f32 %v3279, 0.0
        %v4304 = vmin.f32 %v3280, 0.0
        %v4305 = vmin.f32 %v3281, 0.0
        %v4306 = vmin.f32 %v3282, 0.0
        %v4307 = vmin.f32 %v3283, 0.0
        %v4308 = vmin.f32 %v3284, 0.0
        %v4309 = vmin.f32 %v3285, 0.0
        %v4310 = vmin.f32 %v3286, 0.0
        %v4311 = vmin.f32 %v3287, 0.0
        %v4312 = vmin.f32 %v3288, 0.0
        %v4313 = vmin.f32 %v3289, 0.0
        %v4314 = vmin.f32 %v3290, 0.0
        %v4315 = vmin.f32 %v3291, 0.0
        %v4316 = vmin.f32 %v3292, 0.0
        %v4317 = vmin.f32 %v3293, 0.0
        %v4318 = vmin.f32 %v3294, 0.0
        %v4319 = vmin.f32 %v3295, 0.0
        %v4320 = vmin.f32 %v3296, 0.0
        %v4321 = vmin.f32 %v3297, 0.0
        %v4322 = vmin.f32 %v3298, 0.0
        %v4323 = vmin.f32 %v3299, 0.0
        %v4324 = vmin.f32 %v3300, 0.0
        %v4325 = vmin.f32 %v3301, 0.0
        %v4326 = vmin.f32 %v3302, 0.0
        %v4327 = vmin.f32 %v3303, 0.0
        %v4328 = vmin.f32 %v3304, 0.0
        %v4329 = vmin.f32 %v3305, 0.0
        %v4330 = vmin.f32 %v3306, 0.0
        %v4331 = vmin.f32 %v3307, 0.0
        %v4332 = vmin.f32 %v3308, 0.0
        %v4333 = vmin.f32 %v3309, 0.0
        %v4334 = vmin.f32 %v3310, 0.0
        %v4335 = vmin.f32 %v3311, 0.0
        %v4336 = vmin.f32 %v3312, 0.0
        %v4337 = vmin.f32 %v3313, 0.0
        %v4338 = vmin.f32 %v3314, 0.0
        %v4339 = vmin.f32 %v3315, 0.0
        %v4340 = vmin.f32 %v3316, 0.0
        %v4341 = vmin.f32 %v3317, 0.0
        %v4342 = vmin.f32 %v3318, 0.0
        %v4343 = vmin.f32 %v3319, 0.0
        %v4344 = vmin.f32 %v3320, 0.0
        %v4345 = vmin.f32 %v3321, 0.0
        %v4346 = vmin.f32 %v3322, 0.0
        %v4347 = vmin.f32 %v3323, 0.0
        %v4348 = vmin.f32 %v3324, 0.0
        %v4349 = vmin.f32 %v3325, 0.0
        %v4350 = vmin.f32 %v3326, 0.0
        %v4351 = vmin.f32 %v3327, 0.0
        %v4352 = vmin.f32 %v3328, 0.0
        %v4353 = vmin.f32 %v3329, 0.0
        %v4354 = vmin.f32 %v3330, 0.0
        %v4355 = vmin.f32 %v3331, 0.0
        %v4356 = vmin.f32 %v3332, 0.0
        %v4357 = vmin.f32 %v3333, 0.0
        %v4358 = vmin.f32 %v3334, 0.0
        %v4359 = vmin.f32 %v3335, 0.0
        %v4360 = vmin.f32 %v3336, 0.0
        %v4361 = vmin.f32 %v3337, 0.0
        %v4362 = vmin.f32 %v3338, 0.0
        %v4363 = vmin.f32 %v3339, 0.0
        %v4364 = vmin.f32 %v3340, 0.0
        %v4365 = vmin.f32 %v3341, 0.0
        %v4366 = vmin.f32 %v3342, 0.0
        %v4367 = vmin.f32 %v3343, 0.0
        %v4368 = vmin.f32 %v3344, 0.0
        %v4369 = vmin.f32 %v3345, 0.0
        %v4370 = vmin.f32 %v3346, 0.0
        %v4371 = vmin.f32 %v3347, 0.0
        %v4372 = vmin.f32 %v3348, 0.0
        %v4373 = vmin.f32 %v3349, 0.0
        %v4374 = vmin.f32 %v3350, 0.0
        %v4375 = vmin.f32 %v3351, 0.0
        %v4376 = vmin.f32 %v3352, 0.0
        %v4377 = vmin.f32 %v3353, 0.0
        %v4378 = vmin.f32 %v3354, 0.0
        %v4379 = vmin.f32 %v3355, 0.0
        %v4380 = vmin.f32 %v3356, 0.0
        %v4381 = vmin.f32 %v3357, 0.0
        %v4382 = vmin.f32 %v3358, 0.0
        %v4383 = vmin.f32 %v3359, 0.0
        %v4384 = vmin.f32 %v3360, 0.0
        %v4385 = vmin.f32 %v3361, 0.0
        %v4386 = vmin.f32 %v3362, 0.0
        %v4387 = vmin.f32 %v3363, 0.0
        %v4388 = vmin.f32 %v3364, 0.0
        %v4389 = vmin.f32 %v3365, 0.0
        %v4390 = vmin.f32 %v3366, 0.0
        %v4391 = vmin.f32 %v3367, 0.0
        %v4392 = vmin.f32 %v3368, 0.0
        %v4393 = vmin.f32 %v3369, 0.0
        %v4394 = vmin.f32 %v3370, 0.0
        %v4395 = vmin.f32 %v3371, 0.0
        %v4396 = vmin.f32 %v3372, 0.0
        %v4397 = vmin.f32 %v3373, 0.0
        %v4398 = vmin.f32 %v3374, 0.0
        %v4399 = vmin.f32 %v3375, 0.0
        %v4400 = vmin.f32 %v3376, 0.0
        %v4401 = vmin.f32 %v3377, 0.0
        %v4402 = vmin.f32 %v3378, 0.0
        %v4403 = vmin.f32 %v3379, 0.0
        %v4404 = vmin.f32 %v3380, 0.0
        %v4405 = vmin.f32 %v3381, 0.0
        %v4406 = vmin.f32 %v3382, 0.0
        %v4407 = vmin.f32 %v3383, 0.0
        %v4408 = vmin.f32 %v3384, 0.0
        %v4409 = vmin.f32 %v3385, 0.0
        %v4410 = vmin.f32 %v3386, 0.0
        %v4411 = vmin.f32 %v3387, 0.0
        %v4412 = vmin.f32 %v3388, 0.0
        %v4413 = vmin.f32 %v3389, 0.0
        %v4414 = vmin.f32 %v3390, 0.0
        %v4415 = vmin.f32 %v3391, 0.0
        %v4416 = vmin.f32 %v3392, 0.0
        %v4417 = vmin.f32 %v3393, 0.0
        %v4418 = vmin.f32 %v3394, 0.0
        %v4419 = vmin.f32 %v3395, 0.0
        %v4420 = vmin.f32 %v3396, 0.0
        %v4421 = vmin.f32 %v3397, 0.0
        %v4422 = vmin.f32 %v3398, 0.0
        %v4423 = vmin.f32 %v3399, 0.0
        %v4424 = vmin.f32 %v3400, 0.0
        %v4425 = vmin.f32 %v3401, 0.0
        %v4426 = vmin.f32 %v3402, 0.0
        %v4427 = vmin.f32 %v3403, 0.0
        %v4428 = vmin.f32 %v3404, 0.0
        %v4429 = vmin.f32 %v3405, 0.0
        %v4430 = vmin.f32 %v3406, 0.0
        %v4431 = vmin.f32 %v3407, 0.0
        %v4432 = vmin.f32 %v3408, 0.0
        %v4433 = vmin.f32 %v3409, 0.0
        %v4434 = vmin.f32 %v3410, 0.0
        %v4435 = vmin.f32 %v3411, 0.0
        %v4436 = vmin.f32 %v3412, 0.0
        %v4437 = vmin.f32 %v3413, 0.0
        %v4438 = vmin.f32 %v3414, 0.0
        %v4439 = vmin.f32 %v3415, 0.0
        %v4440 = vmin.f32 %v3416, 0.0
        %v4441 = vmin.f32 %v3417, 0.0
        %v4442 = vmin.f32 %v3418, 0.0
        %v4443 = vmin.f32 %v3419, 0.0
        %v4444 = vmin.f32 %v3420, 0.0
        %v4445 = vmin.f32 %v3421, 0.0
        %v4446 = vmin.f32 %v3422, 0.0
        %v4447 = vmin.f32 %v3423, 0.0
        %v4448 = vmin.f32 %v3424, 0.0
        %v4449 = vmin.f32 %v3425, 0.0
        %v4450 = vmin.f32 %v3426, 0.0
        %v4451 = vmin.f32 %v3427, 0.0
        %v4452 = vmin.f32 %v3428, 0.0
        %v4453 = vmin.f32 %v3429, 0.0
        %v4454 = vmin.f32 %v3430, 0.0
        %v4455 = vmin.f32 %v3431, 0.0
        %v4456 = vmin.f32 %v3432, 0.0
        %v4457 = vmin.f32 %v3433, 0.0
        %v4458 = vmin.f32 %v3434, 0.0
        %v4459 = vmin.f32 %v3435, 0.0
        %v4460 = vmin.f32 %v3436, 0.0
        %v4461 = vmin.f32 %v3437, 0.0
        %v4462 = vmin.f32 %v3438, 0.0
        %v4463 = vmin.f32 %v3439, 0.0
        %v4464 = vmin.f32 %v3440, 0.0
        %v4465 = vmin.f32 %v3441, 0.0
        %v4466 = vmin.f32 %v3442, 0.0
        %v4467 = vmin.f32 %v3443, 0.0
        %v4468 = vmin.f32 %v3444, 0.0
        %v4469 = vmin.f32 %v3445, 0.0
        %v4470 = vmin.f32 %v3446, 0.0
        %v4471 = vmin.f32 %v3447, 0.0
        %v4472 = vmin.f32 %v3448, 0.0
        %v4473 = vmin.f32 %v3449, 0.0
        %v4474 = vmin.f32 %v3450, 0.0
        %v4475 = vmin.f32 %v3451, 0.0
        %v4476 = vmin.f32 %v3452, 0.0
        %v4477 = vmin.f32 %v3453, 0.0
        %v4478 = vmin.f32 %v3454, 0.0
        %v4479 = vmin.f32 %v3455, 0.0
        %v4480 = vmin.f32 %v3456, 0.0
        %v4481 = vmin.f32 %v3457, 0.0
        %v4482 = vmin.f32 %v3458, 0.0
        %v4483 = vmin.f32 %v3459, 0.0
        %v4484 = vmin.f32 %v3460, 0.0
        %v4485 = vmin.f32 %v3461, 0.0
        %v4486 = vmin.f32 %v3462, 0.0
        %v4487 = vmin.f32 %v3463, 0.0
        %v4488 = vmin.f32 %v3464, 0.0
        %v4489 = vmin.f32 %v3465, 0.0
        %v4490 = vmin.f32 %v3466, 0.0
        %v4491 = vmin.f32 %v3467, 0.0
        %v4492 = vmin.f32 %v3468, 0.0
        %v4493 = vmin.f32 %v3469, 0.0
        %v4494 = vmin.f32 %v3470, 0.0
        %v4495 = vmin.f32 %v3471, 0.0
        %v4496 = vmin.f32 %v3472, 0.0
        %v4497 = vmin.f32 %v3473, 0.0
        %v4498 = vmin.f32 %v3474, 0.0
        %v4499 = vmin.f32 %v3475, 0.0
        %v4500 = vmin.f32 %v3476, 0.0
        %v4501 = vmin.f32 %v3477, 0.0
        %v4502 = vmin.f32 %v3478, 0.0
        %v4503 = vmin.f32 %v3479, 0.0
        %v4504 = vmin.f32 %v3480, 0.0
        %v4505 = vmin.f32 %v3481, 0.0
        %v4506 = vmin.f32 %v3482, 0.0
        %v4507 = vmin.f32 %v3483, 0.0
        %v4508 = vmin.f32 %v3484, 0.0
        %v4509 = vmin.f32 %v3485, 0.0
        %v4510 = vmin.f32 %v3486, 0.0
        %v4511 = vmin.f32 %v3487, 0.0
        %v4512 = vmin.f32 %v3488, 0.0
        %v4513 = vmin.f32 %v3489, 0.0
        %v4514 = vmin.f32 %v3490, 0.0
        %v4515 = vmin.f32 %v3491, 0.0
        %v4516 = vmin.f32 %v3492, 0.0
        %v4517 = vmin.f32 %v3493, 0.0
        %v4518 = vmin.f32 %v3494, 0.0
        %v4519 = vmin.f32 %v3495, 0.0
        %v4520 = vmin.f32 %v3496, 0.0
        %v4521 = vmin.f32 %v3497, 0.0
        %v4522 = vmin.f32 %v3498, 0.0
        %v4523 = vmin.f32 %v3499, 0.0
        %v4524 = vmin.f32 %v3500, 0.0
        %v4525 = vmin.f32 %v3501, 0.0
        %v4526 = vmin.f32 %v3502, 0.0
        %v4527 = vmin.f32 %v3503, 0.0
        %v4528 = vmin.f32 %v3504, 0.0
        %v4529 = vmin.f32 %v3505, 0.0
        %v4530 = vmin.f32 %v3506, 0.0
        %v4531 = vmin.f32 %v3507, 0.0
        %v4532 = vmin.f32 %v3508, 0.0
        %v4533 = vmin.f32 %v3509, 0.0
        %v4534 = vmin.f32 %v3510, 0.0
        %v4535 = vmin.f32 %v3511, 0.0
        %v4536 = vmin.f32 %v3512, 0.0
        %v4537 = vmin.f32 %v3513, 0.0
        %v4538 = vmin.f32 %v3514, 0.0
        %v4539 = vmin.f32 %v3515, 0.0
        %v4540 = vmin.f32 %v3516, 0.0
        %v4541 = vmin.f32 %v3517, 0.0
        %v4542 = vmin.f32 %v3518, 0.0
        %v4543 = vmin.f32 %v3519, 0.0
        %v4544 = vmin.f32 %v3520, 0.0
        %v4545 = vmin.f32 %v3521, 0.0
        %v4546 = vmin.f32 %v3522, 0.0
        %v4547 = vmin.f32 %v3523, 0.0
        %v4548 = vmin.f32 %v3524, 0.0
        %v4549 = vmin.f32 %v3525, 0.0
        %v4550 = vmin.f32 %v3526, 0.0
        %v4551 = vmin.f32 %v3527, 0.0
        %v4552 = vmin.f32 %v3528, 0.0
        %v4553 = vmin.f32 %v3529, 0.0
        %v4554 = vmin.f32 %v3530, 0.0
        %v4555 = vmin.f32 %v3531, 0.0
        %v4556 = vmin.f32 %v3532, 0.0
        %v4557 = vmin.f32 %v3533, 0.0
        %v4558 = vmin.f32 %v3534, 0.0
        %v4559 = vmin.f32 %v3535, 0.0
        %v4560 = vmin.f32 %v3536, 0.0
        %v4561 = vmin.f32 %v3537, 0.0
        %v4562 = vmin.f32 %v3538, 0.0
        %v4563 = vmin.f32 %v3539, 0.0
        %v4564 = vmin.f32 %v3540, 0.0
        %v4565 = vmin.f32 %v3541, 0.0
        %v4566 = vmin.f32 %v3542, 0.0
        %v4567 = vmin.f32 %v3543, 0.0
        %v4568 = vmin.f32 %v3544, 0.0
        %v4569 = vmin.f32 %v3545, 0.0
        %v4570 = vmin.f32 %v3546, 0.0
        %v4571 = vmin.f32 %v3547, 0.0
        %v4572 = vmin.f32 %v3548, 0.0
        %v4573 = vmin.f32 %v3549, 0.0
        %v4574 = vmin.f32 %v3550, 0.0
        %v4575 = vmin.f32 %v3551, 0.0
        %v4576 = vmin.f32 %v3552, 0.0
        %v4577 = vmin.f32 %v3553, 0.0
        %v4578 = vmin.f32 %v3554, 0.0
        %v4579 = vmin.f32 %v3555, 0.0
        %v4580 = vmin.f32 %v3556, 0.0
        %v4581 = vmin.f32 %v3557, 0.0
        %v4582 = vmin.f32 %v3558, 0.0
        %v4583 = vmin.f32 %v3559, 0.0
        %v4584 = vmin.f32 %v3560, 0.0
        %v4585 = vmin.f32 %v3561, 0.0
        %v4586 = vmin.f32 %v3562, 0.0
        %v4587 = vmin.f32 %v3563, 0.0
        %v4588 = vmin.f32 %v3564, 0.0
        %v4589 = vmin.f32 %v3565, 0.0
        %v4590 = vmin.f32 %v3566, 0.0
        %v4591 = vmin.f32 %v3567, 0.0
        %v4592 = vmin.f32 %v3568, 0.0
        %v4593 = vmin.f32 %v3569, 0.0
        %v4594 = vmin.f32 %v3570, 0.0
        %v4595 = vmin.f32 %v3571, 0.0
        %v4596 = vmin.f32 %v3572, 0.0
        %v4597 = vmin.f32 %v3573, 0.0
        %v4598 = vmin.f32 %v3574, 0.0
        %v4599 = vmin.f32 %v3575, 0.0
        %v4600 = vmin.f32 %v3576, 0.0
        %v4601 = vmin.f32 %v3577, 0.0
        %v4602 = vmin.f32 %v3578, 0.0
        %v4603 = vmin.f32 %v3579, 0.0
        %v4604 = vmin.f32 %v3580, 0.0
        %v4605 = vmin.f32 %v3581, 0.0
        %v4606 = vmin.f32 %v3582, 0.0
        %v4607 = vmin.f32 %v3583, 0.0
        %v4608 = vmin.f32 %v3584, 0.0
        %v4609 = vmin.f32 %v3585, 0.0
        %v4610 = vmin.f32 %v3586, 0.0
        %v4611 = vmin.f32 %v3587, 0.0
        %v4612 = vmin.f32 %v3588, 0.0
        %v4613 = vmin.f32 %v3589, 0.0
        %v4614 = vmin.f32 %v3590, 0.0
        %v4615 = vmin.f32 %v3591, 0.0
        %v4616 = vmin.f32 %v3592, 0.0
        %v4617 = vmin.f32 %v3593, 0.0
        %v4618 = vmin.f32 %v3594, 0.0
        %v4619 = vmin.f32 %v3595, 0.0
        %v4620 = vmin.f32 %v3596, 0.0
        %v4621 = vmin.f32 %v3597, 0.0
        %v4622 = vmin.f32 %v3598, 0.0
        %v4623 = vmin.f32 %v3599, 0.0
        %v4624 = vmin.f32 %v3600, 0.0
        %v4625 = vmin.f32 %v3601, 0.0
        %v4626 = vmin.f32 %v3602, 0.0
        %v4627 = vmin.f32 %v3603, 0.0
        %v4628 = vmin.f32 %v3604, 0.0
        %v4629 = vmin.f32 %v3605, 0.0
        %v4630 = vmin.f32 %v3606, 0.0
        %v4631 = vmin.f32 %v3607, 0.0
        %v4632 = vmin.f32 %v3608, 0.0
        %v4633 = vmin.f32 %v3609, 0.0
        %v4634 = vmin.f32 %v3610, 0.0
        %v4635 = vmin.f32 %v3611, 0.0
        %v4636 = vmin.f32 %v3612, 0.0
        %v4637 = vmin.f32 %v3613, 0.0
        %v4638 = vmin.f32 %v3614, 0.0
        %v4639 = vmin.f32 %v3615, 0.0
        %v4640 = vmin.f32 %v3616, 0.0
        %v4641 = vmin.f32 %v3617, 0.0
        %v4642 = vmin.f32 %v3618, 0.0
        %v4643 = vmin.f32 %v3619, 0.0
        %v4644 = vmin.f32 %v3620, 0.0
        %v4645 = vmin.f32 %v3621, 0.0
        %v4646 = vmin.f32 %v3622, 0.0
        %v4647 = vmin.f32 %v3623, 0.0
        %v4648 = vmin.f32 %v3624, 0.0
        %v4649 = vmin.f32 %v3625, 0.0
        %v4650 = vmin.f32 %v3626, 0.0
        %v4651 = vmin.f32 %v3627, 0.0
        %v4652 = vmin.f32 %v3628, 0.0
        %v4653 = vmin.f32 %v3629, 0.0
        %v4654 = vmin.f32 %v3630, 0.0
        %v4655 = vmin.f32 %v3631, 0.0
        %v4656 = vmin.f32 %v3632, 0.0
        %v4657 = vmin.f32 %v3633, 0.0
        %v4658 = vmin.f32 %v3634, 0.0
        %v4659 = vmin.f32 %v3635, 0.0
        %v4660 = vmin.f32 %v3636, 0.0
        %v4661 = vmin.f32 %v3637, 0.0
        %v4662 = vmin.f32 %v3638, 0.0
        %v4663 = vmin.f32 %v3639, 0.0
        %v4664 = vmin.f32 %v3640, 0.0
        %v4665 = vmin.f32 %v3641, 0.0
        %v4666 = vmin.f32 %v3642, 0.0
        %v4667 = vmin.f32 %v3643, 0.0
        %v4668 = vmin.f32 %v3644, 0.0
        %v4669 = vmin.f32 %v3645, 0.0
        %v4670 = vmin.f32 %v3646, 0.0
        %v4671 = vmin.f32 %v3647, 0.0
        %v4672 = vmin.f32 %v3648, 0.0
        %v4673 = vmin.f32 %v3649, 0.0
        %v4674 = vmin.f32 %v3650, 0.0
        %v4675 = vmin.f32 %v3651, 0.0
        %v4676 = vmin.f32 %v3652, 0.0
        %v4677 = vmin.f32 %v3653, 0.0
        %v4678 = vmin.f32 %v3654, 0.0
        %v4679 = vmin.f32 %v3655, 0.0
        %v4680 = vmin.f32 %v3656, 0.0
        %v4681 = vmin.f32 %v3657, 0.0
        %v4682 = vmin.f32 %v3658, 0.0
        %v4683 = vmin.f32 %v3659, 0.0
        %v4684 = vmin.f32 %v3660, 0.0
        %v4685 = vmin.f32 %v3661, 0.0
        %v4686 = vmin.f32 %v3662, 0.0
        %v4687 = vmin.f32 %v3663, 0.0
        %v4688 = vmin.f32 %v3664, 0.0
        %v4689 = vmin.f32 %v3665, 0.0
        %v4690 = vmin.f32 %v3666, 0.0
        %v4691 = vmin.f32 %v3667, 0.0
        %v4692 = vmin.f32 %v3668, 0.0
        %v4693 = vmin.f32 %v3669, 0.0
        %v4694 = vmin.f32 %v3670, 0.0
        %v4695 = vmin.f32 %v3671, 0.0
        %v4696 = vmin.f32 %v3672, 0.0
        %v4697 = vmin.f32 %v3673, 0.0
        %v4698 = vmin.f32 %v3674, 0.0
        %v4699 = vmin.f32 %v3675, 0.0
        %v4700 = vmin.f32 %v3676, 0.0
        %v4701 = vmin.f32 %v3677, 0.0
        %v4702 = vmin.f32 %v3678, 0.0
        %v4703 = vmin.f32 %v3679, 0.0
        %v4704 = vmin.f32 %v3680, 0.0
        %v4705 = vmin.f32 %v3681, 0.0
        %v4706 = vmin.f32 %v3682, 0.0
        %v4707 = vmin.f32 %v3683, 0.0
        %v4708 = vmin.f32 %v3684, 0.0
        %v4709 = vmin.f32 %v3685, 0.0
        %v4710 = vmin.f32 %v3686, 0.0
        %v4711 = vmin.f32 %v3687, 0.0
        %v4712 = vmin.f32 %v3688, 0.0
        %v4713 = vmin.f32 %v3689, 0.0
        %v4714 = vmin.f32 %v3690, 0.0
        %v4715 = vmin.f32 %v3691, 0.0
        %v4716 = vmin.f32 %v3692, 0.0
        %v4717 = vmin.f32 %v3693, 0.0
        %v4718 = vmin.f32 %v3694, 0.0
        %v4719 = vmin.f32 %v3695, 0.0
        %v4720 = vmin.f32 %v3696, 0.0
        %v4721 = vmin.f32 %v3697, 0.0
        %v4722 = vmin.f32 %v3698, 0.0
        %v4723 = vmin.f32 %v3699, 0.0
        %v4724 = vmin.f32 %v3700, 0.0
        %v4725 = vmin.f32 %v3701, 0.0
        %v4726 = vmin.f32 %v3702, 0.0
        %v4727 = vmin.f32 %v3703, 0.0
        %v4728 = vmin.f32 %v3704, 0.0
        %v4729 = vmin.f32 %v3705, 0.0
        %v4730 = vmin.f32 %v3706, 0.0
        %v4731 = vmin.f32 %v3707, 0.0
        %v4732 = vmin.f32 %v3708, 0.0
        %v4733 = vmin.f32 %v3709, 0.0
        %v4734 = vmin.f32 %v3710, 0.0
        %v4735 = vmin.f32 %v3711, 0.0
        %v4736 = vmin.f32 %v3712, 0.0
        %v4737 = vmin.f32 %v3713, 0.0
        %v4738 = vmin.f32 %v3714, 0.0
        %v4739 = vmin.f32 %v3715, 0.0
        %v4740 = vmin.f32 %v3716, 0.0
        %v4741 = vmin.f32 %v3717, 0.0
        %v4742 = vmin.f32 %v3718, 0.0
        %v4743 = vmin.f32 %v3719, 0.0
        %v4744 = vmin.f32 %v3720, 0.0
        %v4745 = vmin.f32 %v3721, 0.0
        %v4746 = vmin.f32 %v3722, 0.0
        %v4747 = vmin.f32 %v3723, 0.0
        %v4748 = vmin.f32 %v3724, 0.0
        %v4749 = vmin.f32 %v3725, 0.0
        %v4750 = vmin.f32 %v3726, 0.0
        %v4751 = vmin.f32 %v3727, 0.0
        %v4752 = vmin.f32 %v3728, 0.0
        %v4753 = vmin.f32 %v3729, 0.0
        %v4754 = vmin.f32 %v3730, 0.0
        %v4755 = vmin.f32 %v3731, 0.0
        %v4756 = vmin.f32 %v3732, 0.0
        %v4757 = vmin.f32 %v3733, 0.0
        %v4758 = vmin.f32 %v3734, 0.0
        %v4759 = vmin.f32 %v3735, 0.0
        %v4760 = vmin.f32 %v3736, 0.0
        %v4761 = vmin.f32 %v3737, 0.0
        %v4762 = vmin.f32 %v3738, 0.0
        %v4763 = vmin.f32 %v3739, 0.0
        %v4764 = vmin.f32 %v3740, 0.0
        %v4765 = vmin.f32 %v3741, 0.0
        %v4766 = vmin.f32 %v3742, 0.0
        %v4767 = vmin.f32 %v3743, 0.0
        %v4768 = vmin.f32 %v3744, 0.0
        %v4769 = vmin.f32 %v3745, 0.0
        %v4770 = vmin.f32 %v3746, 0.0
        %v4771 = vmin.f32 %v3747, 0.0
        %v4772 = vmin.f32 %v3748, 0.0
        %v4773 = vmin.f32 %v3749, 0.0
        %v4774 = vmin.f32 %v3750, 0.0
        %v4775 = vmin.f32 %v3751, 0.0
        %v4776 = vmin.f32 %v3752, 0.0
        %v4777 = vmin.f32 %v3753, 0.0
        %v4778 = vmin.f32 %v3754, 0.0
        %v4779 = vmin.f32 %v3755, 0.0
        %v4780 = vmin.f32 %v3756, 0.0
        %v4781 = vmin.f32 %v3757, 0.0
        %v4782 = vmin.f32 %v3758, 0.0
        %v4783 = vmin.f32 %v3759, 0.0
        %v4784 = vmin.f32 %v3760, 0.0
        %v4785 = vmin.f32 %v3761, 0.0
        %v4786 = vmin.f32 %v3762, 0.0
        %v4787 = vmin.f32 %v3763, 0.0
        %v4788 = vmin.f32 %v3764, 0.0
        %v4789 = vmin.f32 %v3765, 0.0
        %v4790 = vmin.f32 %v3766, 0.0
        %v4791 = vmin.f32 %v3767, 0.0
        %v4792 = vmin.f32 %v3768, 0.0
        %v4793 = vmin.f32 %v3769, 0.0
        %v4794 = vmin.f32 %v3770, 0.0
        %v4795 = vmin.f32 %v3771, 0.0
        %v4796 = vmin.f32 %v3772, 0.0
        %v4797 = vmin.f32 %v3773, 0.0
        %v4798 = vmin.f32 %v3774, 0.0
        %v4799 = vmin.f32 %v3775, 0.0
        %v4800 = vmin.f32 %v3776, 0.0
        %v4801 = vmin.f32 %v3777, 0.0
        %v4802 = vmin.f32 %v3778, 0.0
        %v4803 = vmin.f32 %v3779, 0.0
        %v4804 = vmin.f32 %v3780, 0.0
        %v4805 = vmin.f32 %v3781, 0.0
        %v4806 = vmin.f32 %v3782, 0.0
        %v4807 = vmin.f32 %v3783, 0.0
        %v4808 = vmin.f32 %v3784, 0.0
        %v4809 = vmin.f32 %v3785, 0.0
        %v4810 = vmin.f32 %v3786, 0.0
        %v4811 = vmin.f32 %v3787, 0.0
        %v4812 = vmin.f32 %v3788, 0.0
        %v4813 = vmin.f32 %v3789, 0.0
        %v4814 = vmin.f32 %v3790, 0.0
        %v4815 = vmin.f32 %v3791, 0.0
        %v4816 = vmin.f32 %v3792, 0.0
        %v4817 = vmin.f32 %v3793, 0.0
        %v4818 = vmin.f32 %v3794, 0.0
        %v4819 = vmin.f32 %v3795, 0.0
        %v4820 = vmin.f32 %v3796, 0.0
        %v4821 = vmin.f32 %v3797, 0.0
        %v4822 = vmin.f32 %v3798, 0.0
        %v4823 = vmin.f32 %v3799, 0.0
        %v4824 = vmin.f32 %v3800, 0.0
        %v4825 = vmin.f32 %v3801, 0.0
        %v4826 = vmin.f32 %v3802, 0.0
        %v4827 = vmin.f32 %v3803, 0.0
        %v4828 = vmin.f32 %v3804, 0.0
        %v4829 = vmin.f32 %v3805, 0.0
        %v4830 = vmin.f32 %v3806, 0.0
        %v4831 = vmin.f32 %v3807, 0.0
        %v4832 = vmin.f32 %v3808, 0.0
        %v4833 = vmin.f32 %v3809, 0.0
        %v4834 = vmin.f32 %v3810, 0.0
        %v4835 = vmin.f32 %v3811, 0.0
        %v4836 = vmin.f32 %v3812, 0.0
        %v4837 = vmin.f32 %v3813, 0.0
        %v4838 = vmin.f32 %v3814, 0.0
        %v4839 = vmin.f32 %v3815, 0.0
        %v4840 = vmin.f32 %v3816, 0.0
        %v4841 = vmin.f32 %v3817, 0.0
        %v4842 = vmin.f32 %v3818, 0.0
        %v4843 = vmin.f32 %v3819, 0.0
        %v4844 = vmin.f32 %v3820, 0.0
        %v4845 = vmin.f32 %v3821, 0.0
        %v4846 = vmin.f32 %v3822, 0.0
        %v4847 = vmin.f32 %v3823, 0.0
        %v4848 = vmin.f32 %v3824, 0.0
        %v4849 = vmin.f32 %v3825, 0.0
        %v4850 = vmin.f32 %v3826, 0.0
        %v4851 = vmin.f32 %v3827, 0.0
        %v4852 = vmin.f32 %v3828, 0.0
        %v4853 = vmin.f32 %v3829, 0.0
        %v4854 = vmin.f32 %v3830, 0.0
        %v4855 = vmin.f32 %v3831, 0.0
        %v4856 = vmin.f32 %v3832, 0.0
        %v4857 = vmin.f32 %v3833, 0.0
        %v4858 = vmin.f32 %v3834, 0.0
        %v4859 = vmin.f32 %v3835, 0.0
        %v4860 = vmin.f32 %v3836, 0.0
        %v4861 = vmin.f32 %v3837, 0.0
        %v4862 = vmin.f32 %v3838, 0.0
        %v4863 = vmin.f32 %v3839, 0.0
        %v4864 = vmin.f32 %v3840, 0.0
        %v4865 = vmin.f32 %v3841, 0.0
        %v4866 = vmin.f32 %v3842, 0.0
        %v4867 = vmin.f32 %v3843, 0.0
        %v4868 = vmin.f32 %v3844, 0.0
        %v4869 = vmin.f32 %v3845, 0.0
        %v4870 = vmin.f32 %v3846, 0.0
        %v4871 = vmin.f32 %v3847, 0.0
        %v4872 = vmin.f32 %v3848, 0.0
        %v4873 = vmin.f32 %v3849, 0.0
        %v4874 = vmin.f32 %v3850, 0.0
        %v4875 = vmin.f32 %v3851, 0.0
        %v4876 = vmin.f32 %v3852, 0.0
        %v4877 = vmin.f32 %v3853, 0.0
        %v4878 = vmin.f32 %v3854, 0.0
        %v4879 = vmin.f32 %v3855, 0.0
        %v4880 = vmin.f32 %v3856, 0.0
        %v4881 = vmin.f32 %v3857, 0.0
        %v4882 = vmin.f32 %v3858, 0.0
        %v4883 = vmin.f32 %v3859, 0.0
        %v4884 = vmin.f32 %v3860, 0.0
        %v4885 = vmin.f32 %v3861, 0.0
        %v4886 = vmin.f32 %v3862, 0.0
        %v4887 = vmin.f32 %v3863, 0.0
        %v4888 = vmin.f32 %v3864, 0.0
        %v4889 = vmin.f32 %v3865, 0.0
        %v4890 = vmin.f32 %v3866, 0.0
        %v4891 = vmin.f32 %v3867, 0.0
        %v4892 = vmin.f32 %v3868, 0.0
        %v4893 = vmin.f32 %v3869, 0.0
        %v4894 = vmin.f32 %v3870, 0.0
        %v4895 = vmin.f32 %v3871, 0.0
        %v4896 = vmin.f32 %v3872, 0.0
        %v4897 = vmin.f32 %v3873, 0.0
        %v4898 = vmin.f32 %v3874, 0.0
        %v4899 = vmin.f32 %v3875, 0.0
        %v4900 = vmin.f32 %v3876, 0.0
        %v4901 = vmin.f32 %v3877, 0.0
        %v4902 = vmin.f32 %v3878, 0.0
        %v4903 = vmin.f32 %v3879, 0.0
        %v4904 = vmin.f32 %v3880, 0.0
        %v4905 = vmin.f32 %v3881, 0.0
        %v4906 = vmin.f32 %v3882, 0.0
        %v4907 = vmin.f32 %v3883, 0.0
        %v4908 = vmin.f32 %v3884, 0.0
        %v4909 = vmin.f32 %v3885, 0.0
        %v4910 = vmin.f32 %v3886, 0.0
        %v4911 = vmin.f32 %v3887, 0.0
        %v4912 = vmin.f32 %v3888, 0.0
        %v4913 = vmin.f32 %v3889, 0.0
        %v4914 = vmin.f32 %v3890, 0.0
        %v4915 = vmin.f32 %v3891, 0.0
        %v4916 = vmin.f32 %v3892, 0.0
        %v4917 = vmin.f32 %v3893, 0.0
        %v4918 = vmin.f32 %v3894, 0.0
        %v4919 = vmin.f32 %v3895, 0.0
        %v4920 = vmin.f32 %v3896, 0.0
        %v4921 = vmin.f32 %v3897, 0.0
        %v4922 = vmin.f32 %v3898, 0.0
        %v4923 = vmin.f32 %v3899, 0.0
        %v4924 = vmin.f32 %v3900, 0.0
        %v4925 = vmin.f32 %v3901, 0.0
        %v4926 = vmin.f32 %v3902, 0.0
        %v4927 = vmin.f32 %v3903, 0.0
        %v4928 = vmin.f32 %v3904, 0.0
        %v4929 = vmin.f32 %v3905, 0.0
        %v4930 = vmin.f32 %v3906, 0.0
        %v4931 = vmin.f32 %v3907, 0.0
        %v4932 = vmin.f32 %v3908, 0.0
        %v4933 = vmin.f32 %v3909, 0.0
        %v4934 = vmin.f32 %v3910, 0.0
        %v4935 = vmin.f32 %v3911, 0.0
        %v4936 = vmin.f32 %v3912, 0.0
        %v4937 = vmin.f32 %v3913, 0.0
        %v4938 = vmin.f32 %v3914, 0.0
        %v4939 = vmin.f32 %v3915, 0.0
        %v4940 = vmin.f32 %v3916, 0.0
        %v4941 = vmin.f32 %v3917, 0.0
        %v4942 = vmin.f32 %v3918, 0.0
        %v4943 = vmin.f32 %v3919, 0.0
        %v4944 = vmin.f32 %v3920, 0.0
        %v4945 = vmin.f32 %v3921, 0.0
        %v4946 = vmin.f32 %v3922, 0.0
        %v4947 = vmin.f32 %v3923, 0.0
        %v4948 = vmin.f32 %v3924, 0.0
        %v4949 = vmin.f32 %v3925, 0.0
        %v4950 = vmin.f32 %v3926, 0.0
        %v4951 = vmin.f32 %v3927, 0.0
        %v4952 = vmin.f32 %v3928, 0.0
        %v4953 = vmin.f32 %v3929, 0.0
        %v4954 = vmin.f32 %v3930, 0.0
        %v4955 = vmin.f32 %v3931, 0.0
        %v4956 = vmin.f32 %v3932, 0.0
        %v4957 = vmin.f32 %v3933, 0.0
        %v4958 = vmin.f32 %v3934, 0.0
        %v4959 = vmin.f32 %v3935, 0.0
        %v4960 = vmin.f32 %v3936, 0.0
        %v4961 = vmin.f32 %v3937, 0.0
        %v4962 = vmin.f32 %v3938, 0.0
        %v4963 = vmin.f32 %v3939, 0.0
        %v4964 = vmin.f32 %v3940, 0.0
        %v4965 = vmin.f32 %v3941, 0.0
        %v4966 = vmin.f32 %v3942, 0.0
        %v4967 = vmin.f32 %v3943, 0.0
        %v4968 = vmin.f32 %v3944, 0.0
        %v4969 = vmin.f32 %v3945, 0.0
        %v4970 = vmin.f32 %v3946, 0.0
        %v4971 = vmin.f32 %v3947, 0.0
        %v4972 = vmin.f32 %v3948, 0.0
        %v4973 = vmin.f32 %v3949, 0.0
        %v4974 = vmin.f32 %v3950, 0.0
        %v4975 = vmin.f32 %v3951, 0.0
        %v4976 = vmin.f32 %v3952, 0.0
        %v4977 = vmin.f32 %v3953, 0.0
        %v4978 = vmin.f32 %v3954, 0.0
        %v4979 = vmin.f32 %v3955, 0.0
        %v4980 = vmin.f32 %v3956, 0.0
        %v4981 = vmin.f32 %v3957, 0.0
        %v4982 = vmin.f32 %v3958, 0.0
        %v4983 = vmin.f32 %v3959, 0.0
        %v4984 = vmin.f32 %v3960, 0.0
        %v4985 = vmin.f32 %v3961, 0.0
        %v4986 = vmin.f32 %v3962, 0.0
        %v4987 = vmin.f32 %v3963, 0.0
        %v4988 = vmin.f32 %v3964, 0.0
        %v4989 = vmin.f32 %v3965, 0.0
        %v4990 = vmin.f32 %v3966, 0.0
        %v4991 = vmin.f32 %v3967, 0.0
        %v4992 = vmin.f32 %v3968, 0.0
        %v4993 = vmin.f32 %v3969, 0.0
        %v4994 = vmin.f32 %v3970, 0.0
        %v4995 = vmin.f32 %v3971, 0.0
        %v4996 = vmin.f32 %v3972, 0.0
        %v4997 = vmin.f32 %v3973, 0.0
        %v4998 = vmin.f32 %v3974, 0.0
        %v4999 = vmin.f32 %v3975, 0.0
        %v5000 = vmin.f32 %v3976, 0.0
        %v5001 = vmin.f32 %v3977, 0.0
        %v5002 = vmin.f32 %v3978, 0.0
        %v5003 = vmin.f32 %v3979, 0.0
        %v5004 = vmin.f32 %v3980, 0.0
        %v5005 = vmin.f32 %v3981, 0.0
        %v5006 = vmin.f32 %v3982, 0.0
        %v5007 = vmin.f32 %v3983, 0.0
        %v5008 = vmin.f32 %v3984, 0.0
        %v5009 = vmin.f32 %v3985, 0.0
        %v5010 = vmin.f32 %v3986, 0.0
        %v5011 = vmin.f32 %v3987, 0.0
        %v5012 = vmin.f32 %v3988, 0.0
        %v5013 = vmin.f32 %v3989, 0.0
        %v5014 = vmin.f32 %v3990, 0.0
        %v5015 = vmin.f32 %v3991, 0.0
        %v5016 = vmin.f32 %v3992, 0.0
        %v5017 = vmin.f32 %v3993, 0.0
        %v5018 = vmin.f32 %v3994, 0.0
        %v5019 = vmin.f32 %v3995, 0.0
        %v5020 = vmin.f32 %v3996, 0.0
        %v5021 = vmin.f32 %v3997, 0.0
        %v5022 = vmin.f32 %v3998, 0.0
        %v5023 = vmin.f32 %v3999, 0.0
        %v5024 = vmin.f32 %v4000, 0.0
        %v5025 = vmin.f32 %v4001, 0.0
        %v5026 = vmin.f32 %v4002, 0.0
        %v5027 = vmin.f32 %v4003, 0.0
        %v5028 = vmin.f32 %v4004, 0.0
        %v5029 = vmin.f32 %v4005, 0.0
        %v5030 = vmin.f32 %v4006, 0.0
        %v5031 = vmin.f32 %v4007, 0.0
        %v5032 = vmin.f32 %v4008, 0.0
        %v5033 = vmin.f32 %v4009, 0.0
        %v5034 = vmin.f32 %v4010, 0.0
        %v5035 = vmin.f32 %v4011, 0.0
        %v5036 = vmin.f32 %v4012, 0.0
        %v5037 = vmin.f32 %v4013, 0.0
        %v5038 = vmin.f32 %v4014, 0.0
        %v5039 = vmin.f32 %v4015, 0.0
        %v5040 = vmin.f32 %v4016, 0.0
        %v5041 = vmin.f32 %v4017, 0.0
        %v5042 = vmin.f32 %v4018, 0.0
        %v5043 = vmin.f32 %v4019, 0.0
        %v5044 = vmin.f32 %v4020, 0.0
        %v5045 = vmin.f32 %v4021, 0.0
        %v5046 = vmin.f32 %v4022, 0.0
        %v5047 = vmin.f32 %v4023, 0.0
        %v5048 = vmin.f32 %v4024, 0.0
        %v5049 = vmin.f32 %v4025, 0.0
        %v5050 = vmin.f32 %v4026, 0.0
        %v5051 = vmin.f32 %v4027, 0.0
        %v5052 = vmin.f32 %v4028, 0.0
        %v5053 = vmin.f32 %v4029, 0.0
        %v5054 = vmin.f32 %v4030, 0.0
        %v5055 = vmin.f32 %v4031, 0.0
        %v5056 = vmin.f32 %v4032, 0.0
        %v5057 = vmin.f32 %v4033, 0.0
        %v5058 = vmin.f32 %v4034, 0.0
        %v5059 = vmin.f32 %v4035, 0.0
        %v5060 = vmin.f32 %v4036, 0.0
        %v5061 = vmin.f32 %v4037, 0.0
        %v5062 = vmin.f32 %v4038, 0.0
        %v5063 = vmin.f32 %v4039, 0.0
        %v5064 = vmin.f32 %v4040, 0.0
        %v5065 = vmin.f32 %v4041, 0.0
        %v5066 = vmin.f32 %v4042, 0.0
        %v5067 = vmin.f32 %v4043, 0.0
        %v5068 = vmin.f32 %v4044, 0.0
        %v5069 = vmin.f32 %v4045, 0.0
        %v5070 = vmin.f32 %v4046, 0.0
        %v5071 = vmin.f32 %v4047, 0.0
        %v5072 = vmin.f32 %v4048, 0.0
        %v5073 = vmin.f32 %v4049, 0.0
        %v5074 = vmin.f32 %v4050, 0.0
        %v5075 = vmin.f32 %v4051, 0.0
        %v5076 = vmin.f32 %v4052, 0.0
        %v5077 = vmin.f32 %v4053, 0.0
        %v5078 = vmin.f32 %v4054, 0.0
        %v5079 = vmin.f32 %v4055, 0.0
        %v5080 = vmin.f32 %v4056, 0.0
        %v5081 = vmin.f32 %v4057, 0.0
        %v5082 = vmin.f32 %v4058, 0.0
        %v5083 = vmin.f32 %v4059, 0.0
        %v5084 = vmin.f32 %v4060, 0.0
        %v5085 = vmin.f32 %v4061, 0.0
        %v5086 = vmin.f32 %v4062, 0.0
        %v5087 = vmin.f32 %v4063, 0.0
        %v5088 = vmin.f32 %v4064, 0.0
        %v5089 = vmin.f32 %v4065, 0.0
        %v5090 = vmin.f32 %v4066, 0.0
        %v5091 = vmin.f32 %v4067, 0.0
        %v5092 = vmin.f32 %v4068, 0.0
        %v5093 = vmin.f32 %v4069, 0.0
        %v5094 = vmin.f32 %v4070, 0.0
        %v5095 = vmin.f32 %v4071, 0.0
        %v5096 = vmin.f32 %v4072, 0.0
        %v5097 = vmin.f32 %v4073, 0.0
        %v5098 = vmin.f32 %v4074, 0.0
        %v5099 = vmin.f32 %v4075, 0.0
        %v5100 = vmin.f32 %v4076, 0.0
        %v5101 = vmin.f32 %v4077, 0.0
        %v5102 = vmin.f32 %v4078, 0.0
        %v5103 = vmin.f32 %v4079, 0.0
        %v5104 = vmin.f32 %v4080, 0.0
        %v5105 = vmin.f32 %v4081, 0.0
        %v5106 = vmin.f32 %v4082, 0.0
        %v5107 = vmin.f32 %v4083, 0.0
        %v5108 = vmin.f32 %v4084, 0.0
        %v5109 = vmin.f32 %v4085, 0.0
        %v5110 = vmin.f32 %v4086, 0.0
        %v5111 = vmin.f32 %v4087, 0.0
        %v5112 = vmin.f32 %v4088, 0.0
        %v5113 = vmin.f32 %v4089, 0.0
        %v5114 = vmin.f32 %v4090, 0.0
        %v5115 = vmin.f32 %v4091, 0.0
        %v5116 = vmin.f32 %v4092, 0.0
        %v5117 = vmin.f32 %v4093, 0.0
        %v5118 = vmin.f32 %v4094, 0.0
        %v5119 = vmin.f32 %v4095, 0.0
        %v5120 = vmin.f32 %v4096, 0.0
        %v5121 = vmin.f32 %v4097, 0.0
        %v5122 = vmin.f32 %v4098, 0.0
        %v5123 = vmin.f32 %v4099, 0.0
        %v5124 = vmin.f32 %v4100, 0.0
        %v5125 = vmin.f32 %v4101, 0.0
        %v5126 = vmin.f32 %v4102, 0.0
        %v5127 = vmin.f32 %v4103, 0.0
        %v5128 = vmin.f32 %v4104, 0.0
        %v5129 = vmin.f32 %v4105, 0.0
        %v5130 = vmin.f32 %v4106, 0.0
        %v5131 = vmin.f32 %v4107, 0.0
        %v5132 = vmin.f32 %v4108, 0.0
        %v5133 = vmin.f32 %v4109, 0.0
        %v5134 = vmin.f32 %v4110, 0.0
        %v5135 = vmin.f32 %v4111, 0.0
        %v5136 = vmin.f32 %v4112, 0.0
        %v5137 = vmin.f32 %v4113, 0.0
        %v5138 = vmin.f32 %v4114, 0.0
        %v5139 = vmin.f32 %v4115, 0.0
        %v5140 = vmin.f32 %v4116, 0.0
        %v5141 = vmin.f32 %v4117, 0.0
        %v5142 = vmin.f32 %v4118, 0.0
        %v5143 = vmin.f32 %v4119, 0.0
        %v5144 = vmin.f32 %v4120, 0.0
        %v5145 = vmin.f32 %v4121, 0.0
        %v5146 = vmin.f32 %v4122, 0.0
        %v5147 = vmin.f32 %v4123, 0.0
        %v5148 = vmin.f32 %v4124, 0.0
        %v5149 = vmin.f32 %v4125, 0.0
        %v5150 = vmin.f32 %v4126, 0.0
        %v5151 = vmin.f32 %v4127, 0.0
        %v5152 = vmin.f32 %v4128, 0.0
        %v5153 = vmin.f32 %v4129, 0.0
        %v5154 = vmin.f32 %v4130, 0.0
        %v5155 = vmin.f32 %v4131, 0.0
        %v5156 = vmin.f32 %v4132, 0.0
        %v5157 = vmin.f32 %v4133, 0.0
        %v5158 = vmin.f32 %v4134, 0.0
        %v5159 = vmin.f32 %v4135, 0.0
        %v5160 = vmin.f32 %v4136, 0.0
        %v5161 = vmin.f32 %v4137, 0.0
        %v5162 = vmin.f32 %v4138, 0.0
        %v5163 = vmin.f32 %v4139, 0.0
        %v5164 = vmin.f32 %v4140, 0.0
        %v5165 = vmin.f32 %v4141, 0.0
        %v5166 = vmin.f32 %v4142, 0.0
        %v5167 = vmin.f32 %v4143, 0.0
        %v5168 = vmin.f32 %v4144, 0.0
        %v5169 = vmin.f32 %v4145, 0.0
        %v5170 = vmin.f32 %v4146, 0.0
        %v5171 = vmin.f32 %v4147, 0.0
        %v5172 = vmin.f32 %v4148, 0.0
        %v5173 = vmin.f32 %v4149, 0.0
        %v5174 = vmin.f32 %v4150, 0.0
        %v5175 = vmin.f32 %v4151, 0.0
        %v5176 = vmin.f32 %v4152, 0.0
        %v5177 = vmin.f32 %v4153, 0.0
        %v5178 = vmin.f32 %v4154, 0.0
        %v5179 = vmin.f32 %v4155, 0.0
        %v5180 = vmin.f32 %v4156, 0.0
        %v5181 = vmin.f32 %v4157, 0.0
        %v5182 = vmin.f32 %v4158, 0.0
        %v5183 = vmin.f32 %v4159, 0.0
        %v5184 = vmin.f32 %v4160, 0.0
        %v5185 = vmin.f32 %v4161, 0.0
        %v5186 = vmin.f32 %v4162, 0.0
        %v5187 = vmin.f32 %v4163, 0.0
        %v5188 = vmin.f32 %v4164, 0.0
        %v5189 = vmin.f32 %v4165, 0.0
        %v5190 = vmin.f32 %v4166, 0.0
        %v5191 = vmin.f32 %v4167, 0.0
        %v5192 = vmin.f32 %v4168, 0.0
        %v5193 = vmin.f32 %v4169, 0.0
        %v5194 = vmin.f32 %v4170, 0.0
        %v5195 = vmin.f32 %v4171, 0.0
        %v5196 = vmin.f32 %v4172, 0.0
        %v5197 = vmin.f32 %v4173, 0.0
        %v5198 = vmin.f32 %v4174, 0.0
        %v5199 = vmin.f32 %v4175, 0.0
        %v5200 = vmin.f32 %v4176, 0.0
        %v5201 = vmin.f32 %v4177, 0.0
        %v5202 = vmin.f32 %v4178, 0.0
        %v5203 = vmin.f32 %v4179, 0.0
        %v5204 = vmin.f32 %v4180, 0.0
        %v5205 = vmin.f32 %v4181, 0.0
        %v5206 = vmin.f32 %v4182, 0.0
        %v5207 = vmin.f32 %v4183, 0.0
        %v5208 = vmin.f32 %v4184, 0.0
        %v5209 = vmin.f32 %v4185, 0.0
        %v5210 = vmin.f32 %v4186, 0.0
        %v5211 = vmin.f32 %v4187, 0.0
        %v5212 = vmin.f32 %v4188, 0.0
        %v5213 = vmin.f32 %v4189, 0.0
        %v5214 = vmin.f32 %v4190, 0.0
        %v5215 = vmin.f32 %v4191, 0.0
        %v5216 = vmin.f32 %v4192, 0.0
        %v5217 = vmin.f32 %v4193, 0.0
        %v5218 = vmin.f32 %v4194, 0.0
        %v5219 = vmin.f32 %v4195, 0.0
        %v5220 = vmin.f32 %v4196, 0.0
        %v5221 = vmin.f32 %v4197, 0.0
        %v5222 = vmin.f32 %v4198, 0.0
        %v5223 = vmin.f32 %v4199, 0.0
        %v5224 = vmin.f32 %v4200, 0.0
        %v5225 = vmin.f32 %v4201, 0.0
        %v5226 = vmin.f32 %v4202, 0.0
        %v5227 = vmin.f32 %v4203, 0.0
        %v5228 = vmin.f32 %v4204, 0.0
        %v5229 = vmin.f32 %v4205, 0.0
        %v5230 = vmin.f32 %v4206, 0.0
        %v5231 = vmin.f32 %v4207, 0.0
        %v5232 = vmin.f32 %v4208, 0.0
        %v5233 = vmin.f32 %v4209, 0.0
        %v5234 = vmin.f32 %v4210, 0.0
        %v5235 = vmin.f32 %v4211, 0.0
        %v5236 = vmin.f32 %v4212, 0.0
        %v5237 = vmin.f32 %v4213, 0.0
        %v5238 = vmin.f32 %v4214, 0.0
        %v5239 = vmin.f32 %v4215, 0.0
        %v5240 = vmin.f32 %v4216, 0.0
        %v5241 = vmin.f32 %v4217, 0.0
        %v5242 = vmin.f32 %v4218, 0.0
        %v5243 = vmin.f32 %v4219, 0.0
        %v5244 = vmin.f32 %v4220, 0.0
        %v5245 = vmin.f32 %v4221, 0.0
        %v5246 = vmin.f32 %v4222, 0.0
        %v5247 = vmin.f32 %v4223, 0.0
        %v5248 = vmin.f32 %v4224, 0.0
        %v5249 = vmin.f32 %v4225, 0.0
        %v5250 = vmin.f32 %v4226, 0.0
        %v5251 = vmin.f32 %v4227, 0.0
        %v5252 = vmin.f32 %v4228, 0.0
        %v5253 = vmin.f32 %v4229, 0.0
        %v5254 = vmin.f32 %v4230, 0.0
        %v5255 = vmin.f32 %v4231, 0.0
        %v5256 = vmin.f32 %v4232, 0.0
        %v5257 = vmin.f32 %v4233, 0.0
        %v5258 = vmin.f32 %v4234, 0.0
        %v5259 = vmin.f32 %v4235, 0.0
        %v5260 = vmin.f32 %v4236, 0.0
        %v5261 = vmin.f32 %v4237, 0.0
        %v5262 = vmin.f32 %v4238, 0.0
        %v5263 = vmin.f32 %v4239, 0.0
        %v5264 = vmin.f32 %v4240, 0.0
        %v5265 = vmin.f32 %v4241, 0.0
        %v5266 = vmin.f32 %v4242, 0.0
        %v5267 = vmin.f32 %v4243, 0.0
        %v5268 = vmin.f32 %v4244, 0.0
        %v5269 = vmin.f32 %v4245, 0.0
        %v5270 = vmin.f32 %v4246, 0.0
        %v5271 = vmin.f32 %v4247, 0.0
        %v5272 = vmin.f32 %v4248, 0.0
        %v5273 = vmin.f32 %v4249, 0.0
        %v5274 = vmin.f32 %v4250, 0.0
        %vm5275 = vcmp.ge.f32.partialorder %v155, 0.0
        %vm5276 = vcmp.ge.f32.partialorder %v156, 0.0
        %vm5277 = vcmp.ge.f32.partialorder %v157, 0.0
        %vm5278 = vcmp.ge.f32.partialorder %v158, 0.0
        %vm5279 = vcmp.ge.f32.partialorder %v159, 0.0
        %vm5280 = vcmp.ge.f32.partialorder %v160, 0.0
        %vm5281 = vcmp.ge.f32.partialorder %v161, 0.0
        %vm5282 = vcmp.ge.f32.partialorder %v162, 0.0
        %vm5283 = vcmp.ge.f32.partialorder %v163, 0.0
        %vm5284 = vcmp.ge.f32.partialorder %v164, 0.0
        %vm5285 = vcmp.ge.f32.partialorder %v165, 0.0
        %vm5286 = vcmp.ge.f32.partialorder %v166, 0.0
        %vm5287 = vcmp.ge.f32.partialorder %v167, 0.0
        %vm5288 = vcmp.ge.f32.partialorder %v168, 0.0
        %vm5289 = vcmp.ge.f32.partialorder %v169, 0.0
        %vm5290 = vcmp.ge.f32.partialorder %v170, 0.0
        %vm5291 = vcmp.ge.f32.partialorder %v171, 0.0
        %vm5292 = vcmp.ge.f32.partialorder %v172, 0.0
        %vm5293 = vcmp.ge.f32.partialorder %v173, 0.0
        %vm5294 = vcmp.ge.f32.partialorder %v174, 0.0
        %vm5295 = vcmp.ge.f32.partialorder %v175, 0.0
        %vm5296 = vcmp.ge.f32.partialorder %v176, 0.0
        %vm5297 = vcmp.ge.f32.partialorder %v177, 0.0
        %vm5298 = vcmp.ge.f32.partialorder %v178, 0.0
        %vm5299 = vcmp.ge.f32.partialorder %v179, 0.0
        %vm5300 = vcmp.ge.f32.partialorder %v180, 0.0
        %vm5301 = vcmp.ge.f32.partialorder %v181, 0.0
        %vm5302 = vcmp.ge.f32.partialorder %v182, 0.0
        %vm5303 = vcmp.ge.f32.partialorder %v183, 0.0
        %vm5304 = vcmp.ge.f32.partialorder %v184, 0.0
        %vm5305 = vcmp.ge.f32.partialorder %v185, 0.0
        %vm5306 = vcmp.ge.f32.partialorder %v186, 0.0
        %vm5307 = vcmp.ge.f32.partialorder %v187, 0.0
        %vm5308 = vcmp.ge.f32.partialorder %v188, 0.0
        %vm5309 = vcmp.ge.f32.partialorder %v189, 0.0
        %vm5310 = vcmp.ge.f32.partialorder %v190, 0.0
        %vm5311 = vcmp.ge.f32.partialorder %v191, 0.0
        %vm5312 = vcmp.ge.f32.partialorder %v192, 0.0
        %vm5313 = vcmp.ge.f32.partialorder %v193, 0.0
        %vm5314 = vcmp.ge.f32.partialorder %v194, 0.0
        %vm5315 = vcmp.ge.f32.partialorder %v195, 0.0
        %vm5316 = vcmp.ge.f32.partialorder %v196, 0.0
        %vm5317 = vcmp.ge.f32.partialorder %v197, 0.0
        %vm5318 = vcmp.ge.f32.partialorder %v198, 0.0
        %vm5319 = vcmp.ge.f32.partialorder %v199, 0.0
        %vm5320 = vcmp.ge.f32.partialorder %v200, 0.0
        %vm5321 = vcmp.ge.f32.partialorder %v201, 0.0
        %vm5322 = vcmp.ge.f32.partialorder %v202, 0.0
        %vm5323 = vcmp.ge.f32.partialorder %v203, 0.0
        %vm5324 = vcmp.ge.f32.partialorder %v204, 0.0
        %vm5325 = vcmp.ge.f32.partialorder %v205, 0.0
        %vm5326 = vcmp.ge.f32.partialorder %v206, 0.0
        %vm5327 = vcmp.ge.f32.partialorder %v207, 0.0
        %vm5328 = vcmp.ge.f32.partialorder %v208, 0.0
        %vm5329 = vcmp.ge.f32.partialorder %v209, 0.0
        %vm5330 = vcmp.ge.f32.partialorder %v210, 0.0
        %vm5331 = vcmp.ge.f32.partialorder %v211, 0.0
        %vm5332 = vcmp.ge.f32.partialorder %v212, 0.0
        %vm5333 = vcmp.ge.f32.partialorder %v213, 0.0
        %vm5334 = vcmp.ge.f32.partialorder %v214, 0.0
        %vm5335 = vcmp.ge.f32.partialorder %v215, 0.0
        %vm5336 = vcmp.ge.f32.partialorder %v216, 0.0
        %vm5337 = vcmp.ge.f32.partialorder %v217, 0.0
        %vm5338 = vcmp.ge.f32.partialorder %v218, 0.0
        %vm5339 = vcmp.ge.f32.partialorder %v219, 0.0
        %vm5340 = vcmp.ge.f32.partialorder %v220, 0.0
        %vm5341 = vcmp.ge.f32.partialorder %v221, 0.0
        %vm5342 = vcmp.ge.f32.partialorder %v222, 0.0
        %vm5343 = vcmp.ge.f32.partialorder %v223, 0.0
        %vm5344 = vcmp.ge.f32.partialorder %v224, 0.0
        %vm5345 = vcmp.ge.f32.partialorder %v225, 0.0
        %vm5346 = vcmp.ge.f32.partialorder %v226, 0.0
        %vm5347 = vcmp.ge.f32.partialorder %v227, 0.0
        %vm5348 = vcmp.ge.f32.partialorder %v228, 0.0
        %vm5349 = vcmp.ge.f32.partialorder %v229, 0.0
        %vm5350 = vcmp.ge.f32.partialorder %v230, 0.0
        %vm5351 = vcmp.ge.f32.partialorder %v231, 0.0
        %vm5352 = vcmp.ge.f32.partialorder %v232, 0.0
        %vm5353 = vcmp.ge.f32.partialorder %v233, 0.0
        %vm5354 = vcmp.ge.f32.partialorder %v234, 0.0
        %vm5355 = vcmp.ge.f32.partialorder %v235, 0.0
        %vm5356 = vcmp.ge.f32.partialorder %v236, 0.0
        %vm5357 = vcmp.ge.f32.partialorder %v237, 0.0
        %vm5358 = vcmp.ge.f32.partialorder %v238, 0.0
        %vm5359 = vcmp.ge.f32.partialorder %v239, 0.0
        %vm5360 = vcmp.ge.f32.partialorder %v240, 0.0
        %vm5361 = vcmp.ge.f32.partialorder %v241, 0.0
        %vm5362 = vcmp.ge.f32.partialorder %v242, 0.0
        %vm5363 = vcmp.ge.f32.partialorder %v243, 0.0
        %vm5364 = vcmp.ge.f32.partialorder %v244, 0.0
        %vm5365 = vcmp.ge.f32.partialorder %v245, 0.0
        %vm5366 = vcmp.ge.f32.partialorder %v246, 0.0
        %vm5367 = vcmp.ge.f32.partialorder %v247, 0.0
        %vm5368 = vcmp.ge.f32.partialorder %v248, 0.0
        %vm5369 = vcmp.ge.f32.partialorder %v249, 0.0
        %vm5370 = vcmp.ge.f32.partialorder %v250, 0.0
        %vm5371 = vcmp.ge.f32.partialorder %v251, 0.0
        %vm5372 = vcmp.ge.f32.partialorder %v252, 0.0
        %vm5373 = vcmp.ge.f32.partialorder %v253, 0.0
        %vm5374 = vcmp.ge.f32.partialorder %v254, 0.0
        %vm5375 = vcmp.ge.f32.partialorder %v255, 0.0
        %vm5376 = vcmp.ge.f32.partialorder %v256, 0.0
        %vm5377 = vcmp.ge.f32.partialorder %v257, 0.0
        %vm5378 = vcmp.ge.f32.partialorder %v258, 0.0
        %vm5379 = vcmp.ge.f32.partialorder %v259, 0.0
        %vm5380 = vcmp.ge.f32.partialorder %v260, 0.0
        %vm5381 = vcmp.ge.f32.partialorder %v261, 0.0
        %vm5382 = vcmp.ge.f32.partialorder %v262, 0.0
        %vm5383 = vcmp.ge.f32.partialorder %v263, 0.0
        %vm5384 = vcmp.ge.f32.partialorder %v264, 0.0
        %vm5385 = vcmp.ge.f32.partialorder %v265, 0.0
        %vm5386 = vcmp.ge.f32.partialorder %v266, 0.0
        %vm5387 = vcmp.ge.f32.partialorder %v267, 0.0
        %vm5388 = vcmp.ge.f32.partialorder %v268, 0.0
        %vm5389 = vcmp.ge.f32.partialorder %v269, 0.0
        %vm5390 = vcmp.ge.f32.partialorder %v270, 0.0
        %vm5391 = vcmp.ge.f32.partialorder %v271, 0.0
        %vm5392 = vcmp.ge.f32.partialorder %v272, 0.0
        %vm5393 = vcmp.ge.f32.partialorder %v273, 0.0
        %vm5394 = vcmp.ge.f32.partialorder %v274, 0.0
        %vm5395 = vcmp.ge.f32.partialorder %v275, 0.0
        %vm5396 = vcmp.ge.f32.partialorder %v276, 0.0
        %vm5397 = vcmp.ge.f32.partialorder %v277, 0.0
        %vm5398 = vcmp.ge.f32.partialorder %v278, 0.0
        %vm5399 = vcmp.ge.f32.partialorder %v279, 0.0
        %vm5400 = vcmp.ge.f32.partialorder %v280, 0.0
        %vm5401 = vcmp.ge.f32.partialorder %v281, 0.0
        %vm5402 = vcmp.ge.f32.partialorder %v282, 0.0
        %vm5403 = vcmp.ge.f32.partialorder %v283, 0.0
        %vm5404 = vcmp.ge.f32.partialorder %v284, 0.0
        %vm5405 = vcmp.ge.f32.partialorder %v285, 0.0
        %vm5406 = vcmp.ge.f32.partialorder %v286, 0.0
        %vm5407 = vcmp.ge.f32.partialorder %v287, 0.0
        %vm5408 = vcmp.ge.f32.partialorder %v288, 0.0
        %vm5409 = vcmp.ge.f32.partialorder %v289, 0.0
        %vm5410 = vcmp.ge.f32.partialorder %v290, 0.0
        %vm5411 = vcmp.ge.f32.partialorder %v291, 0.0
        %vm5412 = vcmp.ge.f32.partialorder %v292, 0.0
        %vm5413 = vcmp.ge.f32.partialorder %v293, 0.0
        %vm5414 = vcmp.ge.f32.partialorder %v294, 0.0
        %vm5415 = vcmp.ge.f32.partialorder %v295, 0.0
        %vm5416 = vcmp.ge.f32.partialorder %v296, 0.0
        %vm5417 = vcmp.ge.f32.partialorder %v297, 0.0
        %vm5418 = vcmp.ge.f32.partialorder %v298, 0.0
        %vm5419 = vcmp.ge.f32.partialorder %v299, 0.0
        %vm5420 = vcmp.ge.f32.partialorder %v300, 0.0
        %vm5421 = vcmp.ge.f32.partialorder %v301, 0.0
        %vm5422 = vcmp.ge.f32.partialorder %v302, 0.0
        %vm5423 = vcmp.ge.f32.partialorder %v303, 0.0
        %vm5424 = vcmp.ge.f32.partialorder %v304, 0.0
        %vm5425 = vcmp.ge.f32.partialorder %v305, 0.0
        %vm5426 = vcmp.ge.f32.partialorder %v306, 0.0
        %vm5427 = vcmp.ge.f32.partialorder %v307, 0.0
        %vm5428 = vcmp.ge.f32.partialorder %v308, 0.0
        %vm5429 = vcmp.ge.f32.partialorder %v309, 0.0
        %vm5430 = vcmp.ge.f32.partialorder %v310, 0.0
        %vm5431 = vcmp.ge.f32.partialorder %v311, 0.0
        %vm5432 = vcmp.ge.f32.partialorder %v312, 0.0
        %vm5433 = vcmp.ge.f32.partialorder %v313, 0.0
        %vm5434 = vcmp.ge.f32.partialorder %v314, 0.0
        %vm5435 = vcmp.ge.f32.partialorder %v315, 0.0
        %vm5436 = vcmp.ge.f32.partialorder %v316, 0.0
        %vm5437 = vcmp.ge.f32.partialorder %v317, 0.0
        %vm5438 = vcmp.ge.f32.partialorder %v318, 0.0
        %vm5439 = vcmp.ge.f32.partialorder %v319, 0.0
        %vm5440 = vcmp.ge.f32.partialorder %v320, 0.0
        %vm5441 = vcmp.ge.f32.partialorder %v321, 0.0
        %vm5442 = vcmp.ge.f32.partialorder %v322, 0.0
        %vm5443 = vcmp.ge.f32.partialorder %v323, 0.0
        %vm5444 = vcmp.ge.f32.partialorder %v324, 0.0
        %vm5445 = vcmp.ge.f32.partialorder %v325, 0.0
        %vm5446 = vcmp.ge.f32.partialorder %v326, 0.0
        %vm5447 = vcmp.ge.f32.partialorder %v327, 0.0
        %vm5448 = vcmp.ge.f32.partialorder %v328, 0.0
        %vm5449 = vcmp.ge.f32.partialorder %v329, 0.0
        %vm5450 = vcmp.ge.f32.partialorder %v330, 0.0
        %vm5451 = vcmp.ge.f32.partialorder %v331, 0.0
        %vm5452 = vcmp.ge.f32.partialorder %v332, 0.0
        %vm5453 = vcmp.ge.f32.partialorder %v333, 0.0
        %vm5454 = vcmp.ge.f32.partialorder %v334, 0.0
        %vm5455 = vcmp.ge.f32.partialorder %v335, 0.0
        %vm5456 = vcmp.ge.f32.partialorder %v336, 0.0
        %vm5457 = vcmp.ge.f32.partialorder %v337, 0.0
        %vm5458 = vcmp.ge.f32.partialorder %v338, 0.0
        %vm5459 = vcmp.ge.f32.partialorder %v339, 0.0
        %vm5460 = vcmp.ge.f32.partialorder %v340, 0.0
        %vm5461 = vcmp.ge.f32.partialorder %v341, 0.0
        %vm5462 = vcmp.ge.f32.partialorder %v342, 0.0
        %vm5463 = vcmp.ge.f32.partialorder %v343, 0.0
        %vm5464 = vcmp.ge.f32.partialorder %v344, 0.0
        %vm5465 = vcmp.ge.f32.partialorder %v345, 0.0
        %vm5466 = vcmp.ge.f32.partialorder %v346, 0.0
        %vm5467 = vcmp.ge.f32.partialorder %v347, 0.0
        %vm5468 = vcmp.ge.f32.partialorder %v348, 0.0
        %vm5469 = vcmp.ge.f32.partialorder %v349, 0.0
        %vm5470 = vcmp.ge.f32.partialorder %v350, 0.0
        %vm5471 = vcmp.ge.f32.partialorder %v351, 0.0
        %vm5472 = vcmp.ge.f32.partialorder %v352, 0.0
        %vm5473 = vcmp.ge.f32.partialorder %v353, 0.0
        %vm5474 = vcmp.ge.f32.partialorder %v354, 0.0
        %vm5475 = vcmp.ge.f32.partialorder %v355, 0.0
        %vm5476 = vcmp.ge.f32.partialorder %v356, 0.0
        %vm5477 = vcmp.ge.f32.partialorder %v357, 0.0
        %vm5478 = vcmp.ge.f32.partialorder %v358, 0.0
        %vm5479 = vcmp.ge.f32.partialorder %v359, 0.0
        %vm5480 = vcmp.ge.f32.partialorder %v360, 0.0
        %vm5481 = vcmp.ge.f32.partialorder %v361, 0.0
        %vm5482 = vcmp.ge.f32.partialorder %v362, 0.0
        %vm5483 = vcmp.ge.f32.partialorder %v363, 0.0
        %vm5484 = vcmp.ge.f32.partialorder %v364, 0.0
        %vm5485 = vcmp.ge.f32.partialorder %v365, 0.0
        %vm5486 = vcmp.ge.f32.partialorder %v366, 0.0
        %vm5487 = vcmp.ge.f32.partialorder %v367, 0.0
        %vm5488 = vcmp.ge.f32.partialorder %v368, 0.0
        %vm5489 = vcmp.ge.f32.partialorder %v369, 0.0
        %vm5490 = vcmp.ge.f32.partialorder %v370, 0.0
        %vm5491 = vcmp.ge.f32.partialorder %v371, 0.0
        %vm5492 = vcmp.ge.f32.partialorder %v372, 0.0
        %vm5493 = vcmp.ge.f32.partialorder %v373, 0.0
        %vm5494 = vcmp.ge.f32.partialorder %v374, 0.0
        %vm5495 = vcmp.ge.f32.partialorder %v375, 0.0
        %vm5496 = vcmp.ge.f32.partialorder %v376, 0.0
        %vm5497 = vcmp.ge.f32.partialorder %v377, 0.0
        %vm5498 = vcmp.ge.f32.partialorder %v378, 0.0
        %vm5499 = vcmp.ge.f32.partialorder %v379, 0.0
        %vm5500 = vcmp.ge.f32.partialorder %v380, 0.0
        %vm5501 = vcmp.ge.f32.partialorder %v381, 0.0
        %vm5502 = vcmp.ge.f32.partialorder %v382, 0.0
        %vm5503 = vcmp.ge.f32.partialorder %v383, 0.0
        %vm5504 = vcmp.ge.f32.partialorder %v384, 0.0
        %vm5505 = vcmp.ge.f32.partialorder %v385, 0.0
        %vm5506 = vcmp.ge.f32.partialorder %v386, 0.0
        %vm5507 = vcmp.ge.f32.partialorder %v387, 0.0
        %vm5508 = vcmp.ge.f32.partialorder %v388, 0.0
        %vm5509 = vcmp.ge.f32.partialorder %v389, 0.0
        %vm5510 = vcmp.ge.f32.partialorder %v390, 0.0
        %vm5511 = vcmp.ge.f32.partialorder %v391, 0.0
        %vm5512 = vcmp.ge.f32.partialorder %v392, 0.0
        %vm5513 = vcmp.ge.f32.partialorder %v393, 0.0
        %vm5514 = vcmp.ge.f32.partialorder %v394, 0.0
        %vm5515 = vcmp.ge.f32.partialorder %v395, 0.0
        %vm5516 = vcmp.ge.f32.partialorder %v396, 0.0
        %vm5517 = vcmp.ge.f32.partialorder %v397, 0.0
        %vm5518 = vcmp.ge.f32.partialorder %v398, 0.0
        %vm5519 = vcmp.ge.f32.partialorder %v399, 0.0
        %vm5520 = vcmp.ge.f32.partialorder %v400, 0.0
        %vm5521 = vcmp.ge.f32.partialorder %v401, 0.0
        %vm5522 = vcmp.ge.f32.partialorder %v402, 0.0
        %vm5523 = vcmp.ge.f32.partialorder %v403, 0.0
        %vm5524 = vcmp.ge.f32.partialorder %v404, 0.0
        %vm5525 = vcmp.ge.f32.partialorder %v405, 0.0
        %vm5526 = vcmp.ge.f32.partialorder %v406, 0.0
        %vm5527 = vcmp.ge.f32.partialorder %v407, 0.0
        %vm5528 = vcmp.ge.f32.partialorder %v408, 0.0
        %vm5529 = vcmp.ge.f32.partialorder %v409, 0.0
        %vm5530 = vcmp.ge.f32.partialorder %v410, 0.0
        %vm5531 = vcmp.ge.f32.partialorder %v411, 0.0
        %vm5532 = vcmp.ge.f32.partialorder %v412, 0.0
        %vm5533 = vcmp.ge.f32.partialorder %v413, 0.0
        %vm5534 = vcmp.ge.f32.partialorder %v414, 0.0
        %vm5535 = vcmp.ge.f32.partialorder %v415, 0.0
        %vm5536 = vcmp.ge.f32.partialorder %v416, 0.0
        %vm5537 = vcmp.ge.f32.partialorder %v417, 0.0
        %vm5538 = vcmp.ge.f32.partialorder %v418, 0.0
        %vm5539 = vcmp.ge.f32.partialorder %v419, 0.0
        %vm5540 = vcmp.ge.f32.partialorder %v420, 0.0
        %vm5541 = vcmp.ge.f32.partialorder %v421, 0.0
        %vm5542 = vcmp.ge.f32.partialorder %v422, 0.0
        %vm5543 = vcmp.ge.f32.partialorder %v423, 0.0
        %vm5544 = vcmp.ge.f32.partialorder %v424, 0.0
        %vm5545 = vcmp.ge.f32.partialorder %v425, 0.0
        %vm5546 = vcmp.ge.f32.partialorder %v426, 0.0
        %vm5547 = vcmp.ge.f32.partialorder %v427, 0.0
        %vm5548 = vcmp.ge.f32.partialorder %v428, 0.0
        %vm5549 = vcmp.ge.f32.partialorder %v429, 0.0
        %vm5550 = vcmp.ge.f32.partialorder %v430, 0.0
        %vm5551 = vcmp.ge.f32.partialorder %v431, 0.0
        %vm5552 = vcmp.ge.f32.partialorder %v432, 0.0
        %vm5553 = vcmp.ge.f32.partialorder %v433, 0.0
        %vm5554 = vcmp.ge.f32.partialorder %v434, 0.0
        %vm5555 = vcmp.ge.f32.partialorder %v435, 0.0
        %vm5556 = vcmp.ge.f32.partialorder %v436, 0.0
        %vm5557 = vcmp.ge.f32.partialorder %v437, 0.0
        %vm5558 = vcmp.ge.f32.partialorder %v438, 0.0
        %vm5559 = vcmp.ge.f32.partialorder %v439, 0.0
        %vm5560 = vcmp.ge.f32.partialorder %v440, 0.0
        %vm5561 = vcmp.ge.f32.partialorder %v441, 0.0
        %vm5562 = vcmp.ge.f32.partialorder %v442, 0.0
        %vm5563 = vcmp.ge.f32.partialorder %v443, 0.0
        %vm5564 = vcmp.ge.f32.partialorder %v444, 0.0
        %vm5565 = vcmp.ge.f32.partialorder %v445, 0.0
        %vm5566 = vcmp.ge.f32.partialorder %v446, 0.0
        %vm5567 = vcmp.ge.f32.partialorder %v447, 0.0
        %vm5568 = vcmp.ge.f32.partialorder %v448, 0.0
        %vm5569 = vcmp.ge.f32.partialorder %v449, 0.0
        %vm5570 = vcmp.ge.f32.partialorder %v450, 0.0
        %vm5571 = vcmp.ge.f32.partialorder %v451, 0.0
        %vm5572 = vcmp.ge.f32.partialorder %v452, 0.0
        %vm5573 = vcmp.ge.f32.partialorder %v453, 0.0
        %vm5574 = vcmp.ge.f32.partialorder %v454, 0.0
        %vm5575 = vcmp.ge.f32.partialorder %v455, 0.0
        %vm5576 = vcmp.ge.f32.partialorder %v456, 0.0
        %vm5577 = vcmp.ge.f32.partialorder %v457, 0.0
        %vm5578 = vcmp.ge.f32.partialorder %v458, 0.0
        %vm5579 = vcmp.ge.f32.partialorder %v459, 0.0
        %vm5580 = vcmp.ge.f32.partialorder %v460, 0.0
        %vm5581 = vcmp.ge.f32.partialorder %v461, 0.0
        %vm5582 = vcmp.ge.f32.partialorder %v462, 0.0
        %vm5583 = vcmp.ge.f32.partialorder %v463, 0.0
        %vm5584 = vcmp.ge.f32.partialorder %v464, 0.0
        %vm5585 = vcmp.ge.f32.partialorder %v465, 0.0
        %vm5586 = vcmp.ge.f32.partialorder %v466, 0.0
        %vm5587 = vcmp.ge.f32.partialorder %v467, 0.0
        %vm5588 = vcmp.ge.f32.partialorder %v468, 0.0
        %vm5589 = vcmp.ge.f32.partialorder %v469, 0.0
        %vm5590 = vcmp.ge.f32.partialorder %v470, 0.0
        %vm5591 = vcmp.ge.f32.partialorder %v471, 0.0
        %vm5592 = vcmp.ge.f32.partialorder %v472, 0.0
        %vm5593 = vcmp.ge.f32.partialorder %v473, 0.0
        %vm5594 = vcmp.ge.f32.partialorder %v474, 0.0
        %vm5595 = vcmp.ge.f32.partialorder %v475, 0.0
        %vm5596 = vcmp.ge.f32.partialorder %v476, 0.0
        %vm5597 = vcmp.ge.f32.partialorder %v477, 0.0
        %vm5598 = vcmp.ge.f32.partialorder %v478, 0.0
        %vm5599 = vcmp.ge.f32.partialorder %v479, 0.0
        %vm5600 = vcmp.ge.f32.partialorder %v480, 0.0
        %vm5601 = vcmp.ge.f32.partialorder %v481, 0.0
        %vm5602 = vcmp.ge.f32.partialorder %v482, 0.0
        %vm5603 = vcmp.ge.f32.partialorder %v483, 0.0
        %vm5604 = vcmp.ge.f32.partialorder %v484, 0.0
        %vm5605 = vcmp.ge.f32.partialorder %v485, 0.0
        %vm5606 = vcmp.ge.f32.partialorder %v486, 0.0
        %vm5607 = vcmp.ge.f32.partialorder %v487, 0.0
        %vm5608 = vcmp.ge.f32.partialorder %v488, 0.0
        %vm5609 = vcmp.ge.f32.partialorder %v489, 0.0
        %vm5610 = vcmp.ge.f32.partialorder %v490, 0.0
        %vm5611 = vcmp.ge.f32.partialorder %v491, 0.0
        %vm5612 = vcmp.ge.f32.partialorder %v492, 0.0
        %vm5613 = vcmp.ge.f32.partialorder %v493, 0.0
        %vm5614 = vcmp.ge.f32.partialorder %v494, 0.0
        %vm5615 = vcmp.ge.f32.partialorder %v495, 0.0
        %vm5616 = vcmp.ge.f32.partialorder %v496, 0.0
        %vm5617 = vcmp.ge.f32.partialorder %v497, 0.0
        %vm5618 = vcmp.ge.f32.partialorder %v498, 0.0
        %vm5619 = vcmp.ge.f32.partialorder %v499, 0.0
        %vm5620 = vcmp.ge.f32.partialorder %v500, 0.0
        %vm5621 = vcmp.ge.f32.partialorder %v501, 0.0
        %vm5622 = vcmp.ge.f32.partialorder %v502, 0.0
        %vm5623 = vcmp.ge.f32.partialorder %v503, 0.0
        %vm5624 = vcmp.ge.f32.partialorder %v504, 0.0
        %vm5625 = vcmp.ge.f32.partialorder %v505, 0.0
        %vm5626 = vcmp.ge.f32.partialorder %v506, 0.0
        %vm5627 = vcmp.ge.f32.partialorder %v507, 0.0
        %vm5628 = vcmp.ge.f32.partialorder %v508, 0.0
        %vm5629 = vcmp.ge.f32.partialorder %v509, 0.0
        %vm5630 = vcmp.ge.f32.partialorder %v510, 0.0
        %vm5631 = vcmp.ge.f32.partialorder %v511, 0.0
        %vm5632 = vcmp.ge.f32.partialorder %v512, 0.0
        %vm5633 = vcmp.ge.f32.partialorder %v513, 0.0
        %vm5634 = vcmp.ge.f32.partialorder %v514, 0.0
        %vm5635 = vcmp.ge.f32.partialorder %v515, 0.0
        %vm5636 = vcmp.ge.f32.partialorder %v516, 0.0
        %vm5637 = vcmp.ge.f32.partialorder %v517, 0.0
        %vm5638 = vcmp.ge.f32.partialorder %v518, 0.0
        %vm5639 = vcmp.ge.f32.partialorder %v519, 0.0
        %vm5640 = vcmp.ge.f32.partialorder %v520, 0.0
        %vm5641 = vcmp.ge.f32.partialorder %v521, 0.0
        %vm5642 = vcmp.ge.f32.partialorder %v522, 0.0
        %vm5643 = vcmp.ge.f32.partialorder %v523, 0.0
        %vm5644 = vcmp.ge.f32.partialorder %v524, 0.0
        %vm5645 = vcmp.ge.f32.partialorder %v525, 0.0
        %vm5646 = vcmp.ge.f32.partialorder %v526, 0.0
        %vm5647 = vcmp.ge.f32.partialorder %v527, 0.0
        %vm5648 = vcmp.ge.f32.partialorder %v528, 0.0
        %vm5649 = vcmp.ge.f32.partialorder %v529, 0.0
        %vm5650 = vcmp.ge.f32.partialorder %v530, 0.0
        %vm5651 = vcmp.ge.f32.partialorder %v531, 0.0
        %vm5652 = vcmp.ge.f32.partialorder %v532, 0.0
        %vm5653 = vcmp.ge.f32.partialorder %v533, 0.0
        %vm5654 = vcmp.ge.f32.partialorder %v534, 0.0
        %vm5655 = vcmp.ge.f32.partialorder %v535, 0.0
        %vm5656 = vcmp.ge.f32.partialorder %v536, 0.0
        %vm5657 = vcmp.ge.f32.partialorder %v537, 0.0
        %vm5658 = vcmp.ge.f32.partialorder %v538, 0.0
        %vm5659 = vcmp.ge.f32.partialorder %v539, 0.0
        %vm5660 = vcmp.ge.f32.partialorder %v540, 0.0
        %vm5661 = vcmp.ge.f32.partialorder %v541, 0.0
        %vm5662 = vcmp.ge.f32.partialorder %v542, 0.0
        %vm5663 = vcmp.ge.f32.partialorder %v543, 0.0
        %vm5664 = vcmp.ge.f32.partialorder %v544, 0.0
        %vm5665 = vcmp.ge.f32.partialorder %v545, 0.0
        %vm5666 = vcmp.ge.f32.partialorder %v546, 0.0
        %vm5667 = vcmp.ge.f32.partialorder %v547, 0.0
        %vm5668 = vcmp.ge.f32.partialorder %v548, 0.0
        %vm5669 = vcmp.ge.f32.partialorder %v549, 0.0
        %vm5670 = vcmp.ge.f32.partialorder %v550, 0.0
        %vm5671 = vcmp.ge.f32.partialorder %v551, 0.0
        %vm5672 = vcmp.ge.f32.partialorder %v552, 0.0
        %vm5673 = vcmp.ge.f32.partialorder %v553, 0.0
        %vm5674 = vcmp.ge.f32.partialorder %v554, 0.0
        %vm5675 = vcmp.ge.f32.partialorder %v555, 0.0
        %vm5676 = vcmp.ge.f32.partialorder %v556, 0.0
        %vm5677 = vcmp.ge.f32.partialorder %v557, 0.0
        %vm5678 = vcmp.ge.f32.partialorder %v558, 0.0
        %vm5679 = vcmp.ge.f32.partialorder %v559, 0.0
        %vm5680 = vcmp.ge.f32.partialorder %v560, 0.0
        %vm5681 = vcmp.ge.f32.partialorder %v561, 0.0
        %vm5682 = vcmp.ge.f32.partialorder %v562, 0.0
        %vm5683 = vcmp.ge.f32.partialorder %v563, 0.0
        %vm5684 = vcmp.ge.f32.partialorder %v564, 0.0
        %vm5685 = vcmp.ge.f32.partialorder %v565, 0.0
        %vm5686 = vcmp.ge.f32.partialorder %v566, 0.0
        %vm5687 = vcmp.ge.f32.partialorder %v567, 0.0
        %vm5688 = vcmp.ge.f32.partialorder %v568, 0.0
        %vm5689 = vcmp.ge.f32.partialorder %v569, 0.0
        %vm5690 = vcmp.ge.f32.partialorder %v570, 0.0
        %vm5691 = vcmp.ge.f32.partialorder %v571, 0.0
        %vm5692 = vcmp.ge.f32.partialorder %v572, 0.0
        %vm5693 = vcmp.ge.f32.partialorder %v573, 0.0
        %vm5694 = vcmp.ge.f32.partialorder %v574, 0.0
        %vm5695 = vcmp.ge.f32.partialorder %v575, 0.0
        %vm5696 = vcmp.ge.f32.partialorder %v576, 0.0
        %vm5697 = vcmp.ge.f32.partialorder %v577, 0.0
        %vm5698 = vcmp.ge.f32.partialorder %v578, 0.0
        %vm5699 = vcmp.ge.f32.partialorder %v579, 0.0
        %vm5700 = vcmp.ge.f32.partialorder %v580, 0.0
        %vm5701 = vcmp.ge.f32.partialorder %v581, 0.0
        %vm5702 = vcmp.ge.f32.partialorder %v582, 0.0
        %vm5703 = vcmp.ge.f32.partialorder %v583, 0.0
        %vm5704 = vcmp.ge.f32.partialorder %v584, 0.0
        %vm5705 = vcmp.ge.f32.partialorder %v585, 0.0
        %vm5706 = vcmp.ge.f32.partialorder %v586, 0.0
        %vm5707 = vcmp.ge.f32.partialorder %v587, 0.0
        %vm5708 = vcmp.ge.f32.partialorder %v588, 0.0
        %vm5709 = vcmp.ge.f32.partialorder %v589, 0.0
        %vm5710 = vcmp.ge.f32.partialorder %v590, 0.0
        %vm5711 = vcmp.ge.f32.partialorder %v591, 0.0
        %vm5712 = vcmp.ge.f32.partialorder %v592, 0.0
        %vm5713 = vcmp.ge.f32.partialorder %v593, 0.0
        %vm5714 = vcmp.ge.f32.partialorder %v594, 0.0
        %vm5715 = vcmp.ge.f32.partialorder %v595, 0.0
        %vm5716 = vcmp.ge.f32.partialorder %v596, 0.0
        %vm5717 = vcmp.ge.f32.partialorder %v597, 0.0
        %vm5718 = vcmp.ge.f32.partialorder %v598, 0.0
        %vm5719 = vcmp.ge.f32.partialorder %v599, 0.0
        %vm5720 = vcmp.ge.f32.partialorder %v600, 0.0
        %vm5721 = vcmp.ge.f32.partialorder %v601, 0.0
        %vm5722 = vcmp.ge.f32.partialorder %v602, 0.0
        %vm5723 = vcmp.ge.f32.partialorder %v603, 0.0
        %vm5724 = vcmp.ge.f32.partialorder %v604, 0.0
        %vm5725 = vcmp.ge.f32.partialorder %v605, 0.0
        %vm5726 = vcmp.ge.f32.partialorder %v606, 0.0
        %vm5727 = vcmp.ge.f32.partialorder %v607, 0.0
        %vm5728 = vcmp.ge.f32.partialorder %v608, 0.0
        %vm5729 = vcmp.ge.f32.partialorder %v609, 0.0
        %vm5730 = vcmp.ge.f32.partialorder %v610, 0.0
        %vm5731 = vcmp.ge.f32.partialorder %v611, 0.0
        %vm5732 = vcmp.ge.f32.partialorder %v612, 0.0
        %vm5733 = vcmp.ge.f32.partialorder %v613, 0.0
        %vm5734 = vcmp.ge.f32.partialorder %v614, 0.0
        %vm5735 = vcmp.ge.f32.partialorder %v615, 0.0
        %vm5736 = vcmp.ge.f32.partialorder %v616, 0.0
        %vm5737 = vcmp.ge.f32.partialorder %v617, 0.0
        %vm5738 = vcmp.ge.f32.partialorder %v618, 0.0
        %vm5739 = vcmp.ge.f32.partialorder %v619, 0.0
        %vm5740 = vcmp.ge.f32.partialorder %v620, 0.0
        %vm5741 = vcmp.ge.f32.partialorder %v621, 0.0
        %vm5742 = vcmp.ge.f32.partialorder %v622, 0.0
        %vm5743 = vcmp.ge.f32.partialorder %v623, 0.0
        %vm5744 = vcmp.ge.f32.partialorder %v624, 0.0
        %vm5745 = vcmp.ge.f32.partialorder %v625, 0.0
        %vm5746 = vcmp.ge.f32.partialorder %v626, 0.0
        %vm5747 = vcmp.ge.f32.partialorder %v627, 0.0
        %vm5748 = vcmp.ge.f32.partialorder %v628, 0.0
        %vm5749 = vcmp.ge.f32.partialorder %v629, 0.0
        %vm5750 = vcmp.ge.f32.partialorder %v630, 0.0
        %vm5751 = vcmp.ge.f32.partialorder %v631, 0.0
        %vm5752 = vcmp.ge.f32.partialorder %v632, 0.0
        %vm5753 = vcmp.ge.f32.partialorder %v633, 0.0
        %vm5754 = vcmp.ge.f32.partialorder %v634, 0.0
        %vm5755 = vcmp.ge.f32.partialorder %v635, 0.0
        %vm5756 = vcmp.ge.f32.partialorder %v636, 0.0
        %vm5757 = vcmp.ge.f32.partialorder %v637, 0.0
        %vm5758 = vcmp.ge.f32.partialorder %v638, 0.0
        %vm5759 = vcmp.ge.f32.partialorder %v639, 0.0
        %vm5760 = vcmp.ge.f32.partialorder %v640, 0.0
        %vm5761 = vcmp.ge.f32.partialorder %v641, 0.0
        %vm5762 = vcmp.ge.f32.partialorder %v642, 0.0
        %vm5763 = vcmp.ge.f32.partialorder %v643, 0.0
        %vm5764 = vcmp.ge.f32.partialorder %v644, 0.0
        %vm5765 = vcmp.ge.f32.partialorder %v645, 0.0
        %vm5766 = vcmp.ge.f32.partialorder %v646, 0.0
        %vm5767 = vcmp.ge.f32.partialorder %v647, 0.0
        %vm5768 = vcmp.ge.f32.partialorder %v648, 0.0
        %vm5769 = vcmp.ge.f32.partialorder %v649, 0.0
        %vm5770 = vcmp.ge.f32.partialorder %v650, 0.0
        %vm5771 = vcmp.ge.f32.partialorder %v651, 0.0
        %vm5772 = vcmp.ge.f32.partialorder %v652, 0.0
        %vm5773 = vcmp.ge.f32.partialorder %v653, 0.0
        %vm5774 = vcmp.ge.f32.partialorder %v654, 0.0
        %vm5775 = vcmp.ge.f32.partialorder %v655, 0.0
        %vm5776 = vcmp.ge.f32.partialorder %v656, 0.0
        %vm5777 = vcmp.ge.f32.partialorder %v657, 0.0
        %vm5778 = vcmp.ge.f32.partialorder %v658, 0.0
        %vm5779 = vcmp.ge.f32.partialorder %v659, 0.0
        %vm5780 = vcmp.ge.f32.partialorder %v660, 0.0
        %vm5781 = vcmp.ge.f32.partialorder %v661, 0.0
        %vm5782 = vcmp.ge.f32.partialorder %v662, 0.0
        %vm5783 = vcmp.ge.f32.partialorder %v663, 0.0
        %vm5784 = vcmp.ge.f32.partialorder %v664, 0.0
        %vm5785 = vcmp.ge.f32.partialorder %v665, 0.0
        %vm5786 = vcmp.ge.f32.partialorder %v666, 0.0
        %vm5787 = vcmp.ge.f32.partialorder %v667, 0.0
        %vm5788 = vcmp.ge.f32.partialorder %v668, 0.0
        %vm5789 = vcmp.ge.f32.partialorder %v669, 0.0
        %vm5790 = vcmp.ge.f32.partialorder %v670, 0.0
        %vm5791 = vcmp.ge.f32.partialorder %v671, 0.0
        %vm5792 = vcmp.ge.f32.partialorder %v672, 0.0
        %vm5793 = vcmp.ge.f32.partialorder %v673, 0.0
        %vm5794 = vcmp.ge.f32.partialorder %v674, 0.0
        %vm5795 = vcmp.ge.f32.partialorder %v675, 0.0
        %vm5796 = vcmp.ge.f32.partialorder %v676, 0.0
        %vm5797 = vcmp.ge.f32.partialorder %v677, 0.0
        %vm5798 = vcmp.ge.f32.partialorder %v678, 0.0
        %vm5799 = vcmp.ge.f32.partialorder %v679, 0.0
        %vm5800 = vcmp.ge.f32.partialorder %v680, 0.0
        %vm5801 = vcmp.ge.f32.partialorder %v681, 0.0
        %vm5802 = vcmp.ge.f32.partialorder %v682, 0.0
        %vm5803 = vcmp.ge.f32.partialorder %v683, 0.0
        %vm5804 = vcmp.ge.f32.partialorder %v684, 0.0
        %vm5805 = vcmp.ge.f32.partialorder %v685, 0.0
        %vm5806 = vcmp.ge.f32.partialorder %v686, 0.0
        %vm5807 = vcmp.ge.f32.partialorder %v687, 0.0
        %vm5808 = vcmp.ge.f32.partialorder %v688, 0.0
        %vm5809 = vcmp.ge.f32.partialorder %v689, 0.0
        %vm5810 = vcmp.ge.f32.partialorder %v690, 0.0
        %vm5811 = vcmp.ge.f32.partialorder %v691, 0.0
        %vm5812 = vcmp.ge.f32.partialorder %v692, 0.0
        %vm5813 = vcmp.ge.f32.partialorder %v693, 0.0
        %vm5814 = vcmp.ge.f32.partialorder %v694, 0.0
        %vm5815 = vcmp.ge.f32.partialorder %v695, 0.0
        %vm5816 = vcmp.ge.f32.partialorder %v696, 0.0
        %vm5817 = vcmp.ge.f32.partialorder %v697, 0.0
        %vm5818 = vcmp.ge.f32.partialorder %v698, 0.0
        %vm5819 = vcmp.ge.f32.partialorder %v699, 0.0
        %vm5820 = vcmp.ge.f32.partialorder %v700, 0.0
        %vm5821 = vcmp.ge.f32.partialorder %v701, 0.0
        %vm5822 = vcmp.ge.f32.partialorder %v702, 0.0
        %vm5823 = vcmp.ge.f32.partialorder %v703, 0.0
        %vm5824 = vcmp.ge.f32.partialorder %v704, 0.0
        %vm5825 = vcmp.ge.f32.partialorder %v705, 0.0
        %vm5826 = vcmp.ge.f32.partialorder %v706, 0.0
        %vm5827 = vcmp.ge.f32.partialorder %v707, 0.0
        %vm5828 = vcmp.ge.f32.partialorder %v708, 0.0
        %vm5829 = vcmp.ge.f32.partialorder %v709, 0.0
        %vm5830 = vcmp.ge.f32.partialorder %v710, 0.0
        %vm5831 = vcmp.ge.f32.partialorder %v711, 0.0
        %vm5832 = vcmp.ge.f32.partialorder %v712, 0.0
        %vm5833 = vcmp.ge.f32.partialorder %v713, 0.0
        %vm5834 = vcmp.ge.f32.partialorder %v714, 0.0
        %vm5835 = vcmp.ge.f32.partialorder %v715, 0.0
        %vm5836 = vcmp.ge.f32.partialorder %v716, 0.0
        %vm5837 = vcmp.ge.f32.partialorder %v717, 0.0
        %vm5838 = vcmp.ge.f32.partialorder %v718, 0.0
        %vm5839 = vcmp.ge.f32.partialorder %v719, 0.0
        %vm5840 = vcmp.ge.f32.partialorder %v720, 0.0
        %vm5841 = vcmp.ge.f32.partialorder %v721, 0.0
        %vm5842 = vcmp.ge.f32.partialorder %v722, 0.0
        %vm5843 = vcmp.ge.f32.partialorder %v723, 0.0
        %vm5844 = vcmp.ge.f32.partialorder %v724, 0.0
        %vm5845 = vcmp.ge.f32.partialorder %v725, 0.0
        %vm5846 = vcmp.ge.f32.partialorder %v726, 0.0
        %vm5847 = vcmp.ge.f32.partialorder %v727, 0.0
        %vm5848 = vcmp.ge.f32.partialorder %v728, 0.0
        %vm5849 = vcmp.ge.f32.partialorder %v729, 0.0
        %vm5850 = vcmp.ge.f32.partialorder %v730, 0.0
        %vm5851 = vcmp.ge.f32.partialorder %v731, 0.0
        %vm5852 = vcmp.ge.f32.partialorder %v732, 0.0
        %vm5853 = vcmp.ge.f32.partialorder %v733, 0.0
        %vm5854 = vcmp.ge.f32.partialorder %v734, 0.0
        %vm5855 = vcmp.ge.f32.partialorder %v735, 0.0
        %vm5856 = vcmp.ge.f32.partialorder %v736, 0.0
        %vm5857 = vcmp.ge.f32.partialorder %v737, 0.0
        %vm5858 = vcmp.ge.f32.partialorder %v738, 0.0
        %vm5859 = vcmp.ge.f32.partialorder %v739, 0.0
        %vm5860 = vcmp.ge.f32.partialorder %v740, 0.0
        %vm5861 = vcmp.ge.f32.partialorder %v741, 0.0
        %vm5862 = vcmp.ge.f32.partialorder %v742, 0.0
        %vm5863 = vcmp.ge.f32.partialorder %v743, 0.0
        %vm5864 = vcmp.ge.f32.partialorder %v744, 0.0
        %vm5865 = vcmp.ge.f32.partialorder %v745, 0.0
        %vm5866 = vcmp.ge.f32.partialorder %v746, 0.0
        %vm5867 = vcmp.ge.f32.partialorder %v747, 0.0
        %vm5868 = vcmp.ge.f32.partialorder %v748, 0.0
        %vm5869 = vcmp.ge.f32.partialorder %v749, 0.0
        %vm5870 = vcmp.ge.f32.partialorder %v750, 0.0
        %vm5871 = vcmp.ge.f32.partialorder %v751, 0.0
        %vm5872 = vcmp.ge.f32.partialorder %v752, 0.0
        %vm5873 = vcmp.ge.f32.partialorder %v753, 0.0
        %vm5874 = vcmp.ge.f32.partialorder %v754, 0.0
        %vm5875 = vcmp.ge.f32.partialorder %v755, 0.0
        %vm5876 = vcmp.ge.f32.partialorder %v756, 0.0
        %vm5877 = vcmp.ge.f32.partialorder %v757, 0.0
        %vm5878 = vcmp.ge.f32.partialorder %v758, 0.0
        %vm5879 = vcmp.ge.f32.partialorder %v759, 0.0
        %vm5880 = vcmp.ge.f32.partialorder %v760, 0.0
        %vm5881 = vcmp.ge.f32.partialorder %v761, 0.0
        %vm5882 = vcmp.ge.f32.partialorder %v762, 0.0
        %vm5883 = vcmp.ge.f32.partialorder %v763, 0.0
        %vm5884 = vcmp.ge.f32.partialorder %v764, 0.0
        %vm5885 = vcmp.ge.f32.partialorder %v765, 0.0
        %vm5886 = vcmp.ge.f32.partialorder %v766, 0.0
        %vm5887 = vcmp.ge.f32.partialorder %v767, 0.0
        %vm5888 = vcmp.ge.f32.partialorder %v768, 0.0
        %vm5889 = vcmp.ge.f32.partialorder %v769, 0.0
        %vm5890 = vcmp.ge.f32.partialorder %v770, 0.0
        %vm5891 = vcmp.ge.f32.partialorder %v771, 0.0
        %vm5892 = vcmp.ge.f32.partialorder %v772, 0.0
        %vm5893 = vcmp.ge.f32.partialorder %v773, 0.0
        %vm5894 = vcmp.ge.f32.partialorder %v774, 0.0
        %vm5895 = vcmp.ge.f32.partialorder %v775, 0.0
        %vm5896 = vcmp.ge.f32.partialorder %v776, 0.0
        %vm5897 = vcmp.ge.f32.partialorder %v777, 0.0
        %vm5898 = vcmp.ge.f32.partialorder %v778, 0.0
        %vm5899 = vcmp.ge.f32.partialorder %v779, 0.0
        %vm5900 = vcmp.ge.f32.partialorder %v780, 0.0
        %vm5901 = vcmp.ge.f32.partialorder %v781, 0.0
        %vm5902 = vcmp.ge.f32.partialorder %v782, 0.0
        %vm5903 = vcmp.ge.f32.partialorder %v783, 0.0
        %vm5904 = vcmp.ge.f32.partialorder %v784, 0.0
        %vm5905 = vcmp.ge.f32.partialorder %v785, 0.0
        %vm5906 = vcmp.ge.f32.partialorder %v786, 0.0
        %vm5907 = vcmp.ge.f32.partialorder %v787, 0.0
        %vm5908 = vcmp.ge.f32.partialorder %v788, 0.0
        %vm5909 = vcmp.ge.f32.partialorder %v789, 0.0
        %vm5910 = vcmp.ge.f32.partialorder %v790, 0.0
        %vm5911 = vcmp.ge.f32.partialorder %v791, 0.0
        %vm5912 = vcmp.ge.f32.partialorder %v792, 0.0
        %vm5913 = vcmp.ge.f32.partialorder %v793, 0.0
        %vm5914 = vcmp.ge.f32.partialorder %v794, 0.0
        %vm5915 = vcmp.ge.f32.partialorder %v795, 0.0
        %vm5916 = vcmp.ge.f32.partialorder %v796, 0.0
        %vm5917 = vcmp.ge.f32.partialorder %v797, 0.0
        %vm5918 = vcmp.ge.f32.partialorder %v798, 0.0
        %vm5919 = vcmp.ge.f32.partialorder %v799, 0.0
        %vm5920 = vcmp.ge.f32.partialorder %v800, 0.0
        %vm5921 = vcmp.ge.f32.partialorder %v801, 0.0
        %vm5922 = vcmp.ge.f32.partialorder %v802, 0.0
        %vm5923 = vcmp.ge.f32.partialorder %v803, 0.0
        %vm5924 = vcmp.ge.f32.partialorder %v804, 0.0
        %vm5925 = vcmp.ge.f32.partialorder %v805, 0.0
        %vm5926 = vcmp.ge.f32.partialorder %v806, 0.0
        %vm5927 = vcmp.ge.f32.partialorder %v807, 0.0
        %vm5928 = vcmp.ge.f32.partialorder %v808, 0.0
        %vm5929 = vcmp.ge.f32.partialorder %v809, 0.0
        %vm5930 = vcmp.ge.f32.partialorder %v810, 0.0
        %vm5931 = vcmp.ge.f32.partialorder %v811, 0.0
        %vm5932 = vcmp.ge.f32.partialorder %v812, 0.0
        %vm5933 = vcmp.ge.f32.partialorder %v813, 0.0
        %vm5934 = vcmp.ge.f32.partialorder %v814, 0.0
        %vm5935 = vcmp.ge.f32.partialorder %v815, 0.0
        %vm5936 = vcmp.ge.f32.partialorder %v816, 0.0
        %vm5937 = vcmp.ge.f32.partialorder %v817, 0.0
        %vm5938 = vcmp.ge.f32.partialorder %v818, 0.0
        %vm5939 = vcmp.ge.f32.partialorder %v819, 0.0
        %vm5940 = vcmp.ge.f32.partialorder %v820, 0.0
        %vm5941 = vcmp.ge.f32.partialorder %v821, 0.0
        %vm5942 = vcmp.ge.f32.partialorder %v822, 0.0
        %vm5943 = vcmp.ge.f32.partialorder %v823, 0.0
        %vm5944 = vcmp.ge.f32.partialorder %v824, 0.0
        %vm5945 = vcmp.ge.f32.partialorder %v825, 0.0
        %vm5946 = vcmp.ge.f32.partialorder %v826, 0.0
        %vm5947 = vcmp.ge.f32.partialorder %v827, 0.0
        %vm5948 = vcmp.ge.f32.partialorder %v828, 0.0
        %vm5949 = vcmp.ge.f32.partialorder %v829, 0.0
        %vm5950 = vcmp.ge.f32.partialorder %v830, 0.0
        %vm5951 = vcmp.ge.f32.partialorder %v831, 0.0
        %vm5952 = vcmp.ge.f32.partialorder %v832, 0.0
        %vm5953 = vcmp.ge.f32.partialorder %v833, 0.0
        %vm5954 = vcmp.ge.f32.partialorder %v834, 0.0
        %vm5955 = vcmp.ge.f32.partialorder %v835, 0.0
        %vm5956 = vcmp.ge.f32.partialorder %v836, 0.0
        %vm5957 = vcmp.ge.f32.partialorder %v837, 0.0
        %vm5958 = vcmp.ge.f32.partialorder %v838, 0.0
        %vm5959 = vcmp.ge.f32.partialorder %v839, 0.0
        %vm5960 = vcmp.ge.f32.partialorder %v840, 0.0
        %vm5961 = vcmp.ge.f32.partialorder %v841, 0.0
        %vm5962 = vcmp.ge.f32.partialorder %v842, 0.0
        %vm5963 = vcmp.ge.f32.partialorder %v843, 0.0
        %vm5964 = vcmp.ge.f32.partialorder %v844, 0.0
        %vm5965 = vcmp.ge.f32.partialorder %v845, 0.0
        %vm5966 = vcmp.ge.f32.partialorder %v846, 0.0
        %vm5967 = vcmp.ge.f32.partialorder %v847, 0.0
        %vm5968 = vcmp.ge.f32.partialorder %v848, 0.0
        %vm5969 = vcmp.ge.f32.partialorder %v849, 0.0
        %vm5970 = vcmp.ge.f32.partialorder %v850, 0.0
        %vm5971 = vcmp.ge.f32.partialorder %v851, 0.0
        %vm5972 = vcmp.ge.f32.partialorder %v852, 0.0
        %vm5973 = vcmp.ge.f32.partialorder %v853, 0.0
        %vm5974 = vcmp.ge.f32.partialorder %v854, 0.0
        %vm5975 = vcmp.ge.f32.partialorder %v855, 0.0
        %vm5976 = vcmp.ge.f32.partialorder %v856, 0.0
        %vm5977 = vcmp.ge.f32.partialorder %v857, 0.0
        %vm5978 = vcmp.ge.f32.partialorder %v858, 0.0
        %vm5979 = vcmp.ge.f32.partialorder %v859, 0.0
        %vm5980 = vcmp.ge.f32.partialorder %v860, 0.0
        %vm5981 = vcmp.ge.f32.partialorder %v861, 0.0
        %vm5982 = vcmp.ge.f32.partialorder %v862, 0.0
        %vm5983 = vcmp.ge.f32.partialorder %v863, 0.0
        %vm5984 = vcmp.ge.f32.partialorder %v864, 0.0
        %vm5985 = vcmp.ge.f32.partialorder %v865, 0.0
        %vm5986 = vcmp.ge.f32.partialorder %v866, 0.0
        %vm5987 = vcmp.ge.f32.partialorder %v867, 0.0
        %vm5988 = vcmp.ge.f32.partialorder %v868, 0.0
        %vm5989 = vcmp.ge.f32.partialorder %v869, 0.0
        %vm5990 = vcmp.ge.f32.partialorder %v870, 0.0
        %vm5991 = vcmp.ge.f32.partialorder %v871, 0.0
        %vm5992 = vcmp.ge.f32.partialorder %v872, 0.0
        %vm5993 = vcmp.ge.f32.partialorder %v873, 0.0
        %vm5994 = vcmp.ge.f32.partialorder %v874, 0.0
        %vm5995 = vcmp.ge.f32.partialorder %v875, 0.0
        %vm5996 = vcmp.ge.f32.partialorder %v876, 0.0
        %vm5997 = vcmp.ge.f32.partialorder %v877, 0.0
        %vm5998 = vcmp.ge.f32.partialorder %v878, 0.0
        %vm5999 = vcmp.ge.f32.partialorder %v879, 0.0
        %vm6000 = vcmp.ge.f32.partialorder %v880, 0.0
        %vm6001 = vcmp.ge.f32.partialorder %v881, 0.0
        %vm6002 = vcmp.ge.f32.partialorder %v882, 0.0
        %vm6003 = vcmp.ge.f32.partialorder %v883, 0.0
        %vm6004 = vcmp.ge.f32.partialorder %v884, 0.0
        %vm6005 = vcmp.ge.f32.partialorder %v885, 0.0
        %vm6006 = vcmp.ge.f32.partialorder %v886, 0.0
        %vm6007 = vcmp.ge.f32.partialorder %v887, 0.0
        %vm6008 = vcmp.ge.f32.partialorder %v888, 0.0
        %vm6009 = vcmp.ge.f32.partialorder %v889, 0.0
        %vm6010 = vcmp.ge.f32.partialorder %v890, 0.0
        %vm6011 = vcmp.ge.f32.partialorder %v891, 0.0
        %vm6012 = vcmp.ge.f32.partialorder %v892, 0.0
        %vm6013 = vcmp.ge.f32.partialorder %v893, 0.0
        %vm6014 = vcmp.ge.f32.partialorder %v894, 0.0
        %vm6015 = vcmp.ge.f32.partialorder %v895, 0.0
        %vm6016 = vcmp.ge.f32.partialorder %v896, 0.0
        %vm6017 = vcmp.ge.f32.partialorder %v897, 0.0
        %vm6018 = vcmp.ge.f32.partialorder %v898, 0.0
        %vm6019 = vcmp.ge.f32.partialorder %v899, 0.0
        %vm6020 = vcmp.ge.f32.partialorder %v900, 0.0
        %vm6021 = vcmp.ge.f32.partialorder %v901, 0.0
        %vm6022 = vcmp.ge.f32.partialorder %v902, 0.0
        %vm6023 = vcmp.ge.f32.partialorder %v903, 0.0
        %vm6024 = vcmp.ge.f32.partialorder %v904, 0.0
        %vm6025 = vcmp.ge.f32.partialorder %v905, 0.0
        %vm6026 = vcmp.ge.f32.partialorder %v906, 0.0
        %vm6027 = vcmp.ge.f32.partialorder %v907, 0.0
        %vm6028 = vcmp.ge.f32.partialorder %v908, 0.0
        %vm6029 = vcmp.ge.f32.partialorder %v909, 0.0
        %vm6030 = vcmp.ge.f32.partialorder %v910, 0.0
        %vm6031 = vcmp.ge.f32.partialorder %v911, 0.0
        %vm6032 = vcmp.ge.f32.partialorder %v912, 0.0
        %vm6033 = vcmp.ge.f32.partialorder %v913, 0.0
        %vm6034 = vcmp.ge.f32.partialorder %v914, 0.0
        %vm6035 = vcmp.ge.f32.partialorder %v915, 0.0
        %vm6036 = vcmp.ge.f32.partialorder %v916, 0.0
        %vm6037 = vcmp.ge.f32.partialorder %v917, 0.0
        %vm6038 = vcmp.ge.f32.partialorder %v918, 0.0
        %vm6039 = vcmp.ge.f32.partialorder %v919, 0.0
        %vm6040 = vcmp.ge.f32.partialorder %v920, 0.0
        %vm6041 = vcmp.ge.f32.partialorder %v921, 0.0
        %vm6042 = vcmp.ge.f32.partialorder %v922, 0.0
        %vm6043 = vcmp.ge.f32.partialorder %v923, 0.0
        %vm6044 = vcmp.ge.f32.partialorder %v924, 0.0
        %vm6045 = vcmp.ge.f32.partialorder %v925, 0.0
        %vm6046 = vcmp.ge.f32.partialorder %v926, 0.0
        %vm6047 = vcmp.ge.f32.partialorder %v927, 0.0
        %vm6048 = vcmp.ge.f32.partialorder %v928, 0.0
        %vm6049 = vcmp.ge.f32.partialorder %v929, 0.0
        %vm6050 = vcmp.ge.f32.partialorder %v930, 0.0
        %vm6051 = vcmp.ge.f32.partialorder %v931, 0.0
        %vm6052 = vcmp.ge.f32.partialorder %v932, 0.0
        %vm6053 = vcmp.ge.f32.partialorder %v933, 0.0
        %vm6054 = vcmp.ge.f32.partialorder %v934, 0.0
        %vm6055 = vcmp.ge.f32.partialorder %v935, 0.0
        %vm6056 = vcmp.ge.f32.partialorder %v936, 0.0
        %vm6057 = vcmp.ge.f32.partialorder %v937, 0.0
        %vm6058 = vcmp.ge.f32.partialorder %v938, 0.0
        %vm6059 = vcmp.ge.f32.partialorder %v939, 0.0
        %vm6060 = vcmp.ge.f32.partialorder %v940, 0.0
        %vm6061 = vcmp.ge.f32.partialorder %v941, 0.0
        %vm6062 = vcmp.ge.f32.partialorder %v942, 0.0
        %vm6063 = vcmp.ge.f32.partialorder %v943, 0.0
        %vm6064 = vcmp.ge.f32.partialorder %v944, 0.0
        %vm6065 = vcmp.ge.f32.partialorder %v945, 0.0
        %vm6066 = vcmp.ge.f32.partialorder %v946, 0.0
        %vm6067 = vcmp.ge.f32.partialorder %v947, 0.0
        %vm6068 = vcmp.ge.f32.partialorder %v948, 0.0
        %vm6069 = vcmp.ge.f32.partialorder %v949, 0.0
        %vm6070 = vcmp.ge.f32.partialorder %v950, 0.0
        %vm6071 = vcmp.ge.f32.partialorder %v951, 0.0
        %vm6072 = vcmp.ge.f32.partialorder %v952, 0.0
        %vm6073 = vcmp.ge.f32.partialorder %v953, 0.0
        %vm6074 = vcmp.ge.f32.partialorder %v954, 0.0
        %vm6075 = vcmp.ge.f32.partialorder %v955, 0.0
        %vm6076 = vcmp.ge.f32.partialorder %v956, 0.0
        %vm6077 = vcmp.ge.f32.partialorder %v957, 0.0
        %vm6078 = vcmp.ge.f32.partialorder %v958, 0.0
        %vm6079 = vcmp.ge.f32.partialorder %v959, 0.0
        %vm6080 = vcmp.ge.f32.partialorder %v960, 0.0
        %vm6081 = vcmp.ge.f32.partialorder %v961, 0.0
        %vm6082 = vcmp.ge.f32.partialorder %v962, 0.0
        %vm6083 = vcmp.ge.f32.partialorder %v963, 0.0
        %vm6084 = vcmp.ge.f32.partialorder %v964, 0.0
        %vm6085 = vcmp.ge.f32.partialorder %v965, 0.0
        %vm6086 = vcmp.ge.f32.partialorder %v966, 0.0
        %vm6087 = vcmp.ge.f32.partialorder %v967, 0.0
        %vm6088 = vcmp.ge.f32.partialorder %v968, 0.0
        %vm6089 = vcmp.ge.f32.partialorder %v969, 0.0
        %vm6090 = vcmp.ge.f32.partialorder %v970, 0.0
        %vm6091 = vcmp.ge.f32.partialorder %v971, 0.0
        %vm6092 = vcmp.ge.f32.partialorder %v972, 0.0
        %vm6093 = vcmp.ge.f32.partialorder %v973, 0.0
        %vm6094 = vcmp.ge.f32.partialorder %v974, 0.0
        %vm6095 = vcmp.ge.f32.partialorder %v975, 0.0
        %vm6096 = vcmp.ge.f32.partialorder %v976, 0.0
        %vm6097 = vcmp.ge.f32.partialorder %v977, 0.0
        %vm6098 = vcmp.ge.f32.partialorder %v978, 0.0
        %vm6099 = vcmp.ge.f32.partialorder %v979, 0.0
        %vm6100 = vcmp.ge.f32.partialorder %v980, 0.0
        %vm6101 = vcmp.ge.f32.partialorder %v981, 0.0
        %vm6102 = vcmp.ge.f32.partialorder %v982, 0.0
        %vm6103 = vcmp.ge.f32.partialorder %v983, 0.0
        %vm6104 = vcmp.ge.f32.partialorder %v984, 0.0
        %vm6105 = vcmp.ge.f32.partialorder %v985, 0.0
        %vm6106 = vcmp.ge.f32.partialorder %v986, 0.0
        %vm6107 = vcmp.ge.f32.partialorder %v987, 0.0
        %vm6108 = vcmp.ge.f32.partialorder %v988, 0.0
        %vm6109 = vcmp.ge.f32.partialorder %v989, 0.0
        %vm6110 = vcmp.ge.f32.partialorder %v990, 0.0
        %vm6111 = vcmp.ge.f32.partialorder %v991, 0.0
        %vm6112 = vcmp.ge.f32.partialorder %v992, 0.0
        %vm6113 = vcmp.ge.f32.partialorder %v993, 0.0
        %vm6114 = vcmp.ge.f32.partialorder %v994, 0.0
        %vm6115 = vcmp.ge.f32.partialorder %v995, 0.0
        %vm6116 = vcmp.ge.f32.partialorder %v996, 0.0
        %vm6117 = vcmp.ge.f32.partialorder %v997, 0.0
        %vm6118 = vcmp.ge.f32.partialorder %v998, 0.0
        %vm6119 = vcmp.ge.f32.partialorder %v999, 0.0
        %vm6120 = vcmp.ge.f32.partialorder %v1000, 0.0
        %vm6121 = vcmp.ge.f32.partialorder %v1001, 0.0
        %vm6122 = vcmp.ge.f32.partialorder %v1002, 0.0
        %vm6123 = vcmp.ge.f32.partialorder %v1003, 0.0
        %vm6124 = vcmp.ge.f32.partialorder %v1004, 0.0
        %vm6125 = vcmp.ge.f32.partialorder %v1005, 0.0
        %vm6126 = vcmp.ge.f32.partialorder %v1006, 0.0
        %vm6127 = vcmp.ge.f32.partialorder %v1007, 0.0
        %vm6128 = vcmp.ge.f32.partialorder %v1008, 0.0
        %vm6129 = vcmp.ge.f32.partialorder %v1009, 0.0
        %vm6130 = vcmp.ge.f32.partialorder %v1010, 0.0
        %vm6131 = vcmp.ge.f32.partialorder %v1011, 0.0
        %vm6132 = vcmp.ge.f32.partialorder %v1012, 0.0
        %vm6133 = vcmp.ge.f32.partialorder %v1013, 0.0
        %vm6134 = vcmp.ge.f32.partialorder %v1014, 0.0
        %vm6135 = vcmp.ge.f32.partialorder %v1015, 0.0
        %vm6136 = vcmp.ge.f32.partialorder %v1016, 0.0
        %vm6137 = vcmp.ge.f32.partialorder %v1017, 0.0
        %vm6138 = vcmp.ge.f32.partialorder %v1018, 0.0
        %vm6139 = vcmp.ge.f32.partialorder %v1019, 0.0
        %vm6140 = vcmp.ge.f32.partialorder %v1020, 0.0
        %vm6141 = vcmp.ge.f32.partialorder %v1021, 0.0
        %vm6142 = vcmp.ge.f32.partialorder %v1022, 0.0
        %vm6143 = vcmp.ge.f32.partialorder %v1023, 0.0
        %vm6144 = vcmp.ge.f32.partialorder %v1024, 0.0
        %vm6145 = vcmp.ge.f32.partialorder %v1025, 0.0
        %vm6146 = vcmp.ge.f32.partialorder %v1026, 0.0
        %vm6147 = vcmp.ge.f32.partialorder %v1027, 0.0
        %vm6148 = vcmp.ge.f32.partialorder %v1028, 0.0
        %vm6149 = vcmp.ge.f32.partialorder %v1029, 0.0
        %vm6150 = vcmp.ge.f32.partialorder %v1030, 0.0
        %vm6151 = vcmp.ge.f32.partialorder %v1031, 0.0
        %vm6152 = vcmp.ge.f32.partialorder %v1032, 0.0
        %vm6153 = vcmp.ge.f32.partialorder %v1033, 0.0
        %vm6154 = vcmp.ge.f32.partialorder %v1034, 0.0
        %vm6155 = vcmp.ge.f32.partialorder %v1035, 0.0
        %vm6156 = vcmp.ge.f32.partialorder %v1036, 0.0
        %vm6157 = vcmp.ge.f32.partialorder %v1037, 0.0
        %vm6158 = vcmp.ge.f32.partialorder %v1038, 0.0
        %vm6159 = vcmp.ge.f32.partialorder %v1039, 0.0
        %vm6160 = vcmp.ge.f32.partialorder %v1040, 0.0
        %vm6161 = vcmp.ge.f32.partialorder %v1041, 0.0
        %vm6162 = vcmp.ge.f32.partialorder %v1042, 0.0
        %vm6163 = vcmp.ge.f32.partialorder %v1043, 0.0
        %vm6164 = vcmp.ge.f32.partialorder %v1044, 0.0
        %vm6165 = vcmp.ge.f32.partialorder %v1045, 0.0
        %vm6166 = vcmp.ge.f32.partialorder %v1046, 0.0
        %vm6167 = vcmp.ge.f32.partialorder %v1047, 0.0
        %vm6168 = vcmp.ge.f32.partialorder %v1048, 0.0
        %vm6169 = vcmp.ge.f32.partialorder %v1049, 0.0
        %vm6170 = vcmp.ge.f32.partialorder %v1050, 0.0
        %vm6171 = vcmp.ge.f32.partialorder %v1051, 0.0
        %vm6172 = vcmp.ge.f32.partialorder %v1052, 0.0
        %vm6173 = vcmp.ge.f32.partialorder %v1053, 0.0
        %vm6174 = vcmp.ge.f32.partialorder %v1054, 0.0
        %vm6175 = vcmp.ge.f32.partialorder %v1055, 0.0
        %vm6176 = vcmp.ge.f32.partialorder %v1056, 0.0
        %vm6177 = vcmp.ge.f32.partialorder %v1057, 0.0
        %vm6178 = vcmp.ge.f32.partialorder %v1058, 0.0
        %vm6179 = vcmp.ge.f32.partialorder %v1059, 0.0
        %vm6180 = vcmp.ge.f32.partialorder %v1060, 0.0
        %vm6181 = vcmp.ge.f32.partialorder %v1061, 0.0
        %vm6182 = vcmp.ge.f32.partialorder %v1062, 0.0
        %vm6183 = vcmp.ge.f32.partialorder %v1063, 0.0
        %vm6184 = vcmp.ge.f32.partialorder %v1064, 0.0
        %vm6185 = vcmp.ge.f32.partialorder %v1065, 0.0
        %vm6186 = vcmp.ge.f32.partialorder %v1066, 0.0
        %vm6187 = vcmp.ge.f32.partialorder %v1067, 0.0
        %vm6188 = vcmp.ge.f32.partialorder %v1068, 0.0
        %vm6189 = vcmp.ge.f32.partialorder %v1069, 0.0
        %vm6190 = vcmp.ge.f32.partialorder %v1070, 0.0
        %vm6191 = vcmp.ge.f32.partialorder %v1071, 0.0
        %vm6192 = vcmp.ge.f32.partialorder %v1072, 0.0
        %vm6193 = vcmp.ge.f32.partialorder %v1073, 0.0
        %vm6194 = vcmp.ge.f32.partialorder %v1074, 0.0
        %vm6195 = vcmp.ge.f32.partialorder %v1075, 0.0
        %vm6196 = vcmp.ge.f32.partialorder %v1076, 0.0
        %vm6197 = vcmp.ge.f32.partialorder %v1077, 0.0
        %vm6198 = vcmp.ge.f32.partialorder %v1078, 0.0
        %vm6199 = vcmp.ge.f32.partialorder %v1079, 0.0
        %vm6200 = vcmp.ge.f32.partialorder %v1080, 0.0
        %vm6201 = vcmp.ge.f32.partialorder %v1081, 0.0
        %vm6202 = vcmp.ge.f32.partialorder %v1082, 0.0
        %vm6203 = vcmp.ge.f32.partialorder %v1083, 0.0
        %vm6204 = vcmp.ge.f32.partialorder %v1084, 0.0
        %vm6205 = vcmp.ge.f32.partialorder %v1085, 0.0
        %vm6206 = vcmp.ge.f32.partialorder %v1086, 0.0
        %vm6207 = vcmp.ge.f32.partialorder %v1087, 0.0
        %vm6208 = vcmp.ge.f32.partialorder %v1088, 0.0
        %vm6209 = vcmp.ge.f32.partialorder %v1089, 0.0
        %vm6210 = vcmp.ge.f32.partialorder %v1090, 0.0
        %vm6211 = vcmp.ge.f32.partialorder %v1091, 0.0
        %vm6212 = vcmp.ge.f32.partialorder %v1092, 0.0
        %vm6213 = vcmp.ge.f32.partialorder %v1093, 0.0
        %vm6214 = vcmp.ge.f32.partialorder %v1094, 0.0
        %vm6215 = vcmp.ge.f32.partialorder %v1095, 0.0
        %vm6216 = vcmp.ge.f32.partialorder %v1096, 0.0
        %vm6217 = vcmp.ge.f32.partialorder %v1097, 0.0
        %vm6218 = vcmp.ge.f32.partialorder %v1098, 0.0
        %vm6219 = vcmp.ge.f32.partialorder %v1099, 0.0
        %vm6220 = vcmp.ge.f32.partialorder %v1100, 0.0
        %vm6221 = vcmp.ge.f32.partialorder %v1101, 0.0
        %vm6222 = vcmp.ge.f32.partialorder %v1102, 0.0
        %vm6223 = vcmp.ge.f32.partialorder %v1103, 0.0
        %vm6224 = vcmp.ge.f32.partialorder %v1104, 0.0
        %vm6225 = vcmp.ge.f32.partialorder %v1105, 0.0
        %vm6226 = vcmp.ge.f32.partialorder %v1106, 0.0
        %vm6227 = vcmp.ge.f32.partialorder %v1107, 0.0
        %vm6228 = vcmp.ge.f32.partialorder %v1108, 0.0
        %vm6229 = vcmp.ge.f32.partialorder %v1109, 0.0
        %vm6230 = vcmp.ge.f32.partialorder %v1110, 0.0
        %vm6231 = vcmp.ge.f32.partialorder %v1111, 0.0
        %vm6232 = vcmp.ge.f32.partialorder %v1112, 0.0
        %vm6233 = vcmp.ge.f32.partialorder %v1113, 0.0
        %vm6234 = vcmp.ge.f32.partialorder %v1114, 0.0
        %vm6235 = vcmp.ge.f32.partialorder %v1115, 0.0
        %vm6236 = vcmp.ge.f32.partialorder %v1116, 0.0
        %vm6237 = vcmp.ge.f32.partialorder %v1117, 0.0
        %vm6238 = vcmp.ge.f32.partialorder %v1118, 0.0
        %vm6239 = vcmp.ge.f32.partialorder %v1119, 0.0
        %vm6240 = vcmp.ge.f32.partialorder %v1120, 0.0
        %vm6241 = vcmp.ge.f32.partialorder %v1121, 0.0
        %vm6242 = vcmp.ge.f32.partialorder %v1122, 0.0
        %vm6243 = vcmp.ge.f32.partialorder %v1123, 0.0
        %vm6244 = vcmp.ge.f32.partialorder %v1124, 0.0
        %vm6245 = vcmp.ge.f32.partialorder %v1125, 0.0
        %vm6246 = vcmp.ge.f32.partialorder %v1126, 0.0
        %vm6247 = vcmp.ge.f32.partialorder %v1127, 0.0
        %vm6248 = vcmp.ge.f32.partialorder %v1128, 0.0
        %vm6249 = vcmp.ge.f32.partialorder %v1129, 0.0
        %vm6250 = vcmp.ge.f32.partialorder %v1130, 0.0
        %vm6251 = vcmp.ge.f32.partialorder %v1131, 0.0
        %vm6252 = vcmp.ge.f32.partialorder %v1132, 0.0
        %vm6253 = vcmp.ge.f32.partialorder %v1133, 0.0
        %vm6254 = vcmp.ge.f32.partialorder %v1134, 0.0
        %vm6255 = vcmp.ge.f32.partialorder %v1135, 0.0
        %vm6256 = vcmp.ge.f32.partialorder %v1136, 0.0
        %vm6257 = vcmp.ge.f32.partialorder %v1137, 0.0
        %vm6258 = vcmp.ge.f32.partialorder %v1138, 0.0
        %vm6259 = vcmp.ge.f32.partialorder %v1139, 0.0
        %vm6260 = vcmp.ge.f32.partialorder %v1140, 0.0
        %vm6261 = vcmp.ge.f32.partialorder %v1141, 0.0
        %vm6262 = vcmp.ge.f32.partialorder %v1142, 0.0
        %vm6263 = vcmp.ge.f32.partialorder %v1143, 0.0
        %vm6264 = vcmp.ge.f32.partialorder %v1144, 0.0
        %vm6265 = vcmp.ge.f32.partialorder %v1145, 0.0
        %vm6266 = vcmp.ge.f32.partialorder %v1146, 0.0
        %vm6267 = vcmp.ge.f32.partialorder %v1147, 0.0
        %vm6268 = vcmp.ge.f32.partialorder %v1148, 0.0
        %vm6269 = vcmp.ge.f32.partialorder %v1149, 0.0
        %vm6270 = vcmp.ge.f32.partialorder %v1150, 0.0
        %vm6271 = vcmp.ge.f32.partialorder %v1151, 0.0
        %vm6272 = vcmp.ge.f32.partialorder %v1152, 0.0
        %vm6273 = vcmp.ge.f32.partialorder %v1153, 0.0
        %vm6274 = vcmp.ge.f32.partialorder %v1154, 0.0
        %vm6275 = vcmp.ge.f32.partialorder %v1155, 0.0
        %vm6276 = vcmp.ge.f32.partialorder %v1156, 0.0
        %vm6277 = vcmp.ge.f32.partialorder %v1157, 0.0
        %vm6278 = vcmp.ge.f32.partialorder %v1158, 0.0
        %vm6279 = vcmp.ge.f32.partialorder %v1159, 0.0
        %vm6280 = vcmp.ge.f32.partialorder %v1160, 0.0
        %vm6281 = vcmp.ge.f32.partialorder %v1161, 0.0
        %vm6282 = vcmp.ge.f32.partialorder %v1162, 0.0
        %vm6283 = vcmp.ge.f32.partialorder %v1163, 0.0
        %vm6284 = vcmp.ge.f32.partialorder %v1164, 0.0
        %vm6285 = vcmp.ge.f32.partialorder %v1165, 0.0
        %vm6286 = vcmp.ge.f32.partialorder %v1166, 0.0
        %vm6287 = vcmp.ge.f32.partialorder %v1167, 0.0
        %vm6288 = vcmp.ge.f32.partialorder %v1168, 0.0
        %vm6289 = vcmp.ge.f32.partialorder %v1169, 0.0
        %vm6290 = vcmp.ge.f32.partialorder %v1170, 0.0
        %vm6291 = vcmp.ge.f32.partialorder %v1171, 0.0
        %vm6292 = vcmp.ge.f32.partialorder %v1172, 0.0
        %vm6293 = vcmp.ge.f32.partialorder %v1173, 0.0
        %vm6294 = vcmp.ge.f32.partialorder %v1174, 0.0
        %vm6295 = vcmp.ge.f32.partialorder %v1175, 0.0
        %vm6296 = vcmp.ge.f32.partialorder %v1176, 0.0
        %vm6297 = vcmp.ge.f32.partialorder %v1177, 0.0
        %vm6298 = vcmp.ge.f32.partialorder %v1178, 0.0
        %v6299 = vsel %vm5275, %v2203, %v4251
        %v6300 = vsel %vm5276, %v2204, %v4252
        %v6301 = vsel %vm5277, %v2205, %v4253
        %v6302 = vsel %vm5278, %v2206, %v4254
        %v6303 = vsel %vm5279, %v2207, %v4255
        %v6304 = vsel %vm5280, %v2208, %v4256
        %v6305 = vsel %vm5281, %v2209, %v4257
        %v6306 = vsel %vm5282, %v2210, %v4258
        %v6307 = vsel %vm5283, %v2211, %v4259
        %v6308 = vsel %vm5284, %v2212, %v4260
        %v6309 = vsel %vm5285, %v2213, %v4261
        %v6310 = vsel %vm5286, %v2214, %v4262
        %v6311 = vsel %vm5287, %v2215, %v4263
        %v6312 = vsel %vm5288, %v2216, %v4264
        %v6313 = vsel %vm5289, %v2217, %v4265
        %v6314 = vsel %vm5290, %v2218, %v4266
        %v6315 = vsel %vm5291, %v2219, %v4267
        %v6316 = vsel %vm5292, %v2220, %v4268
        %v6317 = vsel %vm5293, %v2221, %v4269
        %v6318 = vsel %vm5294, %v2222, %v4270
        %v6319 = vsel %vm5295, %v2223, %v4271
        %v6320 = vsel %vm5296, %v2224, %v4272
        %v6321 = vsel %vm5297, %v2225, %v4273
        %v6322 = vsel %vm5298, %v2226, %v4274
        %v6323 = vsel %vm5299, %v2227, %v4275
        %v6324 = vsel %vm5300, %v2228, %v4276
        %v6325 = vsel %vm5301, %v2229, %v4277
        %v6326 = vsel %vm5302, %v2230, %v4278
        %v6327 = vsel %vm5303, %v2231, %v4279
        %v6328 = vsel %vm5304, %v2232, %v4280
        %v6329 = vsel %vm5305, %v2233, %v4281
        %v6330 = vsel %vm5306, %v2234, %v4282
        %v6331 = vsel %vm5307, %v2235, %v4283
        %v6332 = vsel %vm5308, %v2236, %v4284
        %v6333 = vsel %vm5309, %v2237, %v4285
        %v6334 = vsel %vm5310, %v2238, %v4286
        %v6335 = vsel %vm5311, %v2239, %v4287
        %v6336 = vsel %vm5312, %v2240, %v4288
        %v6337 = vsel %vm5313, %v2241, %v4289
        %v6338 = vsel %vm5314, %v2242, %v4290
        %v6339 = vsel %vm5315, %v2243, %v4291
        %v6340 = vsel %vm5316, %v2244, %v4292
        %v6341 = vsel %vm5317, %v2245, %v4293
        %v6342 = vsel %vm5318, %v2246, %v4294
        %v6343 = vsel %vm5319, %v2247, %v4295
        %v6344 = vsel %vm5320, %v2248, %v4296
        %v6345 = vsel %vm5321, %v2249, %v4297
        %v6346 = vsel %vm5322, %v2250, %v4298
        %v6347 = vsel %vm5323, %v2251, %v4299
        %v6348 = vsel %vm5324, %v2252, %v4300
        %v6349 = vsel %vm5325, %v2253, %v4301
        %v6350 = vsel %vm5326, %v2254, %v4302
        %v6351 = vsel %vm5327, %v2255, %v4303
        %v6352 = vsel %vm5328, %v2256, %v4304
        %v6353 = vsel %vm5329, %v2257, %v4305
        %v6354 = vsel %vm5330, %v2258, %v4306
        %v6355 = vsel %vm5331, %v2259, %v4307
        %v6356 = vsel %vm5332, %v2260, %v4308
        %v6357 = vsel %vm5333, %v2261, %v4309
        %v6358 = vsel %vm5334, %v2262, %v4310
        %v6359 = vsel %vm5335, %v2263, %v4311
        %v6360 = vsel %vm5336, %v2264, %v4312
        %v6361 = vsel %vm5337, %v2265, %v4313
        %v6362 = vsel %vm5338, %v2266, %v4314
        %v6363 = vsel %vm5339, %v2267, %v4315
        %v6364 = vsel %vm5340, %v2268, %v4316
        %v6365 = vsel %vm5341, %v2269, %v4317
        %v6366 = vsel %vm5342, %v2270, %v4318
        %v6367 = vsel %vm5343, %v2271, %v4319
        %v6368 = vsel %vm5344, %v2272, %v4320
        %v6369 = vsel %vm5345, %v2273, %v4321
        %v6370 = vsel %vm5346, %v2274, %v4322
        %v6371 = vsel %vm5347, %v2275, %v4323
        %v6372 = vsel %vm5348, %v2276, %v4324
        %v6373 = vsel %vm5349, %v2277, %v4325
        %v6374 = vsel %vm5350, %v2278, %v4326
        %v6375 = vsel %vm5351, %v2279, %v4327
        %v6376 = vsel %vm5352, %v2280, %v4328
        %v6377 = vsel %vm5353, %v2281, %v4329
        %v6378 = vsel %vm5354, %v2282, %v4330
        %v6379 = vsel %vm5355, %v2283, %v4331
        %v6380 = vsel %vm5356, %v2284, %v4332
        %v6381 = vsel %vm5357, %v2285, %v4333
        %v6382 = vsel %vm5358, %v2286, %v4334
        %v6383 = vsel %vm5359, %v2287, %v4335
        %v6384 = vsel %vm5360, %v2288, %v4336
        %v6385 = vsel %vm5361, %v2289, %v4337
        %v6386 = vsel %vm5362, %v2290, %v4338
        %v6387 = vsel %vm5363, %v2291, %v4339
        %v6388 = vsel %vm5364, %v2292, %v4340
        %v6389 = vsel %vm5365, %v2293, %v4341
        %v6390 = vsel %vm5366, %v2294, %v4342
        %v6391 = vsel %vm5367, %v2295, %v4343
        %v6392 = vsel %vm5368, %v2296, %v4344
        %v6393 = vsel %vm5369, %v2297, %v4345
        %v6394 = vsel %vm5370, %v2298, %v4346
        %v6395 = vsel %vm5371, %v2299, %v4347
        %v6396 = vsel %vm5372, %v2300, %v4348
        %v6397 = vsel %vm5373, %v2301, %v4349
        %v6398 = vsel %vm5374, %v2302, %v4350
        %v6399 = vsel %vm5375, %v2303, %v4351
        %v6400 = vsel %vm5376, %v2304, %v4352
        %v6401 = vsel %vm5377, %v2305, %v4353
        %v6402 = vsel %vm5378, %v2306, %v4354
        %v6403 = vsel %vm5379, %v2307, %v4355
        %v6404 = vsel %vm5380, %v2308, %v4356
        %v6405 = vsel %vm5381, %v2309, %v4357
        %v6406 = vsel %vm5382, %v2310, %v4358
        %v6407 = vsel %vm5383, %v2311, %v4359
        %v6408 = vsel %vm5384, %v2312, %v4360
        %v6409 = vsel %vm5385, %v2313, %v4361
        %v6410 = vsel %vm5386, %v2314, %v4362
        %v6411 = vsel %vm5387, %v2315, %v4363
        %v6412 = vsel %vm5388, %v2316, %v4364
        %v6413 = vsel %vm5389, %v2317, %v4365
        %v6414 = vsel %vm5390, %v2318, %v4366
        %v6415 = vsel %vm5391, %v2319, %v4367
        %v6416 = vsel %vm5392, %v2320, %v4368
        %v6417 = vsel %vm5393, %v2321, %v4369
        %v6418 = vsel %vm5394, %v2322, %v4370
        %v6419 = vsel %vm5395, %v2323, %v4371
        %v6420 = vsel %vm5396, %v2324, %v4372
        %v6421 = vsel %vm5397, %v2325, %v4373
        %v6422 = vsel %vm5398, %v2326, %v4374
        %v6423 = vsel %vm5399, %v2327, %v4375
        %v6424 = vsel %vm5400, %v2328, %v4376
        %v6425 = vsel %vm5401, %v2329, %v4377
        %v6426 = vsel %vm5402, %v2330, %v4378
        %v6427 = vsel %vm5403, %v2331, %v4379
        %v6428 = vsel %vm5404, %v2332, %v4380
        %v6429 = vsel %vm5405, %v2333, %v4381
        %v6430 = vsel %vm5406, %v2334, %v4382
        %v6431 = vsel %vm5407, %v2335, %v4383
        %v6432 = vsel %vm5408, %v2336, %v4384
        %v6433 = vsel %vm5409, %v2337, %v4385
        %v6434 = vsel %vm5410, %v2338, %v4386
        %v6435 = vsel %vm5411, %v2339, %v4387
        %v6436 = vsel %vm5412, %v2340, %v4388
        %v6437 = vsel %vm5413, %v2341, %v4389
        %v6438 = vsel %vm5414, %v2342, %v4390
        %v6439 = vsel %vm5415, %v2343, %v4391
        %v6440 = vsel %vm5416, %v2344, %v4392
        %v6441 = vsel %vm5417, %v2345, %v4393
        %v6442 = vsel %vm5418, %v2346, %v4394
        %v6443 = vsel %vm5419, %v2347, %v4395
        %v6444 = vsel %vm5420, %v2348, %v4396
        %v6445 = vsel %vm5421, %v2349, %v4397
        %v6446 = vsel %vm5422, %v2350, %v4398
        %v6447 = vsel %vm5423, %v2351, %v4399
        %v6448 = vsel %vm5424, %v2352, %v4400
        %v6449 = vsel %vm5425, %v2353, %v4401
        %v6450 = vsel %vm5426, %v2354, %v4402
        %v6451 = vsel %vm5427, %v2355, %v4403
        %v6452 = vsel %vm5428, %v2356, %v4404
        %v6453 = vsel %vm5429, %v2357, %v4405
        %v6454 = vsel %vm5430, %v2358, %v4406
        %v6455 = vsel %vm5431, %v2359, %v4407
        %v6456 = vsel %vm5432, %v2360, %v4408
        %v6457 = vsel %vm5433, %v2361, %v4409
        %v6458 = vsel %vm5434, %v2362, %v4410
        %v6459 = vsel %vm5435, %v2363, %v4411
        %v6460 = vsel %vm5436, %v2364, %v4412
        %v6461 = vsel %vm5437, %v2365, %v4413
        %v6462 = vsel %vm5438, %v2366, %v4414
        %v6463 = vsel %vm5439, %v2367, %v4415
        %v6464 = vsel %vm5440, %v2368, %v4416
        %v6465 = vsel %vm5441, %v2369, %v4417
        %v6466 = vsel %vm5442, %v2370, %v4418
        %v6467 = vsel %vm5443, %v2371, %v4419
        %v6468 = vsel %vm5444, %v2372, %v4420
        %v6469 = vsel %vm5445, %v2373, %v4421
        %v6470 = vsel %vm5446, %v2374, %v4422
        %v6471 = vsel %vm5447, %v2375, %v4423
        %v6472 = vsel %vm5448, %v2376, %v4424
        %v6473 = vsel %vm5449, %v2377, %v4425
        %v6474 = vsel %vm5450, %v2378, %v4426
        %v6475 = vsel %vm5451, %v2379, %v4427
        %v6476 = vsel %vm5452, %v2380, %v4428
        %v6477 = vsel %vm5453, %v2381, %v4429
        %v6478 = vsel %vm5454, %v2382, %v4430
        %v6479 = vsel %vm5455, %v2383, %v4431
        %v6480 = vsel %vm5456, %v2384, %v4432
        %v6481 = vsel %vm5457, %v2385, %v4433
        %v6482 = vsel %vm5458, %v2386, %v4434
        %v6483 = vsel %vm5459, %v2387, %v4435
        %v6484 = vsel %vm5460, %v2388, %v4436
        %v6485 = vsel %vm5461, %v2389, %v4437
        %v6486 = vsel %vm5462, %v2390, %v4438
        %v6487 = vsel %vm5463, %v2391, %v4439
        %v6488 = vsel %vm5464, %v2392, %v4440
        %v6489 = vsel %vm5465, %v2393, %v4441
        %v6490 = vsel %vm5466, %v2394, %v4442
        %v6491 = vsel %vm5467, %v2395, %v4443
        %v6492 = vsel %vm5468, %v2396, %v4444
        %v6493 = vsel %vm5469, %v2397, %v4445
        %v6494 = vsel %vm5470, %v2398, %v4446
        %v6495 = vsel %vm5471, %v2399, %v4447
        %v6496 = vsel %vm5472, %v2400, %v4448
        %v6497 = vsel %vm5473, %v2401, %v4449
        %v6498 = vsel %vm5474, %v2402, %v4450
        %v6499 = vsel %vm5475, %v2403, %v4451
        %v6500 = vsel %vm5476, %v2404, %v4452
        %v6501 = vsel %vm5477, %v2405, %v4453
        %v6502 = vsel %vm5478, %v2406, %v4454
        %v6503 = vsel %vm5479, %v2407, %v4455
        %v6504 = vsel %vm5480, %v2408, %v4456
        %v6505 = vsel %vm5481, %v2409, %v4457
        %v6506 = vsel %vm5482, %v2410, %v4458
        %v6507 = vsel %vm5483, %v2411, %v4459
        %v6508 = vsel %vm5484, %v2412, %v4460
        %v6509 = vsel %vm5485, %v2413, %v4461
        %v6510 = vsel %vm5486, %v2414, %v4462
        %v6511 = vsel %vm5487, %v2415, %v4463
        %v6512 = vsel %vm5488, %v2416, %v4464
        %v6513 = vsel %vm5489, %v2417, %v4465
        %v6514 = vsel %vm5490, %v2418, %v4466
        %v6515 = vsel %vm5491, %v2419, %v4467
        %v6516 = vsel %vm5492, %v2420, %v4468
        %v6517 = vsel %vm5493, %v2421, %v4469
        %v6518 = vsel %vm5494, %v2422, %v4470
        %v6519 = vsel %vm5495, %v2423, %v4471
        %v6520 = vsel %vm5496, %v2424, %v4472
        %v6521 = vsel %vm5497, %v2425, %v4473
        %v6522 = vsel %vm5498, %v2426, %v4474
        %v6523 = vsel %vm5499, %v2427, %v4475
        %v6524 = vsel %vm5500, %v2428, %v4476
        %v6525 = vsel %vm5501, %v2429, %v4477
        %v6526 = vsel %vm5502, %v2430, %v4478
        %v6527 = vsel %vm5503, %v2431, %v4479
        %v6528 = vsel %vm5504, %v2432, %v4480
        %v6529 = vsel %vm5505, %v2433, %v4481
        %v6530 = vsel %vm5506, %v2434, %v4482
        %v6531 = vsel %vm5507, %v2435, %v4483
        %v6532 = vsel %vm5508, %v2436, %v4484
        %v6533 = vsel %vm5509, %v2437, %v4485
        %v6534 = vsel %vm5510, %v2438, %v4486
        %v6535 = vsel %vm5511, %v2439, %v4487
        %v6536 = vsel %vm5512, %v2440, %v4488
        %v6537 = vsel %vm5513, %v2441, %v4489
        %v6538 = vsel %vm5514, %v2442, %v4490
        %v6539 = vsel %vm5515, %v2443, %v4491
        %v6540 = vsel %vm5516, %v2444, %v4492
        %v6541 = vsel %vm5517, %v2445, %v4493
        %v6542 = vsel %vm5518, %v2446, %v4494
        %v6543 = vsel %vm5519, %v2447, %v4495
        %v6544 = vsel %vm5520, %v2448, %v4496
        %v6545 = vsel %vm5521, %v2449, %v4497
        %v6546 = vsel %vm5522, %v2450, %v4498
        %v6547 = vsel %vm5523, %v2451, %v4499
        %v6548 = vsel %vm5524, %v2452, %v4500
        %v6549 = vsel %vm5525, %v2453, %v4501
        %v6550 = vsel %vm5526, %v2454, %v4502
        %v6551 = vsel %vm5527, %v2455, %v4503
        %v6552 = vsel %vm5528, %v2456, %v4504
        %v6553 = vsel %vm5529, %v2457, %v4505
        %v6554 = vsel %vm5530, %v2458, %v4506
        %v6555 = vsel %vm5531, %v2459, %v4507
        %v6556 = vsel %vm5532, %v2460, %v4508
        %v6557 = vsel %vm5533, %v2461, %v4509
        %v6558 = vsel %vm5534, %v2462, %v4510
        %v6559 = vsel %vm5535, %v2463, %v4511
        %v6560 = vsel %vm5536, %v2464, %v4512
        %v6561 = vsel %vm5537, %v2465, %v4513
        %v6562 = vsel %vm5538, %v2466, %v4514
        %v6563 = vsel %vm5539, %v2467, %v4515
        %v6564 = vsel %vm5540, %v2468, %v4516
        %v6565 = vsel %vm5541, %v2469, %v4517
        %v6566 = vsel %vm5542, %v2470, %v4518
        %v6567 = vsel %vm5543, %v2471, %v4519
        %v6568 = vsel %vm5544, %v2472, %v4520
        %v6569 = vsel %vm5545, %v2473, %v4521
        %v6570 = vsel %vm5546, %v2474, %v4522
        %v6571 = vsel %vm5547, %v2475, %v4523
        %v6572 = vsel %vm5548, %v2476, %v4524
        %v6573 = vsel %vm5549, %v2477, %v4525
        %v6574 = vsel %vm5550, %v2478, %v4526
        %v6575 = vsel %vm5551, %v2479, %v4527
        %v6576 = vsel %vm5552, %v2480, %v4528
        %v6577 = vsel %vm5553, %v2481, %v4529
        %v6578 = vsel %vm5554, %v2482, %v4530
        %v6579 = vsel %vm5555, %v2483, %v4531
        %v6580 = vsel %vm5556, %v2484, %v4532
        %v6581 = vsel %vm5557, %v2485, %v4533
        %v6582 = vsel %vm5558, %v2486, %v4534
        %v6583 = vsel %vm5559, %v2487, %v4535
        %v6584 = vsel %vm5560, %v2488, %v4536
        %v6585 = vsel %vm5561, %v2489, %v4537
        %v6586 = vsel %vm5562, %v2490, %v4538
        %v6587 = vsel %vm5563, %v2491, %v4539
        %v6588 = vsel %vm5564, %v2492, %v4540
        %v6589 = vsel %vm5565, %v2493, %v4541
        %v6590 = vsel %vm5566, %v2494, %v4542
        %v6591 = vsel %vm5567, %v2495, %v4543
        %v6592 = vsel %vm5568, %v2496, %v4544
        %v6593 = vsel %vm5569, %v2497, %v4545
        %v6594 = vsel %vm5570, %v2498, %v4546
        %v6595 = vsel %vm5571, %v2499, %v4547
        %v6596 = vsel %vm5572, %v2500, %v4548
        %v6597 = vsel %vm5573, %v2501, %v4549
        %v6598 = vsel %vm5574, %v2502, %v4550
        %v6599 = vsel %vm5575, %v2503, %v4551
        %v6600 = vsel %vm5576, %v2504, %v4552
        %v6601 = vsel %vm5577, %v2505, %v4553
        %v6602 = vsel %vm5578, %v2506, %v4554
        %v6603 = vsel %vm5579, %v2507, %v4555
        %v6604 = vsel %vm5580, %v2508, %v4556
        %v6605 = vsel %vm5581, %v2509, %v4557
        %v6606 = vsel %vm5582, %v2510, %v4558
        %v6607 = vsel %vm5583, %v2511, %v4559
        %v6608 = vsel %vm5584, %v2512, %v4560
        %v6609 = vsel %vm5585, %v2513, %v4561
        %v6610 = vsel %vm5586, %v2514, %v4562
        %v6611 = vsel %vm5587, %v2515, %v4563
        %v6612 = vsel %vm5588, %v2516, %v4564
        %v6613 = vsel %vm5589, %v2517, %v4565
        %v6614 = vsel %vm5590, %v2518, %v4566
        %v6615 = vsel %vm5591, %v2519, %v4567
        %v6616 = vsel %vm5592, %v2520, %v4568
        %v6617 = vsel %vm5593, %v2521, %v4569
        %v6618 = vsel %vm5594, %v2522, %v4570
        %v6619 = vsel %vm5595, %v2523, %v4571
        %v6620 = vsel %vm5596, %v2524, %v4572
        %v6621 = vsel %vm5597, %v2525, %v4573
        %v6622 = vsel %vm5598, %v2526, %v4574
        %v6623 = vsel %vm5599, %v2527, %v4575
        %v6624 = vsel %vm5600, %v2528, %v4576
        %v6625 = vsel %vm5601, %v2529, %v4577
        %v6626 = vsel %vm5602, %v2530, %v4578
        %v6627 = vsel %vm5603, %v2531, %v4579
        %v6628 = vsel %vm5604, %v2532, %v4580
        %v6629 = vsel %vm5605, %v2533, %v4581
        %v6630 = vsel %vm5606, %v2534, %v4582
        %v6631 = vsel %vm5607, %v2535, %v4583
        %v6632 = vsel %vm5608, %v2536, %v4584
        %v6633 = vsel %vm5609, %v2537, %v4585
        %v6634 = vsel %vm5610, %v2538, %v4586
        %v6635 = vsel %vm5611, %v2539, %v4587
        %v6636 = vsel %vm5612, %v2540, %v4588
        %v6637 = vsel %vm5613, %v2541, %v4589
        %v6638 = vsel %vm5614, %v2542, %v4590
        %v6639 = vsel %vm5615, %v2543, %v4591
        %v6640 = vsel %vm5616, %v2544, %v4592
        %v6641 = vsel %vm5617, %v2545, %v4593
        %v6642 = vsel %vm5618, %v2546, %v4594
        %v6643 = vsel %vm5619, %v2547, %v4595
        %v6644 = vsel %vm5620, %v2548, %v4596
        %v6645 = vsel %vm5621, %v2549, %v4597
        %v6646 = vsel %vm5622, %v2550, %v4598
        %v6647 = vsel %vm5623, %v2551, %v4599
        %v6648 = vsel %vm5624, %v2552, %v4600
        %v6649 = vsel %vm5625, %v2553, %v4601
        %v6650 = vsel %vm5626, %v2554, %v4602
        %v6651 = vsel %vm5627, %v2555, %v4603
        %v6652 = vsel %vm5628, %v2556, %v4604
        %v6653 = vsel %vm5629, %v2557, %v4605
        %v6654 = vsel %vm5630, %v2558, %v4606
        %v6655 = vsel %vm5631, %v2559, %v4607
        %v6656 = vsel %vm5632, %v2560, %v4608
        %v6657 = vsel %vm5633, %v2561, %v4609
        %v6658 = vsel %vm5634, %v2562, %v4610
        %v6659 = vsel %vm5635, %v2563, %v4611
        %v6660 = vsel %vm5636, %v2564, %v4612
        %v6661 = vsel %vm5637, %v2565, %v4613
        %v6662 = vsel %vm5638, %v2566, %v4614
        %v6663 = vsel %vm5639, %v2567, %v4615
        %v6664 = vsel %vm5640, %v2568, %v4616
        %v6665 = vsel %vm5641, %v2569, %v4617
        %v6666 = vsel %vm5642, %v2570, %v4618
        %v6667 = vsel %vm5643, %v2571, %v4619
        %v6668 = vsel %vm5644, %v2572, %v4620
        %v6669 = vsel %vm5645, %v2573, %v4621
        %v6670 = vsel %vm5646, %v2574, %v4622
        %v6671 = vsel %vm5647, %v2575, %v4623
        %v6672 = vsel %vm5648, %v2576, %v4624
        %v6673 = vsel %vm5649, %v2577, %v4625
        %v6674 = vsel %vm5650, %v2578, %v4626
        %v6675 = vsel %vm5651, %v2579, %v4627
        %v6676 = vsel %vm5652, %v2580, %v4628
        %v6677 = vsel %vm5653, %v2581, %v4629
        %v6678 = vsel %vm5654, %v2582, %v4630
        %v6679 = vsel %vm5655, %v2583, %v4631
        %v6680 = vsel %vm5656, %v2584, %v4632
        %v6681 = vsel %vm5657, %v2585, %v4633
        %v6682 = vsel %vm5658, %v2586, %v4634
        %v6683 = vsel %vm5659, %v2587, %v4635
        %v6684 = vsel %vm5660, %v2588, %v4636
        %v6685 = vsel %vm5661, %v2589, %v4637
        %v6686 = vsel %vm5662, %v2590, %v4638
        %v6687 = vsel %vm5663, %v2591, %v4639
        %v6688 = vsel %vm5664, %v2592, %v4640
        %v6689 = vsel %vm5665, %v2593, %v4641
        %v6690 = vsel %vm5666, %v2594, %v4642
        %v6691 = vsel %vm5667, %v2595, %v4643
        %v6692 = vsel %vm5668, %v2596, %v4644
        %v6693 = vsel %vm5669, %v2597, %v4645
        %v6694 = vsel %vm5670, %v2598, %v4646
        %v6695 = vsel %vm5671, %v2599, %v4647
        %v6696 = vsel %vm5672, %v2600, %v4648
        %v6697 = vsel %vm5673, %v2601, %v4649
        %v6698 = vsel %vm5674, %v2602, %v4650
        %v6699 = vsel %vm5675, %v2603, %v4651
        %v6700 = vsel %vm5676, %v2604, %v4652
        %v6701 = vsel %vm5677, %v2605, %v4653
        %v6702 = vsel %vm5678, %v2606, %v4654
        %v6703 = vsel %vm5679, %v2607, %v4655
        %v6704 = vsel %vm5680, %v2608, %v4656
        %v6705 = vsel %vm5681, %v2609, %v4657
        %v6706 = vsel %vm5682, %v2610, %v4658
        %v6707 = vsel %vm5683, %v2611, %v4659
        %v6708 = vsel %vm5684, %v2612, %v4660
        %v6709 = vsel %vm5685, %v2613, %v4661
        %v6710 = vsel %vm5686, %v2614, %v4662
        %v6711 = vsel %vm5687, %v2615, %v4663
        %v6712 = vsel %vm5688, %v2616, %v4664
        %v6713 = vsel %vm5689, %v2617, %v4665
        %v6714 = vsel %vm5690, %v2618, %v4666
        %v6715 = vsel %vm5691, %v2619, %v4667
        %v6716 = vsel %vm5692, %v2620, %v4668
        %v6717 = vsel %vm5693, %v2621, %v4669
        %v6718 = vsel %vm5694, %v2622, %v4670
        %v6719 = vsel %vm5695, %v2623, %v4671
        %v6720 = vsel %vm5696, %v2624, %v4672
        %v6721 = vsel %vm5697, %v2625, %v4673
        %v6722 = vsel %vm5698, %v2626, %v4674
        %v6723 = vsel %vm5699, %v2627, %v4675
        %v6724 = vsel %vm5700, %v2628, %v4676
        %v6725 = vsel %vm5701, %v2629, %v4677
        %v6726 = vsel %vm5702, %v2630, %v4678
        %v6727 = vsel %vm5703, %v2631, %v4679
        %v6728 = vsel %vm5704, %v2632, %v4680
        %v6729 = vsel %vm5705, %v2633, %v4681
        %v6730 = vsel %vm5706, %v2634, %v4682
        %v6731 = vsel %vm5707, %v2635, %v4683
        %v6732 = vsel %vm5708, %v2636, %v4684
        %v6733 = vsel %vm5709, %v2637, %v4685
        %v6734 = vsel %vm5710, %v2638, %v4686
        %v6735 = vsel %vm5711, %v2639, %v4687
        %v6736 = vsel %vm5712, %v2640, %v4688
        %v6737 = vsel %vm5713, %v2641, %v4689
        %v6738 = vsel %vm5714, %v2642, %v4690
        %v6739 = vsel %vm5715, %v2643, %v4691
        %v6740 = vsel %vm5716, %v2644, %v4692
        %v6741 = vsel %vm5717, %v2645, %v4693
        %v6742 = vsel %vm5718, %v2646, %v4694
        %v6743 = vsel %vm5719, %v2647, %v4695
        %v6744 = vsel %vm5720, %v2648, %v4696
        %v6745 = vsel %vm5721, %v2649, %v4697
        %v6746 = vsel %vm5722, %v2650, %v4698
        %v6747 = vsel %vm5723, %v2651, %v4699
        %v6748 = vsel %vm5724, %v2652, %v4700
        %v6749 = vsel %vm5725, %v2653, %v4701
        %v6750 = vsel %vm5726, %v2654, %v4702
        %v6751 = vsel %vm5727, %v2655, %v4703
        %v6752 = vsel %vm5728, %v2656, %v4704
        %v6753 = vsel %vm5729, %v2657, %v4705
        %v6754 = vsel %vm5730, %v2658, %v4706
        %v6755 = vsel %vm5731, %v2659, %v4707
        %v6756 = vsel %vm5732, %v2660, %v4708
        %v6757 = vsel %vm5733, %v2661, %v4709
        %v6758 = vsel %vm5734, %v2662, %v4710
        %v6759 = vsel %vm5735, %v2663, %v4711
        %v6760 = vsel %vm5736, %v2664, %v4712
        %v6761 = vsel %vm5737, %v2665, %v4713
        %v6762 = vsel %vm5738, %v2666, %v4714
        %v6763 = vsel %vm5739, %v2667, %v4715
        %v6764 = vsel %vm5740, %v2668, %v4716
        %v6765 = vsel %vm5741, %v2669, %v4717
        %v6766 = vsel %vm5742, %v2670, %v4718
        %v6767 = vsel %vm5743, %v2671, %v4719
        %v6768 = vsel %vm5744, %v2672, %v4720
        %v6769 = vsel %vm5745, %v2673, %v4721
        %v6770 = vsel %vm5746, %v2674, %v4722
        %v6771 = vsel %vm5747, %v2675, %v4723
        %v6772 = vsel %vm5748, %v2676, %v4724
        %v6773 = vsel %vm5749, %v2677, %v4725
        %v6774 = vsel %vm5750, %v2678, %v4726
        %v6775 = vsel %vm5751, %v2679, %v4727
        %v6776 = vsel %vm5752, %v2680, %v4728
        %v6777 = vsel %vm5753, %v2681, %v4729
        %v6778 = vsel %vm5754, %v2682, %v4730
        %v6779 = vsel %vm5755, %v2683, %v4731
        %v6780 = vsel %vm5756, %v2684, %v4732
        %v6781 = vsel %vm5757, %v2685, %v4733
        %v6782 = vsel %vm5758, %v2686, %v4734
        %v6783 = vsel %vm5759, %v2687, %v4735
        %v6784 = vsel %vm5760, %v2688, %v4736
        %v6785 = vsel %vm5761, %v2689, %v4737
        %v6786 = vsel %vm5762, %v2690, %v4738
        %v6787 = vsel %vm5763, %v2691, %v4739
        %v6788 = vsel %vm5764, %v2692, %v4740
        %v6789 = vsel %vm5765, %v2693, %v4741
        %v6790 = vsel %vm5766, %v2694, %v4742
        %v6791 = vsel %vm5767, %v2695, %v4743
        %v6792 = vsel %vm5768, %v2696, %v4744
        %v6793 = vsel %vm5769, %v2697, %v4745
        %v6794 = vsel %vm5770, %v2698, %v4746
        %v6795 = vsel %vm5771, %v2699, %v4747
        %v6796 = vsel %vm5772, %v2700, %v4748
        %v6797 = vsel %vm5773, %v2701, %v4749
        %v6798 = vsel %vm5774, %v2702, %v4750
        %v6799 = vsel %vm5775, %v2703, %v4751
        %v6800 = vsel %vm5776, %v2704, %v4752
        %v6801 = vsel %vm5777, %v2705, %v4753
        %v6802 = vsel %vm5778, %v2706, %v4754
        %v6803 = vsel %vm5779, %v2707, %v4755
        %v6804 = vsel %vm5780, %v2708, %v4756
        %v6805 = vsel %vm5781, %v2709, %v4757
        %v6806 = vsel %vm5782, %v2710, %v4758
        %v6807 = vsel %vm5783, %v2711, %v4759
        %v6808 = vsel %vm5784, %v2712, %v4760
        %v6809 = vsel %vm5785, %v2713, %v4761
        %v6810 = vsel %vm5786, %v2714, %v4762
        %v6811 = vsel %vm5787, %v2715, %v4763
        %v6812 = vsel %vm5788, %v2716, %v4764
        %v6813 = vsel %vm5789, %v2717, %v4765
        %v6814 = vsel %vm5790, %v2718, %v4766
        %v6815 = vsel %vm5791, %v2719, %v4767
        %v6816 = vsel %vm5792, %v2720, %v4768
        %v6817 = vsel %vm5793, %v2721, %v4769
        %v6818 = vsel %vm5794, %v2722, %v4770
        %v6819 = vsel %vm5795, %v2723, %v4771
        %v6820 = vsel %vm5796, %v2724, %v4772
        %v6821 = vsel %vm5797, %v2725, %v4773
        %v6822 = vsel %vm5798, %v2726, %v4774
        %v6823 = vsel %vm5799, %v2727, %v4775
        %v6824 = vsel %vm5800, %v2728, %v4776
        %v6825 = vsel %vm5801, %v2729, %v4777
        %v6826 = vsel %vm5802, %v2730, %v4778
        %v6827 = vsel %vm5803, %v2731, %v4779
        %v6828 = vsel %vm5804, %v2732, %v4780
        %v6829 = vsel %vm5805, %v2733, %v4781
        %v6830 = vsel %vm5806, %v2734, %v4782
        %v6831 = vsel %vm5807, %v2735, %v4783
        %v6832 = vsel %vm5808, %v2736, %v4784
        %v6833 = vsel %vm5809, %v2737, %v4785
        %v6834 = vsel %vm5810, %v2738, %v4786
        %v6835 = vsel %vm5811, %v2739, %v4787
        %v6836 = vsel %vm5812, %v2740, %v4788
        %v6837 = vsel %vm5813, %v2741, %v4789
        %v6838 = vsel %vm5814, %v2742, %v4790
        %v6839 = vsel %vm5815, %v2743, %v4791
        %v6840 = vsel %vm5816, %v2744, %v4792
        %v6841 = vsel %vm5817, %v2745, %v4793
        %v6842 = vsel %vm5818, %v2746, %v4794
        %v6843 = vsel %vm5819, %v2747, %v4795
        %v6844 = vsel %vm5820, %v2748, %v4796
        %v6845 = vsel %vm5821, %v2749, %v4797
        %v6846 = vsel %vm5822, %v2750, %v4798
        %v6847 = vsel %vm5823, %v2751, %v4799
        %v6848 = vsel %vm5824, %v2752, %v4800
        %v6849 = vsel %vm5825, %v2753, %v4801
        %v6850 = vsel %vm5826, %v2754, %v4802
        %v6851 = vsel %vm5827, %v2755, %v4803
        %v6852 = vsel %vm5828, %v2756, %v4804
        %v6853 = vsel %vm5829, %v2757, %v4805
        %v6854 = vsel %vm5830, %v2758, %v4806
        %v6855 = vsel %vm5831, %v2759, %v4807
        %v6856 = vsel %vm5832, %v2760, %v4808
        %v6857 = vsel %vm5833, %v2761, %v4809
        %v6858 = vsel %vm5834, %v2762, %v4810
        %v6859 = vsel %vm5835, %v2763, %v4811
        %v6860 = vsel %vm5836, %v2764, %v4812
        %v6861 = vsel %vm5837, %v2765, %v4813
        %v6862 = vsel %vm5838, %v2766, %v4814
        %v6863 = vsel %vm5839, %v2767, %v4815
        %v6864 = vsel %vm5840, %v2768, %v4816
        %v6865 = vsel %vm5841, %v2769, %v4817
        %v6866 = vsel %vm5842, %v2770, %v4818
        %v6867 = vsel %vm5843, %v2771, %v4819
        %v6868 = vsel %vm5844, %v2772, %v4820
        %v6869 = vsel %vm5845, %v2773, %v4821
        %v6870 = vsel %vm5846, %v2774, %v4822
        %v6871 = vsel %vm5847, %v2775, %v4823
        %v6872 = vsel %vm5848, %v2776, %v4824
        %v6873 = vsel %vm5849, %v2777, %v4825
        %v6874 = vsel %vm5850, %v2778, %v4826
        %v6875 = vsel %vm5851, %v2779, %v4827
        %v6876 = vsel %vm5852, %v2780, %v4828
        %v6877 = vsel %vm5853, %v2781, %v4829
        %v6878 = vsel %vm5854, %v2782, %v4830
        %v6879 = vsel %vm5855, %v2783, %v4831
        %v6880 = vsel %vm5856, %v2784, %v4832
        %v6881 = vsel %vm5857, %v2785, %v4833
        %v6882 = vsel %vm5858, %v2786, %v4834
        %v6883 = vsel %vm5859, %v2787, %v4835
        %v6884 = vsel %vm5860, %v2788, %v4836
        %v6885 = vsel %vm5861, %v2789, %v4837
        %v6886 = vsel %vm5862, %v2790, %v4838
        %v6887 = vsel %vm5863, %v2791, %v4839
        %v6888 = vsel %vm5864, %v2792, %v4840
        %v6889 = vsel %vm5865, %v2793, %v4841
        %v6890 = vsel %vm5866, %v2794, %v4842
        %v6891 = vsel %vm5867, %v2795, %v4843
        %v6892 = vsel %vm5868, %v2796, %v4844
        %v6893 = vsel %vm5869, %v2797, %v4845
        %v6894 = vsel %vm5870, %v2798, %v4846
        %v6895 = vsel %vm5871, %v2799, %v4847
        %v6896 = vsel %vm5872, %v2800, %v4848
        %v6897 = vsel %vm5873, %v2801, %v4849
        %v6898 = vsel %vm5874, %v2802, %v4850
        %v6899 = vsel %vm5875, %v2803, %v4851
        %v6900 = vsel %vm5876, %v2804, %v4852
        %v6901 = vsel %vm5877, %v2805, %v4853
        %v6902 = vsel %vm5878, %v2806, %v4854
        %v6903 = vsel %vm5879, %v2807, %v4855
        %v6904 = vsel %vm5880, %v2808, %v4856
        %v6905 = vsel %vm5881, %v2809, %v4857
        %v6906 = vsel %vm5882, %v2810, %v4858
        %v6907 = vsel %vm5883, %v2811, %v4859
        %v6908 = vsel %vm5884, %v2812, %v4860
        %v6909 = vsel %vm5885, %v2813, %v4861
        %v6910 = vsel %vm5886, %v2814, %v4862
        %v6911 = vsel %vm5887, %v2815, %v4863
        %v6912 = vsel %vm5888, %v2816, %v4864
        %v6913 = vsel %vm5889, %v2817, %v4865
        %v6914 = vsel %vm5890, %v2818, %v4866
        %v6915 = vsel %vm5891, %v2819, %v4867
        %v6916 = vsel %vm5892, %v2820, %v4868
        %v6917 = vsel %vm5893, %v2821, %v4869
        %v6918 = vsel %vm5894, %v2822, %v4870
        %v6919 = vsel %vm5895, %v2823, %v4871
        %v6920 = vsel %vm5896, %v2824, %v4872
        %v6921 = vsel %vm5897, %v2825, %v4873
        %v6922 = vsel %vm5898, %v2826, %v4874
        %v6923 = vsel %vm5899, %v2827, %v4875
        %v6924 = vsel %vm5900, %v2828, %v4876
        %v6925 = vsel %vm5901, %v2829, %v4877
        %v6926 = vsel %vm5902, %v2830, %v4878
        %v6927 = vsel %vm5903, %v2831, %v4879
        %v6928 = vsel %vm5904, %v2832, %v4880
        %v6929 = vsel %vm5905, %v2833, %v4881
        %v6930 = vsel %vm5906, %v2834, %v4882
        %v6931 = vsel %vm5907, %v2835, %v4883
        %v6932 = vsel %vm5908, %v2836, %v4884
        %v6933 = vsel %vm5909, %v2837, %v4885
        %v6934 = vsel %vm5910, %v2838, %v4886
        %v6935 = vsel %vm5911, %v2839, %v4887
        %v6936 = vsel %vm5912, %v2840, %v4888
        %v6937 = vsel %vm5913, %v2841, %v4889
        %v6938 = vsel %vm5914, %v2842, %v4890
        %v6939 = vsel %vm5915, %v2843, %v4891
        %v6940 = vsel %vm5916, %v2844, %v4892
        %v6941 = vsel %vm5917, %v2845, %v4893
        %v6942 = vsel %vm5918, %v2846, %v4894
        %v6943 = vsel %vm5919, %v2847, %v4895
        %v6944 = vsel %vm5920, %v2848, %v4896
        %v6945 = vsel %vm5921, %v2849, %v4897
        %v6946 = vsel %vm5922, %v2850, %v4898
        %v6947 = vsel %vm5923, %v2851, %v4899
        %v6948 = vsel %vm5924, %v2852, %v4900
        %v6949 = vsel %vm5925, %v2853, %v4901
        %v6950 = vsel %vm5926, %v2854, %v4902
        %v6951 = vsel %vm5927, %v2855, %v4903
        %v6952 = vsel %vm5928, %v2856, %v4904
        %v6953 = vsel %vm5929, %v2857, %v4905
        %v6954 = vsel %vm5930, %v2858, %v4906
        %v6955 = vsel %vm5931, %v2859, %v4907
        %v6956 = vsel %vm5932, %v2860, %v4908
        %v6957 = vsel %vm5933, %v2861, %v4909
        %v6958 = vsel %vm5934, %v2862, %v4910
        %v6959 = vsel %vm5935, %v2863, %v4911
        %v6960 = vsel %vm5936, %v2864, %v4912
        %v6961 = vsel %vm5937, %v2865, %v4913
        %v6962 = vsel %vm5938, %v2866, %v4914
        %v6963 = vsel %vm5939, %v2867, %v4915
        %v6964 = vsel %vm5940, %v2868, %v4916
        %v6965 = vsel %vm5941, %v2869, %v4917
        %v6966 = vsel %vm5942, %v2870, %v4918
        %v6967 = vsel %vm5943, %v2871, %v4919
        %v6968 = vsel %vm5944, %v2872, %v4920
        %v6969 = vsel %vm5945, %v2873, %v4921
        %v6970 = vsel %vm5946, %v2874, %v4922
        %v6971 = vsel %vm5947, %v2875, %v4923
        %v6972 = vsel %vm5948, %v2876, %v4924
        %v6973 = vsel %vm5949, %v2877, %v4925
        %v6974 = vsel %vm5950, %v2878, %v4926
        %v6975 = vsel %vm5951, %v2879, %v4927
        %v6976 = vsel %vm5952, %v2880, %v4928
        %v6977 = vsel %vm5953, %v2881, %v4929
        %v6978 = vsel %vm5954, %v2882, %v4930
        %v6979 = vsel %vm5955, %v2883, %v4931
        %v6980 = vsel %vm5956, %v2884, %v4932
        %v6981 = vsel %vm5957, %v2885, %v4933
        %v6982 = vsel %vm5958, %v2886, %v4934
        %v6983 = vsel %vm5959, %v2887, %v4935
        %v6984 = vsel %vm5960, %v2888, %v4936
        %v6985 = vsel %vm5961, %v2889, %v4937
        %v6986 = vsel %vm5962, %v2890, %v4938
        %v6987 = vsel %vm5963, %v2891, %v4939
        %v6988 = vsel %vm5964, %v2892, %v4940
        %v6989 = vsel %vm5965, %v2893, %v4941
        %v6990 = vsel %vm5966, %v2894, %v4942
        %v6991 = vsel %vm5967, %v2895, %v4943
        %v6992 = vsel %vm5968, %v2896, %v4944
        %v6993 = vsel %vm5969, %v2897, %v4945
        %v6994 = vsel %vm5970, %v2898, %v4946
        %v6995 = vsel %vm5971, %v2899, %v4947
        %v6996 = vsel %vm5972, %v2900, %v4948
        %v6997 = vsel %vm5973, %v2901, %v4949
        %v6998 = vsel %vm5974, %v2902, %v4950
        %v6999 = vsel %vm5975, %v2903, %v4951
        %v7000 = vsel %vm5976, %v2904, %v4952
        %v7001 = vsel %vm5977, %v2905, %v4953
        %v7002 = vsel %vm5978, %v2906, %v4954
        %v7003 = vsel %vm5979, %v2907, %v4955
        %v7004 = vsel %vm5980, %v2908, %v4956
        %v7005 = vsel %vm5981, %v2909, %v4957
        %v7006 = vsel %vm5982, %v2910, %v4958
        %v7007 = vsel %vm5983, %v2911, %v4959
        %v7008 = vsel %vm5984, %v2912, %v4960
        %v7009 = vsel %vm5985, %v2913, %v4961
        %v7010 = vsel %vm5986, %v2914, %v4962
        %v7011 = vsel %vm5987, %v2915, %v4963
        %v7012 = vsel %vm5988, %v2916, %v4964
        %v7013 = vsel %vm5989, %v2917, %v4965
        %v7014 = vsel %vm5990, %v2918, %v4966
        %v7015 = vsel %vm5991, %v2919, %v4967
        %v7016 = vsel %vm5992, %v2920, %v4968
        %v7017 = vsel %vm5993, %v2921, %v4969
        %v7018 = vsel %vm5994, %v2922, %v4970
        %v7019 = vsel %vm5995, %v2923, %v4971
        %v7020 = vsel %vm5996, %v2924, %v4972
        %v7021 = vsel %vm5997, %v2925, %v4973
        %v7022 = vsel %vm5998, %v2926, %v4974
        %v7023 = vsel %vm5999, %v2927, %v4975
        %v7024 = vsel %vm6000, %v2928, %v4976
        %v7025 = vsel %vm6001, %v2929, %v4977
        %v7026 = vsel %vm6002, %v2930, %v4978
        %v7027 = vsel %vm6003, %v2931, %v4979
        %v7028 = vsel %vm6004, %v2932, %v4980
        %v7029 = vsel %vm6005, %v2933, %v4981
        %v7030 = vsel %vm6006, %v2934, %v4982
        %v7031 = vsel %vm6007, %v2935, %v4983
        %v7032 = vsel %vm6008, %v2936, %v4984
        %v7033 = vsel %vm6009, %v2937, %v4985
        %v7034 = vsel %vm6010, %v2938, %v4986
        %v7035 = vsel %vm6011, %v2939, %v4987
        %v7036 = vsel %vm6012, %v2940, %v4988
        %v7037 = vsel %vm6013, %v2941, %v4989
        %v7038 = vsel %vm6014, %v2942, %v4990
        %v7039 = vsel %vm6015, %v2943, %v4991
        %v7040 = vsel %vm6016, %v2944, %v4992
        %v7041 = vsel %vm6017, %v2945, %v4993
        %v7042 = vsel %vm6018, %v2946, %v4994
        %v7043 = vsel %vm6019, %v2947, %v4995
        %v7044 = vsel %vm6020, %v2948, %v4996
        %v7045 = vsel %vm6021, %v2949, %v4997
        %v7046 = vsel %vm6022, %v2950, %v4998
        %v7047 = vsel %vm6023, %v2951, %v4999
        %v7048 = vsel %vm6024, %v2952, %v5000
        %v7049 = vsel %vm6025, %v2953, %v5001
        %v7050 = vsel %vm6026, %v2954, %v5002
        %v7051 = vsel %vm6027, %v2955, %v5003
        %v7052 = vsel %vm6028, %v2956, %v5004
        %v7053 = vsel %vm6029, %v2957, %v5005
        %v7054 = vsel %vm6030, %v2958, %v5006
        %v7055 = vsel %vm6031, %v2959, %v5007
        %v7056 = vsel %vm6032, %v2960, %v5008
        %v7057 = vsel %vm6033, %v2961, %v5009
        %v7058 = vsel %vm6034, %v2962, %v5010
        %v7059 = vsel %vm6035, %v2963, %v5011
        %v7060 = vsel %vm6036, %v2964, %v5012
        %v7061 = vsel %vm6037, %v2965, %v5013
        %v7062 = vsel %vm6038, %v2966, %v5014
        %v7063 = vsel %vm6039, %v2967, %v5015
        %v7064 = vsel %vm6040, %v2968, %v5016
        %v7065 = vsel %vm6041, %v2969, %v5017
        %v7066 = vsel %vm6042, %v2970, %v5018
        %v7067 = vsel %vm6043, %v2971, %v5019
        %v7068 = vsel %vm6044, %v2972, %v5020
        %v7069 = vsel %vm6045, %v2973, %v5021
        %v7070 = vsel %vm6046, %v2974, %v5022
        %v7071 = vsel %vm6047, %v2975, %v5023
        %v7072 = vsel %vm6048, %v2976, %v5024
        %v7073 = vsel %vm6049, %v2977, %v5025
        %v7074 = vsel %vm6050, %v2978, %v5026
        %v7075 = vsel %vm6051, %v2979, %v5027
        %v7076 = vsel %vm6052, %v2980, %v5028
        %v7077 = vsel %vm6053, %v2981, %v5029
        %v7078 = vsel %vm6054, %v2982, %v5030
        %v7079 = vsel %vm6055, %v2983, %v5031
        %v7080 = vsel %vm6056, %v2984, %v5032
        %v7081 = vsel %vm6057, %v2985, %v5033
        %v7082 = vsel %vm6058, %v2986, %v5034
        %v7083 = vsel %vm6059, %v2987, %v5035
        %v7084 = vsel %vm6060, %v2988, %v5036
        %v7085 = vsel %vm6061, %v2989, %v5037
        %v7086 = vsel %vm6062, %v2990, %v5038
        %v7087 = vsel %vm6063, %v2991, %v5039
        %v7088 = vsel %vm6064, %v2992, %v5040
        %v7089 = vsel %vm6065, %v2993, %v5041
        %v7090 = vsel %vm6066, %v2994, %v5042
        %v7091 = vsel %vm6067, %v2995, %v5043
        %v7092 = vsel %vm6068, %v2996, %v5044
        %v7093 = vsel %vm6069, %v2997, %v5045
        %v7094 = vsel %vm6070, %v2998, %v5046
        %v7095 = vsel %vm6071, %v2999, %v5047
        %v7096 = vsel %vm6072, %v3000, %v5048
        %v7097 = vsel %vm6073, %v3001, %v5049
        %v7098 = vsel %vm6074, %v3002, %v5050
        %v7099 = vsel %vm6075, %v3003, %v5051
        %v7100 = vsel %vm6076, %v3004, %v5052
        %v7101 = vsel %vm6077, %v3005, %v5053
        %v7102 = vsel %vm6078, %v3006, %v5054
        %v7103 = vsel %vm6079, %v3007, %v5055
        %v7104 = vsel %vm6080, %v3008, %v5056
        %v7105 = vsel %vm6081, %v3009, %v5057
        %v7106 = vsel %vm6082, %v3010, %v5058
        %v7107 = vsel %vm6083, %v3011, %v5059
        %v7108 = vsel %vm6084, %v3012, %v5060
        %v7109 = vsel %vm6085, %v3013, %v5061
        %v7110 = vsel %vm6086, %v3014, %v5062
        %v7111 = vsel %vm6087, %v3015, %v5063
        %v7112 = vsel %vm6088, %v3016, %v5064
        %v7113 = vsel %vm6089, %v3017, %v5065
        %v7114 = vsel %vm6090, %v3018, %v5066
        %v7115 = vsel %vm6091, %v3019, %v5067
        %v7116 = vsel %vm6092, %v3020, %v5068
        %v7117 = vsel %vm6093, %v3021, %v5069
        %v7118 = vsel %vm6094, %v3022, %v5070
        %v7119 = vsel %vm6095, %v3023, %v5071
        %v7120 = vsel %vm6096, %v3024, %v5072
        %v7121 = vsel %vm6097, %v3025, %v5073
        %v7122 = vsel %vm6098, %v3026, %v5074
        %v7123 = vsel %vm6099, %v3027, %v5075
        %v7124 = vsel %vm6100, %v3028, %v5076
        %v7125 = vsel %vm6101, %v3029, %v5077
        %v7126 = vsel %vm6102, %v3030, %v5078
        %v7127 = vsel %vm6103, %v3031, %v5079
        %v7128 = vsel %vm6104, %v3032, %v5080
        %v7129 = vsel %vm6105, %v3033, %v5081
        %v7130 = vsel %vm6106, %v3034, %v5082
        %v7131 = vsel %vm6107, %v3035, %v5083
        %v7132 = vsel %vm6108, %v3036, %v5084
        %v7133 = vsel %vm6109, %v3037, %v5085
        %v7134 = vsel %vm6110, %v3038, %v5086
        %v7135 = vsel %vm6111, %v3039, %v5087
        %v7136 = vsel %vm6112, %v3040, %v5088
        %v7137 = vsel %vm6113, %v3041, %v5089
        %v7138 = vsel %vm6114, %v3042, %v5090
        %v7139 = vsel %vm6115, %v3043, %v5091
        %v7140 = vsel %vm6116, %v3044, %v5092
        %v7141 = vsel %vm6117, %v3045, %v5093
        %v7142 = vsel %vm6118, %v3046, %v5094
        %v7143 = vsel %vm6119, %v3047, %v5095
        %v7144 = vsel %vm6120, %v3048, %v5096
        %v7145 = vsel %vm6121, %v3049, %v5097
        %v7146 = vsel %vm6122, %v3050, %v5098
        %v7147 = vsel %vm6123, %v3051, %v5099
        %v7148 = vsel %vm6124, %v3052, %v5100
        %v7149 = vsel %vm6125, %v3053, %v5101
        %v7150 = vsel %vm6126, %v3054, %v5102
        %v7151 = vsel %vm6127, %v3055, %v5103
        %v7152 = vsel %vm6128, %v3056, %v5104
        %v7153 = vsel %vm6129, %v3057, %v5105
        %v7154 = vsel %vm6130, %v3058, %v5106
        %v7155 = vsel %vm6131, %v3059, %v5107
        %v7156 = vsel %vm6132, %v3060, %v5108
        %v7157 = vsel %vm6133, %v3061, %v5109
        %v7158 = vsel %vm6134, %v3062, %v5110
        %v7159 = vsel %vm6135, %v3063, %v5111
        %v7160 = vsel %vm6136, %v3064, %v5112
        %v7161 = vsel %vm6137, %v3065, %v5113
        %v7162 = vsel %vm6138, %v3066, %v5114
        %v7163 = vsel %vm6139, %v3067, %v5115
        %v7164 = vsel %vm6140, %v3068, %v5116
        %v7165 = vsel %vm6141, %v3069, %v5117
        %v7166 = vsel %vm6142, %v3070, %v5118
        %v7167 = vsel %vm6143, %v3071, %v5119
        %v7168 = vsel %vm6144, %v3072, %v5120
        %v7169 = vsel %vm6145, %v3073, %v5121
        %v7170 = vsel %vm6146, %v3074, %v5122
        %v7171 = vsel %vm6147, %v3075, %v5123
        %v7172 = vsel %vm6148, %v3076, %v5124
        %v7173 = vsel %vm6149, %v3077, %v5125
        %v7174 = vsel %vm6150, %v3078, %v5126
        %v7175 = vsel %vm6151, %v3079, %v5127
        %v7176 = vsel %vm6152, %v3080, %v5128
        %v7177 = vsel %vm6153, %v3081, %v5129
        %v7178 = vsel %vm6154, %v3082, %v5130
        %v7179 = vsel %vm6155, %v3083, %v5131
        %v7180 = vsel %vm6156, %v3084, %v5132
        %v7181 = vsel %vm6157, %v3085, %v5133
        %v7182 = vsel %vm6158, %v3086, %v5134
        %v7183 = vsel %vm6159, %v3087, %v5135
        %v7184 = vsel %vm6160, %v3088, %v5136
        %v7185 = vsel %vm6161, %v3089, %v5137
        %v7186 = vsel %vm6162, %v3090, %v5138
        %v7187 = vsel %vm6163, %v3091, %v5139
        %v7188 = vsel %vm6164, %v3092, %v5140
        %v7189 = vsel %vm6165, %v3093, %v5141
        %v7190 = vsel %vm6166, %v3094, %v5142
        %v7191 = vsel %vm6167, %v3095, %v5143
        %v7192 = vsel %vm6168, %v3096, %v5144
        %v7193 = vsel %vm6169, %v3097, %v5145
        %v7194 = vsel %vm6170, %v3098, %v5146
        %v7195 = vsel %vm6171, %v3099, %v5147
        %v7196 = vsel %vm6172, %v3100, %v5148
        %v7197 = vsel %vm6173, %v3101, %v5149
        %v7198 = vsel %vm6174, %v3102, %v5150
        %v7199 = vsel %vm6175, %v3103, %v5151
        %v7200 = vsel %vm6176, %v3104, %v5152
        %v7201 = vsel %vm6177, %v3105, %v5153
        %v7202 = vsel %vm6178, %v3106, %v5154
        %v7203 = vsel %vm6179, %v3107, %v5155
        %v7204 = vsel %vm6180, %v3108, %v5156
        %v7205 = vsel %vm6181, %v3109, %v5157
        %v7206 = vsel %vm6182, %v3110, %v5158
        %v7207 = vsel %vm6183, %v3111, %v5159
        %v7208 = vsel %vm6184, %v3112, %v5160
        %v7209 = vsel %vm6185, %v3113, %v5161
        %v7210 = vsel %vm6186, %v3114, %v5162
        %v7211 = vsel %vm6187, %v3115, %v5163
        %v7212 = vsel %vm6188, %v3116, %v5164
        %v7213 = vsel %vm6189, %v3117, %v5165
        %v7214 = vsel %vm6190, %v3118, %v5166
        %v7215 = vsel %vm6191, %v3119, %v5167
        %v7216 = vsel %vm6192, %v3120, %v5168
        %v7217 = vsel %vm6193, %v3121, %v5169
        %v7218 = vsel %vm6194, %v3122, %v5170
        %v7219 = vsel %vm6195, %v3123, %v5171
        %v7220 = vsel %vm6196, %v3124, %v5172
        %v7221 = vsel %vm6197, %v3125, %v5173
        %v7222 = vsel %vm6198, %v3126, %v5174
        %v7223 = vsel %vm6199, %v3127, %v5175
        %v7224 = vsel %vm6200, %v3128, %v5176
        %v7225 = vsel %vm6201, %v3129, %v5177
        %v7226 = vsel %vm6202, %v3130, %v5178
        %v7227 = vsel %vm6203, %v3131, %v5179
        %v7228 = vsel %vm6204, %v3132, %v5180
        %v7229 = vsel %vm6205, %v3133, %v5181
        %v7230 = vsel %vm6206, %v3134, %v5182
        %v7231 = vsel %vm6207, %v3135, %v5183
        %v7232 = vsel %vm6208, %v3136, %v5184
        %v7233 = vsel %vm6209, %v3137, %v5185
        %v7234 = vsel %vm6210, %v3138, %v5186
        %v7235 = vsel %vm6211, %v3139, %v5187
        %v7236 = vsel %vm6212, %v3140, %v5188
        %v7237 = vsel %vm6213, %v3141, %v5189
        %v7238 = vsel %vm6214, %v3142, %v5190
        %v7239 = vsel %vm6215, %v3143, %v5191
        %v7240 = vsel %vm6216, %v3144, %v5192
        %v7241 = vsel %vm6217, %v3145, %v5193
        %v7242 = vsel %vm6218, %v3146, %v5194
        %v7243 = vsel %vm6219, %v3147, %v5195
        %v7244 = vsel %vm6220, %v3148, %v5196
        %v7245 = vsel %vm6221, %v3149, %v5197
        %v7246 = vsel %vm6222, %v3150, %v5198
        %v7247 = vsel %vm6223, %v3151, %v5199
        %v7248 = vsel %vm6224, %v3152, %v5200
        %v7249 = vsel %vm6225, %v3153, %v5201
        %v7250 = vsel %vm6226, %v3154, %v5202
        %v7251 = vsel %vm6227, %v3155, %v5203
        %v7252 = vsel %vm6228, %v3156, %v5204
        %v7253 = vsel %vm6229, %v3157, %v5205
        %v7254 = vsel %vm6230, %v3158, %v5206
        %v7255 = vsel %vm6231, %v3159, %v5207
        %v7256 = vsel %vm6232, %v3160, %v5208
        %v7257 = vsel %vm6233, %v3161, %v5209
        %v7258 = vsel %vm6234, %v3162, %v5210
        %v7259 = vsel %vm6235, %v3163, %v5211
        %v7260 = vsel %vm6236, %v3164, %v5212
        %v7261 = vsel %vm6237, %v3165, %v5213
        %v7262 = vsel %vm6238, %v3166, %v5214
        %v7263 = vsel %vm6239, %v3167, %v5215
        %v7264 = vsel %vm6240, %v3168, %v5216
        %v7265 = vsel %vm6241, %v3169, %v5217
        %v7266 = vsel %vm6242, %v3170, %v5218
        %v7267 = vsel %vm6243, %v3171, %v5219
        %v7268 = vsel %vm6244, %v3172, %v5220
        %v7269 = vsel %vm6245, %v3173, %v5221
        %v7270 = vsel %vm6246, %v3174, %v5222
        %v7271 = vsel %vm6247, %v3175, %v5223
        %v7272 = vsel %vm6248, %v3176, %v5224
        %v7273 = vsel %vm6249, %v3177, %v5225
        %v7274 = vsel %vm6250, %v3178, %v5226
        %v7275 = vsel %vm6251, %v3179, %v5227
        %v7276 = vsel %vm6252, %v3180, %v5228
        %v7277 = vsel %vm6253, %v3181, %v5229
        %v7278 = vsel %vm6254, %v3182, %v5230
        %v7279 = vsel %vm6255, %v3183, %v5231
        %v7280 = vsel %vm6256, %v3184, %v5232
        %v7281 = vsel %vm6257, %v3185, %v5233
        %v7282 = vsel %vm6258, %v3186, %v5234
        %v7283 = vsel %vm6259, %v3187, %v5235
        %v7284 = vsel %vm6260, %v3188, %v5236
        %v7285 = vsel %vm6261, %v3189, %v5237
        %v7286 = vsel %vm6262, %v3190, %v5238
        %v7287 = vsel %vm6263, %v3191, %v5239
        %v7288 = vsel %vm6264, %v3192, %v5240
        %v7289 = vsel %vm6265, %v3193, %v5241
        %v7290 = vsel %vm6266, %v3194, %v5242
        %v7291 = vsel %vm6267, %v3195, %v5243
        %v7292 = vsel %vm6268, %v3196, %v5244
        %v7293 = vsel %vm6269, %v3197, %v5245
        %v7294 = vsel %vm6270, %v3198, %v5246
        %v7295 = vsel %vm6271, %v3199, %v5247
        %v7296 = vsel %vm6272, %v3200, %v5248
        %v7297 = vsel %vm6273, %v3201, %v5249
        %v7298 = vsel %vm6274, %v3202, %v5250
        %v7299 = vsel %vm6275, %v3203, %v5251
        %v7300 = vsel %vm6276, %v3204, %v5252
        %v7301 = vsel %vm6277, %v3205, %v5253
        %v7302 = vsel %vm6278, %v3206, %v5254
        %v7303 = vsel %vm6279, %v3207, %v5255
        %v7304 = vsel %vm6280, %v3208, %v5256
        %v7305 = vsel %vm6281, %v3209, %v5257
        %v7306 = vsel %vm6282, %v3210, %v5258
        %v7307 = vsel %vm6283, %v3211, %v5259
        %v7308 = vsel %vm6284, %v3212, %v5260
        %v7309 = vsel %vm6285, %v3213, %v5261
        %v7310 = vsel %vm6286, %v3214, %v5262
        %v7311 = vsel %vm6287, %v3215, %v5263
        %v7312 = vsel %vm6288, %v3216, %v5264
        %v7313 = vsel %vm6289, %v3217, %v5265
        %v7314 = vsel %vm6290, %v3218, %v5266
        %v7315 = vsel %vm6291, %v3219, %v5267
        %v7316 = vsel %vm6292, %v3220, %v5268
        %v7317 = vsel %vm6293, %v3221, %v5269
        %v7318 = vsel %vm6294, %v3222, %v5270
        %v7319 = vsel %vm6295, %v3223, %v5271
        %v7320 = vsel %vm6296, %v3224, %v5272
        %v7321 = vsel %vm6297, %v3225, %v5273
        %v7322 = vsel %vm6298, %v3226, %v5274
        %7323 = vst [vmem:[%s142] sm:$0xff] %v6299
        %7324 = vst [vmem:[%s142 + $0x8] sm:$0xff] %v6300
        %7325 = vst [vmem:[%s142 + $0x10] sm:$0xff] %v6301
        %7326 = vst [vmem:[%s142 + $0x18] sm:$0xff] %v6302
        %7327 = vst [vmem:[%s142 + $0x20] sm:$0xff] %v6303
        %7328 = vst [vmem:[%s142 + $0x28] sm:$0xff] %v6304
        %7329 = vst [vmem:[%s142 + $0x30] sm:$0xff] %v6305
        %7330 = vst [vmem:[%s142 + $0x38] sm:$0xff] %v6306
        %7331 = vst [vmem:[%s142 + $0x40] sm:$0xff] %v6307
        %7332 = vst [vmem:[%s142 + $0x48] sm:$0xff] %v6308
        %7333 = vst [vmem:[%s142 + $0x50] sm:$0xff] %v6309
        %7334 = vst [vmem:[%s142 + $0x58] sm:$0xff] %v6310
        %7335 = vst [vmem:[%s142 + $0x60] sm:$0xff] %v6311
        %7336 = vst [vmem:[%s142 + $0x68] sm:$0xff] %v6312
        %7337 = vst [vmem:[%s142 + $0x70] sm:$0xff] %v6313
        %7338 = vst [vmem:[%s142 + $0x78] sm:$0xff] %v6314
        %7339 = vst [vmem:[%s142 + $0x80] sm:$0xff] %v6315
        %7340 = vst [vmem:[%s142 + $0x88] sm:$0xff] %v6316
        %7341 = vst [vmem:[%s142 + $0x90] sm:$0xff] %v6317
        %7342 = vst [vmem:[%s142 + $0x98] sm:$0xff] %v6318
        %7343 = vst [vmem:[%s142 + $0xa0] sm:$0xff] %v6319
        %7344 = vst [vmem:[%s142 + $0xa8] sm:$0xff] %v6320
        %7345 = vst [vmem:[%s142 + $0xb0] sm:$0xff] %v6321
        %7346 = vst [vmem:[%s142 + $0xb8] sm:$0xff] %v6322
        %7347 = vst [vmem:[%s142 + $0xc0] sm:$0xff] %v6323
        %7348 = vst [vmem:[%s142 + $0xc8] sm:$0xff] %v6324
        %7349 = vst [vmem:[%s142 + $0xd0] sm:$0xff] %v6325
        %7350 = vst [vmem:[%s142 + $0xd8] sm:$0xff] %v6326
        %7351 = vst [vmem:[%s142 + $0xe0] sm:$0xff] %v6327
        %7352 = vst [vmem:[%s142 + $0xe8] sm:$0xff] %v6328
        %7353 = vst [vmem:[%s142 + $0xf0] sm:$0xff] %v6329
        %7354 = vst [vmem:[%s142 + $0xf8] sm:$0xff] %v6330
        %7355 = vst [vmem:[%s142 + $0x100] sm:$0xff] %v6331
        %7356 = vst [vmem:[%s142 + $0x108] sm:$0xff] %v6332
        %7357 = vst [vmem:[%s142 + $0x110] sm:$0xff] %v6333
        %7358 = vst [vmem:[%s142 + $0x118] sm:$0xff] %v6334
        %7359 = vst [vmem:[%s142 + $0x120] sm:$0xff] %v6335
        %7360 = vst [vmem:[%s142 + $0x128] sm:$0xff] %v6336
        %7361 = vst [vmem:[%s142 + $0x130] sm:$0xff] %v6337
        %7362 = vst [vmem:[%s142 + $0x138] sm:$0xff] %v6338
        %7363 = vst [vmem:[%s142 + $0x140] sm:$0xff] %v6339
        %7364 = vst [vmem:[%s142 + $0x148] sm:$0xff] %v6340
        %7365 = vst [vmem:[%s142 + $0x150] sm:$0xff] %v6341
        %7366 = vst [vmem:[%s142 + $0x158] sm:$0xff] %v6342
        %7367 = vst [vmem:[%s142 + $0x160] sm:$0xff] %v6343
        %7368 = vst [vmem:[%s142 + $0x168] sm:$0xff] %v6344
        %7369 = vst [vmem:[%s142 + $0x170] sm:$0xff] %v6345
        %7370 = vst [vmem:[%s142 + $0x178] sm:$0xff] %v6346
        %7371 = vst [vmem:[%s142 + $0x180] sm:$0xff] %v6347
        %7372 = vst [vmem:[%s142 + $0x188] sm:$0xff] %v6348
        %7373 = vst [vmem:[%s142 + $0x190] sm:$0xff] %v6349
        %7374 = vst [vmem:[%s142 + $0x198] sm:$0xff] %v6350
        %7375 = vst [vmem:[%s142 + $0x1a0] sm:$0xff] %v6351
        %7376 = vst [vmem:[%s142 + $0x1a8] sm:$0xff] %v6352
        %7377 = vst [vmem:[%s142 + $0x1b0] sm:$0xff] %v6353
        %7378 = vst [vmem:[%s142 + $0x1b8] sm:$0xff] %v6354
        %7379 = vst [vmem:[%s142 + $0x1c0] sm:$0xff] %v6355
        %7380 = vst [vmem:[%s142 + $0x1c8] sm:$0xff] %v6356
        %7381 = vst [vmem:[%s142 + $0x1d0] sm:$0xff] %v6357
        %7382 = vst [vmem:[%s142 + $0x1d8] sm:$0xff] %v6358
        %7383 = vst [vmem:[%s142 + $0x1e0] sm:$0xff] %v6359
        %7384 = vst [vmem:[%s142 + $0x1e8] sm:$0xff] %v6360
        %7385 = vst [vmem:[%s142 + $0x1f0] sm:$0xff] %v6361
        %7386 = vst [vmem:[%s142 + $0x1f8] sm:$0xff] %v6362
        %7387 = vst [vmem:[%s142 + $0x200] sm:$0xff] %v6363
        %7388 = vst [vmem:[%s142 + $0x208] sm:$0xff] %v6364
        %7389 = vst [vmem:[%s142 + $0x210] sm:$0xff] %v6365
        %7390 = vst [vmem:[%s142 + $0x218] sm:$0xff] %v6366
        %7391 = vst [vmem:[%s142 + $0x220] sm:$0xff] %v6367
        %7392 = vst [vmem:[%s142 + $0x228] sm:$0xff] %v6368
        %7393 = vst [vmem:[%s142 + $0x230] sm:$0xff] %v6369
        %7394 = vst [vmem:[%s142 + $0x238] sm:$0xff] %v6370
        %7395 = vst [vmem:[%s142 + $0x240] sm:$0xff] %v6371
        %7396 = vst [vmem:[%s142 + $0x248] sm:$0xff] %v6372
        %7397 = vst [vmem:[%s142 + $0x250] sm:$0xff] %v6373
        %7398 = vst [vmem:[%s142 + $0x258] sm:$0xff] %v6374
        %7399 = vst [vmem:[%s142 + $0x260] sm:$0xff] %v6375
        %7400 = vst [vmem:[%s142 + $0x268] sm:$0xff] %v6376
        %7401 = vst [vmem:[%s142 + $0x270] sm:$0xff] %v6377
        %7402 = vst [vmem:[%s142 + $0x278] sm:$0xff] %v6378
        %7403 = vst [vmem:[%s142 + $0x280] sm:$0xff] %v6379
        %7404 = vst [vmem:[%s142 + $0x288] sm:$0xff] %v6380
        %7405 = vst [vmem:[%s142 + $0x290] sm:$0xff] %v6381
        %7406 = vst [vmem:[%s142 + $0x298] sm:$0xff] %v6382
        %7407 = vst [vmem:[%s142 + $0x2a0] sm:$0xff] %v6383
        %7408 = vst [vmem:[%s142 + $0x2a8] sm:$0xff] %v6384
        %7409 = vst [vmem:[%s142 + $0x2b0] sm:$0xff] %v6385
        %7410 = vst [vmem:[%s142 + $0x2b8] sm:$0xff] %v6386
        %7411 = vst [vmem:[%s142 + $0x2c0] sm:$0xff] %v6387
        %7412 = vst [vmem:[%s142 + $0x2c8] sm:$0xff] %v6388
        %7413 = vst [vmem:[%s142 + $0x2d0] sm:$0xff] %v6389
        %7414 = vst [vmem:[%s142 + $0x2d8] sm:$0xff] %v6390
        %7415 = vst [vmem:[%s142 + $0x2e0] sm:$0xff] %v6391
        %7416 = vst [vmem:[%s142 + $0x2e8] sm:$0xff] %v6392
        %7417 = vst [vmem:[%s142 + $0x2f0] sm:$0xff] %v6393
        %7418 = vst [vmem:[%s142 + $0x2f8] sm:$0xff] %v6394
        %7419 = vst [vmem:[%s142 + $0x300] sm:$0xff] %v6395
        %7420 = vst [vmem:[%s142 + $0x308] sm:$0xff] %v6396
        %7421 = vst [vmem:[%s142 + $0x310] sm:$0xff] %v6397
        %7422 = vst [vmem:[%s142 + $0x318] sm:$0xff] %v6398
        %7423 = vst [vmem:[%s142 + $0x320] sm:$0xff] %v6399
        %7424 = vst [vmem:[%s142 + $0x328] sm:$0xff] %v6400
        %7425 = vst [vmem:[%s142 + $0x330] sm:$0xff] %v6401
        %7426 = vst [vmem:[%s142 + $0x338] sm:$0xff] %v6402
        %7427 = vst [vmem:[%s142 + $0x340] sm:$0xff] %v6403
        %7428 = vst [vmem:[%s142 + $0x348] sm:$0xff] %v6404
        %7429 = vst [vmem:[%s142 + $0x350] sm:$0xff] %v6405
        %7430 = vst [vmem:[%s142 + $0x358] sm:$0xff] %v6406
        %7431 = vst [vmem:[%s142 + $0x360] sm:$0xff] %v6407
        %7432 = vst [vmem:[%s142 + $0x368] sm:$0xff] %v6408
        %7433 = vst [vmem:[%s142 + $0x370] sm:$0xff] %v6409
        %7434 = vst [vmem:[%s142 + $0x378] sm:$0xff] %v6410
        %7435 = vst [vmem:[%s142 + $0x380] sm:$0xff] %v6411
        %7436 = vst [vmem:[%s142 + $0x388] sm:$0xff] %v6412
        %7437 = vst [vmem:[%s142 + $0x390] sm:$0xff] %v6413
        %7438 = vst [vmem:[%s142 + $0x398] sm:$0xff] %v6414
        %7439 = vst [vmem:[%s142 + $0x3a0] sm:$0xff] %v6415
        %7440 = vst [vmem:[%s142 + $0x3a8] sm:$0xff] %v6416
        %7441 = vst [vmem:[%s142 + $0x3b0] sm:$0xff] %v6417
        %7442 = vst [vmem:[%s142 + $0x3b8] sm:$0xff] %v6418
        %7443 = vst [vmem:[%s142 + $0x3c0] sm:$0xff] %v6419
        %7444 = vst [vmem:[%s142 + $0x3c8] sm:$0xff] %v6420
        %7445 = vst [vmem:[%s142 + $0x3d0] sm:$0xff] %v6421
        %7446 = vst [vmem:[%s142 + $0x3d8] sm:$0xff] %v6422
        %7447 = vst [vmem:[%s142 + $0x3e0] sm:$0xff] %v6423
        %7448 = vst [vmem:[%s142 + $0x3e8] sm:$0xff] %v6424
        %7449 = vst [vmem:[%s142 + $0x3f0] sm:$0xff] %v6425
        %7450 = vst [vmem:[%s142 + $0x3f8] sm:$0xff] %v6426
        %7451 = vst [vmem:[%s142 + $0x400] sm:$0xff] %v6427
        %7452 = vst [vmem:[%s142 + $0x408] sm:$0xff] %v6428
        %7453 = vst [vmem:[%s142 + $0x410] sm:$0xff] %v6429
        %7454 = vst [vmem:[%s142 + $0x418] sm:$0xff] %v6430
        %7455 = vst [vmem:[%s142 + $0x420] sm:$0xff] %v6431
        %7456 = vst [vmem:[%s142 + $0x428] sm:$0xff] %v6432
        %7457 = vst [vmem:[%s142 + $0x430] sm:$0xff] %v6433
        %7458 = vst [vmem:[%s142 + $0x438] sm:$0xff] %v6434
        %7459 = vst [vmem:[%s142 + $0x440] sm:$0xff] %v6435
        %7460 = vst [vmem:[%s142 + $0x448] sm:$0xff] %v6436
        %7461 = vst [vmem:[%s142 + $0x450] sm:$0xff] %v6437
        %7462 = vst [vmem:[%s142 + $0x458] sm:$0xff] %v6438
        %7463 = vst [vmem:[%s142 + $0x460] sm:$0xff] %v6439
        %7464 = vst [vmem:[%s142 + $0x468] sm:$0xff] %v6440
        %7465 = vst [vmem:[%s142 + $0x470] sm:$0xff] %v6441
        %7466 = vst [vmem:[%s142 + $0x478] sm:$0xff] %v6442
        %7467 = vst [vmem:[%s142 + $0x480] sm:$0xff] %v6443
        %7468 = vst [vmem:[%s142 + $0x488] sm:$0xff] %v6444
        %7469 = vst [vmem:[%s142 + $0x490] sm:$0xff] %v6445
        %7470 = vst [vmem:[%s142 + $0x498] sm:$0xff] %v6446
        %7471 = vst [vmem:[%s142 + $0x4a0] sm:$0xff] %v6447
        %7472 = vst [vmem:[%s142 + $0x4a8] sm:$0xff] %v6448
        %7473 = vst [vmem:[%s142 + $0x4b0] sm:$0xff] %v6449
        %7474 = vst [vmem:[%s142 + $0x4b8] sm:$0xff] %v6450
        %7475 = vst [vmem:[%s142 + $0x4c0] sm:$0xff] %v6451
        %7476 = vst [vmem:[%s142 + $0x4c8] sm:$0xff] %v6452
        %7477 = vst [vmem:[%s142 + $0x4d0] sm:$0xff] %v6453
        %7478 = vst [vmem:[%s142 + $0x4d8] sm:$0xff] %v6454
        %7479 = vst [vmem:[%s142 + $0x4e0] sm:$0xff] %v6455
        %7480 = vst [vmem:[%s142 + $0x4e8] sm:$0xff] %v6456
        %7481 = vst [vmem:[%s142 + $0x4f0] sm:$0xff] %v6457
        %7482 = vst [vmem:[%s142 + $0x4f8] sm:$0xff] %v6458
        %7483 = vst [vmem:[%s142 + $0x500] sm:$0xff] %v6459
        %7484 = vst [vmem:[%s142 + $0x508] sm:$0xff] %v6460
        %7485 = vst [vmem:[%s142 + $0x510] sm:$0xff] %v6461
        %7486 = vst [vmem:[%s142 + $0x518] sm:$0xff] %v6462
        %7487 = vst [vmem:[%s142 + $0x520] sm:$0xff] %v6463
        %7488 = vst [vmem:[%s142 + $0x528] sm:$0xff] %v6464
        %7489 = vst [vmem:[%s142 + $0x530] sm:$0xff] %v6465
        %7490 = vst [vmem:[%s142 + $0x538] sm:$0xff] %v6466
        %7491 = vst [vmem:[%s142 + $0x540] sm:$0xff] %v6467
        %7492 = vst [vmem:[%s142 + $0x548] sm:$0xff] %v6468
        %7493 = vst [vmem:[%s142 + $0x550] sm:$0xff] %v6469
        %7494 = vst [vmem:[%s142 + $0x558] sm:$0xff] %v6470
        %7495 = vst [vmem:[%s142 + $0x560] sm:$0xff] %v6471
        %7496 = vst [vmem:[%s142 + $0x568] sm:$0xff] %v6472
        %7497 = vst [vmem:[%s142 + $0x570] sm:$0xff] %v6473
        %7498 = vst [vmem:[%s142 + $0x578] sm:$0xff] %v6474
        %7499 = vst [vmem:[%s142 + $0x580] sm:$0xff] %v6475
        %7500 = vst [vmem:[%s142 + $0x588] sm:$0xff] %v6476
        %7501 = vst [vmem:[%s142 + $0x590] sm:$0xff] %v6477
        %7502 = vst [vmem:[%s142 + $0x598] sm:$0xff] %v6478
        %7503 = vst [vmem:[%s142 + $0x5a0] sm:$0xff] %v6479
        %7504 = vst [vmem:[%s142 + $0x5a8] sm:$0xff] %v6480
        %7505 = vst [vmem:[%s142 + $0x5b0] sm:$0xff] %v6481
        %7506 = vst [vmem:[%s142 + $0x5b8] sm:$0xff] %v6482
        %7507 = vst [vmem:[%s142 + $0x5c0] sm:$0xff] %v6483
        %7508 = vst [vmem:[%s142 + $0x5c8] sm:$0xff] %v6484
        %7509 = vst [vmem:[%s142 + $0x5d0] sm:$0xff] %v6485
        %7510 = vst [vmem:[%s142 + $0x5d8] sm:$0xff] %v6486
        %7511 = vst [vmem:[%s142 + $0x5e0] sm:$0xff] %v6487
        %7512 = vst [vmem:[%s142 + $0x5e8] sm:$0xff] %v6488
        %7513 = vst [vmem:[%s142 + $0x5f0] sm:$0xff] %v6489
        %7514 = vst [vmem:[%s142 + $0x5f8] sm:$0xff] %v6490
        %7515 = vst [vmem:[%s142 + $0x600] sm:$0xff] %v6491
        %7516 = vst [vmem:[%s142 + $0x608] sm:$0xff] %v6492
        %7517 = vst [vmem:[%s142 + $0x610] sm:$0xff] %v6493
        %7518 = vst [vmem:[%s142 + $0x618] sm:$0xff] %v6494
        %7519 = vst [vmem:[%s142 + $0x620] sm:$0xff] %v6495
        %7520 = vst [vmem:[%s142 + $0x628] sm:$0xff] %v6496
        %7521 = vst [vmem:[%s142 + $0x630] sm:$0xff] %v6497
        %7522 = vst [vmem:[%s142 + $0x638] sm:$0xff] %v6498
        %7523 = vst [vmem:[%s142 + $0x640] sm:$0xff] %v6499
        %7524 = vst [vmem:[%s142 + $0x648] sm:$0xff] %v6500
        %7525 = vst [vmem:[%s142 + $0x650] sm:$0xff] %v6501
        %7526 = vst [vmem:[%s142 + $0x658] sm:$0xff] %v6502
        %7527 = vst [vmem:[%s142 + $0x660] sm:$0xff] %v6503
        %7528 = vst [vmem:[%s142 + $0x668] sm:$0xff] %v6504
        %7529 = vst [vmem:[%s142 + $0x670] sm:$0xff] %v6505
        %7530 = vst [vmem:[%s142 + $0x678] sm:$0xff] %v6506
        %7531 = vst [vmem:[%s142 + $0x680] sm:$0xff] %v6507
        %7532 = vst [vmem:[%s142 + $0x688] sm:$0xff] %v6508
        %7533 = vst [vmem:[%s142 + $0x690] sm:$0xff] %v6509
        %7534 = vst [vmem:[%s142 + $0x698] sm:$0xff] %v6510
        %7535 = vst [vmem:[%s142 + $0x6a0] sm:$0xff] %v6511
        %7536 = vst [vmem:[%s142 + $0x6a8] sm:$0xff] %v6512
        %7537 = vst [vmem:[%s142 + $0x6b0] sm:$0xff] %v6513
        %7538 = vst [vmem:[%s142 + $0x6b8] sm:$0xff] %v6514
        %7539 = vst [vmem:[%s142 + $0x6c0] sm:$0xff] %v6515
        %7540 = vst [vmem:[%s142 + $0x6c8] sm:$0xff] %v6516
        %7541 = vst [vmem:[%s142 + $0x6d0] sm:$0xff] %v6517
        %7542 = vst [vmem:[%s142 + $0x6d8] sm:$0xff] %v6518
        %7543 = vst [vmem:[%s142 + $0x6e0] sm:$0xff] %v6519
        %7544 = vst [vmem:[%s142 + $0x6e8] sm:$0xff] %v6520
        %7545 = vst [vmem:[%s142 + $0x6f0] sm:$0xff] %v6521
        %7546 = vst [vmem:[%s142 + $0x6f8] sm:$0xff] %v6522
        %7547 = vst [vmem:[%s142 + $0x700] sm:$0xff] %v6523
        %7548 = vst [vmem:[%s142 + $0x708] sm:$0xff] %v6524
        %7549 = vst [vmem:[%s142 + $0x710] sm:$0xff] %v6525
        %7550 = vst [vmem:[%s142 + $0x718] sm:$0xff] %v6526
        %7551 = vst [vmem:[%s142 + $0x720] sm:$0xff] %v6527
        %7552 = vst [vmem:[%s142 + $0x728] sm:$0xff] %v6528
        %7553 = vst [vmem:[%s142 + $0x730] sm:$0xff] %v6529
        %7554 = vst [vmem:[%s142 + $0x738] sm:$0xff] %v6530
        %7555 = vst [vmem:[%s142 + $0x740] sm:$0xff] %v6531
        %7556 = vst [vmem:[%s142 + $0x748] sm:$0xff] %v6532
        %7557 = vst [vmem:[%s142 + $0x750] sm:$0xff] %v6533
        %7558 = vst [vmem:[%s142 + $0x758] sm:$0xff] %v6534
        %7559 = vst [vmem:[%s142 + $0x760] sm:$0xff] %v6535
        %7560 = vst [vmem:[%s142 + $0x768] sm:$0xff] %v6536
        %7561 = vst [vmem:[%s142 + $0x770] sm:$0xff] %v6537
        %7562 = vst [vmem:[%s142 + $0x778] sm:$0xff] %v6538
        %7563 = vst [vmem:[%s142 + $0x780] sm:$0xff] %v6539
        %7564 = vst [vmem:[%s142 + $0x788] sm:$0xff] %v6540
        %7565 = vst [vmem:[%s142 + $0x790] sm:$0xff] %v6541
        %7566 = vst [vmem:[%s142 + $0x798] sm:$0xff] %v6542
        %7567 = vst [vmem:[%s142 + $0x7a0] sm:$0xff] %v6543
        %7568 = vst [vmem:[%s142 + $0x7a8] sm:$0xff] %v6544
        %7569 = vst [vmem:[%s142 + $0x7b0] sm:$0xff] %v6545
        %7570 = vst [vmem:[%s142 + $0x7b8] sm:$0xff] %v6546
        %7571 = vst [vmem:[%s142 + $0x7c0] sm:$0xff] %v6547
        %7572 = vst [vmem:[%s142 + $0x7c8] sm:$0xff] %v6548
        %7573 = vst [vmem:[%s142 + $0x7d0] sm:$0xff] %v6549
        %7574 = vst [vmem:[%s142 + $0x7d8] sm:$0xff] %v6550
        %7575 = vst [vmem:[%s142 + $0x7e0] sm:$0xff] %v6551
        %7576 = vst [vmem:[%s142 + $0x7e8] sm:$0xff] %v6552
        %7577 = vst [vmem:[%s142 + $0x7f0] sm:$0xff] %v6553
        %7578 = vst [vmem:[%s142 + $0x7f8] sm:$0xff] %v6554
        %7579 = vst [vmem:[%s142 + $0x800] sm:$0xff] %v6555
        %7580 = vst [vmem:[%s142 + $0x808] sm:$0xff] %v6556
        %7581 = vst [vmem:[%s142 + $0x810] sm:$0xff] %v6557
        %7582 = vst [vmem:[%s142 + $0x818] sm:$0xff] %v6558
        %7583 = vst [vmem:[%s142 + $0x820] sm:$0xff] %v6559
        %7584 = vst [vmem:[%s142 + $0x828] sm:$0xff] %v6560
        %7585 = vst [vmem:[%s142 + $0x830] sm:$0xff] %v6561
        %7586 = vst [vmem:[%s142 + $0x838] sm:$0xff] %v6562
        %7587 = vst [vmem:[%s142 + $0x840] sm:$0xff] %v6563
        %7588 = vst [vmem:[%s142 + $0x848] sm:$0xff] %v6564
        %7589 = vst [vmem:[%s142 + $0x850] sm:$0xff] %v6565
        %7590 = vst [vmem:[%s142 + $0x858] sm:$0xff] %v6566
        %7591 = vst [vmem:[%s142 + $0x860] sm:$0xff] %v6567
        %7592 = vst [vmem:[%s142 + $0x868] sm:$0xff] %v6568
        %7593 = vst [vmem:[%s142 + $0x870] sm:$0xff] %v6569
        %7594 = vst [vmem:[%s142 + $0x878] sm:$0xff] %v6570
        %7595 = vst [vmem:[%s142 + $0x880] sm:$0xff] %v6571
        %7596 = vst [vmem:[%s142 + $0x888] sm:$0xff] %v6572
        %7597 = vst [vmem:[%s142 + $0x890] sm:$0xff] %v6573
        %7598 = vst [vmem:[%s142 + $0x898] sm:$0xff] %v6574
        %7599 = vst [vmem:[%s142 + $0x8a0] sm:$0xff] %v6575
        %7600 = vst [vmem:[%s142 + $0x8a8] sm:$0xff] %v6576
        %7601 = vst [vmem:[%s142 + $0x8b0] sm:$0xff] %v6577
        %7602 = vst [vmem:[%s142 + $0x8b8] sm:$0xff] %v6578
        %7603 = vst [vmem:[%s142 + $0x8c0] sm:$0xff] %v6579
        %7604 = vst [vmem:[%s142 + $0x8c8] sm:$0xff] %v6580
        %7605 = vst [vmem:[%s142 + $0x8d0] sm:$0xff] %v6581
        %7606 = vst [vmem:[%s142 + $0x8d8] sm:$0xff] %v6582
        %7607 = vst [vmem:[%s142 + $0x8e0] sm:$0xff] %v6583
        %7608 = vst [vmem:[%s142 + $0x8e8] sm:$0xff] %v6584
        %7609 = vst [vmem:[%s142 + $0x8f0] sm:$0xff] %v6585
        %7610 = vst [vmem:[%s142 + $0x8f8] sm:$0xff] %v6586
        %7611 = vst [vmem:[%s142 + $0x900] sm:$0xff] %v6587
        %7612 = vst [vmem:[%s142 + $0x908] sm:$0xff] %v6588
        %7613 = vst [vmem:[%s142 + $0x910] sm:$0xff] %v6589
        %7614 = vst [vmem:[%s142 + $0x918] sm:$0xff] %v6590
        %7615 = vst [vmem:[%s142 + $0x920] sm:$0xff] %v6591
        %7616 = vst [vmem:[%s142 + $0x928] sm:$0xff] %v6592
        %7617 = vst [vmem:[%s142 + $0x930] sm:$0xff] %v6593
        %7618 = vst [vmem:[%s142 + $0x938] sm:$0xff] %v6594
        %7619 = vst [vmem:[%s142 + $0x940] sm:$0xff] %v6595
        %7620 = vst [vmem:[%s142 + $0x948] sm:$0xff] %v6596
        %7621 = vst [vmem:[%s142 + $0x950] sm:$0xff] %v6597
        %7622 = vst [vmem:[%s142 + $0x958] sm:$0xff] %v6598
        %7623 = vst [vmem:[%s142 + $0x960] sm:$0xff] %v6599
        %7624 = vst [vmem:[%s142 + $0x968] sm:$0xff] %v6600
        %7625 = vst [vmem:[%s142 + $0x970] sm:$0xff] %v6601
        %7626 = vst [vmem:[%s142 + $0x978] sm:$0xff] %v6602
        %7627 = vst [vmem:[%s142 + $0x980] sm:$0xff] %v6603
        %7628 = vst [vmem:[%s142 + $0x988] sm:$0xff] %v6604
        %7629 = vst [vmem:[%s142 + $0x990] sm:$0xff] %v6605
        %7630 = vst [vmem:[%s142 + $0x998] sm:$0xff] %v6606
        %7631 = vst [vmem:[%s142 + $0x9a0] sm:$0xff] %v6607
        %7632 = vst [vmem:[%s142 + $0x9a8] sm:$0xff] %v6608
        %7633 = vst [vmem:[%s142 + $0x9b0] sm:$0xff] %v6609
        %7634 = vst [vmem:[%s142 + $0x9b8] sm:$0xff] %v6610
        %7635 = vst [vmem:[%s142 + $0x9c0] sm:$0xff] %v6611
        %7636 = vst [vmem:[%s142 + $0x9c8] sm:$0xff] %v6612
        %7637 = vst [vmem:[%s142 + $0x9d0] sm:$0xff] %v6613
        %7638 = vst [vmem:[%s142 + $0x9d8] sm:$0xff] %v6614
        %7639 = vst [vmem:[%s142 + $0x9e0] sm:$0xff] %v6615
        %7640 = vst [vmem:[%s142 + $0x9e8] sm:$0xff] %v6616
        %7641 = vst [vmem:[%s142 + $0x9f0] sm:$0xff] %v6617
        %7642 = vst [vmem:[%s142 + $0x9f8] sm:$0xff] %v6618
        %7643 = vst [vmem:[%s142 + $0xa00] sm:$0xff] %v6619
        %7644 = vst [vmem:[%s142 + $0xa08] sm:$0xff] %v6620
        %7645 = vst [vmem:[%s142 + $0xa10] sm:$0xff] %v6621
        %7646 = vst [vmem:[%s142 + $0xa18] sm:$0xff] %v6622
        %7647 = vst [vmem:[%s142 + $0xa20] sm:$0xff] %v6623
        %7648 = vst [vmem:[%s142 + $0xa28] sm:$0xff] %v6624
        %7649 = vst [vmem:[%s142 + $0xa30] sm:$0xff] %v6625
        %7650 = vst [vmem:[%s142 + $0xa38] sm:$0xff] %v6626
        %7651 = vst [vmem:[%s142 + $0xa40] sm:$0xff] %v6627
        %7652 = vst [vmem:[%s142 + $0xa48] sm:$0xff] %v6628
        %7653 = vst [vmem:[%s142 + $0xa50] sm:$0xff] %v6629
        %7654 = vst [vmem:[%s142 + $0xa58] sm:$0xff] %v6630
        %7655 = vst [vmem:[%s142 + $0xa60] sm:$0xff] %v6631
        %7656 = vst [vmem:[%s142 + $0xa68] sm:$0xff] %v6632
        %7657 = vst [vmem:[%s142 + $0xa70] sm:$0xff] %v6633
        %7658 = vst [vmem:[%s142 + $0xa78] sm:$0xff] %v6634
        %7659 = vst [vmem:[%s142 + $0xa80] sm:$0xff] %v6635
        %7660 = vst [vmem:[%s142 + $0xa88] sm:$0xff] %v6636
        %7661 = vst [vmem:[%s142 + $0xa90] sm:$0xff] %v6637
        %7662 = vst [vmem:[%s142 + $0xa98] sm:$0xff] %v6638
        %7663 = vst [vmem:[%s142 + $0xaa0] sm:$0xff] %v6639
        %7664 = vst [vmem:[%s142 + $0xaa8] sm:$0xff] %v6640
        %7665 = vst [vmem:[%s142 + $0xab0] sm:$0xff] %v6641
        %7666 = vst [vmem:[%s142 + $0xab8] sm:$0xff] %v6642
        %7667 = vst [vmem:[%s142 + $0xac0] sm:$0xff] %v6643
        %7668 = vst [vmem:[%s142 + $0xac8] sm:$0xff] %v6644
        %7669 = vst [vmem:[%s142 + $0xad0] sm:$0xff] %v6645
        %7670 = vst [vmem:[%s142 + $0xad8] sm:$0xff] %v6646
        %7671 = vst [vmem:[%s142 + $0xae0] sm:$0xff] %v6647
        %7672 = vst [vmem:[%s142 + $0xae8] sm:$0xff] %v6648
        %7673 = vst [vmem:[%s142 + $0xaf0] sm:$0xff] %v6649
        %7674 = vst [vmem:[%s142 + $0xaf8] sm:$0xff] %v6650
        %7675 = vst [vmem:[%s142 + $0xb00] sm:$0xff] %v6651
        %7676 = vst [vmem:[%s142 + $0xb08] sm:$0xff] %v6652
        %7677 = vst [vmem:[%s142 + $0xb10] sm:$0xff] %v6653
        %7678 = vst [vmem:[%s142 + $0xb18] sm:$0xff] %v6654
        %7679 = vst [vmem:[%s142 + $0xb20] sm:$0xff] %v6655
        %7680 = vst [vmem:[%s142 + $0xb28] sm:$0xff] %v6656
        %7681 = vst [vmem:[%s142 + $0xb30] sm:$0xff] %v6657
        %7682 = vst [vmem:[%s142 + $0xb38] sm:$0xff] %v6658
        %7683 = vst [vmem:[%s142 + $0xb40] sm:$0xff] %v6659
        %7684 = vst [vmem:[%s142 + $0xb48] sm:$0xff] %v6660
        %7685 = vst [vmem:[%s142 + $0xb50] sm:$0xff] %v6661
        %7686 = vst [vmem:[%s142 + $0xb58] sm:$0xff] %v6662
        %7687 = vst [vmem:[%s142 + $0xb60] sm:$0xff] %v6663
        %7688 = vst [vmem:[%s142 + $0xb68] sm:$0xff] %v6664
        %7689 = vst [vmem:[%s142 + $0xb70] sm:$0xff] %v6665
        %7690 = vst [vmem:[%s142 + $0xb78] sm:$0xff] %v6666
        %7691 = vst [vmem:[%s142 + $0xb80] sm:$0xff] %v6667
        %7692 = vst [vmem:[%s142 + $0xb88] sm:$0xff] %v6668
        %7693 = vst [vmem:[%s142 + $0xb90] sm:$0xff] %v6669
        %7694 = vst [vmem:[%s142 + $0xb98] sm:$0xff] %v6670
        %7695 = vst [vmem:[%s142 + $0xba0] sm:$0xff] %v6671
        %7696 = vst [vmem:[%s142 + $0xba8] sm:$0xff] %v6672
        %7697 = vst [vmem:[%s142 + $0xbb0] sm:$0xff] %v6673
        %7698 = vst [vmem:[%s142 + $0xbb8] sm:$0xff] %v6674
        %7699 = vst [vmem:[%s142 + $0xbc0] sm:$0xff] %v6675
        %7700 = vst [vmem:[%s142 + $0xbc8] sm:$0xff] %v6676
        %7701 = vst [vmem:[%s142 + $0xbd0] sm:$0xff] %v6677
        %7702 = vst [vmem:[%s142 + $0xbd8] sm:$0xff] %v6678
        %7703 = vst [vmem:[%s142 + $0xbe0] sm:$0xff] %v6679
        %7704 = vst [vmem:[%s142 + $0xbe8] sm:$0xff] %v6680
        %7705 = vst [vmem:[%s142 + $0xbf0] sm:$0xff] %v6681
        %7706 = vst [vmem:[%s142 + $0xbf8] sm:$0xff] %v6682
        %7707 = vst [vmem:[%s142 + $0xc00] sm:$0xff] %v6683
        %7708 = vst [vmem:[%s142 + $0xc08] sm:$0xff] %v6684
        %7709 = vst [vmem:[%s142 + $0xc10] sm:$0xff] %v6685
        %7710 = vst [vmem:[%s142 + $0xc18] sm:$0xff] %v6686
        %7711 = vst [vmem:[%s142 + $0xc20] sm:$0xff] %v6687
        %7712 = vst [vmem:[%s142 + $0xc28] sm:$0xff] %v6688
        %7713 = vst [vmem:[%s142 + $0xc30] sm:$0xff] %v6689
        %7714 = vst [vmem:[%s142 + $0xc38] sm:$0xff] %v6690
        %7715 = vst [vmem:[%s142 + $0xc40] sm:$0xff] %v6691
        %7716 = vst [vmem:[%s142 + $0xc48] sm:$0xff] %v6692
        %7717 = vst [vmem:[%s142 + $0xc50] sm:$0xff] %v6693
        %7718 = vst [vmem:[%s142 + $0xc58] sm:$0xff] %v6694
        %7719 = vst [vmem:[%s142 + $0xc60] sm:$0xff] %v6695
        %7720 = vst [vmem:[%s142 + $0xc68] sm:$0xff] %v6696
        %7721 = vst [vmem:[%s142 + $0xc70] sm:$0xff] %v6697
        %7722 = vst [vmem:[%s142 + $0xc78] sm:$0xff] %v6698
        %7723 = vst [vmem:[%s142 + $0xc80] sm:$0xff] %v6699
        %7724 = vst [vmem:[%s142 + $0xc88] sm:$0xff] %v6700
        %7725 = vst [vmem:[%s142 + $0xc90] sm:$0xff] %v6701
        %7726 = vst [vmem:[%s142 + $0xc98] sm:$0xff] %v6702
        %7727 = vst [vmem:[%s142 + $0xca0] sm:$0xff] %v6703
        %7728 = vst [vmem:[%s142 + $0xca8] sm:$0xff] %v6704
        %7729 = vst [vmem:[%s142 + $0xcb0] sm:$0xff] %v6705
        %7730 = vst [vmem:[%s142 + $0xcb8] sm:$0xff] %v6706
        %7731 = vst [vmem:[%s142 + $0xcc0] sm:$0xff] %v6707
        %7732 = vst [vmem:[%s142 + $0xcc8] sm:$0xff] %v6708
        %7733 = vst [vmem:[%s142 + $0xcd0] sm:$0xff] %v6709
        %7734 = vst [vmem:[%s142 + $0xcd8] sm:$0xff] %v6710
        %7735 = vst [vmem:[%s142 + $0xce0] sm:$0xff] %v6711
        %7736 = vst [vmem:[%s142 + $0xce8] sm:$0xff] %v6712
        %7737 = vst [vmem:[%s142 + $0xcf0] sm:$0xff] %v6713
        %7738 = vst [vmem:[%s142 + $0xcf8] sm:$0xff] %v6714
        %7739 = vst [vmem:[%s142 + $0xd00] sm:$0xff] %v6715
        %7740 = vst [vmem:[%s142 + $0xd08] sm:$0xff] %v6716
        %7741 = vst [vmem:[%s142 + $0xd10] sm:$0xff] %v6717
        %7742 = vst [vmem:[%s142 + $0xd18] sm:$0xff] %v6718
        %7743 = vst [vmem:[%s142 + $0xd20] sm:$0xff] %v6719
        %7744 = vst [vmem:[%s142 + $0xd28] sm:$0xff] %v6720
        %7745 = vst [vmem:[%s142 + $0xd30] sm:$0xff] %v6721
        %7746 = vst [vmem:[%s142 + $0xd38] sm:$0xff] %v6722
        %7747 = vst [vmem:[%s142 + $0xd40] sm:$0xff] %v6723
        %7748 = vst [vmem:[%s142 + $0xd48] sm:$0xff] %v6724
        %7749 = vst [vmem:[%s142 + $0xd50] sm:$0xff] %v6725
        %7750 = vst [vmem:[%s142 + $0xd58] sm:$0xff] %v6726
        %7751 = vst [vmem:[%s142 + $0xd60] sm:$0xff] %v6727
        %7752 = vst [vmem:[%s142 + $0xd68] sm:$0xff] %v6728
        %7753 = vst [vmem:[%s142 + $0xd70] sm:$0xff] %v6729
        %7754 = vst [vmem:[%s142 + $0xd78] sm:$0xff] %v6730
        %7755 = vst [vmem:[%s142 + $0xd80] sm:$0xff] %v6731
        %7756 = vst [vmem:[%s142 + $0xd88] sm:$0xff] %v6732
        %7757 = vst [vmem:[%s142 + $0xd90] sm:$0xff] %v6733
        %7758 = vst [vmem:[%s142 + $0xd98] sm:$0xff] %v6734
        %7759 = vst [vmem:[%s142 + $0xda0] sm:$0xff] %v6735
        %7760 = vst [vmem:[%s142 + $0xda8] sm:$0xff] %v6736
        %7761 = vst [vmem:[%s142 + $0xdb0] sm:$0xff] %v6737
        %7762 = vst [vmem:[%s142 + $0xdb8] sm:$0xff] %v6738
        %7763 = vst [vmem:[%s142 + $0xdc0] sm:$0xff] %v6739
        %7764 = vst [vmem:[%s142 + $0xdc8] sm:$0xff] %v6740
        %7765 = vst [vmem:[%s142 + $0xdd0] sm:$0xff] %v6741
        %7766 = vst [vmem:[%s142 + $0xdd8] sm:$0xff] %v6742
        %7767 = vst [vmem:[%s142 + $0xde0] sm:$0xff] %v6743
        %7768 = vst [vmem:[%s142 + $0xde8] sm:$0xff] %v6744
        %7769 = vst [vmem:[%s142 + $0xdf0] sm:$0xff] %v6745
        %7770 = vst [vmem:[%s142 + $0xdf8] sm:$0xff] %v6746
        %7771 = vst [vmem:[%s142 + $0xe00] sm:$0xff] %v6747
        %7772 = vst [vmem:[%s142 + $0xe08] sm:$0xff] %v6748
        %7773 = vst [vmem:[%s142 + $0xe10] sm:$0xff] %v6749
        %7774 = vst [vmem:[%s142 + $0xe18] sm:$0xff] %v6750
        %7775 = vst [vmem:[%s142 + $0xe20] sm:$0xff] %v6751
        %7776 = vst [vmem:[%s142 + $0xe28] sm:$0xff] %v6752
        %7777 = vst [vmem:[%s142 + $0xe30] sm:$0xff] %v6753
        %7778 = vst [vmem:[%s142 + $0xe38] sm:$0xff] %v6754
        %7779 = vst [vmem:[%s142 + $0xe40] sm:$0xff] %v6755
        %7780 = vst [vmem:[%s142 + $0xe48] sm:$0xff] %v6756
        %7781 = vst [vmem:[%s142 + $0xe50] sm:$0xff] %v6757
        %7782 = vst [vmem:[%s142 + $0xe58] sm:$0xff] %v6758
        %7783 = vst [vmem:[%s142 + $0xe60] sm:$0xff] %v6759
        %7784 = vst [vmem:[%s142 + $0xe68] sm:$0xff] %v6760
        %7785 = vst [vmem:[%s142 + $0xe70] sm:$0xff] %v6761
        %7786 = vst [vmem:[%s142 + $0xe78] sm:$0xff] %v6762
        %7787 = vst [vmem:[%s142 + $0xe80] sm:$0xff] %v6763
        %7788 = vst [vmem:[%s142 + $0xe88] sm:$0xff] %v6764
        %7789 = vst [vmem:[%s142 + $0xe90] sm:$0xff] %v6765
        %7790 = vst [vmem:[%s142 + $0xe98] sm:$0xff] %v6766
        %7791 = vst [vmem:[%s142 + $0xea0] sm:$0xff] %v6767
        %7792 = vst [vmem:[%s142 + $0xea8] sm:$0xff] %v6768
        %7793 = vst [vmem:[%s142 + $0xeb0] sm:$0xff] %v6769
        %7794 = vst [vmem:[%s142 + $0xeb8] sm:$0xff] %v6770
        %7795 = vst [vmem:[%s142 + $0xec0] sm:$0xff] %v6771
        %7796 = vst [vmem:[%s142 + $0xec8] sm:$0xff] %v6772
        %7797 = vst [vmem:[%s142 + $0xed0] sm:$0xff] %v6773
        %7798 = vst [vmem:[%s142 + $0xed8] sm:$0xff] %v6774
        %7799 = vst [vmem:[%s142 + $0xee0] sm:$0xff] %v6775
        %7800 = vst [vmem:[%s142 + $0xee8] sm:$0xff] %v6776
        %7801 = vst [vmem:[%s142 + $0xef0] sm:$0xff] %v6777
        %7802 = vst [vmem:[%s142 + $0xef8] sm:$0xff] %v6778
        %7803 = vst [vmem:[%s142 + $0xf00] sm:$0xff] %v6779
        %7804 = vst [vmem:[%s142 + $0xf08] sm:$0xff] %v6780
        %7805 = vst [vmem:[%s142 + $0xf10] sm:$0xff] %v6781
        %7806 = vst [vmem:[%s142 + $0xf18] sm:$0xff] %v6782
        %7807 = vst [vmem:[%s142 + $0xf20] sm:$0xff] %v6783
        %7808 = vst [vmem:[%s142 + $0xf28] sm:$0xff] %v6784
        %7809 = vst [vmem:[%s142 + $0xf30] sm:$0xff] %v6785
        %7810 = vst [vmem:[%s142 + $0xf38] sm:$0xff] %v6786
        %7811 = vst [vmem:[%s142 + $0xf40] sm:$0xff] %v6787
        %7812 = vst [vmem:[%s142 + $0xf48] sm:$0xff] %v6788
        %7813 = vst [vmem:[%s142 + $0xf50] sm:$0xff] %v6789
        %7814 = vst [vmem:[%s142 + $0xf58] sm:$0xff] %v6790
        %7815 = vst [vmem:[%s142 + $0xf60] sm:$0xff] %v6791
        %7816 = vst [vmem:[%s142 + $0xf68] sm:$0xff] %v6792
        %7817 = vst [vmem:[%s142 + $0xf70] sm:$0xff] %v6793
        %7818 = vst [vmem:[%s142 + $0xf78] sm:$0xff] %v6794
        %7819 = vst [vmem:[%s142 + $0xf80] sm:$0xff] %v6795
        %7820 = vst [vmem:[%s142 + $0xf88] sm:$0xff] %v6796
        %7821 = vst [vmem:[%s142 + $0xf90] sm:$0xff] %v6797
        %7822 = vst [vmem:[%s142 + $0xf98] sm:$0xff] %v6798
        %7823 = vst [vmem:[%s142 + $0xfa0] sm:$0xff] %v6799
        %7824 = vst [vmem:[%s142 + $0xfa8] sm:$0xff] %v6800
        %7825 = vst [vmem:[%s142 + $0xfb0] sm:$0xff] %v6801
        %7826 = vst [vmem:[%s142 + $0xfb8] sm:$0xff] %v6802
        %7827 = vst [vmem:[%s142 + $0xfc0] sm:$0xff] %v6803
        %7828 = vst [vmem:[%s142 + $0xfc8] sm:$0xff] %v6804
        %7829 = vst [vmem:[%s142 + $0xfd0] sm:$0xff] %v6805
        %7830 = vst [vmem:[%s142 + $0xfd8] sm:$0xff] %v6806
        %7831 = vst [vmem:[%s142 + $0xfe0] sm:$0xff] %v6807
        %7832 = vst [vmem:[%s142 + $0xfe8] sm:$0xff] %v6808
        %7833 = vst [vmem:[%s142 + $0xff0] sm:$0xff] %v6809
        %7834 = vst [vmem:[%s142 + $0xff8] sm:$0xff] %v6810
        %7835 = vst [vmem:[%s142 + $0x1000] sm:$0xff] %v6811
        %7836 = vst [vmem:[%s142 + $0x1008] sm:$0xff] %v6812
        %7837 = vst [vmem:[%s142 + $0x1010] sm:$0xff] %v6813
        %7838 = vst [vmem:[%s142 + $0x1018] sm:$0xff] %v6814
        %7839 = vst [vmem:[%s142 + $0x1020] sm:$0xff] %v6815
        %7840 = vst [vmem:[%s142 + $0x1028] sm:$0xff] %v6816
        %7841 = vst [vmem:[%s142 + $0x1030] sm:$0xff] %v6817
        %7842 = vst [vmem:[%s142 + $0x1038] sm:$0xff] %v6818
        %7843 = vst [vmem:[%s142 + $0x1040] sm:$0xff] %v6819
        %7844 = vst [vmem:[%s142 + $0x1048] sm:$0xff] %v6820
        %7845 = vst [vmem:[%s142 + $0x1050] sm:$0xff] %v6821
        %7846 = vst [vmem:[%s142 + $0x1058] sm:$0xff] %v6822
        %7847 = vst [vmem:[%s142 + $0x1060] sm:$0xff] %v6823
        %7848 = vst [vmem:[%s142 + $0x1068] sm:$0xff] %v6824
        %7849 = vst [vmem:[%s142 + $0x1070] sm:$0xff] %v6825
        %7850 = vst [vmem:[%s142 + $0x1078] sm:$0xff] %v6826
        %7851 = vst [vmem:[%s142 + $0x1080] sm:$0xff] %v6827
        %7852 = vst [vmem:[%s142 + $0x1088] sm:$0xff] %v6828
        %7853 = vst [vmem:[%s142 + $0x1090] sm:$0xff] %v6829
        %7854 = vst [vmem:[%s142 + $0x1098] sm:$0xff] %v6830
        %7855 = vst [vmem:[%s142 + $0x10a0] sm:$0xff] %v6831
        %7856 = vst [vmem:[%s142 + $0x10a8] sm:$0xff] %v6832
        %7857 = vst [vmem:[%s142 + $0x10b0] sm:$0xff] %v6833
        %7858 = vst [vmem:[%s142 + $0x10b8] sm:$0xff] %v6834
        %7859 = vst [vmem:[%s142 + $0x10c0] sm:$0xff] %v6835
        %7860 = vst [vmem:[%s142 + $0x10c8] sm:$0xff] %v6836
        %7861 = vst [vmem:[%s142 + $0x10d0] sm:$0xff] %v6837
        %7862 = vst [vmem:[%s142 + $0x10d8] sm:$0xff] %v6838
        %7863 = vst [vmem:[%s142 + $0x10e0] sm:$0xff] %v6839
        %7864 = vst [vmem:[%s142 + $0x10e8] sm:$0xff] %v6840
        %7865 = vst [vmem:[%s142 + $0x10f0] sm:$0xff] %v6841
        %7866 = vst [vmem:[%s142 + $0x10f8] sm:$0xff] %v6842
        %7867 = vst [vmem:[%s142 + $0x1100] sm:$0xff] %v6843
        %7868 = vst [vmem:[%s142 + $0x1108] sm:$0xff] %v6844
        %7869 = vst [vmem:[%s142 + $0x1110] sm:$0xff] %v6845
        %7870 = vst [vmem:[%s142 + $0x1118] sm:$0xff] %v6846
        %7871 = vst [vmem:[%s142 + $0x1120] sm:$0xff] %v6847
        %7872 = vst [vmem:[%s142 + $0x1128] sm:$0xff] %v6848
        %7873 = vst [vmem:[%s142 + $0x1130] sm:$0xff] %v6849
        %7874 = vst [vmem:[%s142 + $0x1138] sm:$0xff] %v6850
        %7875 = vst [vmem:[%s142 + $0x1140] sm:$0xff] %v6851
        %7876 = vst [vmem:[%s142 + $0x1148] sm:$0xff] %v6852
        %7877 = vst [vmem:[%s142 + $0x1150] sm:$0xff] %v6853
        %7878 = vst [vmem:[%s142 + $0x1158] sm:$0xff] %v6854
        %7879 = vst [vmem:[%s142 + $0x1160] sm:$0xff] %v6855
        %7880 = vst [vmem:[%s142 + $0x1168] sm:$0xff] %v6856
        %7881 = vst [vmem:[%s142 + $0x1170] sm:$0xff] %v6857
        %7882 = vst [vmem:[%s142 + $0x1178] sm:$0xff] %v6858
        %7883 = vst [vmem:[%s142 + $0x1180] sm:$0xff] %v6859
        %7884 = vst [vmem:[%s142 + $0x1188] sm:$0xff] %v6860
        %7885 = vst [vmem:[%s142 + $0x1190] sm:$0xff] %v6861
        %7886 = vst [vmem:[%s142 + $0x1198] sm:$0xff] %v6862
        %7887 = vst [vmem:[%s142 + $0x11a0] sm:$0xff] %v6863
        %7888 = vst [vmem:[%s142 + $0x11a8] sm:$0xff] %v6864
        %7889 = vst [vmem:[%s142 + $0x11b0] sm:$0xff] %v6865
        %7890 = vst [vmem:[%s142 + $0x11b8] sm:$0xff] %v6866
        %7891 = vst [vmem:[%s142 + $0x11c0] sm:$0xff] %v6867
        %7892 = vst [vmem:[%s142 + $0x11c8] sm:$0xff] %v6868
        %7893 = vst [vmem:[%s142 + $0x11d0] sm:$0xff] %v6869
        %7894 = vst [vmem:[%s142 + $0x11d8] sm:$0xff] %v6870
        %7895 = vst [vmem:[%s142 + $0x11e0] sm:$0xff] %v6871
        %7896 = vst [vmem:[%s142 + $0x11e8] sm:$0xff] %v6872
        %7897 = vst [vmem:[%s142 + $0x11f0] sm:$0xff] %v6873
        %7898 = vst [vmem:[%s142 + $0x11f8] sm:$0xff] %v6874
        %7899 = vst [vmem:[%s142 + $0x1200] sm:$0xff] %v6875
        %7900 = vst [vmem:[%s142 + $0x1208] sm:$0xff] %v6876
        %7901 = vst [vmem:[%s142 + $0x1210] sm:$0xff] %v6877
        %7902 = vst [vmem:[%s142 + $0x1218] sm:$0xff] %v6878
        %7903 = vst [vmem:[%s142 + $0x1220] sm:$0xff] %v6879
        %7904 = vst [vmem:[%s142 + $0x1228] sm:$0xff] %v6880
        %7905 = vst [vmem:[%s142 + $0x1230] sm:$0xff] %v6881
        %7906 = vst [vmem:[%s142 + $0x1238] sm:$0xff] %v6882
        %7907 = vst [vmem:[%s142 + $0x1240] sm:$0xff] %v6883
        %7908 = vst [vmem:[%s142 + $0x1248] sm:$0xff] %v6884
        %7909 = vst [vmem:[%s142 + $0x1250] sm:$0xff] %v6885
        %7910 = vst [vmem:[%s142 + $0x1258] sm:$0xff] %v6886
        %7911 = vst [vmem:[%s142 + $0x1260] sm:$0xff] %v6887
        %7912 = vst [vmem:[%s142 + $0x1268] sm:$0xff] %v6888
        %7913 = vst [vmem:[%s142 + $0x1270] sm:$0xff] %v6889
        %7914 = vst [vmem:[%s142 + $0x1278] sm:$0xff] %v6890
        %7915 = vst [vmem:[%s142 + $0x1280] sm:$0xff] %v6891
        %7916 = vst [vmem:[%s142 + $0x1288] sm:$0xff] %v6892
        %7917 = vst [vmem:[%s142 + $0x1290] sm:$0xff] %v6893
        %7918 = vst [vmem:[%s142 + $0x1298] sm:$0xff] %v6894
        %7919 = vst [vmem:[%s142 + $0x12a0] sm:$0xff] %v6895
        %7920 = vst [vmem:[%s142 + $0x12a8] sm:$0xff] %v6896
        %7921 = vst [vmem:[%s142 + $0x12b0] sm:$0xff] %v6897
        %7922 = vst [vmem:[%s142 + $0x12b8] sm:$0xff] %v6898
        %7923 = vst [vmem:[%s142 + $0x12c0] sm:$0xff] %v6899
        %7924 = vst [vmem:[%s142 + $0x12c8] sm:$0xff] %v6900
        %7925 = vst [vmem:[%s142 + $0x12d0] sm:$0xff] %v6901
        %7926 = vst [vmem:[%s142 + $0x12d8] sm:$0xff] %v6902
        %7927 = vst [vmem:[%s142 + $0x12e0] sm:$0xff] %v6903
        %7928 = vst [vmem:[%s142 + $0x12e8] sm:$0xff] %v6904
        %7929 = vst [vmem:[%s142 + $0x12f0] sm:$0xff] %v6905
        %7930 = vst [vmem:[%s142 + $0x12f8] sm:$0xff] %v6906
        %7931 = vst [vmem:[%s142 + $0x1300] sm:$0xff] %v6907
        %7932 = vst [vmem:[%s142 + $0x1308] sm:$0xff] %v6908
        %7933 = vst [vmem:[%s142 + $0x1310] sm:$0xff] %v6909
        %7934 = vst [vmem:[%s142 + $0x1318] sm:$0xff] %v6910
        %7935 = vst [vmem:[%s142 + $0x1320] sm:$0xff] %v6911
        %7936 = vst [vmem:[%s142 + $0x1328] sm:$0xff] %v6912
        %7937 = vst [vmem:[%s142 + $0x1330] sm:$0xff] %v6913
        %7938 = vst [vmem:[%s142 + $0x1338] sm:$0xff] %v6914
        %7939 = vst [vmem:[%s142 + $0x1340] sm:$0xff] %v6915
        %7940 = vst [vmem:[%s142 + $0x1348] sm:$0xff] %v6916
        %7941 = vst [vmem:[%s142 + $0x1350] sm:$0xff] %v6917
        %7942 = vst [vmem:[%s142 + $0x1358] sm:$0xff] %v6918
        %7943 = vst [vmem:[%s142 + $0x1360] sm:$0xff] %v6919
        %7944 = vst [vmem:[%s142 + $0x1368] sm:$0xff] %v6920
        %7945 = vst [vmem:[%s142 + $0x1370] sm:$0xff] %v6921
        %7946 = vst [vmem:[%s142 + $0x1378] sm:$0xff] %v6922
        %7947 = vst [vmem:[%s142 + $0x1380] sm:$0xff] %v6923
        %7948 = vst [vmem:[%s142 + $0x1388] sm:$0xff] %v6924
        %7949 = vst [vmem:[%s142 + $0x1390] sm:$0xff] %v6925
        %7950 = vst [vmem:[%s142 + $0x1398] sm:$0xff] %v6926
        %7951 = vst [vmem:[%s142 + $0x13a0] sm:$0xff] %v6927
        %7952 = vst [vmem:[%s142 + $0x13a8] sm:$0xff] %v6928
        %7953 = vst [vmem:[%s142 + $0x13b0] sm:$0xff] %v6929
        %7954 = vst [vmem:[%s142 + $0x13b8] sm:$0xff] %v6930
        %7955 = vst [vmem:[%s142 + $0x13c0] sm:$0xff] %v6931
        %7956 = vst [vmem:[%s142 + $0x13c8] sm:$0xff] %v6932
        %7957 = vst [vmem:[%s142 + $0x13d0] sm:$0xff] %v6933
        %7958 = vst [vmem:[%s142 + $0x13d8] sm:$0xff] %v6934
        %7959 = vst [vmem:[%s142 + $0x13e0] sm:$0xff] %v6935
        %7960 = vst [vmem:[%s142 + $0x13e8] sm:$0xff] %v6936
        %7961 = vst [vmem:[%s142 + $0x13f0] sm:$0xff] %v6937
        %7962 = vst [vmem:[%s142 + $0x13f8] sm:$0xff] %v6938
        %7963 = vst [vmem:[%s142 + $0x1400] sm:$0xff] %v6939
        %7964 = vst [vmem:[%s142 + $0x1408] sm:$0xff] %v6940
        %7965 = vst [vmem:[%s142 + $0x1410] sm:$0xff] %v6941
        %7966 = vst [vmem:[%s142 + $0x1418] sm:$0xff] %v6942
        %7967 = vst [vmem:[%s142 + $0x1420] sm:$0xff] %v6943
        %7968 = vst [vmem:[%s142 + $0x1428] sm:$0xff] %v6944
        %7969 = vst [vmem:[%s142 + $0x1430] sm:$0xff] %v6945
        %7970 = vst [vmem:[%s142 + $0x1438] sm:$0xff] %v6946
        %7971 = vst [vmem:[%s142 + $0x1440] sm:$0xff] %v6947
        %7972 = vst [vmem:[%s142 + $0x1448] sm:$0xff] %v6948
        %7973 = vst [vmem:[%s142 + $0x1450] sm:$0xff] %v6949
        %7974 = vst [vmem:[%s142 + $0x1458] sm:$0xff] %v6950
        %7975 = vst [vmem:[%s142 + $0x1460] sm:$0xff] %v6951
        %7976 = vst [vmem:[%s142 + $0x1468] sm:$0xff] %v6952
        %7977 = vst [vmem:[%s142 + $0x1470] sm:$0xff] %v6953
        %7978 = vst [vmem:[%s142 + $0x1478] sm:$0xff] %v6954
        %7979 = vst [vmem:[%s142 + $0x1480] sm:$0xff] %v6955
        %7980 = vst [vmem:[%s142 + $0x1488] sm:$0xff] %v6956
        %7981 = vst [vmem:[%s142 + $0x1490] sm:$0xff] %v6957
        %7982 = vst [vmem:[%s142 + $0x1498] sm:$0xff] %v6958
        %7983 = vst [vmem:[%s142 + $0x14a0] sm:$0xff] %v6959
        %7984 = vst [vmem:[%s142 + $0x14a8] sm:$0xff] %v6960
        %7985 = vst [vmem:[%s142 + $0x14b0] sm:$0xff] %v6961
        %7986 = vst [vmem:[%s142 + $0x14b8] sm:$0xff] %v6962
        %7987 = vst [vmem:[%s142 + $0x14c0] sm:$0xff] %v6963
        %7988 = vst [vmem:[%s142 + $0x14c8] sm:$0xff] %v6964
        %7989 = vst [vmem:[%s142 + $0x14d0] sm:$0xff] %v6965
        %7990 = vst [vmem:[%s142 + $0x14d8] sm:$0xff] %v6966
        %7991 = vst [vmem:[%s142 + $0x14e0] sm:$0xff] %v6967
        %7992 = vst [vmem:[%s142 + $0x14e8] sm:$0xff] %v6968
        %7993 = vst [vmem:[%s142 + $0x14f0] sm:$0xff] %v6969
        %7994 = vst [vmem:[%s142 + $0x14f8] sm:$0xff] %v6970
        %7995 = vst [vmem:[%s142 + $0x1500] sm:$0xff] %v6971
        %7996 = vst [vmem:[%s142 + $0x1508] sm:$0xff] %v6972
        %7997 = vst [vmem:[%s142 + $0x1510] sm:$0xff] %v6973
        %7998 = vst [vmem:[%s142 + $0x1518] sm:$0xff] %v6974
        %7999 = vst [vmem:[%s142 + $0x1520] sm:$0xff] %v6975
        %8000 = vst [vmem:[%s142 + $0x1528] sm:$0xff] %v6976
        %8001 = vst [vmem:[%s142 + $0x1530] sm:$0xff] %v6977
        %8002 = vst [vmem:[%s142 + $0x1538] sm:$0xff] %v6978
        %8003 = vst [vmem:[%s142 + $0x1540] sm:$0xff] %v6979
        %8004 = vst [vmem:[%s142 + $0x1548] sm:$0xff] %v6980
        %8005 = vst [vmem:[%s142 + $0x1550] sm:$0xff] %v6981
        %8006 = vst [vmem:[%s142 + $0x1558] sm:$0xff] %v6982
        %8007 = vst [vmem:[%s142 + $0x1560] sm:$0xff] %v6983
        %8008 = vst [vmem:[%s142 + $0x1568] sm:$0xff] %v6984
        %8009 = vst [vmem:[%s142 + $0x1570] sm:$0xff] %v6985
        %8010 = vst [vmem:[%s142 + $0x1578] sm:$0xff] %v6986
        %8011 = vst [vmem:[%s142 + $0x1580] sm:$0xff] %v6987
        %8012 = vst [vmem:[%s142 + $0x1588] sm:$0xff] %v6988
        %8013 = vst [vmem:[%s142 + $0x1590] sm:$0xff] %v6989
        %8014 = vst [vmem:[%s142 + $0x1598] sm:$0xff] %v6990
        %8015 = vst [vmem:[%s142 + $0x15a0] sm:$0xff] %v6991
        %8016 = vst [vmem:[%s142 + $0x15a8] sm:$0xff] %v6992
        %8017 = vst [vmem:[%s142 + $0x15b0] sm:$0xff] %v6993
        %8018 = vst [vmem:[%s142 + $0x15b8] sm:$0xff] %v6994
        %8019 = vst [vmem:[%s142 + $0x15c0] sm:$0xff] %v6995
        %8020 = vst [vmem:[%s142 + $0x15c8] sm:$0xff] %v6996
        %8021 = vst [vmem:[%s142 + $0x15d0] sm:$0xff] %v6997
        %8022 = vst [vmem:[%s142 + $0x15d8] sm:$0xff] %v6998
        %8023 = vst [vmem:[%s142 + $0x15e0] sm:$0xff] %v6999
        %8024 = vst [vmem:[%s142 + $0x15e8] sm:$0xff] %v7000
        %8025 = vst [vmem:[%s142 + $0x15f0] sm:$0xff] %v7001
        %8026 = vst [vmem:[%s142 + $0x15f8] sm:$0xff] %v7002
        %8027 = vst [vmem:[%s142 + $0x1600] sm:$0xff] %v7003
        %8028 = vst [vmem:[%s142 + $0x1608] sm:$0xff] %v7004
        %8029 = vst [vmem:[%s142 + $0x1610] sm:$0xff] %v7005
        %8030 = vst [vmem:[%s142 + $0x1618] sm:$0xff] %v7006
        %8031 = vst [vmem:[%s142 + $0x1620] sm:$0xff] %v7007
        %8032 = vst [vmem:[%s142 + $0x1628] sm:$0xff] %v7008
        %8033 = vst [vmem:[%s142 + $0x1630] sm:$0xff] %v7009
        %8034 = vst [vmem:[%s142 + $0x1638] sm:$0xff] %v7010
        %8035 = vst [vmem:[%s142 + $0x1640] sm:$0xff] %v7011
        %8036 = vst [vmem:[%s142 + $0x1648] sm:$0xff] %v7012
        %8037 = vst [vmem:[%s142 + $0x1650] sm:$0xff] %v7013
        %8038 = vst [vmem:[%s142 + $0x1658] sm:$0xff] %v7014
        %8039 = vst [vmem:[%s142 + $0x1660] sm:$0xff] %v7015
        %8040 = vst [vmem:[%s142 + $0x1668] sm:$0xff] %v7016
        %8041 = vst [vmem:[%s142 + $0x1670] sm:$0xff] %v7017
        %8042 = vst [vmem:[%s142 + $0x1678] sm:$0xff] %v7018
        %8043 = vst [vmem:[%s142 + $0x1680] sm:$0xff] %v7019
        %8044 = vst [vmem:[%s142 + $0x1688] sm:$0xff] %v7020
        %8045 = vst [vmem:[%s142 + $0x1690] sm:$0xff] %v7021
        %8046 = vst [vmem:[%s142 + $0x1698] sm:$0xff] %v7022
        %8047 = vst [vmem:[%s142 + $0x16a0] sm:$0xff] %v7023
        %8048 = vst [vmem:[%s142 + $0x16a8] sm:$0xff] %v7024
        %8049 = vst [vmem:[%s142 + $0x16b0] sm:$0xff] %v7025
        %8050 = vst [vmem:[%s142 + $0x16b8] sm:$0xff] %v7026
        %8051 = vst [vmem:[%s142 + $0x16c0] sm:$0xff] %v7027
        %8052 = vst [vmem:[%s142 + $0x16c8] sm:$0xff] %v7028
        %8053 = vst [vmem:[%s142 + $0x16d0] sm:$0xff] %v7029
        %8054 = vst [vmem:[%s142 + $0x16d8] sm:$0xff] %v7030
        %8055 = vst [vmem:[%s142 + $0x16e0] sm:$0xff] %v7031
        %8056 = vst [vmem:[%s142 + $0x16e8] sm:$0xff] %v7032
        %8057 = vst [vmem:[%s142 + $0x16f0] sm:$0xff] %v7033
        %8058 = vst [vmem:[%s142 + $0x16f8] sm:$0xff] %v7034
        %8059 = vst [vmem:[%s142 + $0x1700] sm:$0xff] %v7035
        %8060 = vst [vmem:[%s142 + $0x1708] sm:$0xff] %v7036
        %8061 = vst [vmem:[%s142 + $0x1710] sm:$0xff] %v7037
        %8062 = vst [vmem:[%s142 + $0x1718] sm:$0xff] %v7038
        %8063 = vst [vmem:[%s142 + $0x1720] sm:$0xff] %v7039
        %8064 = vst [vmem:[%s142 + $0x1728] sm:$0xff] %v7040
        %8065 = vst [vmem:[%s142 + $0x1730] sm:$0xff] %v7041
        %8066 = vst [vmem:[%s142 + $0x1738] sm:$0xff] %v7042
        %8067 = vst [vmem:[%s142 + $0x1740] sm:$0xff] %v7043
        %8068 = vst [vmem:[%s142 + $0x1748] sm:$0xff] %v7044
        %8069 = vst [vmem:[%s142 + $0x1750] sm:$0xff] %v7045
        %8070 = vst [vmem:[%s142 + $0x1758] sm:$0xff] %v7046
        %8071 = vst [vmem:[%s142 + $0x1760] sm:$0xff] %v7047
        %8072 = vst [vmem:[%s142 + $0x1768] sm:$0xff] %v7048
        %8073 = vst [vmem:[%s142 + $0x1770] sm:$0xff] %v7049
        %8074 = vst [vmem:[%s142 + $0x1778] sm:$0xff] %v7050
        %8075 = vst [vmem:[%s142 + $0x1780] sm:$0xff] %v7051
        %8076 = vst [vmem:[%s142 + $0x1788] sm:$0xff] %v7052
        %8077 = vst [vmem:[%s142 + $0x1790] sm:$0xff] %v7053
        %8078 = vst [vmem:[%s142 + $0x1798] sm:$0xff] %v7054
        %8079 = vst [vmem:[%s142 + $0x17a0] sm:$0xff] %v7055
        %8080 = vst [vmem:[%s142 + $0x17a8] sm:$0xff] %v7056
        %8081 = vst [vmem:[%s142 + $0x17b0] sm:$0xff] %v7057
        %8082 = vst [vmem:[%s142 + $0x17b8] sm:$0xff] %v7058
        %8083 = vst [vmem:[%s142 + $0x17c0] sm:$0xff] %v7059
        %8084 = vst [vmem:[%s142 + $0x17c8] sm:$0xff] %v7060
        %8085 = vst [vmem:[%s142 + $0x17d0] sm:$0xff] %v7061
        %8086 = vst [vmem:[%s142 + $0x17d8] sm:$0xff] %v7062
        %8087 = vst [vmem:[%s142 + $0x17e0] sm:$0xff] %v7063
        %8088 = vst [vmem:[%s142 + $0x17e8] sm:$0xff] %v7064
        %8089 = vst [vmem:[%s142 + $0x17f0] sm:$0xff] %v7065
        %8090 = vst [vmem:[%s142 + $0x17f8] sm:$0xff] %v7066
        %8091 = vst [vmem:[%s142 + $0x1800] sm:$0xff] %v7067
        %8092 = vst [vmem:[%s142 + $0x1808] sm:$0xff] %v7068
        %8093 = vst [vmem:[%s142 + $0x1810] sm:$0xff] %v7069
        %8094 = vst [vmem:[%s142 + $0x1818] sm:$0xff] %v7070
        %8095 = vst [vmem:[%s142 + $0x1820] sm:$0xff] %v7071
        %8096 = vst [vmem:[%s142 + $0x1828] sm:$0xff] %v7072
        %8097 = vst [vmem:[%s142 + $0x1830] sm:$0xff] %v7073
        %8098 = vst [vmem:[%s142 + $0x1838] sm:$0xff] %v7074
        %8099 = vst [vmem:[%s142 + $0x1840] sm:$0xff] %v7075
        %8100 = vst [vmem:[%s142 + $0x1848] sm:$0xff] %v7076
        %8101 = vst [vmem:[%s142 + $0x1850] sm:$0xff] %v7077
        %8102 = vst [vmem:[%s142 + $0x1858] sm:$0xff] %v7078
        %8103 = vst [vmem:[%s142 + $0x1860] sm:$0xff] %v7079
        %8104 = vst [vmem:[%s142 + $0x1868] sm:$0xff] %v7080
        %8105 = vst [vmem:[%s142 + $0x1870] sm:$0xff] %v7081
        %8106 = vst [vmem:[%s142 + $0x1878] sm:$0xff] %v7082
        %8107 = vst [vmem:[%s142 + $0x1880] sm:$0xff] %v7083
        %8108 = vst [vmem:[%s142 + $0x1888] sm:$0xff] %v7084
        %8109 = vst [vmem:[%s142 + $0x1890] sm:$0xff] %v7085
        %8110 = vst [vmem:[%s142 + $0x1898] sm:$0xff] %v7086
        %8111 = vst [vmem:[%s142 + $0x18a0] sm:$0xff] %v7087
        %8112 = vst [vmem:[%s142 + $0x18a8] sm:$0xff] %v7088
        %8113 = vst [vmem:[%s142 + $0x18b0] sm:$0xff] %v7089
        %8114 = vst [vmem:[%s142 + $0x18b8] sm:$0xff] %v7090
        %8115 = vst [vmem:[%s142 + $0x18c0] sm:$0xff] %v7091
        %8116 = vst [vmem:[%s142 + $0x18c8] sm:$0xff] %v7092
        %8117 = vst [vmem:[%s142 + $0x18d0] sm:$0xff] %v7093
        %8118 = vst [vmem:[%s142 + $0x18d8] sm:$0xff] %v7094
        %8119 = vst [vmem:[%s142 + $0x18e0] sm:$0xff] %v7095
        %8120 = vst [vmem:[%s142 + $0x18e8] sm:$0xff] %v7096
        %8121 = vst [vmem:[%s142 + $0x18f0] sm:$0xff] %v7097
        %8122 = vst [vmem:[%s142 + $0x18f8] sm:$0xff] %v7098
        %8123 = vst [vmem:[%s142 + $0x1900] sm:$0xff] %v7099
        %8124 = vst [vmem:[%s142 + $0x1908] sm:$0xff] %v7100
        %8125 = vst [vmem:[%s142 + $0x1910] sm:$0xff] %v7101
        %8126 = vst [vmem:[%s142 + $0x1918] sm:$0xff] %v7102
        %8127 = vst [vmem:[%s142 + $0x1920] sm:$0xff] %v7103
        %8128 = vst [vmem:[%s142 + $0x1928] sm:$0xff] %v7104
        %8129 = vst [vmem:[%s142 + $0x1930] sm:$0xff] %v7105
        %8130 = vst [vmem:[%s142 + $0x1938] sm:$0xff] %v7106
        %8131 = vst [vmem:[%s142 + $0x1940] sm:$0xff] %v7107
        %8132 = vst [vmem:[%s142 + $0x1948] sm:$0xff] %v7108
        %8133 = vst [vmem:[%s142 + $0x1950] sm:$0xff] %v7109
        %8134 = vst [vmem:[%s142 + $0x1958] sm:$0xff] %v7110
        %8135 = vst [vmem:[%s142 + $0x1960] sm:$0xff] %v7111
        %8136 = vst [vmem:[%s142 + $0x1968] sm:$0xff] %v7112
        %8137 = vst [vmem:[%s142 + $0x1970] sm:$0xff] %v7113
        %8138 = vst [vmem:[%s142 + $0x1978] sm:$0xff] %v7114
        %8139 = vst [vmem:[%s142 + $0x1980] sm:$0xff] %v7115
        %8140 = vst [vmem:[%s142 + $0x1988] sm:$0xff] %v7116
        %8141 = vst [vmem:[%s142 + $0x1990] sm:$0xff] %v7117
        %8142 = vst [vmem:[%s142 + $0x1998] sm:$0xff] %v7118
        %8143 = vst [vmem:[%s142 + $0x19a0] sm:$0xff] %v7119
        %8144 = vst [vmem:[%s142 + $0x19a8] sm:$0xff] %v7120
        %8145 = vst [vmem:[%s142 + $0x19b0] sm:$0xff] %v7121
        %8146 = vst [vmem:[%s142 + $0x19b8] sm:$0xff] %v7122
        %8147 = vst [vmem:[%s142 + $0x19c0] sm:$0xff] %v7123
        %8148 = vst [vmem:[%s142 + $0x19c8] sm:$0xff] %v7124
        %8149 = vst [vmem:[%s142 + $0x19d0] sm:$0xff] %v7125
        %8150 = vst [vmem:[%s142 + $0x19d8] sm:$0xff] %v7126
        %8151 = vst [vmem:[%s142 + $0x19e0] sm:$0xff] %v7127
        %8152 = vst [vmem:[%s142 + $0x19e8] sm:$0xff] %v7128
        %8153 = vst [vmem:[%s142 + $0x19f0] sm:$0xff] %v7129
        %8154 = vst [vmem:[%s142 + $0x19f8] sm:$0xff] %v7130
        %8155 = vst [vmem:[%s142 + $0x1a00] sm:$0xff] %v7131
        %8156 = vst [vmem:[%s142 + $0x1a08] sm:$0xff] %v7132
        %8157 = vst [vmem:[%s142 + $0x1a10] sm:$0xff] %v7133
        %8158 = vst [vmem:[%s142 + $0x1a18] sm:$0xff] %v7134
        %8159 = vst [vmem:[%s142 + $0x1a20] sm:$0xff] %v7135
        %8160 = vst [vmem:[%s142 + $0x1a28] sm:$0xff] %v7136
        %8161 = vst [vmem:[%s142 + $0x1a30] sm:$0xff] %v7137
        %8162 = vst [vmem:[%s142 + $0x1a38] sm:$0xff] %v7138
        %8163 = vst [vmem:[%s142 + $0x1a40] sm:$0xff] %v7139
        %8164 = vst [vmem:[%s142 + $0x1a48] sm:$0xff] %v7140
        %8165 = vst [vmem:[%s142 + $0x1a50] sm:$0xff] %v7141
        %8166 = vst [vmem:[%s142 + $0x1a58] sm:$0xff] %v7142
        %8167 = vst [vmem:[%s142 + $0x1a60] sm:$0xff] %v7143
        %8168 = vst [vmem:[%s142 + $0x1a68] sm:$0xff] %v7144
        %8169 = vst [vmem:[%s142 + $0x1a70] sm:$0xff] %v7145
        %8170 = vst [vmem:[%s142 + $0x1a78] sm:$0xff] %v7146
        %8171 = vst [vmem:[%s142 + $0x1a80] sm:$0xff] %v7147
        %8172 = vst [vmem:[%s142 + $0x1a88] sm:$0xff] %v7148
        %8173 = vst [vmem:[%s142 + $0x1a90] sm:$0xff] %v7149
        %8174 = vst [vmem:[%s142 + $0x1a98] sm:$0xff] %v7150
        %8175 = vst [vmem:[%s142 + $0x1aa0] sm:$0xff] %v7151
        %8176 = vst [vmem:[%s142 + $0x1aa8] sm:$0xff] %v7152
        %8177 = vst [vmem:[%s142 + $0x1ab0] sm:$0xff] %v7153
        %8178 = vst [vmem:[%s142 + $0x1ab8] sm:$0xff] %v7154
        %8179 = vst [vmem:[%s142 + $0x1ac0] sm:$0xff] %v7155
        %8180 = vst [vmem:[%s142 + $0x1ac8] sm:$0xff] %v7156
        %8181 = vst [vmem:[%s142 + $0x1ad0] sm:$0xff] %v7157
        %8182 = vst [vmem:[%s142 + $0x1ad8] sm:$0xff] %v7158
        %8183 = vst [vmem:[%s142 + $0x1ae0] sm:$0xff] %v7159
        %8184 = vst [vmem:[%s142 + $0x1ae8] sm:$0xff] %v7160
        %8185 = vst [vmem:[%s142 + $0x1af0] sm:$0xff] %v7161
        %8186 = vst [vmem:[%s142 + $0x1af8] sm:$0xff] %v7162
        %8187 = vst [vmem:[%s142 + $0x1b00] sm:$0xff] %v7163
        %8188 = vst [vmem:[%s142 + $0x1b08] sm:$0xff] %v7164
        %8189 = vst [vmem:[%s142 + $0x1b10] sm:$0xff] %v7165
        %8190 = vst [vmem:[%s142 + $0x1b18] sm:$0xff] %v7166
        %8191 = vst [vmem:[%s142 + $0x1b20] sm:$0xff] %v7167
        %8192 = vst [vmem:[%s142 + $0x1b28] sm:$0xff] %v7168
        %8193 = vst [vmem:[%s142 + $0x1b30] sm:$0xff] %v7169
        %8194 = vst [vmem:[%s142 + $0x1b38] sm:$0xff] %v7170
        %8195 = vst [vmem:[%s142 + $0x1b40] sm:$0xff] %v7171
        %8196 = vst [vmem:[%s142 + $0x1b48] sm:$0xff] %v7172
        %8197 = vst [vmem:[%s142 + $0x1b50] sm:$0xff] %v7173
        %8198 = vst [vmem:[%s142 + $0x1b58] sm:$0xff] %v7174
        %8199 = vst [vmem:[%s142 + $0x1b60] sm:$0xff] %v7175
        %8200 = vst [vmem:[%s142 + $0x1b68] sm:$0xff] %v7176
        %8201 = vst [vmem:[%s142 + $0x1b70] sm:$0xff] %v7177
        %8202 = vst [vmem:[%s142 + $0x1b78] sm:$0xff] %v7178
        %8203 = vst [vmem:[%s142 + $0x1b80] sm:$0xff] %v7179
        %8204 = vst [vmem:[%s142 + $0x1b88] sm:$0xff] %v7180
        %8205 = vst [vmem:[%s142 + $0x1b90] sm:$0xff] %v7181
        %8206 = vst [vmem:[%s142 + $0x1b98] sm:$0xff] %v7182
        %8207 = vst [vmem:[%s142 + $0x1ba0] sm:$0xff] %v7183
        %8208 = vst [vmem:[%s142 + $0x1ba8] sm:$0xff] %v7184
        %8209 = vst [vmem:[%s142 + $0x1bb0] sm:$0xff] %v7185
        %8210 = vst [vmem:[%s142 + $0x1bb8] sm:$0xff] %v7186
        %8211 = vst [vmem:[%s142 + $0x1bc0] sm:$0xff] %v7187
        %8212 = vst [vmem:[%s142 + $0x1bc8] sm:$0xff] %v7188
        %8213 = vst [vmem:[%s142 + $0x1bd0] sm:$0xff] %v7189
        %8214 = vst [vmem:[%s142 + $0x1bd8] sm:$0xff] %v7190
        %8215 = vst [vmem:[%s142 + $0x1be0] sm:$0xff] %v7191
        %8216 = vst [vmem:[%s142 + $0x1be8] sm:$0xff] %v7192
        %8217 = vst [vmem:[%s142 + $0x1bf0] sm:$0xff] %v7193
        %8218 = vst [vmem:[%s142 + $0x1bf8] sm:$0xff] %v7194
        %8219 = vst [vmem:[%s142 + $0x1c00] sm:$0xff] %v7195
        %8220 = vst [vmem:[%s142 + $0x1c08] sm:$0xff] %v7196
        %8221 = vst [vmem:[%s142 + $0x1c10] sm:$0xff] %v7197
        %8222 = vst [vmem:[%s142 + $0x1c18] sm:$0xff] %v7198
        %8223 = vst [vmem:[%s142 + $0x1c20] sm:$0xff] %v7199
        %8224 = vst [vmem:[%s142 + $0x1c28] sm:$0xff] %v7200
        %8225 = vst [vmem:[%s142 + $0x1c30] sm:$0xff] %v7201
        %8226 = vst [vmem:[%s142 + $0x1c38] sm:$0xff] %v7202
        %8227 = vst [vmem:[%s142 + $0x1c40] sm:$0xff] %v7203
        %8228 = vst [vmem:[%s142 + $0x1c48] sm:$0xff] %v7204
        %8229 = vst [vmem:[%s142 + $0x1c50] sm:$0xff] %v7205
        %8230 = vst [vmem:[%s142 + $0x1c58] sm:$0xff] %v7206
        %8231 = vst [vmem:[%s142 + $0x1c60] sm:$0xff] %v7207
        %8232 = vst [vmem:[%s142 + $0x1c68] sm:$0xff] %v7208
        %8233 = vst [vmem:[%s142 + $0x1c70] sm:$0xff] %v7209
        %8234 = vst [vmem:[%s142 + $0x1c78] sm:$0xff] %v7210
        %8235 = vst [vmem:[%s142 + $0x1c80] sm:$0xff] %v7211
        %8236 = vst [vmem:[%s142 + $0x1c88] sm:$0xff] %v7212
        %8237 = vst [vmem:[%s142 + $0x1c90] sm:$0xff] %v7213
        %8238 = vst [vmem:[%s142 + $0x1c98] sm:$0xff] %v7214
        %8239 = vst [vmem:[%s142 + $0x1ca0] sm:$0xff] %v7215
        %8240 = vst [vmem:[%s142 + $0x1ca8] sm:$0xff] %v7216
        %8241 = vst [vmem:[%s142 + $0x1cb0] sm:$0xff] %v7217
        %8242 = vst [vmem:[%s142 + $0x1cb8] sm:$0xff] %v7218
        %8243 = vst [vmem:[%s142 + $0x1cc0] sm:$0xff] %v7219
        %8244 = vst [vmem:[%s142 + $0x1cc8] sm:$0xff] %v7220
        %8245 = vst [vmem:[%s142 + $0x1cd0] sm:$0xff] %v7221
        %8246 = vst [vmem:[%s142 + $0x1cd8] sm:$0xff] %v7222
        %8247 = vst [vmem:[%s142 + $0x1ce0] sm:$0xff] %v7223
        %8248 = vst [vmem:[%s142 + $0x1ce8] sm:$0xff] %v7224
        %8249 = vst [vmem:[%s142 + $0x1cf0] sm:$0xff] %v7225
        %8250 = vst [vmem:[%s142 + $0x1cf8] sm:$0xff] %v7226
        %8251 = vst [vmem:[%s142 + $0x1d00] sm:$0xff] %v7227
        %8252 = vst [vmem:[%s142 + $0x1d08] sm:$0xff] %v7228
        %8253 = vst [vmem:[%s142 + $0x1d10] sm:$0xff] %v7229
        %8254 = vst [vmem:[%s142 + $0x1d18] sm:$0xff] %v7230
        %8255 = vst [vmem:[%s142 + $0x1d20] sm:$0xff] %v7231
        %8256 = vst [vmem:[%s142 + $0x1d28] sm:$0xff] %v7232
        %8257 = vst [vmem:[%s142 + $0x1d30] sm:$0xff] %v7233
        %8258 = vst [vmem:[%s142 + $0x1d38] sm:$0xff] %v7234
        %8259 = vst [vmem:[%s142 + $0x1d40] sm:$0xff] %v7235
        %8260 = vst [vmem:[%s142 + $0x1d48] sm:$0xff] %v7236
        %8261 = vst [vmem:[%s142 + $0x1d50] sm:$0xff] %v7237
        %8262 = vst [vmem:[%s142 + $0x1d58] sm:$0xff] %v7238
        %8263 = vst [vmem:[%s142 + $0x1d60] sm:$0xff] %v7239
        %8264 = vst [vmem:[%s142 + $0x1d68] sm:$0xff] %v7240
        %8265 = vst [vmem:[%s142 + $0x1d70] sm:$0xff] %v7241
        %8266 = vst [vmem:[%s142 + $0x1d78] sm:$0xff] %v7242
        %8267 = vst [vmem:[%s142 + $0x1d80] sm:$0xff] %v7243
        %8268 = vst [vmem:[%s142 + $0x1d88] sm:$0xff] %v7244
        %8269 = vst [vmem:[%s142 + $0x1d90] sm:$0xff] %v7245
        %8270 = vst [vmem:[%s142 + $0x1d98] sm:$0xff] %v7246
        %8271 = vst [vmem:[%s142 + $0x1da0] sm:$0xff] %v7247
        %8272 = vst [vmem:[%s142 + $0x1da8] sm:$0xff] %v7248
        %8273 = vst [vmem:[%s142 + $0x1db0] sm:$0xff] %v7249
        %8274 = vst [vmem:[%s142 + $0x1db8] sm:$0xff] %v7250
        %8275 = vst [vmem:[%s142 + $0x1dc0] sm:$0xff] %v7251
        %8276 = vst [vmem:[%s142 + $0x1dc8] sm:$0xff] %v7252
        %8277 = vst [vmem:[%s142 + $0x1dd0] sm:$0xff] %v7253
        %8278 = vst [vmem:[%s142 + $0x1dd8] sm:$0xff] %v7254
        %8279 = vst [vmem:[%s142 + $0x1de0] sm:$0xff] %v7255
        %8280 = vst [vmem:[%s142 + $0x1de8] sm:$0xff] %v7256
        %8281 = vst [vmem:[%s142 + $0x1df0] sm:$0xff] %v7257
        %8282 = vst [vmem:[%s142 + $0x1df8] sm:$0xff] %v7258
        %8283 = vst [vmem:[%s142 + $0x1e00] sm:$0xff] %v7259
        %8284 = vst [vmem:[%s142 + $0x1e08] sm:$0xff] %v7260
        %8285 = vst [vmem:[%s142 + $0x1e10] sm:$0xff] %v7261
        %8286 = vst [vmem:[%s142 + $0x1e18] sm:$0xff] %v7262
        %8287 = vst [vmem:[%s142 + $0x1e20] sm:$0xff] %v7263
        %8288 = vst [vmem:[%s142 + $0x1e28] sm:$0xff] %v7264
        %8289 = vst [vmem:[%s142 + $0x1e30] sm:$0xff] %v7265
        %8290 = vst [vmem:[%s142 + $0x1e38] sm:$0xff] %v7266
        %8291 = vst [vmem:[%s142 + $0x1e40] sm:$0xff] %v7267
        %8292 = vst [vmem:[%s142 + $0x1e48] sm:$0xff] %v7268
        %8293 = vst [vmem:[%s142 + $0x1e50] sm:$0xff] %v7269
        %8294 = vst [vmem:[%s142 + $0x1e58] sm:$0xff] %v7270
        %8295 = vst [vmem:[%s142 + $0x1e60] sm:$0xff] %v7271
        %8296 = vst [vmem:[%s142 + $0x1e68] sm:$0xff] %v7272
        %8297 = vst [vmem:[%s142 + $0x1e70] sm:$0xff] %v7273
        %8298 = vst [vmem:[%s142 + $0x1e78] sm:$0xff] %v7274
        %8299 = vst [vmem:[%s142 + $0x1e80] sm:$0xff] %v7275
        %8300 = vst [vmem:[%s142 + $0x1e88] sm:$0xff] %v7276
        %8301 = vst [vmem:[%s142 + $0x1e90] sm:$0xff] %v7277
        %8302 = vst [vmem:[%s142 + $0x1e98] sm:$0xff] %v7278
        %8303 = vst [vmem:[%s142 + $0x1ea0] sm:$0xff] %v7279
        %8304 = vst [vmem:[%s142 + $0x1ea8] sm:$0xff] %v7280
        %8305 = vst [vmem:[%s142 + $0x1eb0] sm:$0xff] %v7281
        %8306 = vst [vmem:[%s142 + $0x1eb8] sm:$0xff] %v7282
        %8307 = vst [vmem:[%s142 + $0x1ec0] sm:$0xff] %v7283
        %8308 = vst [vmem:[%s142 + $0x1ec8] sm:$0xff] %v7284
        %8309 = vst [vmem:[%s142 + $0x1ed0] sm:$0xff] %v7285
        %8310 = vst [vmem:[%s142 + $0x1ed8] sm:$0xff] %v7286
        %8311 = vst [vmem:[%s142 + $0x1ee0] sm:$0xff] %v7287
        %8312 = vst [vmem:[%s142 + $0x1ee8] sm:$0xff] %v7288
        %8313 = vst [vmem:[%s142 + $0x1ef0] sm:$0xff] %v7289
        %8314 = vst [vmem:[%s142 + $0x1ef8] sm:$0xff] %v7290
        %8315 = vst [vmem:[%s142 + $0x1f00] sm:$0xff] %v7291
        %8316 = vst [vmem:[%s142 + $0x1f08] sm:$0xff] %v7292
        %8317 = vst [vmem:[%s142 + $0x1f10] sm:$0xff] %v7293
        %8318 = vst [vmem:[%s142 + $0x1f18] sm:$0xff] %v7294
        %8319 = vst [vmem:[%s142 + $0x1f20] sm:$0xff] %v7295
        %8320 = vst [vmem:[%s142 + $0x1f28] sm:$0xff] %v7296
        %8321 = vst [vmem:[%s142 + $0x1f30] sm:$0xff] %v7297
        %8322 = vst [vmem:[%s142 + $0x1f38] sm:$0xff] %v7298
        %8323 = vst [vmem:[%s142 + $0x1f40] sm:$0xff] %v7299
        %8324 = vst [vmem:[%s142 + $0x1f48] sm:$0xff] %v7300
        %8325 = vst [vmem:[%s142 + $0x1f50] sm:$0xff] %v7301
        %8326 = vst [vmem:[%s142 + $0x1f58] sm:$0xff] %v7302
        %8327 = vst [vmem:[%s142 + $0x1f60] sm:$0xff] %v7303
        %8328 = vst [vmem:[%s142 + $0x1f68] sm:$0xff] %v7304
        %8329 = vst [vmem:[%s142 + $0x1f70] sm:$0xff] %v7305
        %8330 = vst [vmem:[%s142 + $0x1f78] sm:$0xff] %v7306
        %8331 = vst [vmem:[%s142 + $0x1f80] sm:$0xff] %v7307
        %8332 = vst [vmem:[%s142 + $0x1f88] sm:$0xff] %v7308
        %8333 = vst [vmem:[%s142 + $0x1f90] sm:$0xff] %v7309
        %8334 = vst [vmem:[%s142 + $0x1f98] sm:$0xff] %v7310
        %8335 = vst [vmem:[%s142 + $0x1fa0] sm:$0xff] %v7311
        %8336 = vst [vmem:[%s142 + $0x1fa8] sm:$0xff] %v7312
        %8337 = vst [vmem:[%s142 + $0x1fb0] sm:$0xff] %v7313
        %8338 = vst [vmem:[%s142 + $0x1fb8] sm:$0xff] %v7314
        %8339 = vst [vmem:[%s142 + $0x1fc0] sm:$0xff] %v7315
        %8340 = vst [vmem:[%s142 + $0x1fc8] sm:$0xff] %v7316
        %8341 = vst [vmem:[%s142 + $0x1fd0] sm:$0xff] %v7317
        %8342 = vst [vmem:[%s142 + $0x1fd8] sm:$0xff] %v7318
        %8343 = vst [vmem:[%s142 + $0x1fe0] sm:$0xff] %v7319
        %8344 = vst [vmem:[%s142 + $0x1fe8] sm:$0xff] %v7320
        %8345 = vst [vmem:[%s142 + $0x1ff0] sm:$0xff] %v7321
        %8346 = vst [vmem:[%s142 + $0x1ff8] sm:$0xff] %v7322
        %s8347 = sand.u32 %s52, 1
        %s8348 = scalar_lea.sflag [#allocation4], %s8347
        %s8349 = sand.u32 %s52, 1
        %s8350 = smul.addr %s8349, 8192
        %s8351 = scalar_lea.vmem [#allocation5], %s8350
        // Predicated region
        $region29: #{tpu_custom_call.1} parent=23 // pred_check
          %p8352 = pneg %p62
        $region30: #{tpu_custom_call.1} parent=23 // pred_check_branch
          %8354 = sbr.rel (%p8352) target = $region32
        $region31: #{tpu_custom_call.1} parent=23 // pred_region
          %s8355 = smul.u32 128, %s18
          %s8356 = ssub.s32 264, %s8355
          %p8357 = scmp.lt.s32.totalorder %s8356, 128
          %s8358 = scalar_select %p8357, %s8356, 128
          %s8359 = smul.u32 128, %s8358
          %s8360 = smul.u32 %s8359, 8
          %s8362 = ssub.s32 131072, %s8360
          %8363 = vsyncadd %s8348, %s8362
          %p8364 = scmp.ne.s32.totalorder 0, %s8360
          %s8365 = smul.addr %s8355, 8
          %s8366 = smul.addr %s8365, 128
          %s8367 = scalar_lea.hbm %s1, %s8366
          %s8368 = smul.u32 64, %s8358
          %s8369 = sshll.u32 %s8351, 4
          %s8370 = int_to_ptr.vmem [resolvable:$true] %s8369
          %s8371 = sshll.u32 %s8368, 4
          %8375 = dma.vmem_to_hbm [thread:$0]  (%p8364), %s8370, %s8371, %s8367, %s8348, 1024, 1024, 64
        $region32: #{tpu_custom_call.1} parent=23 // pred_fallthru
          _
      $region24: #{tpu_custom_call.1} parent=5 // pred_fallthru
        _
      %p8376 = scmp.le.s32.totalorder 2, %s13
      // Predicated region
      $region33: #{tpu_custom_call.1} parent=5 // pred_check
        %p8377 = pneg %p8376
      $region34: #{tpu_custom_call.1} parent=5 // pred_check_branch
        %8379 = sbr.rel (%p8377) target = $region36
      $region35: #{tpu_custom_call.1} parent=5 // pred_region
        %s8380 = ssub.s32 %s13, 2
        // Predicated region
        $region37: #{tpu_custom_call.1} parent=35 // pred_check
          %p8381 = pneg %p68
        $region38: #{tpu_custom_call.1} parent=35 // pred_check_branch
          %8383 = sbr.rel (%p8381) target = $region40
        $region39: #{tpu_custom_call.1} parent=35 // pred_region
          %s8384 = sand.u32 %s53, 1
          %s8385 = scalar_lea.sflag [#allocation4], %s8384
          %s8386 = sand.u32 %s53, 1
          %s8387 = smul.addr %s8386, 8192
          %s8388 = scalar_lea.vmem [#allocation5], %s8387
          %8389 = dma.done %s8385, 131072
        $region40: #{tpu_custom_call.1} parent=35 // pred_fallthru
          _
      $region36: #{tpu_custom_call.1} parent=5 // pred_fallthru
        _
    $region6: #{tpu_custom_call.1} parent=1 // loop_footer
      %s17 = sadd.s32 1, %s13
    $region7: #{tpu_custom_call.1} parent=1 // loop_footer_branch
      %12 = sbr.rel target = $region3
    $region8: #{tpu_custom_call.1} parent=1 // loop_exit
      _
    %8390 = vsyncpa [#allocation3], 1
    %s8391 = scalar_lea.sflag [#allocation3], 1
    %8392 = vsyncpa %s8391, 1
    %8393 = vsyncpa [#allocation4], 1
    %s8394 = scalar_lea.sflag [#allocation4], 1
    %8395 = vsyncpa %s8394, 1

</llo_original>
